<compile_context>
chip_gen: v6e
topology: v6e:2x2x1
jax: 0.10.0
libtpu: 0.0.40
codegen_flags: <defaults>
</compile_context>

<pallas_src>
import functools

import jax
import jax.numpy as jnp
from jax.experimental import pallas as pl
from jax.experimental.pallas import tpu as pltpu

_EPS = 1e-5   # nn.BatchNorm2d default eps
_K = 5        # conv kernel size
_PAD = 2      # conv padding


def _affn_kernel(*refs, stages, nhw, img_w):
    """Fused AFFN forward (all encoder + decoder stages), channels-on-sublanes.

    refs = (x, w_0..w_{S-1}, gb, mask, alpha, out, pat_scratch)
      x:     (1, NHW)            f32  flattened single-channel input (n,h,w order)
      w_s:   (Cout_s, 25*Cin_s)  bf16 conv weights, row index = (ky*5+kx)*Cin + c
      gb:    (sum_s 2*Cout_s, 1) f32  packed [gamma_s; beta_s] columns, stage order
      mask:  (25, NHW)           f32  0/1 validity of tap (ky,kx) at each position
      alpha: (num_decoders,)     f32  sigmoid(alpha) in execution order (SMEM)
      out:   (1, NHW)            f32
      pat:   (25*Cmax, NHW)      bf16 VMEM im2col scratch

    stages: tuple of (cin, cout, is_decoder) in execution order
            (encoders 0..L-1 then decoders L-1..0).
    """
    n_stages = len(stages)
    x_ref = refs[0]
    w_refs = refs[1:1 + n_stages]
    gb_ref = refs[1 + n_stages]
    mask_ref = refs[2 + n_stages]
    alpha_ref = refs[3 + n_stages]
    o_ref = refs[4 + n_stages]
    pat_ref = refs[5 + n_stages]

    act = x_ref[...]                       # (1, NHW) f32
    residuals = []
    off = 0                                # running row offset into gb
    dec_idx = 0
    for si, (cin, cout, is_dec) in enumerate(stages):
        if not is_dec:
            residuals.append(act)          # residual = encoder input (stays in VMEM)

        # ---- im2col via lane rotation + border mask (no padded scratch) -------
        # pat[tap*cin + c, p] = act[c, p + (ky-2)*W + (kx-2)]   (0 outside image)
        for tap in range(_K * _K):
            ky, kx = tap // _K, tap % _K
            s = (ky - _PAD) * img_w + (kx - _PAD)
            if s == 0:                                         # center tap: identity
                val = act
            else:
                shifted = pltpu.roll(act, shift=(-s) % nhw, axis=1)  # act[:, p+s]
                val = shifted * mask_ref[tap:tap + 1, :]             # zero the halo
            pat_ref[tap * cin:(tap + 1) * cin, :] = val.astype(pat_ref.dtype)
        k = _K * _K * cin

        # ---- conv5x5 as ONE MXU matmul, bf16 in / f32 accumulate --------------
        # (bias omitted: exactly cancelled by train-mode BN mean subtraction)
        y = jnp.dot(w_refs[si][...], pat_ref[0:k, :],
                    preferred_element_type=jnp.float32)        # (cout, NHW) f32

        # ---- BatchNorm2d (train-mode batch stats, biased var) + ReLU ----------
        # Lane reduction over NHW; folded to a per-channel scale/shift.
        mean = jnp.mean(y, axis=1, keepdims=True)              # (cout, 1)
        d = y - mean
        var = jnp.mean(d * d, axis=1, keepdims=True)           # biased variance
        gamma = gb_ref[off:off + cout, :]                      # (cout, 1)
        beta = gb_ref[off + cout:off + 2 * cout, :]
        off += 2 * cout
        scale = jax.lax.rsqrt(var + _EPS) * gamma
        shift = beta - mean * scale
        y = jnp.maximum(y * scale + shift, 0.0)                # BN + ReLU, f32

        # ---- adaptive residual blend (decoder stages only) --------------------
        if is_dec:
            a = alpha_ref[dec_idx]                             # sigmoid(alpha) scalar
            res = residuals.pop()
            y = res + a * (y - res)                            # a*y + (1-a)*res
            dec_idx += 1

        act = y

    o_ref[...] = act                                           # (1, NHW) lane-dense


def _vmem_spec():
    return pl.BlockSpec(memory_space=pltpu.MemorySpace.VMEM)


def affn_forward(x_nchw, params):
    """AFFN forward matching the PyTorch module (fresh module => train-mode BN)."""
    N, c0, H, W = x_nchw.shape
    assert c0 == 1, "AFFN expects single-channel input"
    NHW = N * H * W
    layers = len(params)

    # ---- build stage metadata / weights (PyTorch OIHW -> (Cout, 25*Cin)) ------
    stages = []        # (cin, cout, is_decoder) in execution order
    w_mats = []        # (cout, 25*cin), row index (ky*5+kx)*cin + c
    gb_cols = []       # gamma_s, beta_s per stage
    alphas = []
    in_ch = 1
    for p in params:                                   # encoders 0..L-1
        cout = p["enc_w"].shape[0]
        stages.append((in_ch, cout, False))
        w_mats.append(jnp.transpose(p["enc_w"], (0, 2, 3, 1)).reshape(cout, _K * _K * in_ch))
        gb_cols += [p["enc_gamma"], p["enc_beta"]]
        in_ch = cout
    for i in range(layers - 1, -1, -1):                # decoders L-1..0
        p = params[i]
        cout, cin = p["dec_w"].shape[0], p["dec_w"].shape[1]
        stages.append((cin, cout, True))
        w_mats.append(jnp.transpose(p["dec_w"], (0, 2, 3, 1)).reshape(cout, _K * _K * cin))
        gb_cols += [p["dec_gamma"], p["dec_beta"]]
        alphas.append(p["alpha"])

    # Packed per-channel BN params as a column: [gamma_s; beta_s] per stage.
    gb = jnp.concatenate(gb_cols).reshape(-1, 1).astype(jnp.float32)
    # sigmoid(alpha) for decoder stages in execution order (tiny XLA op).
    alpha_sig = jax.nn.sigmoid(jnp.stack(alphas)).astype(jnp.float32)

    # 0/1 validity masks for the 25 taps (depend only on the spatial geometry).
    idx = jnp.arange(NHW, dtype=jnp.int32)
    xc = idx % W
    yc = (idx // W) % H
    mrows = []
    for ky in range(_K):
        for kx in range(_K):
            dy, dx = ky - _PAD, kx - _PAD
            mrows.append((yc + dy >= 0) & (yc + dy < H) & (xc + dx >= 0) & (xc + dx < W))
    mask = jnp.stack(mrows).astype(jnp.float32)        # (25, NHW)

    cmax = max(s[0] for s in stages)                   # max input channels (16)
    x2d = x_nchw.astype(jnp.float32).reshape(1, NHW)   # (n,h,w) flat order on lanes

    # Explicit scoped-VMEM budget (scales with NHW; defaults are 16/32 MiB).
    pat_bytes = _K * _K * cmax * NHW * 2               # bf16 im2col scratch
    w_bytes = sum(int(w.size) for w in w_mats) * 2
    act_bytes = (len(stages) + 2) * cmax * NHW * 4     # live activations + residuals
    io_bytes = 2 * NHW * 4 + int(mask.size) * 4 + int(gb.size) * 4
    vmem_limit = int(min(max(2 * (pat_bytes + w_bytes + act_bytes + io_bytes),
                             32 * 1024 * 1024), 64 * 1024 * 1024))

    out = pl.pallas_call(
        functools.partial(_affn_kernel, stages=tuple(stages), nhw=NHW, img_w=W),
        out_shape=jax.ShapeDtypeStruct((1, NHW), jnp.float32),
        in_specs=[_vmem_spec()] * (1 + len(w_mats) + 2)
                 + [pl.BlockSpec(memory_space=pltpu.MemorySpace.SMEM)],
        out_specs=_vmem_spec(),
        scratch_shapes=[pltpu.VMEM((_K * _K * cmax, NHW), jnp.bfloat16)],
        compiler_params=pltpu.CompilerParams(vmem_limit_bytes=vmem_limit),
    )(x2d, *[w.astype(jnp.bfloat16) for w in w_mats], gb, mask, alpha_sig)

    return out.reshape(N, 1, H, W)                     # NCHW


def affn_reference(x_nchw, params):
    """Pure-JAX reference (bf16 conv operands, f32 everything else, WITH conv bias)."""
    def conv_bn_relu(x, w_oihw, b, gamma, beta):
        y = jax.lax.conv_general_dilated(
            x.astype(jnp.bfloat16), w_oihw.astype(jnp.bfloat16),
            window_strides=(1, 1), padding=((_PAD, _PAD), (_PAD, _PAD)),
            dimension_numbers=("NCHW", "OIHW", "NCHW"),
            preferred_element_type=jnp.float32)
        y = y + b[None, :, None, None]
        mean = jnp.mean(y, axis=(0, 2, 3), keepdims=True)
        var = jnp.mean((y - mean) ** 2, axis=(0, 2, 3), keepdims=True)
        y = (y - mean) * jax.lax.rsqrt(var + _EPS) * gamma[None, :, None, None] \
            + beta[None, :, None, None]
        return jnp.maximum(y, 0.0)

    x = x_nchw.astype(jnp.float32)
    residuals = []
    L = len(params)
    for i in range(L):
        residuals.append(x)
        p = params[i]
        x = conv_bn_relu(x, p["enc_w"], p["enc_b"], p["enc_gamma"], p["enc_beta"])
    for i in range(L - 1, -1, -1):
        p = params[i]
        d = conv_bn_relu(x, p["dec_w"], p["dec_b"], p["dec_gamma"], p["dec_beta"])
        a = jax.nn.sigmoid(p["alpha"])
        x = a * d + (1.0 - a) * residuals[i]
    return x


def init_affn_params(key, layers=2):
    """Deterministic params mirroring AFFN.__init__ shapes (PyTorch layouts).

    encoder i: Conv2d(in_ch, 4**(i+1), 5, padding=2) + BN(4**(i+1)) + ReLU
    decoder i: Conv2d(4**(i+1), in_ch, 5, padding=2) + BN(in_ch) + ReLU
    alpha i:   scalar 0.5
    Conv weights are OIHW, biases (Cout,). Biases are mathematically inert under
    train-mode BN (mean subtraction cancels them), so the fused kernel skips them.
    """
    params = []
    in_ch = 1
    for i in range(layers):
        out_ch = 4 ** (i + 1)
        key, k1, k2, k3, k4, k5, k6, k7, k8 = jax.random.split(key, 9)
        enc_fan = in_ch * _K * _K
        dec_fan = out_ch * _K * _K
        params.append(dict(
            enc_w=jax.random.normal(k1, (out_ch, in_ch, _K, _K), jnp.float32) / jnp.sqrt(enc_fan),
            enc_b=jax.random.normal(k2, (out_ch,), jnp.float32) * 0.1,
            enc_gamma=1.0 + 0.1 * jax.random.normal(k3, (out_ch,), jnp.float32),
            enc_beta=0.1 * jax.random.normal(k4, (out_ch,), jnp.float32),
            dec_w=jax.random.normal(k5, (in_ch, out_ch, _K, _K), jnp.float32) / jnp.sqrt(dec_fan),
            dec_b=jax.random.normal(k6, (in_ch,), jnp.float32) * 0.1,
            dec_gamma=1.0 + 0.1 * jax.random.normal(k7, (in_ch,), jnp.float32),
            dec_beta=0.1 * jax.random.normal(k8, (in_ch,), jnp.float32),
            alpha=jnp.float32(0.5),
        ))
        in_ch = out_ch
    return params


if __name__ == "__main__":
    key = jax.random.PRNGKey(0)
    key, xk = jax.random.split(key)
    # Small single-channel NCHW input consistent with AFFN.
    x = jax.random.normal(xk, (2, 1, 16, 16), jnp.float32)
    params = init_affn_params(key, layers=2)

    out = jax.jit(affn_forward)(x, params)
    out = jax.block_until_ready(out)
    assert out.shape == (2, 1, 16, 16), out.shape
    assert jnp.all(jnp.isfinite(out))

    # Correctness check against a pure-JAX reference with matching bf16 conv inputs.
    ref = jax.block_until_ready(jax.jit(affn_reference)(x, params))
    max_err = float(jnp.max(jnp.abs(out - ref)))
    assert max_err < 1e-2, f"mismatch vs reference: max_err={max_err}"

    print("KERNEL_OK")
</pallas_src>

<mosaic_0001>
module attributes {stable_mosaic.version = 11 : i64} {
  func.func @_affn_kernel(%arg0: memref<1x512xf32, #tpu.memory_space<vmem>>, %arg1: memref<4x25xbf16, #tpu.memory_space<vmem>>, %arg2: memref<16x100xbf16, #tpu.memory_space<vmem>>, %arg3: memref<4x400xbf16, #tpu.memory_space<vmem>>, %arg4: memref<1x100xbf16, #tpu.memory_space<vmem>>, %arg5: memref<50x1xf32, #tpu.memory_space<vmem>>, %arg6: memref<25x512xf32, #tpu.memory_space<vmem>>, %arg7: memref<2xf32, #tpu.memory_space<smem>>, %arg8: memref<1x512xf32, #tpu.memory_space<vmem>>, %arg9: memref<400x512xbf16, #tpu.memory_space<vmem>>) attributes {dimension_semantics = [], scalar_prefetch = 0 : i64, scratch_operands = 1 : i64, tpu.core_type = #tpu.core_type<tc>} {
    %c0 = arith.constant 0 : index
    %c0_0 = arith.constant 0 : index
    %0 = vector.load %arg0[%c0, %c0_0] : memref<1x512xf32, #tpu.memory_space<vmem>>, vector<1x512xf32>
    %c34_i32 = arith.constant 34 : i32
    %1 = tpu.dynamic_rotate %0 by %c34_i32 dim 1 : vector<1x512xf32>, i32 -> vector<1x512xf32>
    %c0_1 = arith.constant 0 : index
    %c0_2 = arith.constant 0 : index
    %2 = vector.load %arg6[%c0_1, %c0_2] : memref<25x512xf32, #tpu.memory_space<vmem>>, vector<1x512xf32>
    %3 = arith.mulf %1, %2 : vector<1x512xf32>
    %4 = arith.truncf %3 : vector<1x512xf32> to vector<1x512xbf16>
    %c0_3 = arith.constant 0 : index
    %c0_4 = arith.constant 0 : index
    %5 = vector.load %arg9[%c0_3, %c0_4] : memref<400x512xbf16, #tpu.memory_space<vmem>>, vector<1x512xbf16>
    tpu.vector_store %arg9[%c0_3, %c0_4], %4 {strides = array<i32>} : memref<400x512xbf16, #tpu.memory_space<vmem>>, vector<1x512xbf16>,
    %c33_i32 = arith.constant 33 : i32
    %6 = tpu.dynamic_rotate %0 by %c33_i32 dim 1 : vector<1x512xf32>, i32 -> vector<1x512xf32>
    %c1 = arith.constant 1 : index
    %c0_5 = arith.constant 0 : index
    %7 = vector.load %arg6[%c1, %c0_5] : memref<25x512xf32, #tpu.memory_space<vmem>>, vector<1x512xf32>
    %8 = arith.mulf %6, %7 : vector<1x512xf32>
    %9 = arith.truncf %8 : vector<1x512xf32> to vector<1x512xbf16>
    %c1_6 = arith.constant 1 : index
    %c0_7 = arith.constant 0 : index
    %10 = vector.load %arg9[%c1_6, %c0_7] : memref<400x512xbf16, #tpu.memory_space<vmem>>, vector<1x512xbf16>
    tpu.vector_store %arg9[%c1_6, %c0_7], %9 {strides = array<i32>} : memref<400x512xbf16, #tpu.memory_space<vmem>>, vector<1x512xbf16>,
    %c32_i32 = arith.constant 32 : i32
    %11 = tpu.dynamic_rotate %0 by %c32_i32 dim 1 : vector<1x512xf32>, i32 -> vector<1x512xf32>
    %c2 = arith.constant 2 : index
    %c0_8 = arith.constant 0 : index
    %12 = vector.load %arg6[%c2, %c0_8] : memref<25x512xf32, #tpu.memory_space<vmem>>, vector<1x512xf32>
    %13 = arith.mulf %11, %12 : vector<1x512xf32>
    %14 = arith.truncf %13 : vector<1x512xf32> to vector<1x512xbf16>
    %c2_9 = arith.constant 2 : index
    %c0_10 = arith.constant 0 : index
    %15 = vector.load %arg9[%c2_9, %c0_10] : memref<400x512xbf16, #tpu.memory_space<vmem>>, vector<1x512xbf16>
    tpu.vector_store %arg9[%c2_9, %c0_10], %14 {strides = array<i32>} : memref<400x512xbf16, #tpu.memory_space<vmem>>, vector<1x512xbf16>,
    %c31_i32 = arith.constant 31 : i32
    %16 = tpu.dynamic_rotate %0 by %c31_i32 dim 1 : vector<1x512xf32>, i32 -> vector<1x512xf32>
    %c3 = arith.constant 3 : index
    %c0_11 = arith.constant 0 : index
    %17 = vector.load %arg6[%c3, %c0_11] : memref<25x512xf32, #tpu.memory_space<vmem>>, vector<1x512xf32>
    %18 = arith.mulf %16, %17 : vector<1x512xf32>
    %19 = arith.truncf %18 : vector<1x512xf32> to vector<1x512xbf16>
    %c3_12 = arith.constant 3 : index
    %c0_13 = arith.constant 0 : index
    %20 = vector.load %arg9[%c3_12, %c0_13] : memref<400x512xbf16, #tpu.memory_space<vmem>>, vector<1x512xbf16>
    tpu.vector_store %arg9[%c3_12, %c0_13], %19 {strides = array<i32>} : memref<400x512xbf16, #tpu.memory_space<vmem>>, vector<1x512xbf16>,
    %c30_i32 = arith.constant 30 : i32
    %21 = tpu.dynamic_rotate %0 by %c30_i32 dim 1 : vector<1x512xf32>, i32 -> vector<1x512xf32>
    %c4 = arith.constant 4 : index
    %c0_14 = arith.constant 0 : index
    %22 = vector.load %arg6[%c4, %c0_14] : memref<25x512xf32, #tpu.memory_space<vmem>>, vector<1x512xf32>
    %23 = arith.mulf %21, %22 : vector<1x512xf32>
    %24 = arith.truncf %23 : vector<1x512xf32> to vector<1x512xbf16>
    %c4_15 = arith.constant 4 : index
    %c0_16 = arith.constant 0 : index
    %25 = vector.load %arg9[%c4_15, %c0_16] : memref<400x512xbf16, #tpu.memory_space<vmem>>, vector<1x512xbf16>
    tpu.vector_store %arg9[%c4_15, %c0_16], %24 {strides = array<i32>} : memref<400x512xbf16, #tpu.memory_space<vmem>>, vector<1x512xbf16>,
    %c18_i32 = arith.constant 18 : i32
    %26 = tpu.dynamic_rotate %0 by %c18_i32 dim 1 : vector<1x512xf32>, i32 -> vector<1x512xf32>
    %c5 = arith.constant 5 : index
    %c0_17 = arith.constant 0 : index
    %27 = vector.load %arg6[%c5, %c0_17] : memref<25x512xf32, #tpu.memory_space<vmem>>, vector<1x512xf32>
    %28 = arith.mulf %26, %27 : vector<1x512xf32>
    %29 = arith.truncf %28 : vector<1x512xf32> to vector<1x512xbf16>
    %c5_18 = arith.constant 5 : index
    %c0_19 = arith.constant 0 : index
    %30 = vector.load %arg9[%c5_18, %c0_19] : memref<400x512xbf16, #tpu.memory_space<vmem>>, vector<1x512xbf16>
    tpu.vector_store %arg9[%c5_18, %c0_19], %29 {strides = array<i32>} : memref<400x512xbf16, #tpu.memory_space<vmem>>, vector<1x512xbf16>,
    %c17_i32 = arith.constant 17 : i32
    %31 = tpu.dynamic_rotate %0 by %c17_i32 dim 1 : vector<1x512xf32>, i32 -> vector<1x512xf32>
    %c6 = arith.constant 6 : index
    %c0_20 = arith.constant 0 : index
    %32 = vector.load %arg6[%c6, %c0_20] : memref<25x512xf32, #tpu.memory_space<vmem>>, vector<1x512xf32>
    %33 = arith.mulf %31, %32 : vector<1x512xf32>
    %34 = arith.truncf %33 : vector<1x512xf32> to vector<1x512xbf16>
    %c6_21 = arith.constant 6 : index
    %c0_22 = arith.constant 0 : index
    %35 = vector.load %arg9[%c6_21, %c0_22] : memref<400x512xbf16, #tpu.memory_space<vmem>>, vector<1x512xbf16>
    tpu.vector_store %arg9[%c6_21, %c0_22], %34 {strides = array<i32>} : memref<400x512xbf16, #tpu.memory_space<vmem>>, vector<1x512xbf16>,
    %c16_i32 = arith.constant 16 : i32
    %36 = tpu.dynamic_rotate %0 by %c16_i32 dim 1 : vector<1x512xf32>, i32 -> vector<1x512xf32>
    %c7 = arith.constant 7 : index
    %c0_23 = arith.constant 0 : index
    %37 = vector.load %arg6[%c7, %c0_23] : memref<25x512xf32, #tpu.memory_space<vmem>>, vector<1x512xf32>
    %38 = arith.mulf %36, %37 : vector<1x512xf32>
    %39 = arith.truncf %38 : vector<1x512xf32> to vector<1x512xbf16>
    %c7_24 = arith.constant 7 : index
    %c0_25 = arith.constant 0 : index
    %40 = vector.load %arg9[%c7_24, %c0_25] : memref<400x512xbf16, #tpu.memory_space<vmem>>, vector<1x512xbf16>
    tpu.vector_store %arg9[%c7_24, %c0_25], %39 {strides = array<i32>} : memref<400x512xbf16, #tpu.memory_space<vmem>>, vector<1x512xbf16>,
    %c15_i32 = arith.constant 15 : i32
    %41 = tpu.dynamic_rotate %0 by %c15_i32 dim 1 : vector<1x512xf32>, i32 -> vector<1x512xf32>
    %c8 = arith.constant 8 : index
    %c0_26 = arith.constant 0 : index
    %42 = vector.load %arg6[%c8, %c0_26] : memref<25x512xf32, #tpu.memory_space<vmem>>, vector<1x512xf32>
    %43 = arith.mulf %41, %42 : vector<1x512xf32>
    %44 = arith.truncf %43 : vector<1x512xf32> to vector<1x512xbf16>
    %c8_27 = arith.constant 8 : index
    %c0_28 = arith.constant 0 : index
    %45 = vector.load %arg9[%c8_27, %c0_28] : memref<400x512xbf16, #tpu.memory_space<vmem>>, vector<1x512xbf16>
    tpu.vector_store %arg9[%c8_27, %c0_28], %44 {strides = array<i32>} : memref<400x512xbf16, #tpu.memory_space<vmem>>, vector<1x512xbf16>,
    %c14_i32 = arith.constant 14 : i32
    %46 = tpu.dynamic_rotate %0 by %c14_i32 dim 1 : vector<1x512xf32>, i32 -> vector<1x512xf32>
    %c9 = arith.constant 9 : index
    %c0_29 = arith.constant 0 : index
    %47 = vector.load %arg6[%c9, %c0_29] : memref<25x512xf32, #tpu.memory_space<vmem>>, vector<1x512xf32>
    %48 = arith.mulf %46, %47 : vector<1x512xf32>
    %49 = arith.truncf %48 : vector<1x512xf32> to vector<1x512xbf16>
    %c9_30 = arith.constant 9 : index
    %c0_31 = arith.constant 0 : index
    %50 = vector.load %arg9[%c9_30, %c0_31] : memref<400x512xbf16, #tpu.memory_space<vmem>>, vector<1x512xbf16>
    tpu.vector_store %arg9[%c9_30, %c0_31], %49 {strides = array<i32>} : memref<400x512xbf16, #tpu.memory_space<vmem>>, vector<1x512xbf16>,
    %c2_i32 = arith.constant 2 : i32
    %51 = tpu.dynamic_rotate %0 by %c2_i32 dim 1 : vector<1x512xf32>, i32 -> vector<1x512xf32>
    %c10 = arith.constant 10 : index
    %c0_32 = arith.constant 0 : index
    %52 = vector.load %arg6[%c10, %c0_32] : memref<25x512xf32, #tpu.memory_space<vmem>>, vector<1x512xf32>
    %53 = arith.mulf %51, %52 : vector<1x512xf32>
    %54 = arith.truncf %53 : vector<1x512xf32> to vector<1x512xbf16>
    %c10_33 = arith.constant 10 : index
    %c0_34 = arith.constant 0 : index
    %55 = vector.load %arg9[%c10_33, %c0_34] : memref<400x512xbf16, #tpu.memory_space<vmem>>, vector<1x512xbf16>
    tpu.vector_store %arg9[%c10_33, %c0_34], %54 {strides = array<i32>} : memref<400x512xbf16, #tpu.memory_space<vmem>>, vector<1x512xbf16>,
    %c1_i32 = arith.constant 1 : i32
    %56 = tpu.dynamic_rotate %0 by %c1_i32 dim 1 : vector<1x512xf32>, i32 -> vector<1x512xf32>
    %c11 = arith.constant 11 : index
    %c0_35 = arith.constant 0 : index
    %57 = vector.load %arg6[%c11, %c0_35] : memref<25x512xf32, #tpu.memory_space<vmem>>, vector<1x512xf32>
    %58 = arith.mulf %56, %57 : vector<1x512xf32>
    %59 = arith.truncf %58 : vector<1x512xf32> to vector<1x512xbf16>
    %c11_36 = arith.constant 11 : index
    %c0_37 = arith.constant 0 : index
    %60 = vector.load %arg9[%c11_36, %c0_37] : memref<400x512xbf16, #tpu.memory_space<vmem>>, vector<1x512xbf16>
    tpu.vector_store %arg9[%c11_36, %c0_37], %59 {strides = array<i32>} : memref<400x512xbf16, #tpu.memory_space<vmem>>, vector<1x512xbf16>,
    %61 = arith.truncf %0 : vector<1x512xf32> to vector<1x512xbf16>
    %c12 = arith.constant 12 : index
    %c0_38 = arith.constant 0 : index
    %62 = vector.load %arg9[%c12, %c0_38] : memref<400x512xbf16, #tpu.memory_space<vmem>>, vector<1x512xbf16>
    tpu.vector_store %arg9[%c12, %c0_38], %61 {strides = array<i32>} : memref<400x512xbf16, #tpu.memory_space<vmem>>, vector<1x512xbf16>,
    %c511_i32 = arith.constant 511 : i32
    %63 = tpu.dynamic_rotate %0 by %c511_i32 dim 1 : vector<1x512xf32>, i32 -> vector<1x512xf32>
    %c13 = arith.constant 13 : index
    %c0_39 = arith.constant 0 : index
    %64 = vector.load %arg6[%c13, %c0_39] : memref<25x512xf32, #tpu.memory_space<vmem>>, vector<1x512xf32>
    %65 = arith.mulf %63, %64 : vector<1x512xf32>
    %66 = arith.truncf %65 : vector<1x512xf32> to vector<1x512xbf16>
    %c13_40 = arith.constant 13 : index
    %c0_41 = arith.constant 0 : index
    %67 = vector.load %arg9[%c13_40, %c0_41] : memref<400x512xbf16, #tpu.memory_space<vmem>>, vector<1x512xbf16>
    tpu.vector_store %arg9[%c13_40, %c0_41], %66 {strides = array<i32>} : memref<400x512xbf16, #tpu.memory_space<vmem>>, vector<1x512xbf16>,
    %c510_i32 = arith.constant 510 : i32
    %68 = tpu.dynamic_rotate %0 by %c510_i32 dim 1 : vector<1x512xf32>, i32 -> vector<1x512xf32>
    %c14 = arith.constant 14 : index
    %c0_42 = arith.constant 0 : index
    %69 = vector.load %arg6[%c14, %c0_42] : memref<25x512xf32, #tpu.memory_space<vmem>>, vector<1x512xf32>
    %70 = arith.mulf %68, %69 : vector<1x512xf32>
    %71 = arith.truncf %70 : vector<1x512xf32> to vector<1x512xbf16>
    %c14_43 = arith.constant 14 : index
    %c0_44 = arith.constant 0 : index
    %72 = vector.load %arg9[%c14_43, %c0_44] : memref<400x512xbf16, #tpu.memory_space<vmem>>, vector<1x512xbf16>
    tpu.vector_store %arg9[%c14_43, %c0_44], %71 {strides = array<i32>} : memref<400x512xbf16, #tpu.memory_space<vmem>>, vector<1x512xbf16>,
    %c498_i32 = arith.constant 498 : i32
    %73 = tpu.dynamic_rotate %0 by %c498_i32 dim 1 : vector<1x512xf32>, i32 -> vector<1x512xf32>
    %c15 = arith.constant 15 : index
    %c0_45 = arith.constant 0 : index
    %74 = vector.load %arg6[%c15, %c0_45] : memref<25x512xf32, #tpu.memory_space<vmem>>, vector<1x512xf32>
    %75 = arith.mulf %73, %74 : vector<1x512xf32>
    %76 = arith.truncf %75 : vector<1x512xf32> to vector<1x512xbf16>
    %c15_46 = arith.constant 15 : index
    %c0_47 = arith.constant 0 : index
    %77 = vector.load %arg9[%c15_46, %c0_47] : memref<400x512xbf16, #tpu.memory_space<vmem>>, vector<1x512xbf16>
    tpu.vector_store %arg9[%c15_46, %c0_47], %76 {strides = array<i32>} : memref<400x512xbf16, #tpu.memory_space<vmem>>, vector<1x512xbf16>,
    %c497_i32 = arith.constant 497 : i32
    %78 = tpu.dynamic_rotate %0 by %c497_i32 dim 1 : vector<1x512xf32>, i32 -> vector<1x512xf32>
    %c16 = arith.constant 16 : index
    %c0_48 = arith.constant 0 : index
    %79 = vector.load %arg6[%c16, %c0_48] : memref<25x512xf32, #tpu.memory_space<vmem>>, vector<1x512xf32>
    %80 = arith.mulf %78, %79 : vector<1x512xf32>
    %81 = arith.truncf %80 : vector<1x512xf32> to vector<1x512xbf16>
    %c16_49 = arith.constant 16 : index
    %c0_50 = arith.constant 0 : index
    %82 = vector.load %arg9[%c16_49, %c0_50] : memref<400x512xbf16, #tpu.memory_space<vmem>>, vector<1x512xbf16>
    tpu.vector_store %arg9[%c16_49, %c0_50], %81 {strides = array<i32>} : memref<400x512xbf16, #tpu.memory_space<vmem>>, vector<1x512xbf16>,
    %c496_i32 = arith.constant 496 : i32
    %83 = tpu.dynamic_rotate %0 by %c496_i32 dim 1 : vector<1x512xf32>, i32 -> vector<1x512xf32>
    %c17 = arith.constant 17 : index
    %c0_51 = arith.constant 0 : index
    %84 = vector.load %arg6[%c17, %c0_51] : memref<25x512xf32, #tpu.memory_space<vmem>>, vector<1x512xf32>
    %85 = arith.mulf %83, %84 : vector<1x512xf32>
    %86 = arith.truncf %85 : vector<1x512xf32> to vector<1x512xbf16>
    %c17_52 = arith.constant 17 : index
    %c0_53 = arith.constant 0 : index
    %87 = vector.load %arg9[%c17_52, %c0_53] : memref<400x512xbf16, #tpu.memory_space<vmem>>, vector<1x512xbf16>
    tpu.vector_store %arg9[%c17_52, %c0_53], %86 {strides = array<i32>} : memref<400x512xbf16, #tpu.memory_space<vmem>>, vector<1x512xbf16>,
    %c495_i32 = arith.constant 495 : i32
    %88 = tpu.dynamic_rotate %0 by %c495_i32 dim 1 : vector<1x512xf32>, i32 -> vector<1x512xf32>
    %c18 = arith.constant 18 : index
    %c0_54 = arith.constant 0 : index
    %89 = vector.load %arg6[%c18, %c0_54] : memref<25x512xf32, #tpu.memory_space<vmem>>, vector<1x512xf32>
    %90 = arith.mulf %88, %89 : vector<1x512xf32>
    %91 = arith.truncf %90 : vector<1x512xf32> to vector<1x512xbf16>
    %c18_55 = arith.constant 18 : index
    %c0_56 = arith.constant 0 : index
    %92 = vector.load %arg9[%c18_55, %c0_56] : memref<400x512xbf16, #tpu.memory_space<vmem>>, vector<1x512xbf16>
    tpu.vector_store %arg9[%c18_55, %c0_56], %91 {strides = array<i32>} : memref<400x512xbf16, #tpu.memory_space<vmem>>, vector<1x512xbf16>,
    %c494_i32 = arith.constant 494 : i32
    %93 = tpu.dynamic_rotate %0 by %c494_i32 dim 1 : vector<1x512xf32>, i32 -> vector<1x512xf32>
    %c19 = arith.constant 19 : index
    %c0_57 = arith.constant 0 : index
    %94 = vector.load %arg6[%c19, %c0_57] : memref<25x512xf32, #tpu.memory_space<vmem>>, vector<1x512xf32>
    %95 = arith.mulf %93, %94 : vector<1x512xf32>
    %96 = arith.truncf %95 : vector<1x512xf32> to vector<1x512xbf16>
    %c19_58 = arith.constant 19 : index
    %c0_59 = arith.constant 0 : index
    %97 = vector.load %arg9[%c19_58, %c0_59] : memref<400x512xbf16, #tpu.memory_space<vmem>>, vector<1x512xbf16>
    tpu.vector_store %arg9[%c19_58, %c0_59], %96 {strides = array<i32>} : memref<400x512xbf16, #tpu.memory_space<vmem>>, vector<1x512xbf16>,
    %c482_i32 = arith.constant 482 : i32
    %98 = tpu.dynamic_rotate %0 by %c482_i32 dim 1 : vector<1x512xf32>, i32 -> vector<1x512xf32>
    %c20 = arith.constant 20 : index
    %c0_60 = arith.constant 0 : index
    %99 = vector.load %arg6[%c20, %c0_60] : memref<25x512xf32, #tpu.memory_space<vmem>>, vector<1x512xf32>
    %100 = arith.mulf %98, %99 : vector<1x512xf32>
    %101 = arith.truncf %100 : vector<1x512xf32> to vector<1x512xbf16>
    %c20_61 = arith.constant 20 : index
    %c0_62 = arith.constant 0 : index
    %102 = vector.load %arg9[%c20_61, %c0_62] : memref<400x512xbf16, #tpu.memory_space<vmem>>, vector<1x512xbf16>
    tpu.vector_store %arg9[%c20_61, %c0_62], %101 {strides = array<i32>} : memref<400x512xbf16, #tpu.memory_space<vmem>>, vector<1x512xbf16>,
    %c481_i32 = arith.constant 481 : i32
    %103 = tpu.dynamic_rotate %0 by %c481_i32 dim 1 : vector<1x512xf32>, i32 -> vector<1x512xf32>
    %c21 = arith.constant 21 : index
    %c0_63 = arith.constant 0 : index
    %104 = vector.load %arg6[%c21, %c0_63] : memref<25x512xf32, #tpu.memory_space<vmem>>, vector<1x512xf32>
    %105 = arith.mulf %103, %104 : vector<1x512xf32>
    %106 = arith.truncf %105 : vector<1x512xf32> to vector<1x512xbf16>
    %c21_64 = arith.constant 21 : index
    %c0_65 = arith.constant 0 : index
    %107 = vector.load %arg9[%c21_64, %c0_65] : memref<400x512xbf16, #tpu.memory_space<vmem>>, vector<1x512xbf16>
    tpu.vector_store %arg9[%c21_64, %c0_65], %106 {strides = array<i32>} : memref<400x512xbf16, #tpu.memory_space<vmem>>, vector<1x512xbf16>,
    %c480_i32 = arith.constant 480 : i32
    %108 = tpu.dynamic_rotate %0 by %c480_i32 dim 1 : vector<1x512xf32>, i32 -> vector<1x512xf32>
    %c22 = arith.constant 22 : index
    %c0_66 = arith.constant 0 : index
    %109 = vector.load %arg6[%c22, %c0_66] : memref<25x512xf32, #tpu.memory_space<vmem>>, vector<1x512xf32>
    %110 = arith.mulf %108, %109 : vector<1x512xf32>
    %111 = arith.truncf %110 : vector<1x512xf32> to vector<1x512xbf16>
    %c22_67 = arith.constant 22 : index
    %c0_68 = arith.constant 0 : index
    %112 = vector.load %arg9[%c22_67, %c0_68] : memref<400x512xbf16, #tpu.memory_space<vmem>>, vector<1x512xbf16>
    tpu.vector_store %arg9[%c22_67, %c0_68], %111 {strides = array<i32>} : memref<400x512xbf16, #tpu.memory_space<vmem>>, vector<1x512xbf16>,
    %c479_i32 = arith.constant 479 : i32
    %113 = tpu.dynamic_rotate %0 by %c479_i32 dim 1 : vector<1x512xf32>, i32 -> vector<1x512xf32>
    %c23 = arith.constant 23 : index
    %c0_69 = arith.constant 0 : index
    %114 = vector.load %arg6[%c23, %c0_69] : memref<25x512xf32, #tpu.memory_space<vmem>>, vector<1x512xf32>
    %115 = arith.mulf %113, %114 : vector<1x512xf32>
    %116 = arith.truncf %115 : vector<1x512xf32> to vector<1x512xbf16>
    %c23_70 = arith.constant 23 : index
    %c0_71 = arith.constant 0 : index
    %117 = vector.load %arg9[%c23_70, %c0_71] : memref<400x512xbf16, #tpu.memory_space<vmem>>, vector<1x512xbf16>
    tpu.vector_store %arg9[%c23_70, %c0_71], %116 {strides = array<i32>} : memref<400x512xbf16, #tpu.memory_space<vmem>>, vector<1x512xbf16>,
    %c478_i32 = arith.constant 478 : i32
    %118 = tpu.dynamic_rotate %0 by %c478_i32 dim 1 : vector<1x512xf32>, i32 -> vector<1x512xf32>
    %c24 = arith.constant 24 : index
    %c0_72 = arith.constant 0 : index
    %119 = vector.load %arg6[%c24, %c0_72] : memref<25x512xf32, #tpu.memory_space<vmem>>, vector<1x512xf32>
    %120 = arith.mulf %118, %119 : vector<1x512xf32>
    %121 = arith.truncf %120 : vector<1x512xf32> to vector<1x512xbf16>
    %c24_73 = arith.constant 24 : index
    %c0_74 = arith.constant 0 : index
    %122 = vector.load %arg9[%c24_73, %c0_74] : memref<400x512xbf16, #tpu.memory_space<vmem>>, vector<1x512xbf16>
    tpu.vector_store %arg9[%c24_73, %c0_74], %121 {strides = array<i32>} : memref<400x512xbf16, #tpu.memory_space<vmem>>, vector<1x512xbf16>,
    %c0_75 = arith.constant 0 : index
    %c0_76 = arith.constant 0 : index
    %123 = vector.load %arg1[%c0_75, %c0_76] : memref<4x25xbf16, #tpu.memory_space<vmem>>, vector<4x25xbf16>
    %c0_77 = arith.constant 0 : index
    %c0_78 = arith.constant 0 : index
    %124 = vector.load %arg9[%c0_77, %c0_78] : memref<400x512xbf16, #tpu.memory_space<vmem>>, vector<25x512xbf16>
    %cst = arith.constant dense<0.000000e+00> : vector<4x512xf32>
    %125 = tpu.matmul %123, %124, %cst {dimension_numbers = #tpu.dot_dimension_numbers<[1], [0], [0], [1], [0, 0, 1, 1], [], []>} : vector<4x25xbf16>, vector<25x512xbf16>, vector<4x512xf32> -> vector<4x512xf32>
    %cst_79 = arith.constant dense<0.000000e+00> : vector<4xf32>
    %126 = vector.multi_reduction <add>, %125, %cst_79 [1] : vector<4x512xf32> to vector<4xf32>
    %127 = vector.shape_cast %126 : vector<4xf32> to vector<4x1xf32>
    %cst_80 = arith.constant 5.120000e+02 : f32
    %128 = vector.broadcast %cst_80 : f32 to vector<4x1xf32>
    %129 = arith.divf %127, %128 : vector<4x1xf32>
    %130 = vector.broadcast %129 : vector<4x1xf32> to vector<4x512xf32>
    %131 = arith.subf %125, %130 : vector<4x512xf32>
    %132 = arith.mulf %131, %131 : vector<4x512xf32>
    %cst_81 = arith.constant dense<0.000000e+00> : vector<4xf32>
    %133 = vector.multi_reduction <add>, %132, %cst_81 [1] : vector<4x512xf32> to vector<4xf32>
    %134 = vector.shape_cast %133 : vector<4xf32> to vector<4x1xf32>
    %cst_82 = arith.constant 5.120000e+02 : f32
    %135 = vector.broadcast %cst_82 : f32 to vector<4x1xf32>
    %136 = arith.divf %134, %135 : vector<4x1xf32>
    %c0_83 = arith.constant 0 : index
    %c0_84 = arith.constant 0 : index
    %137 = vector.load %arg5[%c0_83, %c0_84] : memref<50x1xf32, #tpu.memory_space<vmem>>, vector<4x1xf32>
    %c4_85 = arith.constant 4 : index
    %c0_86 = arith.constant 0 : index
    %138 = vector.load %arg5[%c4_85, %c0_86] : memref<50x1xf32, #tpu.memory_space<vmem>>, vector<4x1xf32>
    %cst_87 = arith.constant 9.99999974E-6 : f32
    %139 = vector.broadcast %cst_87 : f32 to vector<4x1xf32>
    %140 = arith.addf %136, %139 : vector<4x1xf32>
    %141 = math.rsqrt %140 : vector<4x1xf32>
    %142 = arith.mulf %141, %137 : vector<4x1xf32>
    %143 = arith.mulf %129, %142 : vector<4x1xf32>
    %144 = arith.subf %138, %143 : vector<4x1xf32>
    %145 = vector.broadcast %142 : vector<4x1xf32> to vector<4x512xf32>
    %146 = arith.mulf %125, %145 : vector<4x512xf32>
    %147 = vector.broadcast %144 : vector<4x1xf32> to vector<4x512xf32>
    %148 = arith.addf %146, %147 : vector<4x512xf32>
    %cst_88 = arith.constant 0.000000e+00 : f32
    %149 = vector.broadcast %cst_88 : f32 to vector<4x512xf32>
    %150 = arith.maximumf %148, %149 : vector<4x512xf32>
    %c34_i32_89 = arith.constant 34 : i32
    %151 = tpu.dynamic_rotate %150 by %c34_i32_89 dim 1 : vector<4x512xf32>, i32 -> vector<4x512xf32>
    %c0_90 = arith.constant 0 : index
    %c0_91 = arith.constant 0 : index
    %152 = vector.load %arg6[%c0_90, %c0_91] : memref<25x512xf32, #tpu.memory_space<vmem>>, vector<1x512xf32>
    %153 = vector.broadcast %152 : vector<1x512xf32> to vector<4x512xf32>
    %154 = arith.mulf %151, %153 : vector<4x512xf32>
    %155 = arith.truncf %154 : vector<4x512xf32> to vector<4x512xbf16>
    %c0_92 = arith.constant 0 : index
    %c0_93 = arith.constant 0 : index
    %156 = vector.load %arg9[%c0_92, %c0_93] : memref<400x512xbf16, #tpu.memory_space<vmem>>, vector<4x512xbf16>
    tpu.vector_store %arg9[%c0_92, %c0_93], %155 {strides = array<i32>} : memref<400x512xbf16, #tpu.memory_space<vmem>>, vector<4x512xbf16>,
    %c33_i32_94 = arith.constant 33 : i32
    %157 = tpu.dynamic_rotate %150 by %c33_i32_94 dim 1 : vector<4x512xf32>, i32 -> vector<4x512xf32>
    %c1_95 = arith.constant 1 : index
    %c0_96 = arith.constant 0 : index
    %158 = vector.load %arg6[%c1_95, %c0_96] : memref<25x512xf32, #tpu.memory_space<vmem>>, vector<1x512xf32>
    %159 = vector.broadcast %158 : vector<1x512xf32> to vector<4x512xf32>
    %160 = arith.mulf %157, %159 : vector<4x512xf32>
    %161 = arith.truncf %160 : vector<4x512xf32> to vector<4x512xbf16>
    %c4_97 = arith.constant 4 : index
    %c0_98 = arith.constant 0 : index
    %162 = vector.load %arg9[%c4_97, %c0_98] : memref<400x512xbf16, #tpu.memory_space<vmem>>, vector<4x512xbf16>
    tpu.vector_store %arg9[%c4_97, %c0_98], %161 {strides = array<i32>} : memref<400x512xbf16, #tpu.memory_space<vmem>>, vector<4x512xbf16>,
    %c32_i32_99 = arith.constant 32 : i32
    %163 = tpu.dynamic_rotate %150 by %c32_i32_99 dim 1 : vector<4x512xf32>, i32 -> vector<4x512xf32>
    %c2_100 = arith.constant 2 : index
    %c0_101 = arith.constant 0 : index
    %164 = vector.load %arg6[%c2_100, %c0_101] : memref<25x512xf32, #tpu.memory_space<vmem>>, vector<1x512xf32>
    %165 = vector.broadcast %164 : vector<1x512xf32> to vector<4x512xf32>
    %166 = arith.mulf %163, %165 : vector<4x512xf32>
    %167 = arith.truncf %166 : vector<4x512xf32> to vector<4x512xbf16>
    %c8_102 = arith.constant 8 : index
    %c0_103 = arith.constant 0 : index
    %168 = vector.load %arg9[%c8_102, %c0_103] : memref<400x512xbf16, #tpu.memory_space<vmem>>, vector<4x512xbf16>
    tpu.vector_store %arg9[%c8_102, %c0_103], %167 {strides = array<i32>} : memref<400x512xbf16, #tpu.memory_space<vmem>>, vector<4x512xbf16>,
    %c31_i32_104 = arith.constant 31 : i32
    %169 = tpu.dynamic_rotate %150 by %c31_i32_104 dim 1 : vector<4x512xf32>, i32 -> vector<4x512xf32>
    %c3_105 = arith.constant 3 : index
    %c0_106 = arith.constant 0 : index
    %170 = vector.load %arg6[%c3_105, %c0_106] : memref<25x512xf32, #tpu.memory_space<vmem>>, vector<1x512xf32>
    %171 = vector.broadcast %170 : vector<1x512xf32> to vector<4x512xf32>
    %172 = arith.mulf %169, %171 : vector<4x512xf32>
    %173 = arith.truncf %172 : vector<4x512xf32> to vector<4x512xbf16>
    %c12_107 = arith.constant 12 : index
    %c0_108 = arith.constant 0 : index
    %174 = vector.load %arg9[%c12_107, %c0_108] : memref<400x512xbf16, #tpu.memory_space<vmem>>, vector<4x512xbf16>
    tpu.vector_store %arg9[%c12_107, %c0_108], %173 {strides = array<i32>} : memref<400x512xbf16, #tpu.memory_space<vmem>>, vector<4x512xbf16>,
    %c30_i32_109 = arith.constant 30 : i32
    %175 = tpu.dynamic_rotate %150 by %c30_i32_109 dim 1 : vector<4x512xf32>, i32 -> vector<4x512xf32>
    %c4_110 = arith.constant 4 : index
    %c0_111 = arith.constant 0 : index
    %176 = vector.load %arg6[%c4_110, %c0_111] : memref<25x512xf32, #tpu.memory_space<vmem>>, vector<1x512xf32>
    %177 = vector.broadcast %176 : vector<1x512xf32> to vector<4x512xf32>
    %178 = arith.mulf %175, %177 : vector<4x512xf32>
    %179 = arith.truncf %178 : vector<4x512xf32> to vector<4x512xbf16>
    %c16_112 = arith.constant 16 : index
    %c0_113 = arith.constant 0 : index
    %180 = vector.load %arg9[%c16_112, %c0_113] : memref<400x512xbf16, #tpu.memory_space<vmem>>, vector<4x512xbf16>
    tpu.vector_store %arg9[%c16_112, %c0_113], %179 {strides = array<i32>} : memref<400x512xbf16, #tpu.memory_space<vmem>>, vector<4x512xbf16>,
    %c18_i32_114 = arith.constant 18 : i32
    %181 = tpu.dynamic_rotate %150 by %c18_i32_114 dim 1 : vector<4x512xf32>, i32 -> vector<4x512xf32>
    %c5_115 = arith.constant 5 : index
    %c0_116 = arith.constant 0 : index
    %182 = vector.load %arg6[%c5_115, %c0_116] : memref<25x512xf32, #tpu.memory_space<vmem>>, vector<1x512xf32>
    %183 = vector.broadcast %182 : vector<1x512xf32> to vector<4x512xf32>
    %184 = arith.mulf %181, %183 : vector<4x512xf32>
    %185 = arith.truncf %184 : vector<4x512xf32> to vector<4x512xbf16>
    %c20_117 = arith.constant 20 : index
    %c0_118 = arith.constant 0 : index
    %186 = vector.load %arg9[%c20_117, %c0_118] : memref<400x512xbf16, #tpu.memory_space<vmem>>, vector<4x512xbf16>
    tpu.vector_store %arg9[%c20_117, %c0_118], %185 {strides = array<i32>} : memref<400x512xbf16, #tpu.memory_space<vmem>>, vector<4x512xbf16>,
    %c17_i32_119 = arith.constant 17 : i32
    %187 = tpu.dynamic_rotate %150 by %c17_i32_119 dim 1 : vector<4x512xf32>, i32 -> vector<4x512xf32>
    %c6_120 = arith.constant 6 : index
    %c0_121 = arith.constant 0 : index
    %188 = vector.load %arg6[%c6_120, %c0_121] : memref<25x512xf32, #tpu.memory_space<vmem>>, vector<1x512xf32>
    %189 = vector.broadcast %188 : vector<1x512xf32> to vector<4x512xf32>
    %190 = arith.mulf %187, %189 : vector<4x512xf32>
    %191 = arith.truncf %190 : vector<4x512xf32> to vector<4x512xbf16>
    %c24_122 = arith.constant 24 : index
    %c0_123 = arith.constant 0 : index
    %192 = vector.load %arg9[%c24_122, %c0_123] : memref<400x512xbf16, #tpu.memory_space<vmem>>, vector<4x512xbf16>
    tpu.vector_store %arg9[%c24_122, %c0_123], %191 {strides = array<i32>} : memref<400x512xbf16, #tpu.memory_space<vmem>>, vector<4x512xbf16>,
    %c16_i32_124 = arith.constant 16 : i32
    %193 = tpu.dynamic_rotate %150 by %c16_i32_124 dim 1 : vector<4x512xf32>, i32 -> vector<4x512xf32>
    %c7_125 = arith.constant 7 : index
    %c0_126 = arith.constant 0 : index
    %194 = vector.load %arg6[%c7_125, %c0_126] : memref<25x512xf32, #tpu.memory_space<vmem>>, vector<1x512xf32>
    %195 = vector.broadcast %194 : vector<1x512xf32> to vector<4x512xf32>
    %196 = arith.mulf %193, %195 : vector<4x512xf32>
    %197 = arith.truncf %196 : vector<4x512xf32> to vector<4x512xbf16>
    %c28 = arith.constant 28 : index
    %c0_127 = arith.constant 0 : index
    %198 = vector.load %arg9[%c28, %c0_127] : memref<400x512xbf16, #tpu.memory_space<vmem>>, vector<4x512xbf16>
    tpu.vector_store %arg9[%c28, %c0_127], %197 {strides = array<i32>} : memref<400x512xbf16, #tpu.memory_space<vmem>>, vector<4x512xbf16>,
    %c15_i32_128 = arith.constant 15 : i32
    %199 = tpu.dynamic_rotate %150 by %c15_i32_128 dim 1 : vector<4x512xf32>, i32 -> vector<4x512xf32>
    %c8_129 = arith.constant 8 : index
    %c0_130 = arith.constant 0 : index
    %200 = vector.load %arg6[%c8_129, %c0_130] : memref<25x512xf32, #tpu.memory_space<vmem>>, vector<1x512xf32>
    %201 = vector.broadcast %200 : vector<1x512xf32> to vector<4x512xf32>
    %202 = arith.mulf %199, %201 : vector<4x512xf32>
    %203 = arith.truncf %202 : vector<4x512xf32> to vector<4x512xbf16>
    %c32 = arith.constant 32 : index
    %c0_131 = arith.constant 0 : index
    %204 = vector.load %arg9[%c32, %c0_131] : memref<400x512xbf16, #tpu.memory_space<vmem>>, vector<4x512xbf16>
    tpu.vector_store %arg9[%c32, %c0_131], %203 {strides = array<i32>} : memref<400x512xbf16, #tpu.memory_space<vmem>>, vector<4x512xbf16>,
    %c14_i32_132 = arith.constant 14 : i32
    %205 = tpu.dynamic_rotate %150 by %c14_i32_132 dim 1 : vector<4x512xf32>, i32 -> vector<4x512xf32>
    %c9_133 = arith.constant 9 : index
    %c0_134 = arith.constant 0 : index
    %206 = vector.load %arg6[%c9_133, %c0_134] : memref<25x512xf32, #tpu.memory_space<vmem>>, vector<1x512xf32>
    %207 = vector.broadcast %206 : vector<1x512xf32> to vector<4x512xf32>
    %208 = arith.mulf %205, %207 : vector<4x512xf32>
    %209 = arith.truncf %208 : vector<4x512xf32> to vector<4x512xbf16>
    %c36 = arith.constant 36 : index
    %c0_135 = arith.constant 0 : index
    %210 = vector.load %arg9[%c36, %c0_135] : memref<400x512xbf16, #tpu.memory_space<vmem>>, vector<4x512xbf16>
    tpu.vector_store %arg9[%c36, %c0_135], %209 {strides = array<i32>} : memref<400x512xbf16, #tpu.memory_space<vmem>>, vector<4x512xbf16>,
    %c2_i32_136 = arith.constant 2 : i32
    %211 = tpu.dynamic_rotate %150 by %c2_i32_136 dim 1 : vector<4x512xf32>, i32 -> vector<4x512xf32>
    %c10_137 = arith.constant 10 : index
    %c0_138 = arith.constant 0 : index
    %212 = vector.load %arg6[%c10_137, %c0_138] : memref<25x512xf32, #tpu.memory_space<vmem>>, vector<1x512xf32>
    %213 = vector.broadcast %212 : vector<1x512xf32> to vector<4x512xf32>
    %214 = arith.mulf %211, %213 : vector<4x512xf32>
    %215 = arith.truncf %214 : vector<4x512xf32> to vector<4x512xbf16>
    %c40 = arith.constant 40 : index
    %c0_139 = arith.constant 0 : index
    %216 = vector.load %arg9[%c40, %c0_139] : memref<400x512xbf16, #tpu.memory_space<vmem>>, vector<4x512xbf16>
    tpu.vector_store %arg9[%c40, %c0_139], %215 {strides = array<i32>} : memref<400x512xbf16, #tpu.memory_space<vmem>>, vector<4x512xbf16>,
    %c1_i32_140 = arith.constant 1 : i32
    %217 = tpu.dynamic_rotate %150 by %c1_i32_140 dim 1 : vector<4x512xf32>, i32 -> vector<4x512xf32>
    %c11_141 = arith.constant 11 : index
    %c0_142 = arith.constant 0 : index
    %218 = vector.load %arg6[%c11_141, %c0_142] : memref<25x512xf32, #tpu.memory_space<vmem>>, vector<1x512xf32>
    %219 = vector.broadcast %218 : vector<1x512xf32> to vector<4x512xf32>
    %220 = arith.mulf %217, %219 : vector<4x512xf32>
    %221 = arith.truncf %220 : vector<4x512xf32> to vector<4x512xbf16>
    %c44 = arith.constant 44 : index
    %c0_143 = arith.constant 0 : index
    %222 = vector.load %arg9[%c44, %c0_143] : memref<400x512xbf16, #tpu.memory_space<vmem>>, vector<4x512xbf16>
    tpu.vector_store %arg9[%c44, %c0_143], %221 {strides = array<i32>} : memref<400x512xbf16, #tpu.memory_space<vmem>>, vector<4x512xbf16>,
    %223 = arith.truncf %150 : vector<4x512xf32> to vector<4x512xbf16>
    %c48 = arith.constant 48 : index
    %c0_144 = arith.constant 0 : index
    %224 = vector.load %arg9[%c48, %c0_144] : memref<400x512xbf16, #tpu.memory_space<vmem>>, vector<4x512xbf16>
    tpu.vector_store %arg9[%c48, %c0_144], %223 {strides = array<i32>} : memref<400x512xbf16, #tpu.memory_space<vmem>>, vector<4x512xbf16>,
    %c511_i32_145 = arith.constant 511 : i32
    %225 = tpu.dynamic_rotate %150 by %c511_i32_145 dim 1 : vector<4x512xf32>, i32 -> vector<4x512xf32>
    %c13_146 = arith.constant 13 : index
    %c0_147 = arith.constant 0 : index
    %226 = vector.load %arg6[%c13_146, %c0_147] : memref<25x512xf32, #tpu.memory_space<vmem>>, vector<1x512xf32>
    %227 = vector.broadcast %226 : vector<1x512xf32> to vector<4x512xf32>
    %228 = arith.mulf %225, %227 : vector<4x512xf32>
    %229 = arith.truncf %228 : vector<4x512xf32> to vector<4x512xbf16>
    %c52 = arith.constant 52 : index
    %c0_148 = arith.constant 0 : index
    %230 = vector.load %arg9[%c52, %c0_148] : memref<400x512xbf16, #tpu.memory_space<vmem>>, vector<4x512xbf16>
    tpu.vector_store %arg9[%c52, %c0_148], %229 {strides = array<i32>} : memref<400x512xbf16, #tpu.memory_space<vmem>>, vector<4x512xbf16>,
    %c510_i32_149 = arith.constant 510 : i32
    %231 = tpu.dynamic_rotate %150 by %c510_i32_149 dim 1 : vector<4x512xf32>, i32 -> vector<4x512xf32>
    %c14_150 = arith.constant 14 : index
    %c0_151 = arith.constant 0 : index
    %232 = vector.load %arg6[%c14_150, %c0_151] : memref<25x512xf32, #tpu.memory_space<vmem>>, vector<1x512xf32>
    %233 = vector.broadcast %232 : vector<1x512xf32> to vector<4x512xf32>
    %234 = arith.mulf %231, %233 : vector<4x512xf32>
    %235 = arith.truncf %234 : vector<4x512xf32> to vector<4x512xbf16>
    %c56 = arith.constant 56 : index
    %c0_152 = arith.constant 0 : index
    %236 = vector.load %arg9[%c56, %c0_152] : memref<400x512xbf16, #tpu.memory_space<vmem>>, vector<4x512xbf16>
    tpu.vector_store %arg9[%c56, %c0_152], %235 {strides = array<i32>} : memref<400x512xbf16, #tpu.memory_space<vmem>>, vector<4x512xbf16>,
    %c498_i32_153 = arith.constant 498 : i32
    %237 = tpu.dynamic_rotate %150 by %c498_i32_153 dim 1 : vector<4x512xf32>, i32 -> vector<4x512xf32>
    %c15_154 = arith.constant 15 : index
    %c0_155 = arith.constant 0 : index
    %238 = vector.load %arg6[%c15_154, %c0_155] : memref<25x512xf32, #tpu.memory_space<vmem>>, vector<1x512xf32>
    %239 = vector.broadcast %238 : vector<1x512xf32> to vector<4x512xf32>
    %240 = arith.mulf %237, %239 : vector<4x512xf32>
    %241 = arith.truncf %240 : vector<4x512xf32> to vector<4x512xbf16>
    %c60 = arith.constant 60 : index
    %c0_156 = arith.constant 0 : index
    %242 = vector.load %arg9[%c60, %c0_156] : memref<400x512xbf16, #tpu.memory_space<vmem>>, vector<4x512xbf16>
    tpu.vector_store %arg9[%c60, %c0_156], %241 {strides = array<i32>} : memref<400x512xbf16, #tpu.memory_space<vmem>>, vector<4x512xbf16>,
    %c497_i32_157 = arith.constant 497 : i32
    %243 = tpu.dynamic_rotate %150 by %c497_i32_157 dim 1 : vector<4x512xf32>, i32 -> vector<4x512xf32>
    %c16_158 = arith.constant 16 : index
    %c0_159 = arith.constant 0 : index
    %244 = vector.load %arg6[%c16_158, %c0_159] : memref<25x512xf32, #tpu.memory_space<vmem>>, vector<1x512xf32>
    %245 = vector.broadcast %244 : vector<1x512xf32> to vector<4x512xf32>
    %246 = arith.mulf %243, %245 : vector<4x512xf32>
    %247 = arith.truncf %246 : vector<4x512xf32> to vector<4x512xbf16>
    %c64 = arith.constant 64 : index
    %c0_160 = arith.constant 0 : index
    %248 = vector.load %arg9[%c64, %c0_160] : memref<400x512xbf16, #tpu.memory_space<vmem>>, vector<4x512xbf16>
    tpu.vector_store %arg9[%c64, %c0_160], %247 {strides = array<i32>} : memref<400x512xbf16, #tpu.memory_space<vmem>>, vector<4x512xbf16>,
    %c496_i32_161 = arith.constant 496 : i32
    %249 = tpu.dynamic_rotate %150 by %c496_i32_161 dim 1 : vector<4x512xf32>, i32 -> vector<4x512xf32>
    %c17_162 = arith.constant 17 : index
    %c0_163 = arith.constant 0 : index
    %250 = vector.load %arg6[%c17_162, %c0_163] : memref<25x512xf32, #tpu.memory_space<vmem>>, vector<1x512xf32>
    %251 = vector.broadcast %250 : vector<1x512xf32> to vector<4x512xf32>
    %252 = arith.mulf %249, %251 : vector<4x512xf32>
    %253 = arith.truncf %252 : vector<4x512xf32> to vector<4x512xbf16>
    %c68 = arith.constant 68 : index
    %c0_164 = arith.constant 0 : index
    %254 = vector.load %arg9[%c68, %c0_164] : memref<400x512xbf16, #tpu.memory_space<vmem>>, vector<4x512xbf16>
    tpu.vector_store %arg9[%c68, %c0_164], %253 {strides = array<i32>} : memref<400x512xbf16, #tpu.memory_space<vmem>>, vector<4x512xbf16>,
    %c495_i32_165 = arith.constant 495 : i32
    %255 = tpu.dynamic_rotate %150 by %c495_i32_165 dim 1 : vector<4x512xf32>, i32 -> vector<4x512xf32>
    %c18_166 = arith.constant 18 : index
    %c0_167 = arith.constant 0 : index
    %256 = vector.load %arg6[%c18_166, %c0_167] : memref<25x512xf32, #tpu.memory_space<vmem>>, vector<1x512xf32>
    %257 = vector.broadcast %256 : vector<1x512xf32> to vector<4x512xf32>
    %258 = arith.mulf %255, %257 : vector<4x512xf32>
    %259 = arith.truncf %258 : vector<4x512xf32> to vector<4x512xbf16>
    %c72 = arith.constant 72 : index
    %c0_168 = arith.constant 0 : index
    %260 = vector.load %arg9[%c72, %c0_168] : memref<400x512xbf16, #tpu.memory_space<vmem>>, vector<4x512xbf16>
    tpu.vector_store %arg9[%c72, %c0_168], %259 {strides = array<i32>} : memref<400x512xbf16, #tpu.memory_space<vmem>>, vector<4x512xbf16>,
    %c494_i32_169 = arith.constant 494 : i32
    %261 = tpu.dynamic_rotate %150 by %c494_i32_169 dim 1 : vector<4x512xf32>, i32 -> vector<4x512xf32>
    %c19_170 = arith.constant 19 : index
    %c0_171 = arith.constant 0 : index
    %262 = vector.load %arg6[%c19_170, %c0_171] : memref<25x512xf32, #tpu.memory_space<vmem>>, vector<1x512xf32>
    %263 = vector.broadcast %262 : vector<1x512xf32> to vector<4x512xf32>
    %264 = arith.mulf %261, %263 : vector<4x512xf32>
    %265 = arith.truncf %264 : vector<4x512xf32> to vector<4x512xbf16>
    %c76 = arith.constant 76 : index
    %c0_172 = arith.constant 0 : index
    %266 = vector.load %arg9[%c76, %c0_172] : memref<400x512xbf16, #tpu.memory_space<vmem>>, vector<4x512xbf16>
    tpu.vector_store %arg9[%c76, %c0_172], %265 {strides = array<i32>} : memref<400x512xbf16, #tpu.memory_space<vmem>>, vector<4x512xbf16>,
    %c482_i32_173 = arith.constant 482 : i32
    %267 = tpu.dynamic_rotate %150 by %c482_i32_173 dim 1 : vector<4x512xf32>, i32 -> vector<4x512xf32>
    %c20_174 = arith.constant 20 : index
    %c0_175 = arith.constant 0 : index
    %268 = vector.load %arg6[%c20_174, %c0_175] : memref<25x512xf32, #tpu.memory_space<vmem>>, vector<1x512xf32>
    %269 = vector.broadcast %268 : vector<1x512xf32> to vector<4x512xf32>
    %270 = arith.mulf %267, %269 : vector<4x512xf32>
    %271 = arith.truncf %270 : vector<4x512xf32> to vector<4x512xbf16>
    %c80 = arith.constant 80 : index
    %c0_176 = arith.constant 0 : index
    %272 = vector.load %arg9[%c80, %c0_176] : memref<400x512xbf16, #tpu.memory_space<vmem>>, vector<4x512xbf16>
    tpu.vector_store %arg9[%c80, %c0_176], %271 {strides = array<i32>} : memref<400x512xbf16, #tpu.memory_space<vmem>>, vector<4x512xbf16>,
    %c481_i32_177 = arith.constant 481 : i32
    %273 = tpu.dynamic_rotate %150 by %c481_i32_177 dim 1 : vector<4x512xf32>, i32 -> vector<4x512xf32>
    %c21_178 = arith.constant 21 : index
    %c0_179 = arith.constant 0 : index
    %274 = vector.load %arg6[%c21_178, %c0_179] : memref<25x512xf32, #tpu.memory_space<vmem>>, vector<1x512xf32>
    %275 = vector.broadcast %274 : vector<1x512xf32> to vector<4x512xf32>
    %276 = arith.mulf %273, %275 : vector<4x512xf32>
    %277 = arith.truncf %276 : vector<4x512xf32> to vector<4x512xbf16>
    %c84 = arith.constant 84 : index
    %c0_180 = arith.constant 0 : index
    %278 = vector.load %arg9[%c84, %c0_180] : memref<400x512xbf16, #tpu.memory_space<vmem>>, vector<4x512xbf16>
    tpu.vector_store %arg9[%c84, %c0_180], %277 {strides = array<i32>} : memref<400x512xbf16, #tpu.memory_space<vmem>>, vector<4x512xbf16>,
    %c480_i32_181 = arith.constant 480 : i32
    %279 = tpu.dynamic_rotate %150 by %c480_i32_181 dim 1 : vector<4x512xf32>, i32 -> vector<4x512xf32>
    %c22_182 = arith.constant 22 : index
    %c0_183 = arith.constant 0 : index
    %280 = vector.load %arg6[%c22_182, %c0_183] : memref<25x512xf32, #tpu.memory_space<vmem>>, vector<1x512xf32>
    %281 = vector.broadcast %280 : vector<1x512xf32> to vector<4x512xf32>
    %282 = arith.mulf %279, %281 : vector<4x512xf32>
    %283 = arith.truncf %282 : vector<4x512xf32> to vector<4x512xbf16>
    %c88 = arith.constant 88 : index
    %c0_184 = arith.constant 0 : index
    %284 = vector.load %arg9[%c88, %c0_184] : memref<400x512xbf16, #tpu.memory_space<vmem>>, vector<4x512xbf16>
    tpu.vector_store %arg9[%c88, %c0_184], %283 {strides = array<i32>} : memref<400x512xbf16, #tpu.memory_space<vmem>>, vector<4x512xbf16>,
    %c479_i32_185 = arith.constant 479 : i32
    %285 = tpu.dynamic_rotate %150 by %c479_i32_185 dim 1 : vector<4x512xf32>, i32 -> vector<4x512xf32>
    %c23_186 = arith.constant 23 : index
    %c0_187 = arith.constant 0 : index
    %286 = vector.load %arg6[%c23_186, %c0_187] : memref<25x512xf32, #tpu.memory_space<vmem>>, vector<1x512xf32>
    %287 = vector.broadcast %286 : vector<1x512xf32> to vector<4x512xf32>
    %288 = arith.mulf %285, %287 : vector<4x512xf32>
    %289 = arith.truncf %288 : vector<4x512xf32> to vector<4x512xbf16>
    %c92 = arith.constant 92 : index
    %c0_188 = arith.constant 0 : index
    %290 = vector.load %arg9[%c92, %c0_188] : memref<400x512xbf16, #tpu.memory_space<vmem>>, vector<4x512xbf16>
    tpu.vector_store %arg9[%c92, %c0_188], %289 {strides = array<i32>} : memref<400x512xbf16, #tpu.memory_space<vmem>>, vector<4x512xbf16>,
    %c478_i32_189 = arith.constant 478 : i32
    %291 = tpu.dynamic_rotate %150 by %c478_i32_189 dim 1 : vector<4x512xf32>, i32 -> vector<4x512xf32>
    %c24_190 = arith.constant 24 : index
    %c0_191 = arith.constant 0 : index
    %292 = vector.load %arg6[%c24_190, %c0_191] : memref<25x512xf32, #tpu.memory_space<vmem>>, vector<1x512xf32>
    %293 = vector.broadcast %292 : vector<1x512xf32> to vector<4x512xf32>
    %294 = arith.mulf %291, %293 : vector<4x512xf32>
    %295 = arith.truncf %294 : vector<4x512xf32> to vector<4x512xbf16>
    %c96 = arith.constant 96 : index
    %c0_192 = arith.constant 0 : index
    %296 = vector.load %arg9[%c96, %c0_192] : memref<400x512xbf16, #tpu.memory_space<vmem>>, vector<4x512xbf16>
    tpu.vector_store %arg9[%c96, %c0_192], %295 {strides = array<i32>} : memref<400x512xbf16, #tpu.memory_space<vmem>>, vector<4x512xbf16>,
    %c0_193 = arith.constant 0 : index
    %c0_194 = arith.constant 0 : index
    %297 = vector.load %arg2[%c0_193, %c0_194] : memref<16x100xbf16, #tpu.memory_space<vmem>>, vector<16x100xbf16>
    %c0_195 = arith.constant 0 : index
    %c0_196 = arith.constant 0 : index
    %298 = vector.load %arg9[%c0_195, %c0_196] : memref<400x512xbf16, #tpu.memory_space<vmem>>, vector<100x512xbf16>
    %cst_197 = arith.constant dense<0.000000e+00> : vector<16x512xf32>
    %299 = tpu.matmul %297, %298, %cst_197 {dimension_numbers = #tpu.dot_dimension_numbers<[1], [0], [0], [1], [0, 0, 1, 1], [], []>} : vector<16x100xbf16>, vector<100x512xbf16>, vector<16x512xf32> -> vector<16x512xf32>
    %cst_198 = arith.constant dense<0.000000e+00> : vector<16xf32>
    %300 = vector.multi_reduction <add>, %299, %cst_198 [1] : vector<16x512xf32> to vector<16xf32>
    %301 = vector.shape_cast %300 : vector<16xf32> to vector<16x1xf32>
    %cst_199 = arith.constant 5.120000e+02 : f32
    %302 = vector.broadcast %cst_199 : f32 to vector<16x1xf32>
    %303 = arith.divf %301, %302 : vector<16x1xf32>
    %304 = vector.broadcast %303 : vector<16x1xf32> to vector<16x512xf32>
    %305 = arith.subf %299, %304 : vector<16x512xf32>
    %306 = arith.mulf %305, %305 : vector<16x512xf32>
    %cst_200 = arith.constant dense<0.000000e+00> : vector<16xf32>
    %307 = vector.multi_reduction <add>, %306, %cst_200 [1] : vector<16x512xf32> to vector<16xf32>
    %308 = vector.shape_cast %307 : vector<16xf32> to vector<16x1xf32>
    %cst_201 = arith.constant 5.120000e+02 : f32
    %309 = vector.broadcast %cst_201 : f32 to vector<16x1xf32>
    %310 = arith.divf %308, %309 : vector<16x1xf32>
    %c8_202 = arith.constant 8 : index
    %c0_203 = arith.constant 0 : index
    %311 = vector.load %arg5[%c8_202, %c0_203] : memref<50x1xf32, #tpu.memory_space<vmem>>, vector<16x1xf32>
    %c24_204 = arith.constant 24 : index
    %c0_205 = arith.constant 0 : index
    %312 = vector.load %arg5[%c24_204, %c0_205] : memref<50x1xf32, #tpu.memory_space<vmem>>, vector<16x1xf32>
    %cst_206 = arith.constant 9.99999974E-6 : f32
    %313 = vector.broadcast %cst_206 : f32 to vector<16x1xf32>
    %314 = arith.addf %310, %313 : vector<16x1xf32>
    %315 = math.rsqrt %314 : vector<16x1xf32>
    %316 = arith.mulf %315, %311 : vector<16x1xf32>
    %317 = arith.mulf %303, %316 : vector<16x1xf32>
    %318 = arith.subf %312, %317 : vector<16x1xf32>
    %319 = vector.broadcast %316 : vector<16x1xf32> to vector<16x512xf32>
    %320 = arith.mulf %299, %319 : vector<16x512xf32>
    %321 = vector.broadcast %318 : vector<16x1xf32> to vector<16x512xf32>
    %322 = arith.addf %320, %321 : vector<16x512xf32>
    %cst_207 = arith.constant 0.000000e+00 : f32
    %323 = vector.broadcast %cst_207 : f32 to vector<16x512xf32>
    %324 = arith.maximumf %322, %323 : vector<16x512xf32>
    %c34_i32_208 = arith.constant 34 : i32
    %325 = tpu.dynamic_rotate %324 by %c34_i32_208 dim 1 : vector<16x512xf32>, i32 -> vector<16x512xf32>
    %c0_209 = arith.constant 0 : index
    %c0_210 = arith.constant 0 : index
    %326 = vector.load %arg6[%c0_209, %c0_210] : memref<25x512xf32, #tpu.memory_space<vmem>>, vector<1x512xf32>
    %327 = vector.broadcast %326 : vector<1x512xf32> to vector<16x512xf32>
    %328 = arith.mulf %325, %327 : vector<16x512xf32>
    %329 = arith.truncf %328 : vector<16x512xf32> to vector<16x512xbf16>
    %c0_211 = arith.constant 0 : index
    %c0_212 = arith.constant 0 : index
    %330 = vector.load %arg9[%c0_211, %c0_212] : memref<400x512xbf16, #tpu.memory_space<vmem>>, vector<16x512xbf16>
    tpu.vector_store %arg9[%c0_211, %c0_212], %329 {strides = array<i32>} : memref<400x512xbf16, #tpu.memory_space<vmem>>, vector<16x512xbf16>,
    %c33_i32_213 = arith.constant 33 : i32
    %331 = tpu.dynamic_rotate %324 by %c33_i32_213 dim 1 : vector<16x512xf32>, i32 -> vector<16x512xf32>
    %c1_214 = arith.constant 1 : index
    %c0_215 = arith.constant 0 : index
    %332 = vector.load %arg6[%c1_214, %c0_215] : memref<25x512xf32, #tpu.memory_space<vmem>>, vector<1x512xf32>
    %333 = vector.broadcast %332 : vector<1x512xf32> to vector<16x512xf32>
    %334 = arith.mulf %331, %333 : vector<16x512xf32>
    %335 = arith.truncf %334 : vector<16x512xf32> to vector<16x512xbf16>
    %c16_216 = arith.constant 16 : index
    %c0_217 = arith.constant 0 : index
    %336 = vector.load %arg9[%c16_216, %c0_217] : memref<400x512xbf16, #tpu.memory_space<vmem>>, vector<16x512xbf16>
    tpu.vector_store %arg9[%c16_216, %c0_217], %335 {strides = array<i32>} : memref<400x512xbf16, #tpu.memory_space<vmem>>, vector<16x512xbf16>,
    %c32_i32_218 = arith.constant 32 : i32
    %337 = tpu.dynamic_rotate %324 by %c32_i32_218 dim 1 : vector<16x512xf32>, i32 -> vector<16x512xf32>
    %c2_219 = arith.constant 2 : index
    %c0_220 = arith.constant 0 : index
    %338 = vector.load %arg6[%c2_219, %c0_220] : memref<25x512xf32, #tpu.memory_space<vmem>>, vector<1x512xf32>
    %339 = vector.broadcast %338 : vector<1x512xf32> to vector<16x512xf32>
    %340 = arith.mulf %337, %339 : vector<16x512xf32>
    %341 = arith.truncf %340 : vector<16x512xf32> to vector<16x512xbf16>
    %c32_221 = arith.constant 32 : index
    %c0_222 = arith.constant 0 : index
    %342 = vector.load %arg9[%c32_221, %c0_222] : memref<400x512xbf16, #tpu.memory_space<vmem>>, vector<16x512xbf16>
    tpu.vector_store %arg9[%c32_221, %c0_222], %341 {strides = array<i32>} : memref<400x512xbf16, #tpu.memory_space<vmem>>, vector<16x512xbf16>,
    %c31_i32_223 = arith.constant 31 : i32
    %343 = tpu.dynamic_rotate %324 by %c31_i32_223 dim 1 : vector<16x512xf32>, i32 -> vector<16x512xf32>
    %c3_224 = arith.constant 3 : index
    %c0_225 = arith.constant 0 : index
    %344 = vector.load %arg6[%c3_224, %c0_225] : memref<25x512xf32, #tpu.memory_space<vmem>>, vector<1x512xf32>
    %345 = vector.broadcast %344 : vector<1x512xf32> to vector<16x512xf32>
    %346 = arith.mulf %343, %345 : vector<16x512xf32>
    %347 = arith.truncf %346 : vector<16x512xf32> to vector<16x512xbf16>
    %c48_226 = arith.constant 48 : index
    %c0_227 = arith.constant 0 : index
    %348 = vector.load %arg9[%c48_226, %c0_227] : memref<400x512xbf16, #tpu.memory_space<vmem>>, vector<16x512xbf16>
    tpu.vector_store %arg9[%c48_226, %c0_227], %347 {strides = array<i32>} : memref<400x512xbf16, #tpu.memory_space<vmem>>, vector<16x512xbf16>,
    %c30_i32_228 = arith.constant 30 : i32
    %349 = tpu.dynamic_rotate %324 by %c30_i32_228 dim 1 : vector<16x512xf32>, i32 -> vector<16x512xf32>
    %c4_229 = arith.constant 4 : index
    %c0_230 = arith.constant 0 : index
    %350 = vector.load %arg6[%c4_229, %c0_230] : memref<25x512xf32, #tpu.memory_space<vmem>>, vector<1x512xf32>
    %351 = vector.broadcast %350 : vector<1x512xf32> to vector<16x512xf32>
    %352 = arith.mulf %349, %351 : vector<16x512xf32>
    %353 = arith.truncf %352 : vector<16x512xf32> to vector<16x512xbf16>
    %c64_231 = arith.constant 64 : index
    %c0_232 = arith.constant 0 : index
    %354 = vector.load %arg9[%c64_231, %c0_232] : memref<400x512xbf16, #tpu.memory_space<vmem>>, vector<16x512xbf16>
    tpu.vector_store %arg9[%c64_231, %c0_232], %353 {strides = array<i32>} : memref<400x512xbf16, #tpu.memory_space<vmem>>, vector<16x512xbf16>,
    %c18_i32_233 = arith.constant 18 : i32
    %355 = tpu.dynamic_rotate %324 by %c18_i32_233 dim 1 : vector<16x512xf32>, i32 -> vector<16x512xf32>
    %c5_234 = arith.constant 5 : index
    %c0_235 = arith.constant 0 : index
    %356 = vector.load %arg6[%c5_234, %c0_235] : memref<25x512xf32, #tpu.memory_space<vmem>>, vector<1x512xf32>
    %357 = vector.broadcast %356 : vector<1x512xf32> to vector<16x512xf32>
    %358 = arith.mulf %355, %357 : vector<16x512xf32>
    %359 = arith.truncf %358 : vector<16x512xf32> to vector<16x512xbf16>
    %c80_236 = arith.constant 80 : index
    %c0_237 = arith.constant 0 : index
    %360 = vector.load %arg9[%c80_236, %c0_237] : memref<400x512xbf16, #tpu.memory_space<vmem>>, vector<16x512xbf16>
    tpu.vector_store %arg9[%c80_236, %c0_237], %359 {strides = array<i32>} : memref<400x512xbf16, #tpu.memory_space<vmem>>, vector<16x512xbf16>,
    %c17_i32_238 = arith.constant 17 : i32
    %361 = tpu.dynamic_rotate %324 by %c17_i32_238 dim 1 : vector<16x512xf32>, i32 -> vector<16x512xf32>
    %c6_239 = arith.constant 6 : index
    %c0_240 = arith.constant 0 : index
    %362 = vector.load %arg6[%c6_239, %c0_240] : memref<25x512xf32, #tpu.memory_space<vmem>>, vector<1x512xf32>
    %363 = vector.broadcast %362 : vector<1x512xf32> to vector<16x512xf32>
    %364 = arith.mulf %361, %363 : vector<16x512xf32>
    %365 = arith.truncf %364 : vector<16x512xf32> to vector<16x512xbf16>
    %c96_241 = arith.constant 96 : index
    %c0_242 = arith.constant 0 : index
    %366 = vector.load %arg9[%c96_241, %c0_242] : memref<400x512xbf16, #tpu.memory_space<vmem>>, vector<16x512xbf16>
    tpu.vector_store %arg9[%c96_241, %c0_242], %365 {strides = array<i32>} : memref<400x512xbf16, #tpu.memory_space<vmem>>, vector<16x512xbf16>,
    %c16_i32_243 = arith.constant 16 : i32
    %367 = tpu.dynamic_rotate %324 by %c16_i32_243 dim 1 : vector<16x512xf32>, i32 -> vector<16x512xf32>
    %c7_244 = arith.constant 7 : index
    %c0_245 = arith.constant 0 : index
    %368 = vector.load %arg6[%c7_244, %c0_245] : memref<25x512xf32, #tpu.memory_space<vmem>>, vector<1x512xf32>
    %369 = vector.broadcast %368 : vector<1x512xf32> to vector<16x512xf32>
    %370 = arith.mulf %367, %369 : vector<16x512xf32>
    %371 = arith.truncf %370 : vector<16x512xf32> to vector<16x512xbf16>
    %c112 = arith.constant 112 : index
    %c0_246 = arith.constant 0 : index
    %372 = vector.load %arg9[%c112, %c0_246] : memref<400x512xbf16, #tpu.memory_space<vmem>>, vector<16x512xbf16>
    tpu.vector_store %arg9[%c112, %c0_246], %371 {strides = array<i32>} : memref<400x512xbf16, #tpu.memory_space<vmem>>, vector<16x512xbf16>,
    %c15_i32_247 = arith.constant 15 : i32
    %373 = tpu.dynamic_rotate %324 by %c15_i32_247 dim 1 : vector<16x512xf32>, i32 -> vector<16x512xf32>
    %c8_248 = arith.constant 8 : index
    %c0_249 = arith.constant 0 : index
    %374 = vector.load %arg6[%c8_248, %c0_249] : memref<25x512xf32, #tpu.memory_space<vmem>>, vector<1x512xf32>
    %375 = vector.broadcast %374 : vector<1x512xf32> to vector<16x512xf32>
    %376 = arith.mulf %373, %375 : vector<16x512xf32>
    %377 = arith.truncf %376 : vector<16x512xf32> to vector<16x512xbf16>
    %c128 = arith.constant 128 : index
    %c0_250 = arith.constant 0 : index
    %378 = vector.load %arg9[%c128, %c0_250] : memref<400x512xbf16, #tpu.memory_space<vmem>>, vector<16x512xbf16>
    tpu.vector_store %arg9[%c128, %c0_250], %377 {strides = array<i32>} : memref<400x512xbf16, #tpu.memory_space<vmem>>, vector<16x512xbf16>,
    %c14_i32_251 = arith.constant 14 : i32
    %379 = tpu.dynamic_rotate %324 by %c14_i32_251 dim 1 : vector<16x512xf32>, i32 -> vector<16x512xf32>
    %c9_252 = arith.constant 9 : index
    %c0_253 = arith.constant 0 : index
    %380 = vector.load %arg6[%c9_252, %c0_253] : memref<25x512xf32, #tpu.memory_space<vmem>>, vector<1x512xf32>
    %381 = vector.broadcast %380 : vector<1x512xf32> to vector<16x512xf32>
    %382 = arith.mulf %379, %381 : vector<16x512xf32>
    %383 = arith.truncf %382 : vector<16x512xf32> to vector<16x512xbf16>
    %c144 = arith.constant 144 : index
    %c0_254 = arith.constant 0 : index
    %384 = vector.load %arg9[%c144, %c0_254] : memref<400x512xbf16, #tpu.memory_space<vmem>>, vector<16x512xbf16>
    tpu.vector_store %arg9[%c144, %c0_254], %383 {strides = array<i32>} : memref<400x512xbf16, #tpu.memory_space<vmem>>, vector<16x512xbf16>,
    %c2_i32_255 = arith.constant 2 : i32
    %385 = tpu.dynamic_rotate %324 by %c2_i32_255 dim 1 : vector<16x512xf32>, i32 -> vector<16x512xf32>
    %c10_256 = arith.constant 10 : index
    %c0_257 = arith.constant 0 : index
    %386 = vector.load %arg6[%c10_256, %c0_257] : memref<25x512xf32, #tpu.memory_space<vmem>>, vector<1x512xf32>
    %387 = vector.broadcast %386 : vector<1x512xf32> to vector<16x512xf32>
    %388 = arith.mulf %385, %387 : vector<16x512xf32>
    %389 = arith.truncf %388 : vector<16x512xf32> to vector<16x512xbf16>
    %c160 = arith.constant 160 : index
    %c0_258 = arith.constant 0 : index
    %390 = vector.load %arg9[%c160, %c0_258] : memref<400x512xbf16, #tpu.memory_space<vmem>>, vector<16x512xbf16>
    tpu.vector_store %arg9[%c160, %c0_258], %389 {strides = array<i32>} : memref<400x512xbf16, #tpu.memory_space<vmem>>, vector<16x512xbf16>,
    %c1_i32_259 = arith.constant 1 : i32
    %391 = tpu.dynamic_rotate %324 by %c1_i32_259 dim 1 : vector<16x512xf32>, i32 -> vector<16x512xf32>
    %c11_260 = arith.constant 11 : index
    %c0_261 = arith.constant 0 : index
    %392 = vector.load %arg6[%c11_260, %c0_261] : memref<25x512xf32, #tpu.memory_space<vmem>>, vector<1x512xf32>
    %393 = vector.broadcast %392 : vector<1x512xf32> to vector<16x512xf32>
    %394 = arith.mulf %391, %393 : vector<16x512xf32>
    %395 = arith.truncf %394 : vector<16x512xf32> to vector<16x512xbf16>
    %c176 = arith.constant 176 : index
    %c0_262 = arith.constant 0 : index
    %396 = vector.load %arg9[%c176, %c0_262] : memref<400x512xbf16, #tpu.memory_space<vmem>>, vector<16x512xbf16>
    tpu.vector_store %arg9[%c176, %c0_262], %395 {strides = array<i32>} : memref<400x512xbf16, #tpu.memory_space<vmem>>, vector<16x512xbf16>,
    %397 = arith.truncf %324 : vector<16x512xf32> to vector<16x512xbf16>
    %c192 = arith.constant 192 : index
    %c0_263 = arith.constant 0 : index
    %398 = vector.load %arg9[%c192, %c0_263] : memref<400x512xbf16, #tpu.memory_space<vmem>>, vector<16x512xbf16>
    tpu.vector_store %arg9[%c192, %c0_263], %397 {strides = array<i32>} : memref<400x512xbf16, #tpu.memory_space<vmem>>, vector<16x512xbf16>,
    %c511_i32_264 = arith.constant 511 : i32
    %399 = tpu.dynamic_rotate %324 by %c511_i32_264 dim 1 : vector<16x512xf32>, i32 -> vector<16x512xf32>
    %c13_265 = arith.constant 13 : index
    %c0_266 = arith.constant 0 : index
    %400 = vector.load %arg6[%c13_265, %c0_266] : memref<25x512xf32, #tpu.memory_space<vmem>>, vector<1x512xf32>
    %401 = vector.broadcast %400 : vector<1x512xf32> to vector<16x512xf32>
    %402 = arith.mulf %399, %401 : vector<16x512xf32>
    %403 = arith.truncf %402 : vector<16x512xf32> to vector<16x512xbf16>
    %c208 = arith.constant 208 : index
    %c0_267 = arith.constant 0 : index
    %404 = vector.load %arg9[%c208, %c0_267] : memref<400x512xbf16, #tpu.memory_space<vmem>>, vector<16x512xbf16>
    tpu.vector_store %arg9[%c208, %c0_267], %403 {strides = array<i32>} : memref<400x512xbf16, #tpu.memory_space<vmem>>, vector<16x512xbf16>,
    %c510_i32_268 = arith.constant 510 : i32
    %405 = tpu.dynamic_rotate %324 by %c510_i32_268 dim 1 : vector<16x512xf32>, i32 -> vector<16x512xf32>
    %c14_269 = arith.constant 14 : index
    %c0_270 = arith.constant 0 : index
    %406 = vector.load %arg6[%c14_269, %c0_270] : memref<25x512xf32, #tpu.memory_space<vmem>>, vector<1x512xf32>
    %407 = vector.broadcast %406 : vector<1x512xf32> to vector<16x512xf32>
    %408 = arith.mulf %405, %407 : vector<16x512xf32>
    %409 = arith.truncf %408 : vector<16x512xf32> to vector<16x512xbf16>
    %c224 = arith.constant 224 : index
    %c0_271 = arith.constant 0 : index
    %410 = vector.load %arg9[%c224, %c0_271] : memref<400x512xbf16, #tpu.memory_space<vmem>>, vector<16x512xbf16>
    tpu.vector_store %arg9[%c224, %c0_271], %409 {strides = array<i32>} : memref<400x512xbf16, #tpu.memory_space<vmem>>, vector<16x512xbf16>,
    %c498_i32_272 = arith.constant 498 : i32
    %411 = tpu.dynamic_rotate %324 by %c498_i32_272 dim 1 : vector<16x512xf32>, i32 -> vector<16x512xf32>
    %c15_273 = arith.constant 15 : index
    %c0_274 = arith.constant 0 : index
    %412 = vector.load %arg6[%c15_273, %c0_274] : memref<25x512xf32, #tpu.memory_space<vmem>>, vector<1x512xf32>
    %413 = vector.broadcast %412 : vector<1x512xf32> to vector<16x512xf32>
    %414 = arith.mulf %411, %413 : vector<16x512xf32>
    %415 = arith.truncf %414 : vector<16x512xf32> to vector<16x512xbf16>
    %c240 = arith.constant 240 : index
    %c0_275 = arith.constant 0 : index
    %416 = vector.load %arg9[%c240, %c0_275] : memref<400x512xbf16, #tpu.memory_space<vmem>>, vector<16x512xbf16>
    tpu.vector_store %arg9[%c240, %c0_275], %415 {strides = array<i32>} : memref<400x512xbf16, #tpu.memory_space<vmem>>, vector<16x512xbf16>,
    %c497_i32_276 = arith.constant 497 : i32
    %417 = tpu.dynamic_rotate %324 by %c497_i32_276 dim 1 : vector<16x512xf32>, i32 -> vector<16x512xf32>
    %c16_277 = arith.constant 16 : index
    %c0_278 = arith.constant 0 : index
    %418 = vector.load %arg6[%c16_277, %c0_278] : memref<25x512xf32, #tpu.memory_space<vmem>>, vector<1x512xf32>
    %419 = vector.broadcast %418 : vector<1x512xf32> to vector<16x512xf32>
    %420 = arith.mulf %417, %419 : vector<16x512xf32>
    %421 = arith.truncf %420 : vector<16x512xf32> to vector<16x512xbf16>
    %c256 = arith.constant 256 : index
    %c0_279 = arith.constant 0 : index
    %422 = vector.load %arg9[%c256, %c0_279] : memref<400x512xbf16, #tpu.memory_space<vmem>>, vector<16x512xbf16>
    tpu.vector_store %arg9[%c256, %c0_279], %421 {strides = array<i32>} : memref<400x512xbf16, #tpu.memory_space<vmem>>, vector<16x512xbf16>,
    %c496_i32_280 = arith.constant 496 : i32
    %423 = tpu.dynamic_rotate %324 by %c496_i32_280 dim 1 : vector<16x512xf32>, i32 -> vector<16x512xf32>
    %c17_281 = arith.constant 17 : index
    %c0_282 = arith.constant 0 : index
    %424 = vector.load %arg6[%c17_281, %c0_282] : memref<25x512xf32, #tpu.memory_space<vmem>>, vector<1x512xf32>
    %425 = vector.broadcast %424 : vector<1x512xf32> to vector<16x512xf32>
    %426 = arith.mulf %423, %425 : vector<16x512xf32>
    %427 = arith.truncf %426 : vector<16x512xf32> to vector<16x512xbf16>
    %c272 = arith.constant 272 : index
    %c0_283 = arith.constant 0 : index
    %428 = vector.load %arg9[%c272, %c0_283] : memref<400x512xbf16, #tpu.memory_space<vmem>>, vector<16x512xbf16>
    tpu.vector_store %arg9[%c272, %c0_283], %427 {strides = array<i32>} : memref<400x512xbf16, #tpu.memory_space<vmem>>, vector<16x512xbf16>,
    %c495_i32_284 = arith.constant 495 : i32
    %429 = tpu.dynamic_rotate %324 by %c495_i32_284 dim 1 : vector<16x512xf32>, i32 -> vector<16x512xf32>
    %c18_285 = arith.constant 18 : index
    %c0_286 = arith.constant 0 : index
    %430 = vector.load %arg6[%c18_285, %c0_286] : memref<25x512xf32, #tpu.memory_space<vmem>>, vector<1x512xf32>
    %431 = vector.broadcast %430 : vector<1x512xf32> to vector<16x512xf32>
    %432 = arith.mulf %429, %431 : vector<16x512xf32>
    %433 = arith.truncf %432 : vector<16x512xf32> to vector<16x512xbf16>
    %c288 = arith.constant 288 : index
    %c0_287 = arith.constant 0 : index
    %434 = vector.load %arg9[%c288, %c0_287] : memref<400x512xbf16, #tpu.memory_space<vmem>>, vector<16x512xbf16>
    tpu.vector_store %arg9[%c288, %c0_287], %433 {strides = array<i32>} : memref<400x512xbf16, #tpu.memory_space<vmem>>, vector<16x512xbf16>,
    %c494_i32_288 = arith.constant 494 : i32
    %435 = tpu.dynamic_rotate %324 by %c494_i32_288 dim 1 : vector<16x512xf32>, i32 -> vector<16x512xf32>
    %c19_289 = arith.constant 19 : index
    %c0_290 = arith.constant 0 : index
    %436 = vector.load %arg6[%c19_289, %c0_290] : memref<25x512xf32, #tpu.memory_space<vmem>>, vector<1x512xf32>
    %437 = vector.broadcast %436 : vector<1x512xf32> to vector<16x512xf32>
    %438 = arith.mulf %435, %437 : vector<16x512xf32>
    %439 = arith.truncf %438 : vector<16x512xf32> to vector<16x512xbf16>
    %c304 = arith.constant 304 : index
    %c0_291 = arith.constant 0 : index
    %440 = vector.load %arg9[%c304, %c0_291] : memref<400x512xbf16, #tpu.memory_space<vmem>>, vector<16x512xbf16>
    tpu.vector_store %arg9[%c304, %c0_291], %439 {strides = array<i32>} : memref<400x512xbf16, #tpu.memory_space<vmem>>, vector<16x512xbf16>,
    %c482_i32_292 = arith.constant 482 : i32
    %441 = tpu.dynamic_rotate %324 by %c482_i32_292 dim 1 : vector<16x512xf32>, i32 -> vector<16x512xf32>
    %c20_293 = arith.constant 20 : index
    %c0_294 = arith.constant 0 : index
    %442 = vector.load %arg6[%c20_293, %c0_294] : memref<25x512xf32, #tpu.memory_space<vmem>>, vector<1x512xf32>
    %443 = vector.broadcast %442 : vector<1x512xf32> to vector<16x512xf32>
    %444 = arith.mulf %441, %443 : vector<16x512xf32>
    %445 = arith.truncf %444 : vector<16x512xf32> to vector<16x512xbf16>
    %c320 = arith.constant 320 : index
    %c0_295 = arith.constant 0 : index
    %446 = vector.load %arg9[%c320, %c0_295] : memref<400x512xbf16, #tpu.memory_space<vmem>>, vector<16x512xbf16>
    tpu.vector_store %arg9[%c320, %c0_295], %445 {strides = array<i32>} : memref<400x512xbf16, #tpu.memory_space<vmem>>, vector<16x512xbf16>,
    %c481_i32_296 = arith.constant 481 : i32
    %447 = tpu.dynamic_rotate %324 by %c481_i32_296 dim 1 : vector<16x512xf32>, i32 -> vector<16x512xf32>
    %c21_297 = arith.constant 21 : index
    %c0_298 = arith.constant 0 : index
    %448 = vector.load %arg6[%c21_297, %c0_298] : memref<25x512xf32, #tpu.memory_space<vmem>>, vector<1x512xf32>
    %449 = vector.broadcast %448 : vector<1x512xf32> to vector<16x512xf32>
    %450 = arith.mulf %447, %449 : vector<16x512xf32>
    %451 = arith.truncf %450 : vector<16x512xf32> to vector<16x512xbf16>
    %c336 = arith.constant 336 : index
    %c0_299 = arith.constant 0 : index
    %452 = vector.load %arg9[%c336, %c0_299] : memref<400x512xbf16, #tpu.memory_space<vmem>>, vector<16x512xbf16>
    tpu.vector_store %arg9[%c336, %c0_299], %451 {strides = array<i32>} : memref<400x512xbf16, #tpu.memory_space<vmem>>, vector<16x512xbf16>,
    %c480_i32_300 = arith.constant 480 : i32
    %453 = tpu.dynamic_rotate %324 by %c480_i32_300 dim 1 : vector<16x512xf32>, i32 -> vector<16x512xf32>
    %c22_301 = arith.constant 22 : index
    %c0_302 = arith.constant 0 : index
    %454 = vector.load %arg6[%c22_301, %c0_302] : memref<25x512xf32, #tpu.memory_space<vmem>>, vector<1x512xf32>
    %455 = vector.broadcast %454 : vector<1x512xf32> to vector<16x512xf32>
    %456 = arith.mulf %453, %455 : vector<16x512xf32>
    %457 = arith.truncf %456 : vector<16x512xf32> to vector<16x512xbf16>
    %c352 = arith.constant 352 : index
    %c0_303 = arith.constant 0 : index
    %458 = vector.load %arg9[%c352, %c0_303] : memref<400x512xbf16, #tpu.memory_space<vmem>>, vector<16x512xbf16>
    tpu.vector_store %arg9[%c352, %c0_303], %457 {strides = array<i32>} : memref<400x512xbf16, #tpu.memory_space<vmem>>, vector<16x512xbf16>,
    %c479_i32_304 = arith.constant 479 : i32
    %459 = tpu.dynamic_rotate %324 by %c479_i32_304 dim 1 : vector<16x512xf32>, i32 -> vector<16x512xf32>
    %c23_305 = arith.constant 23 : index
    %c0_306 = arith.constant 0 : index
    %460 = vector.load %arg6[%c23_305, %c0_306] : memref<25x512xf32, #tpu.memory_space<vmem>>, vector<1x512xf32>
    %461 = vector.broadcast %460 : vector<1x512xf32> to vector<16x512xf32>
    %462 = arith.mulf %459, %461 : vector<16x512xf32>
    %463 = arith.truncf %462 : vector<16x512xf32> to vector<16x512xbf16>
    %c368 = arith.constant 368 : index
    %c0_307 = arith.constant 0 : index
    %464 = vector.load %arg9[%c368, %c0_307] : memref<400x512xbf16, #tpu.memory_space<vmem>>, vector<16x512xbf16>
    tpu.vector_store %arg9[%c368, %c0_307], %463 {strides = array<i32>} : memref<400x512xbf16, #tpu.memory_space<vmem>>, vector<16x512xbf16>,
    %c478_i32_308 = arith.constant 478 : i32
    %465 = tpu.dynamic_rotate %324 by %c478_i32_308 dim 1 : vector<16x512xf32>, i32 -> vector<16x512xf32>
    %c24_309 = arith.constant 24 : index
    %c0_310 = arith.constant 0 : index
    %466 = vector.load %arg6[%c24_309, %c0_310] : memref<25x512xf32, #tpu.memory_space<vmem>>, vector<1x512xf32>
    %467 = vector.broadcast %466 : vector<1x512xf32> to vector<16x512xf32>
    %468 = arith.mulf %465, %467 : vector<16x512xf32>
    %469 = arith.truncf %468 : vector<16x512xf32> to vector<16x512xbf16>
    %c384 = arith.constant 384 : index
    %c0_311 = arith.constant 0 : index
    %470 = vector.load %arg9[%c384, %c0_311] : memref<400x512xbf16, #tpu.memory_space<vmem>>, vector<16x512xbf16>
    tpu.vector_store %arg9[%c384, %c0_311], %469 {strides = array<i32>} : memref<400x512xbf16, #tpu.memory_space<vmem>>, vector<16x512xbf16>,
    %c0_312 = arith.constant 0 : index
    %c0_313 = arith.constant 0 : index
    %471 = vector.load %arg3[%c0_312, %c0_313] : memref<4x400xbf16, #tpu.memory_space<vmem>>, vector<4x400xbf16>
    %c0_314 = arith.constant 0 : index
    %c0_315 = arith.constant 0 : index
    %472 = vector.load %arg9[%c0_314, %c0_315] : memref<400x512xbf16, #tpu.memory_space<vmem>>, vector<400x512xbf16>
    %cst_316 = arith.constant dense<0.000000e+00> : vector<4x512xf32>
    %473 = tpu.matmul %471, %472, %cst_316 {dimension_numbers = #tpu.dot_dimension_numbers<[1], [0], [0], [1], [0, 0, 1, 1], [], []>} : vector<4x400xbf16>, vector<400x512xbf16>, vector<4x512xf32> -> vector<4x512xf32>
    %cst_317 = arith.constant dense<0.000000e+00> : vector<4xf32>
    %474 = vector.multi_reduction <add>, %473, %cst_317 [1] : vector<4x512xf32> to vector<4xf32>
    %475 = vector.shape_cast %474 : vector<4xf32> to vector<4x1xf32>
    %cst_318 = arith.constant 5.120000e+02 : f32
    %476 = vector.broadcast %cst_318 : f32 to vector<4x1xf32>
    %477 = arith.divf %475, %476 : vector<4x1xf32>
    %478 = vector.broadcast %477 : vector<4x1xf32> to vector<4x512xf32>
    %479 = arith.subf %473, %478 : vector<4x512xf32>
    %480 = arith.mulf %479, %479 : vector<4x512xf32>
    %cst_319 = arith.constant dense<0.000000e+00> : vector<4xf32>
    %481 = vector.multi_reduction <add>, %480, %cst_319 [1] : vector<4x512xf32> to vector<4xf32>
    %482 = vector.shape_cast %481 : vector<4xf32> to vector<4x1xf32>
    %cst_320 = arith.constant 5.120000e+02 : f32
    %483 = vector.broadcast %cst_320 : f32 to vector<4x1xf32>
    %484 = arith.divf %482, %483 : vector<4x1xf32>
    %c40_321 = arith.constant 40 : index
    %c0_322 = arith.constant 0 : index
    %485 = vector.load %arg5[%c40_321, %c0_322] : memref<50x1xf32, #tpu.memory_space<vmem>>, vector<4x1xf32>
    %c44_323 = arith.constant 44 : index
    %c0_324 = arith.constant 0 : index
    %486 = vector.load %arg5[%c44_323, %c0_324] : memref<50x1xf32, #tpu.memory_space<vmem>>, vector<4x1xf32>
    %cst_325 = arith.constant 9.99999974E-6 : f32
    %487 = vector.broadcast %cst_325 : f32 to vector<4x1xf32>
    %488 = arith.addf %484, %487 : vector<4x1xf32>
    %489 = math.rsqrt %488 : vector<4x1xf32>
    %490 = arith.mulf %489, %485 : vector<4x1xf32>
    %491 = arith.mulf %477, %490 : vector<4x1xf32>
    %492 = arith.subf %486, %491 : vector<4x1xf32>
    %493 = vector.broadcast %490 : vector<4x1xf32> to vector<4x512xf32>
    %494 = arith.mulf %473, %493 : vector<4x512xf32>
    %495 = vector.broadcast %492 : vector<4x1xf32> to vector<4x512xf32>
    %496 = arith.addf %494, %495 : vector<4x512xf32>
    %cst_326 = arith.constant 0.000000e+00 : f32
    %497 = vector.broadcast %cst_326 : f32 to vector<4x512xf32>
    %498 = arith.maximumf %496, %497 : vector<4x512xf32>
    %c0_327 = arith.constant 0 : index
    %499 = memref.load %arg7[%c0_327] : memref<2xf32, #tpu.memory_space<smem>>
    %500 = arith.subf %498, %150 : vector<4x512xf32>
    %501 = vector.broadcast %499 : f32 to vector<4x512xf32>
    %502 = arith.mulf %501, %500 : vector<4x512xf32>
    %503 = arith.addf %150, %502 : vector<4x512xf32>
    %c34_i32_328 = arith.constant 34 : i32
    %504 = tpu.dynamic_rotate %503 by %c34_i32_328 dim 1 : vector<4x512xf32>, i32 -> vector<4x512xf32>
    %c0_329 = arith.constant 0 : index
    %c0_330 = arith.constant 0 : index
    %505 = vector.load %arg6[%c0_329, %c0_330] : memref<25x512xf32, #tpu.memory_space<vmem>>, vector<1x512xf32>
    %506 = vector.broadcast %505 : vector<1x512xf32> to vector<4x512xf32>
    %507 = arith.mulf %504, %506 : vector<4x512xf32>
    %508 = arith.truncf %507 : vector<4x512xf32> to vector<4x512xbf16>
    %c0_331 = arith.constant 0 : index
    %c0_332 = arith.constant 0 : index
    %509 = vector.load %arg9[%c0_331, %c0_332] : memref<400x512xbf16, #tpu.memory_space<vmem>>, vector<4x512xbf16>
    tpu.vector_store %arg9[%c0_331, %c0_332], %508 {strides = array<i32>} : memref<400x512xbf16, #tpu.memory_space<vmem>>, vector<4x512xbf16>,
    %c33_i32_333 = arith.constant 33 : i32
    %510 = tpu.dynamic_rotate %503 by %c33_i32_333 dim 1 : vector<4x512xf32>, i32 -> vector<4x512xf32>
    %c1_334 = arith.constant 1 : index
    %c0_335 = arith.constant 0 : index
    %511 = vector.load %arg6[%c1_334, %c0_335] : memref<25x512xf32, #tpu.memory_space<vmem>>, vector<1x512xf32>
    %512 = vector.broadcast %511 : vector<1x512xf32> to vector<4x512xf32>
    %513 = arith.mulf %510, %512 : vector<4x512xf32>
    %514 = arith.truncf %513 : vector<4x512xf32> to vector<4x512xbf16>
    %c4_336 = arith.constant 4 : index
    %c0_337 = arith.constant 0 : index
    %515 = vector.load %arg9[%c4_336, %c0_337] : memref<400x512xbf16, #tpu.memory_space<vmem>>, vector<4x512xbf16>
    tpu.vector_store %arg9[%c4_336, %c0_337], %514 {strides = array<i32>} : memref<400x512xbf16, #tpu.memory_space<vmem>>, vector<4x512xbf16>,
    %c32_i32_338 = arith.constant 32 : i32
    %516 = tpu.dynamic_rotate %503 by %c32_i32_338 dim 1 : vector<4x512xf32>, i32 -> vector<4x512xf32>
    %c2_339 = arith.constant 2 : index
    %c0_340 = arith.constant 0 : index
    %517 = vector.load %arg6[%c2_339, %c0_340] : memref<25x512xf32, #tpu.memory_space<vmem>>, vector<1x512xf32>
    %518 = vector.broadcast %517 : vector<1x512xf32> to vector<4x512xf32>
    %519 = arith.mulf %516, %518 : vector<4x512xf32>
    %520 = arith.truncf %519 : vector<4x512xf32> to vector<4x512xbf16>
    %c8_341 = arith.constant 8 : index
    %c0_342 = arith.constant 0 : index
    %521 = vector.load %arg9[%c8_341, %c0_342] : memref<400x512xbf16, #tpu.memory_space<vmem>>, vector<4x512xbf16>
    tpu.vector_store %arg9[%c8_341, %c0_342], %520 {strides = array<i32>} : memref<400x512xbf16, #tpu.memory_space<vmem>>, vector<4x512xbf16>,
    %c31_i32_343 = arith.constant 31 : i32
    %522 = tpu.dynamic_rotate %503 by %c31_i32_343 dim 1 : vector<4x512xf32>, i32 -> vector<4x512xf32>
    %c3_344 = arith.constant 3 : index
    %c0_345 = arith.constant 0 : index
    %523 = vector.load %arg6[%c3_344, %c0_345] : memref<25x512xf32, #tpu.memory_space<vmem>>, vector<1x512xf32>
    %524 = vector.broadcast %523 : vector<1x512xf32> to vector<4x512xf32>
    %525 = arith.mulf %522, %524 : vector<4x512xf32>
    %526 = arith.truncf %525 : vector<4x512xf32> to vector<4x512xbf16>
    %c12_346 = arith.constant 12 : index
    %c0_347 = arith.constant 0 : index
    %527 = vector.load %arg9[%c12_346, %c0_347] : memref<400x512xbf16, #tpu.memory_space<vmem>>, vector<4x512xbf16>
    tpu.vector_store %arg9[%c12_346, %c0_347], %526 {strides = array<i32>} : memref<400x512xbf16, #tpu.memory_space<vmem>>, vector<4x512xbf16>,
    %c30_i32_348 = arith.constant 30 : i32
    %528 = tpu.dynamic_rotate %503 by %c30_i32_348 dim 1 : vector<4x512xf32>, i32 -> vector<4x512xf32>
    %c4_349 = arith.constant 4 : index
    %c0_350 = arith.constant 0 : index
    %529 = vector.load %arg6[%c4_349, %c0_350] : memref<25x512xf32, #tpu.memory_space<vmem>>, vector<1x512xf32>
    %530 = vector.broadcast %529 : vector<1x512xf32> to vector<4x512xf32>
    %531 = arith.mulf %528, %530 : vector<4x512xf32>
    %532 = arith.truncf %531 : vector<4x512xf32> to vector<4x512xbf16>
    %c16_351 = arith.constant 16 : index
    %c0_352 = arith.constant 0 : index
    %533 = vector.load %arg9[%c16_351, %c0_352] : memref<400x512xbf16, #tpu.memory_space<vmem>>, vector<4x512xbf16>
    tpu.vector_store %arg9[%c16_351, %c0_352], %532 {strides = array<i32>} : memref<400x512xbf16, #tpu.memory_space<vmem>>, vector<4x512xbf16>,
    %c18_i32_353 = arith.constant 18 : i32
    %534 = tpu.dynamic_rotate %503 by %c18_i32_353 dim 1 : vector<4x512xf32>, i32 -> vector<4x512xf32>
    %c5_354 = arith.constant 5 : index
    %c0_355 = arith.constant 0 : index
    %535 = vector.load %arg6[%c5_354, %c0_355] : memref<25x512xf32, #tpu.memory_space<vmem>>, vector<1x512xf32>
    %536 = vector.broadcast %535 : vector<1x512xf32> to vector<4x512xf32>
    %537 = arith.mulf %534, %536 : vector<4x512xf32>
    %538 = arith.truncf %537 : vector<4x512xf32> to vector<4x512xbf16>
    %c20_356 = arith.constant 20 : index
    %c0_357 = arith.constant 0 : index
    %539 = vector.load %arg9[%c20_356, %c0_357] : memref<400x512xbf16, #tpu.memory_space<vmem>>, vector<4x512xbf16>
    tpu.vector_store %arg9[%c20_356, %c0_357], %538 {strides = array<i32>} : memref<400x512xbf16, #tpu.memory_space<vmem>>, vector<4x512xbf16>,
    %c17_i32_358 = arith.constant 17 : i32
    %540 = tpu.dynamic_rotate %503 by %c17_i32_358 dim 1 : vector<4x512xf32>, i32 -> vector<4x512xf32>
    %c6_359 = arith.constant 6 : index
    %c0_360 = arith.constant 0 : index
    %541 = vector.load %arg6[%c6_359, %c0_360] : memref<25x512xf32, #tpu.memory_space<vmem>>, vector<1x512xf32>
    %542 = vector.broadcast %541 : vector<1x512xf32> to vector<4x512xf32>
    %543 = arith.mulf %540, %542 : vector<4x512xf32>
    %544 = arith.truncf %543 : vector<4x512xf32> to vector<4x512xbf16>
    %c24_361 = arith.constant 24 : index
    %c0_362 = arith.constant 0 : index
    %545 = vector.load %arg9[%c24_361, %c0_362] : memref<400x512xbf16, #tpu.memory_space<vmem>>, vector<4x512xbf16>
    tpu.vector_store %arg9[%c24_361, %c0_362], %544 {strides = array<i32>} : memref<400x512xbf16, #tpu.memory_space<vmem>>, vector<4x512xbf16>,
    %c16_i32_363 = arith.constant 16 : i32
    %546 = tpu.dynamic_rotate %503 by %c16_i32_363 dim 1 : vector<4x512xf32>, i32 -> vector<4x512xf32>
    %c7_364 = arith.constant 7 : index
    %c0_365 = arith.constant 0 : index
    %547 = vector.load %arg6[%c7_364, %c0_365] : memref<25x512xf32, #tpu.memory_space<vmem>>, vector<1x512xf32>
    %548 = vector.broadcast %547 : vector<1x512xf32> to vector<4x512xf32>
    %549 = arith.mulf %546, %548 : vector<4x512xf32>
    %550 = arith.truncf %549 : vector<4x512xf32> to vector<4x512xbf16>
    %c28_366 = arith.constant 28 : index
    %c0_367 = arith.constant 0 : index
    %551 = vector.load %arg9[%c28_366, %c0_367] : memref<400x512xbf16, #tpu.memory_space<vmem>>, vector<4x512xbf16>
    tpu.vector_store %arg9[%c28_366, %c0_367], %550 {strides = array<i32>} : memref<400x512xbf16, #tpu.memory_space<vmem>>, vector<4x512xbf16>,
    %c15_i32_368 = arith.constant 15 : i32
    %552 = tpu.dynamic_rotate %503 by %c15_i32_368 dim 1 : vector<4x512xf32>, i32 -> vector<4x512xf32>
    %c8_369 = arith.constant 8 : index
    %c0_370 = arith.constant 0 : index
    %553 = vector.load %arg6[%c8_369, %c0_370] : memref<25x512xf32, #tpu.memory_space<vmem>>, vector<1x512xf32>
    %554 = vector.broadcast %553 : vector<1x512xf32> to vector<4x512xf32>
    %555 = arith.mulf %552, %554 : vector<4x512xf32>
    %556 = arith.truncf %555 : vector<4x512xf32> to vector<4x512xbf16>
    %c32_371 = arith.constant 32 : index
    %c0_372 = arith.constant 0 : index
    %557 = vector.load %arg9[%c32_371, %c0_372] : memref<400x512xbf16, #tpu.memory_space<vmem>>, vector<4x512xbf16>
    tpu.vector_store %arg9[%c32_371, %c0_372], %556 {strides = array<i32>} : memref<400x512xbf16, #tpu.memory_space<vmem>>, vector<4x512xbf16>,
    %c14_i32_373 = arith.constant 14 : i32
    %558 = tpu.dynamic_rotate %503 by %c14_i32_373 dim 1 : vector<4x512xf32>, i32 -> vector<4x512xf32>
    %c9_374 = arith.constant 9 : index
    %c0_375 = arith.constant 0 : index
    %559 = vector.load %arg6[%c9_374, %c0_375] : memref<25x512xf32, #tpu.memory_space<vmem>>, vector<1x512xf32>
    %560 = vector.broadcast %559 : vector<1x512xf32> to vector<4x512xf32>
    %561 = arith.mulf %558, %560 : vector<4x512xf32>
    %562 = arith.truncf %561 : vector<4x512xf32> to vector<4x512xbf16>
    %c36_376 = arith.constant 36 : index
    %c0_377 = arith.constant 0 : index
    %563 = vector.load %arg9[%c36_376, %c0_377] : memref<400x512xbf16, #tpu.memory_space<vmem>>, vector<4x512xbf16>
    tpu.vector_store %arg9[%c36_376, %c0_377], %562 {strides = array<i32>} : memref<400x512xbf16, #tpu.memory_space<vmem>>, vector<4x512xbf16>,
    %c2_i32_378 = arith.constant 2 : i32
    %564 = tpu.dynamic_rotate %503 by %c2_i32_378 dim 1 : vector<4x512xf32>, i32 -> vector<4x512xf32>
    %c10_379 = arith.constant 10 : index
    %c0_380 = arith.constant 0 : index
    %565 = vector.load %arg6[%c10_379, %c0_380] : memref<25x512xf32, #tpu.memory_space<vmem>>, vector<1x512xf32>
    %566 = vector.broadcast %565 : vector<1x512xf32> to vector<4x512xf32>
    %567 = arith.mulf %564, %566 : vector<4x512xf32>
    %568 = arith.truncf %567 : vector<4x512xf32> to vector<4x512xbf16>
    %c40_381 = arith.constant 40 : index
    %c0_382 = arith.constant 0 : index
    %569 = vector.load %arg9[%c40_381, %c0_382] : memref<400x512xbf16, #tpu.memory_space<vmem>>, vector<4x512xbf16>
    tpu.vector_store %arg9[%c40_381, %c0_382], %568 {strides = array<i32>} : memref<400x512xbf16, #tpu.memory_space<vmem>>, vector<4x512xbf16>,
    %c1_i32_383 = arith.constant 1 : i32
    %570 = tpu.dynamic_rotate %503 by %c1_i32_383 dim 1 : vector<4x512xf32>, i32 -> vector<4x512xf32>
    %c11_384 = arith.constant 11 : index
    %c0_385 = arith.constant 0 : index
    %571 = vector.load %arg6[%c11_384, %c0_385] : memref<25x512xf32, #tpu.memory_space<vmem>>, vector<1x512xf32>
    %572 = vector.broadcast %571 : vector<1x512xf32> to vector<4x512xf32>
    %573 = arith.mulf %570, %572 : vector<4x512xf32>
    %574 = arith.truncf %573 : vector<4x512xf32> to vector<4x512xbf16>
    %c44_386 = arith.constant 44 : index
    %c0_387 = arith.constant 0 : index
    %575 = vector.load %arg9[%c44_386, %c0_387] : memref<400x512xbf16, #tpu.memory_space<vmem>>, vector<4x512xbf16>
    tpu.vector_store %arg9[%c44_386, %c0_387], %574 {strides = array<i32>} : memref<400x512xbf16, #tpu.memory_space<vmem>>, vector<4x512xbf16>,
    %576 = arith.truncf %503 : vector<4x512xf32> to vector<4x512xbf16>
    %c48_388 = arith.constant 48 : index
    %c0_389 = arith.constant 0 : index
    %577 = vector.load %arg9[%c48_388, %c0_389] : memref<400x512xbf16, #tpu.memory_space<vmem>>, vector<4x512xbf16>
    tpu.vector_store %arg9[%c48_388, %c0_389], %576 {strides = array<i32>} : memref<400x512xbf16, #tpu.memory_space<vmem>>, vector<4x512xbf16>,
    %c511_i32_390 = arith.constant 511 : i32
    %578 = tpu.dynamic_rotate %503 by %c511_i32_390 dim 1 : vector<4x512xf32>, i32 -> vector<4x512xf32>
    %c13_391 = arith.constant 13 : index
    %c0_392 = arith.constant 0 : index
    %579 = vector.load %arg6[%c13_391, %c0_392] : memref<25x512xf32, #tpu.memory_space<vmem>>, vector<1x512xf32>
    %580 = vector.broadcast %579 : vector<1x512xf32> to vector<4x512xf32>
    %581 = arith.mulf %578, %580 : vector<4x512xf32>
    %582 = arith.truncf %581 : vector<4x512xf32> to vector<4x512xbf16>
    %c52_393 = arith.constant 52 : index
    %c0_394 = arith.constant 0 : index
    %583 = vector.load %arg9[%c52_393, %c0_394] : memref<400x512xbf16, #tpu.memory_space<vmem>>, vector<4x512xbf16>
    tpu.vector_store %arg9[%c52_393, %c0_394], %582 {strides = array<i32>} : memref<400x512xbf16, #tpu.memory_space<vmem>>, vector<4x512xbf16>,
    %c510_i32_395 = arith.constant 510 : i32
    %584 = tpu.dynamic_rotate %503 by %c510_i32_395 dim 1 : vector<4x512xf32>, i32 -> vector<4x512xf32>
    %c14_396 = arith.constant 14 : index
    %c0_397 = arith.constant 0 : index
    %585 = vector.load %arg6[%c14_396, %c0_397] : memref<25x512xf32, #tpu.memory_space<vmem>>, vector<1x512xf32>
    %586 = vector.broadcast %585 : vector<1x512xf32> to vector<4x512xf32>
    %587 = arith.mulf %584, %586 : vector<4x512xf32>
    %588 = arith.truncf %587 : vector<4x512xf32> to vector<4x512xbf16>
    %c56_398 = arith.constant 56 : index
    %c0_399 = arith.constant 0 : index
    %589 = vector.load %arg9[%c56_398, %c0_399] : memref<400x512xbf16, #tpu.memory_space<vmem>>, vector<4x512xbf16>
    tpu.vector_store %arg9[%c56_398, %c0_399], %588 {strides = array<i32>} : memref<400x512xbf16, #tpu.memory_space<vmem>>, vector<4x512xbf16>,
    %c498_i32_400 = arith.constant 498 : i32
    %590 = tpu.dynamic_rotate %503 by %c498_i32_400 dim 1 : vector<4x512xf32>, i32 -> vector<4x512xf32>
    %c15_401 = arith.constant 15 : index
    %c0_402 = arith.constant 0 : index
    %591 = vector.load %arg6[%c15_401, %c0_402] : memref<25x512xf32, #tpu.memory_space<vmem>>, vector<1x512xf32>
    %592 = vector.broadcast %591 : vector<1x512xf32> to vector<4x512xf32>
    %593 = arith.mulf %590, %592 : vector<4x512xf32>
    %594 = arith.truncf %593 : vector<4x512xf32> to vector<4x512xbf16>
    %c60_403 = arith.constant 60 : index
    %c0_404 = arith.constant 0 : index
    %595 = vector.load %arg9[%c60_403, %c0_404] : memref<400x512xbf16, #tpu.memory_space<vmem>>, vector<4x512xbf16>
    tpu.vector_store %arg9[%c60_403, %c0_404], %594 {strides = array<i32>} : memref<400x512xbf16, #tpu.memory_space<vmem>>, vector<4x512xbf16>,
    %c497_i32_405 = arith.constant 497 : i32
    %596 = tpu.dynamic_rotate %503 by %c497_i32_405 dim 1 : vector<4x512xf32>, i32 -> vector<4x512xf32>
    %c16_406 = arith.constant 16 : index
    %c0_407 = arith.constant 0 : index
    %597 = vector.load %arg6[%c16_406, %c0_407] : memref<25x512xf32, #tpu.memory_space<vmem>>, vector<1x512xf32>
    %598 = vector.broadcast %597 : vector<1x512xf32> to vector<4x512xf32>
    %599 = arith.mulf %596, %598 : vector<4x512xf32>
    %600 = arith.truncf %599 : vector<4x512xf32> to vector<4x512xbf16>
    %c64_408 = arith.constant 64 : index
    %c0_409 = arith.constant 0 : index
    %601 = vector.load %arg9[%c64_408, %c0_409] : memref<400x512xbf16, #tpu.memory_space<vmem>>, vector<4x512xbf16>
    tpu.vector_store %arg9[%c64_408, %c0_409], %600 {strides = array<i32>} : memref<400x512xbf16, #tpu.memory_space<vmem>>, vector<4x512xbf16>,
    %c496_i32_410 = arith.constant 496 : i32
    %602 = tpu.dynamic_rotate %503 by %c496_i32_410 dim 1 : vector<4x512xf32>, i32 -> vector<4x512xf32>
    %c17_411 = arith.constant 17 : index
    %c0_412 = arith.constant 0 : index
    %603 = vector.load %arg6[%c17_411, %c0_412] : memref<25x512xf32, #tpu.memory_space<vmem>>, vector<1x512xf32>
    %604 = vector.broadcast %603 : vector<1x512xf32> to vector<4x512xf32>
    %605 = arith.mulf %602, %604 : vector<4x512xf32>
    %606 = arith.truncf %605 : vector<4x512xf32> to vector<4x512xbf16>
    %c68_413 = arith.constant 68 : index
    %c0_414 = arith.constant 0 : index
    %607 = vector.load %arg9[%c68_413, %c0_414] : memref<400x512xbf16, #tpu.memory_space<vmem>>, vector<4x512xbf16>
    tpu.vector_store %arg9[%c68_413, %c0_414], %606 {strides = array<i32>} : memref<400x512xbf16, #tpu.memory_space<vmem>>, vector<4x512xbf16>,
    %c495_i32_415 = arith.constant 495 : i32
    %608 = tpu.dynamic_rotate %503 by %c495_i32_415 dim 1 : vector<4x512xf32>, i32 -> vector<4x512xf32>
    %c18_416 = arith.constant 18 : index
    %c0_417 = arith.constant 0 : index
    %609 = vector.load %arg6[%c18_416, %c0_417] : memref<25x512xf32, #tpu.memory_space<vmem>>, vector<1x512xf32>
    %610 = vector.broadcast %609 : vector<1x512xf32> to vector<4x512xf32>
    %611 = arith.mulf %608, %610 : vector<4x512xf32>
    %612 = arith.truncf %611 : vector<4x512xf32> to vector<4x512xbf16>
    %c72_418 = arith.constant 72 : index
    %c0_419 = arith.constant 0 : index
    %613 = vector.load %arg9[%c72_418, %c0_419] : memref<400x512xbf16, #tpu.memory_space<vmem>>, vector<4x512xbf16>
    tpu.vector_store %arg9[%c72_418, %c0_419], %612 {strides = array<i32>} : memref<400x512xbf16, #tpu.memory_space<vmem>>, vector<4x512xbf16>,
    %c494_i32_420 = arith.constant 494 : i32
    %614 = tpu.dynamic_rotate %503 by %c494_i32_420 dim 1 : vector<4x512xf32>, i32 -> vector<4x512xf32>
    %c19_421 = arith.constant 19 : index
    %c0_422 = arith.constant 0 : index
    %615 = vector.load %arg6[%c19_421, %c0_422] : memref<25x512xf32, #tpu.memory_space<vmem>>, vector<1x512xf32>
    %616 = vector.broadcast %615 : vector<1x512xf32> to vector<4x512xf32>
    %617 = arith.mulf %614, %616 : vector<4x512xf32>
    %618 = arith.truncf %617 : vector<4x512xf32> to vector<4x512xbf16>
    %c76_423 = arith.constant 76 : index
    %c0_424 = arith.constant 0 : index
    %619 = vector.load %arg9[%c76_423, %c0_424] : memref<400x512xbf16, #tpu.memory_space<vmem>>, vector<4x512xbf16>
    tpu.vector_store %arg9[%c76_423, %c0_424], %618 {strides = array<i32>} : memref<400x512xbf16, #tpu.memory_space<vmem>>, vector<4x512xbf16>,
    %c482_i32_425 = arith.constant 482 : i32
    %620 = tpu.dynamic_rotate %503 by %c482_i32_425 dim 1 : vector<4x512xf32>, i32 -> vector<4x512xf32>
    %c20_426 = arith.constant 20 : index
    %c0_427 = arith.constant 0 : index
    %621 = vector.load %arg6[%c20_426, %c0_427] : memref<25x512xf32, #tpu.memory_space<vmem>>, vector<1x512xf32>
    %622 = vector.broadcast %621 : vector<1x512xf32> to vector<4x512xf32>
    %623 = arith.mulf %620, %622 : vector<4x512xf32>
    %624 = arith.truncf %623 : vector<4x512xf32> to vector<4x512xbf16>
    %c80_428 = arith.constant 80 : index
    %c0_429 = arith.constant 0 : index
    %625 = vector.load %arg9[%c80_428, %c0_429] : memref<400x512xbf16, #tpu.memory_space<vmem>>, vector<4x512xbf16>
    tpu.vector_store %arg9[%c80_428, %c0_429], %624 {strides = array<i32>} : memref<400x512xbf16, #tpu.memory_space<vmem>>, vector<4x512xbf16>,
    %c481_i32_430 = arith.constant 481 : i32
    %626 = tpu.dynamic_rotate %503 by %c481_i32_430 dim 1 : vector<4x512xf32>, i32 -> vector<4x512xf32>
    %c21_431 = arith.constant 21 : index
    %c0_432 = arith.constant 0 : index
    %627 = vector.load %arg6[%c21_431, %c0_432] : memref<25x512xf32, #tpu.memory_space<vmem>>, vector<1x512xf32>
    %628 = vector.broadcast %627 : vector<1x512xf32> to vector<4x512xf32>
    %629 = arith.mulf %626, %628 : vector<4x512xf32>
    %630 = arith.truncf %629 : vector<4x512xf32> to vector<4x512xbf16>
    %c84_433 = arith.constant 84 : index
    %c0_434 = arith.constant 0 : index
    %631 = vector.load %arg9[%c84_433, %c0_434] : memref<400x512xbf16, #tpu.memory_space<vmem>>, vector<4x512xbf16>
    tpu.vector_store %arg9[%c84_433, %c0_434], %630 {strides = array<i32>} : memref<400x512xbf16, #tpu.memory_space<vmem>>, vector<4x512xbf16>,
    %c480_i32_435 = arith.constant 480 : i32
    %632 = tpu.dynamic_rotate %503 by %c480_i32_435 dim 1 : vector<4x512xf32>, i32 -> vector<4x512xf32>
    %c22_436 = arith.constant 22 : index
    %c0_437 = arith.constant 0 : index
    %633 = vector.load %arg6[%c22_436, %c0_437] : memref<25x512xf32, #tpu.memory_space<vmem>>, vector<1x512xf32>
    %634 = vector.broadcast %633 : vector<1x512xf32> to vector<4x512xf32>
    %635 = arith.mulf %632, %634 : vector<4x512xf32>
    %636 = arith.truncf %635 : vector<4x512xf32> to vector<4x512xbf16>
    %c88_438 = arith.constant 88 : index
    %c0_439 = arith.constant 0 : index
    %637 = vector.load %arg9[%c88_438, %c0_439] : memref<400x512xbf16, #tpu.memory_space<vmem>>, vector<4x512xbf16>
    tpu.vector_store %arg9[%c88_438, %c0_439], %636 {strides = array<i32>} : memref<400x512xbf16, #tpu.memory_space<vmem>>, vector<4x512xbf16>,
    %c479_i32_440 = arith.constant 479 : i32
    %638 = tpu.dynamic_rotate %503 by %c479_i32_440 dim 1 : vector<4x512xf32>, i32 -> vector<4x512xf32>
    %c23_441 = arith.constant 23 : index
    %c0_442 = arith.constant 0 : index
    %639 = vector.load %arg6[%c23_441, %c0_442] : memref<25x512xf32, #tpu.memory_space<vmem>>, vector<1x512xf32>
    %640 = vector.broadcast %639 : vector<1x512xf32> to vector<4x512xf32>
    %641 = arith.mulf %638, %640 : vector<4x512xf32>
    %642 = arith.truncf %641 : vector<4x512xf32> to vector<4x512xbf16>
    %c92_443 = arith.constant 92 : index
    %c0_444 = arith.constant 0 : index
    %643 = vector.load %arg9[%c92_443, %c0_444] : memref<400x512xbf16, #tpu.memory_space<vmem>>, vector<4x512xbf16>
    tpu.vector_store %arg9[%c92_443, %c0_444], %642 {strides = array<i32>} : memref<400x512xbf16, #tpu.memory_space<vmem>>, vector<4x512xbf16>,
    %c478_i32_445 = arith.constant 478 : i32
    %644 = tpu.dynamic_rotate %503 by %c478_i32_445 dim 1 : vector<4x512xf32>, i32 -> vector<4x512xf32>
    %c24_446 = arith.constant 24 : index
    %c0_447 = arith.constant 0 : index
    %645 = vector.load %arg6[%c24_446, %c0_447] : memref<25x512xf32, #tpu.memory_space<vmem>>, vector<1x512xf32>
    %646 = vector.broadcast %645 : vector<1x512xf32> to vector<4x512xf32>
    %647 = arith.mulf %644, %646 : vector<4x512xf32>
    %648 = arith.truncf %647 : vector<4x512xf32> to vector<4x512xbf16>
    %c96_448 = arith.constant 96 : index
    %c0_449 = arith.constant 0 : index
    %649 = vector.load %arg9[%c96_448, %c0_449] : memref<400x512xbf16, #tpu.memory_space<vmem>>, vector<4x512xbf16>
    tpu.vector_store %arg9[%c96_448, %c0_449], %648 {strides = array<i32>} : memref<400x512xbf16, #tpu.memory_space<vmem>>, vector<4x512xbf16>,
    %c0_450 = arith.constant 0 : index
    %c0_451 = arith.constant 0 : index
    %650 = vector.load %arg4[%c0_450, %c0_451] : memref<1x100xbf16, #tpu.memory_space<vmem>>, vector<1x100xbf16>
    %c0_452 = arith.constant 0 : index
    %c0_453 = arith.constant 0 : index
    %651 = vector.load %arg9[%c0_452, %c0_453] : memref<400x512xbf16, #tpu.memory_space<vmem>>, vector<100x512xbf16>
    %cst_454 = arith.constant dense<0.000000e+00> : vector<1x512xf32>
    %652 = tpu.matmul %650, %651, %cst_454 {dimension_numbers = #tpu.dot_dimension_numbers<[1], [0], [0], [1], [0, 0, 1, 1], [], []>} : vector<1x100xbf16>, vector<100x512xbf16>, vector<1x512xf32> -> vector<1x512xf32>
    %cst_455 = arith.constant dense<0.000000e+00> : vector<1xf32>
    %653 = vector.multi_reduction <add>, %652, %cst_455 [1] : vector<1x512xf32> to vector<1xf32>
    %654 = vector.shape_cast %653 : vector<1xf32> to vector<1x1xf32>
    %cst_456 = arith.constant 5.120000e+02 : f32
    %655 = vector.broadcast %cst_456 : f32 to vector<1x1xf32>
    %656 = arith.divf %654, %655 : vector<1x1xf32>
    %657 = vector.broadcast %656 : vector<1x1xf32> to vector<1x512xf32>
    %658 = arith.subf %652, %657 : vector<1x512xf32>
    %659 = arith.mulf %658, %658 : vector<1x512xf32>
    %cst_457 = arith.constant dense<0.000000e+00> : vector<1xf32>
    %660 = vector.multi_reduction <add>, %659, %cst_457 [1] : vector<1x512xf32> to vector<1xf32>
    %661 = vector.shape_cast %660 : vector<1xf32> to vector<1x1xf32>
    %cst_458 = arith.constant 5.120000e+02 : f32
    %662 = vector.broadcast %cst_458 : f32 to vector<1x1xf32>
    %663 = arith.divf %661, %662 : vector<1x1xf32>
    %c48_459 = arith.constant 48 : index
    %c0_460 = arith.constant 0 : index
    %664 = vector.load %arg5[%c48_459, %c0_460] : memref<50x1xf32, #tpu.memory_space<vmem>>, vector<1x1xf32>
    %c49 = arith.constant 49 : index
    %c0_461 = arith.constant 0 : index
    %665 = vector.load %arg5[%c49, %c0_461] : memref<50x1xf32, #tpu.memory_space<vmem>>, vector<1x1xf32>
    %cst_462 = arith.constant 9.99999974E-6 : f32
    %666 = vector.broadcast %cst_462 : f32 to vector<1x1xf32>
    %667 = arith.addf %663, %666 : vector<1x1xf32>
    %668 = math.rsqrt %667 : vector<1x1xf32>
    %669 = arith.mulf %668, %664 : vector<1x1xf32>
    %670 = arith.mulf %656, %669 : vector<1x1xf32>
    %671 = arith.subf %665, %670 : vector<1x1xf32>
    %672 = vector.broadcast %669 : vector<1x1xf32> to vector<1x512xf32>
    %673 = arith.mulf %652, %672 : vector<1x512xf32>
    %674 = vector.broadcast %671 : vector<1x1xf32> to vector<1x512xf32>
    %675 = arith.addf %673, %674 : vector<1x512xf32>
    %cst_463 = arith.constant 0.000000e+00 : f32
    %676 = vector.broadcast %cst_463 : f32 to vector<1x512xf32>
    %677 = arith.maximumf %675, %676 : vector<1x512xf32>
    %c1_464 = arith.constant 1 : index
    %678 = memref.load %arg7[%c1_464] : memref<2xf32, #tpu.memory_space<smem>>
    %679 = arith.subf %677, %0 : vector<1x512xf32>
    %680 = vector.broadcast %678 : f32 to vector<1x512xf32>
    %681 = arith.mulf %680, %679 : vector<1x512xf32>
    %682 = arith.addf %0, %681 : vector<1x512xf32>
    %c0_465 = arith.constant 0 : index
    %c0_466 = arith.constant 0 : index
    %683 = vector.load %arg8[%c0_465, %c0_466] : memref<1x512xf32, #tpu.memory_space<vmem>>, vector<1x512xf32>
    tpu.vector_store %arg8[%c0_465, %c0_466], %682 {strides = array<i32>} : memref<1x512xf32, #tpu.memory_space<vmem>>, vector<1x512xf32>,
    return
  }
}

</mosaic_0001>

<llo_original>
// kernel: affn_forward.1
$region0: #{affn_forward.1}
  #allocation0 [shape = 'u32[]', space=smem, size = 0x4, offset = 0x4, fixed_abs, tag = 'smem constant byte address 0x4 - core index']
  #allocation1 [shape = 'u32[144,128]{1,0:T(1,128)}', space=vmem, size = 0x12000, scoped, tag = 'internal scratch']
  #allocation2 [shape = 'bf16[400,512]{1,0:T(8,128)(2,1)}', space=vmem, size = 0x64000, scoped, tag = 'scratch operand']
  %s0 = inlined_call_operand.vmem [shape: f32[1,512], index: 0, kind: input, shape index: {}]
  %s1 = inlined_call_operand.vmem [shape: bf16[4,25], index: 1, kind: input, shape index: {}]
  %s2 = inlined_call_operand.vmem [shape: bf16[16,100], index: 2, kind: input, shape index: {}]
  %s3 = inlined_call_operand.vmem [shape: bf16[4,400], index: 3, kind: input, shape index: {}]
  %s4 = inlined_call_operand.vmem [shape: bf16[1,100], index: 4, kind: input, shape index: {}]
  %s5 = inlined_call_operand.vmem [shape: f32[50,1], index: 5, kind: input, shape index: {}]
  %s6 = inlined_call_operand.vmem [shape: f32[25,512], index: 6, kind: input, shape index: {}]
  %s7 = inlined_call_operand.vmem [shape: f32[2], index: 7, kind: input, shape index: {}]
  %s8 = inlined_call_operand.vmem [shape: f32[1,512], index: 8, kind: output, shape index: {}]
  %s9 = sld [smem:[#allocation0]]
  $region46: #{affn_forward.1} parent=0
    _
  %s11 = ssub.s32 1, %s9
  %s12 = scalar_select 0, %s11, %s9
  $region1: #{affn_forward.1} parent=0
    #allocation3 [shape = 'u8[512]{0}', space=smem, size = 0x200, scoped, tag = 'input window, operand 7, single buffered']
    #allocation4 [shape = 's32[1]{0}', space=sflag, size = 0x4, scoped, tag = 'scoped memory for affn_forward.1']
    %13 = vsyncpa [#allocation4], 0
    // Predicated region
    $region2: #{affn_forward.1} parent=1 // pred_check
      _
    $region3: #{affn_forward.1} parent=1 // pred_check_branch
      %15 = sbr.rel (0) target = $region5
    $region4: #{affn_forward.1} parent=1 // pred_region
      _
    $region5: #{affn_forward.1} parent=1 // pred_fallthru
      _
    // Predicated region
    $region6: #{affn_forward.1} parent=1 // pred_check
      _
    $region7: #{affn_forward.1} parent=1 // pred_check_branch
      %17 = sbr.rel (0) target = $region9
    $region8: #{affn_forward.1} parent=1 // pred_region
      _
    $region9: #{affn_forward.1} parent=1 // pred_fallthru
      _
    // Predicated region
    $region10: #{affn_forward.1} parent=1 // pred_check
      _
    $region11: #{affn_forward.1} parent=1 // pred_check_branch
      %19 = sbr.rel (0) target = $region13
    $region12: #{affn_forward.1} parent=1 // pred_region
      _
    $region13: #{affn_forward.1} parent=1 // pred_fallthru
      _
    // Predicated region
    $region14: #{affn_forward.1} parent=1 // pred_check
      _
    $region15: #{affn_forward.1} parent=1 // pred_check_branch
      %21 = sbr.rel (0) target = $region17
    $region16: #{affn_forward.1} parent=1 // pred_region
      _
    $region17: #{affn_forward.1} parent=1 // pred_fallthru
      _
    // Predicated region
    $region18: #{affn_forward.1} parent=1 // pred_check
      _
    $region19: #{affn_forward.1} parent=1 // pred_check_branch
      %23 = sbr.rel (0) target = $region21
    $region20: #{affn_forward.1} parent=1 // pred_region
      _
    $region21: #{affn_forward.1} parent=1 // pred_fallthru
      _
    // Predicated region
    $region22: #{affn_forward.1} parent=1 // pred_check
      _
    $region23: #{affn_forward.1} parent=1 // pred_check_branch
      %25 = sbr.rel (0) target = $region25
    $region24: #{affn_forward.1} parent=1 // pred_region
      _
    $region25: #{affn_forward.1} parent=1 // pred_fallthru
      _
    // Predicated region
    $region26: #{affn_forward.1} parent=1 // pred_check
      _
    $region27: #{affn_forward.1} parent=1 // pred_check_branch
      %27 = sbr.rel (0) target = $region29
    $region28: #{affn_forward.1} parent=1 // pred_region
      _
    $region29: #{affn_forward.1} parent=1 // pred_fallthru
      _
    // Predicated region
    $region30: #{affn_forward.1} parent=1 // pred_check
      _
    $region31: #{affn_forward.1} parent=1 // pred_check_branch
      %29 = sbr.rel (0) target = $region33
    $region32: #{affn_forward.1} parent=1 // pred_region
      %s31 = ssub.s32 16, 16
      %32 = vsyncadd [#allocation4], %s31
      %s34 = sshll.u32 %s7, 4
      %s35 = int_to_ptr.vmem [resolvable:$true] %s34
      %37 = dma.vmem_to_smem %s35, 16, [#allocation3], [#allocation4]
    $region33: #{affn_forward.1} parent=1 // pred_fallthru
      _
    // Predicated region
    $region34: #{affn_forward.1} parent=1 // pred_check
      _
    $region35: #{affn_forward.1} parent=1 // pred_check_branch
      %39 = sbr.rel (0) target = $region37
    $region36: #{affn_forward.1} parent=1 // pred_region
      %40 = dma.done [#allocation4], 16
    $region37: #{affn_forward.1} parent=1 // pred_fallthru
      _
    %41 = sfence
    %v43 = vld [vmem:[%s0] sm:$0xf]
    %v45 = vlaneseq
    %v46 = vshrl.u32 %v45, 7
    %v47 = vsub.s32 0, %v46
    %v48 = vrot.slane %v43, %v47
    %v49 = vlaneseq
    %v50 = vshrl.u32 %v49, 7
    %v51 = vsub.s32 1, %v50
    %v52 = vrot.slane %v43, %v51
    %v53 = vlaneseq
    %v54 = vshrl.u32 %v53, 7
    %v55 = vsub.s32 2, %v54
    %v56 = vrot.slane %v43, %v55
    %v57 = vlaneseq
    %v58 = vshrl.u32 %v57, 7
    %v59 = vsub.s32 3, %v58
    %v60 = vrot.slane %v43, %v59
    %65 = vrot.lane.b32.xlu0 %v48, 34
    %v66 = vpop.permute.xlu0 %65
    %67 = vrot.lane.b32.xlu0 %v52, 34
    %v68 = vpop.permute.xlu0 %67
    %69 = vrot.lane.b32.xlu0 %v56, 34
    %v70 = vpop.permute.xlu0 %69
    %71 = vrot.lane.b32.xlu0 %v60, 34
    %v72 = vpop.permute.xlu0 %71
    %v73 = vlaneseq
    %v74 = vand.u32 %v73, 127
    %vm75 = vcmp.lt.s32.totalorder %v74, 34
    %v76 = vsel %vm75, %v70, %v72
    %v77 = vsel %vm75, %v68, %v70
    %v78 = vsel %vm75, %v66, %v68
    %v79 = vsel %vm75, %v72, %v66
    %v80 = vld [vmem:[%s6] ss:$8 sm:$0xf]
    %v82 = vlaneseq
    %v83 = vshrl.u32 %v82, 7
    %v84 = vsub.s32 0, %v83
    %v85 = vrot.slane %v80, %v84
    %v86 = vlaneseq
    %v87 = vshrl.u32 %v86, 7
    %v88 = vsub.s32 1, %v87
    %v89 = vrot.slane %v80, %v88
    %v90 = vlaneseq
    %v91 = vshrl.u32 %v90, 7
    %v92 = vsub.s32 2, %v91
    %v93 = vrot.slane %v80, %v92
    %v94 = vlaneseq
    %v95 = vshrl.u32 %v94, 7
    %v96 = vsub.s32 3, %v95
    %v97 = vrot.slane %v80, %v96
    %v102 = vmul.f32 %v79, %v85
    %v103 = vmul.f32 %v78, %v89
    %v104 = vmul.f32 %v77, %v93
    %v105 = vmul.f32 %v76, %v97
    %v106 = vpack.c.bf16 %v102, %v102
    %v107 = vpack.c.bf16 %v103, %v103
    %v108 = vpack.c.bf16 %v104, %v104
    %v109 = vpack.c.bf16 %v105, %v105
    %v114 = vunpack.c.l.b16 %v106
    %v115 = vunpack.c.l.b16 %v107
    %v116 = vunpack.c.l.b16 %v108
    %v117 = vunpack.c.l.b16 %v109
    %v118 = vpack.c.b16 %v115, %v114
    %v119 = vpack.c.b16 %v117, %v116
    %vm122 = vcmask 1040384
    %vm123 = vsmask.f32 256
    %vm124 = vmand %vm122, %vm123
    %vm125 = vcmask 1044484
    %vm126 = vsmask.f32 4352
    %vm127 = vmand %vm125, %vm126
    %vm128 = vmor %vm127, %vm124
    %v129 = vld [vmem:[#allocation2] sm:$0x11]
    %v130 = vsel %vm128, %v118, %v129
    %131 = vst [vmem:[#allocation2] sm:$0x11] %v130
    %v132 = vld [vmem:[#allocation2 + $0x8] sm:$0x11]
    %v133 = vsel %vm128, %v119, %v132
    %134 = vst [vmem:[#allocation2 + $0x8] sm:$0x11] %v133
    %135 = vrot.lane.b32.xlu0 %v48, 33
    %v136 = vpop.permute.xlu0 %135
    %137 = vrot.lane.b32.xlu0 %v52, 33
    %v138 = vpop.permute.xlu0 %137
    %139 = vrot.lane.b32.xlu0 %v56, 33
    %v140 = vpop.permute.xlu0 %139
    %141 = vrot.lane.b32.xlu0 %v60, 33
    %v142 = vpop.permute.xlu0 %141
    %vm143 = vcmp.lt.s32.totalorder %v74, 33
    %v144 = vsel %vm143, %v140, %v142
    %v145 = vsel %vm143, %v138, %v140
    %v146 = vsel %vm143, %v136, %v138
    %v147 = vsel %vm143, %v142, %v136
    %s148 = scalar_lea.vmem %s6, 1
    %v149 = vld [vmem:[%s148] ss:$8 sm:$0xf]
    %v151 = vlaneseq
    %v152 = vshrl.u32 %v151, 7
    %v153 = vsub.s32 0, %v152
    %v154 = vrot.slane %v149, %v153
    %v155 = vlaneseq
    %v156 = vshrl.u32 %v155, 7
    %v157 = vsub.s32 1, %v156
    %v158 = vrot.slane %v149, %v157
    %v159 = vlaneseq
    %v160 = vshrl.u32 %v159, 7
    %v161 = vsub.s32 2, %v160
    %v162 = vrot.slane %v149, %v161
    %v163 = vlaneseq
    %v164 = vshrl.u32 %v163, 7
    %v165 = vsub.s32 3, %v164
    %v166 = vrot.slane %v149, %v165
    %v171 = vmul.f32 %v147, %v154
    %v172 = vmul.f32 %v146, %v158
    %v173 = vmul.f32 %v145, %v162
    %v174 = vmul.f32 %v144, %v166
    %v175 = vpack.c.bf16 %v171, %v171
    %v176 = vpack.c.bf16 %v172, %v172
    %v177 = vpack.c.bf16 %v173, %v173
    %v178 = vpack.c.bf16 %v174, %v174
    %v183 = vunpack.c.l.b16 %v175
    %v184 = vunpack.c.l.b16 %v176
    %v185 = vunpack.c.l.b16 %v177
    %v186 = vunpack.c.l.b16 %v178
    %v187 = vpack.c.b16 %v184, %v183
    %v188 = vpack.c.b16 %v186, %v185
    %v190 = vshll.u32 %v187, 16
    %v193 = vshll.u32 %v188, 16
    %vm197 = vsmask.f32 7938
    %vm198 = vmand %vm122, %vm197
    %vm199 = vsmask.f32 7954
    %vm200 = vmand %vm125, %vm199
    %vm201 = vmor %vm200, %vm198
    %v202 = vld [vmem:[#allocation2] sm:$0x11]
    %v203 = vsel %vm201, %v190, %v202
    %204 = vst [vmem:[#allocation2] sm:$0x11] %v203
    %v205 = vld [vmem:[#allocation2 + $0x8] sm:$0x11]
    %v206 = vsel %vm201, %v193, %v205
    %207 = vst [vmem:[#allocation2 + $0x8] sm:$0x11] %v206
    %208 = vrot.lane.b32.xlu0 %v48, 32
    %v209 = vpop.permute.xlu0 %208
    %210 = vrot.lane.b32.xlu0 %v52, 32
    %v211 = vpop.permute.xlu0 %210
    %212 = vrot.lane.b32.xlu0 %v56, 32
    %v213 = vpop.permute.xlu0 %212
    %214 = vrot.lane.b32.xlu0 %v60, 32
    %v215 = vpop.permute.xlu0 %214
    %vm216 = vcmp.lt.s32.totalorder %v74, 32
    %v217 = vsel %vm216, %v213, %v215
    %v218 = vsel %vm216, %v211, %v213
    %v219 = vsel %vm216, %v209, %v211
    %v220 = vsel %vm216, %v215, %v209
    %s221 = scalar_lea.vmem %s6, 2
    %v222 = vld [vmem:[%s221] ss:$8 sm:$0xf]
    %v224 = vlaneseq
    %v225 = vshrl.u32 %v224, 7
    %v226 = vsub.s32 0, %v225
    %v227 = vrot.slane %v222, %v226
    %v228 = vlaneseq
    %v229 = vshrl.u32 %v228, 7
    %v230 = vsub.s32 1, %v229
    %v231 = vrot.slane %v222, %v230
    %v232 = vlaneseq
    %v233 = vshrl.u32 %v232, 7
    %v234 = vsub.s32 2, %v233
    %v235 = vrot.slane %v222, %v234
    %v236 = vlaneseq
    %v237 = vshrl.u32 %v236, 7
    %v238 = vsub.s32 3, %v237
    %v239 = vrot.slane %v222, %v238
    %v244 = vmul.f32 %v220, %v227
    %v245 = vmul.f32 %v219, %v231
    %v246 = vmul.f32 %v218, %v235
    %v247 = vmul.f32 %v217, %v239
    %v248 = vpack.c.bf16 %v244, %v244
    %v249 = vpack.c.bf16 %v245, %v245
    %v250 = vpack.c.bf16 %v246, %v246
    %v251 = vpack.c.bf16 %v247, %v247
    %v256 = vunpack.c.l.b16 %v248
    %v257 = vunpack.c.l.b16 %v249
    %v258 = vunpack.c.l.b16 %v250
    %v259 = vunpack.c.l.b16 %v251
    %v260 = vpack.c.b16 %v257, %v256
    %v261 = vpack.c.b16 %v259, %v258
    %v262 = vrot.slane %v260, 7
    %v263 = vrot.slane %v261, 7
    %vm266 = vcmask 1041409
    %vm267 = vsmask.f32 1280
    %vm268 = vmand %vm266, %vm267
    %vm269 = vcmask 1045509
    %vm270 = vsmask.f32 5376
    %vm271 = vmand %vm269, %vm270
    %vm272 = vmor %vm271, %vm268
    %v273 = vld [vmem:[#allocation2] sm:$0x22]
    %v274 = vsel %vm272, %v262, %v273
    %275 = vst [vmem:[#allocation2] sm:$0x22] %v274
    %v276 = vld [vmem:[#allocation2 + $0x8] sm:$0x22]
    %v277 = vsel %vm272, %v263, %v276
    %278 = vst [vmem:[#allocation2 + $0x8] sm:$0x22] %v277
    %279 = vrot.lane.b32.xlu0 %v48, 31
    %v280 = vpop.permute.xlu0 %279
    %281 = vrot.lane.b32.xlu0 %v52, 31
    %v282 = vpop.permute.xlu0 %281
    %283 = vrot.lane.b32.xlu0 %v56, 31
    %v284 = vpop.permute.xlu0 %283
    %285 = vrot.lane.b32.xlu0 %v60, 31
    %v286 = vpop.permute.xlu0 %285
    %vm287 = vcmp.lt.s32.totalorder %v74, 31
    %v288 = vsel %vm287, %v284, %v286
    %v289 = vsel %vm287, %v282, %v284
    %v290 = vsel %vm287, %v280, %v282
    %v291 = vsel %vm287, %v286, %v280
    %s292 = scalar_lea.vmem %s6, 3
    %v293 = vld [vmem:[%s292] ss:$8 sm:$0xf]
    %v295 = vlaneseq
    %v296 = vshrl.u32 %v295, 7
    %v297 = vsub.s32 0, %v296
    %v298 = vrot.slane %v293, %v297
    %v299 = vlaneseq
    %v300 = vshrl.u32 %v299, 7
    %v301 = vsub.s32 1, %v300
    %v302 = vrot.slane %v293, %v301
    %v303 = vlaneseq
    %v304 = vshrl.u32 %v303, 7
    %v305 = vsub.s32 2, %v304
    %v306 = vrot.slane %v293, %v305
    %v307 = vlaneseq
    %v308 = vshrl.u32 %v307, 7
    %v309 = vsub.s32 3, %v308
    %v310 = vrot.slane %v293, %v309
    %v315 = vmul.f32 %v291, %v298
    %v316 = vmul.f32 %v290, %v302
    %v317 = vmul.f32 %v289, %v306
    %v318 = vmul.f32 %v288, %v310
    %v319 = vpack.c.bf16 %v315, %v315
    %v320 = vpack.c.bf16 %v316, %v316
    %v321 = vpack.c.bf16 %v317, %v317
    %v322 = vpack.c.bf16 %v318, %v318
    %v327 = vunpack.c.l.b16 %v319
    %v328 = vunpack.c.l.b16 %v320
    %v329 = vunpack.c.l.b16 %v321
    %v330 = vunpack.c.l.b16 %v322
    %v331 = vpack.c.b16 %v328, %v327
    %v332 = vpack.c.b16 %v330, %v329
    %v334 = vshll.u32 %v331, 16
    %v336 = vrot.slane %v334, 7
    %v338 = vshll.u32 %v332, 16
    %v340 = vrot.slane %v338, 7
    %vm343 = vsmask.f32 7942
    %vm344 = vmand %vm266, %vm343
    %vm345 = vsmask.f32 7958
    %vm346 = vmand %vm269, %vm345
    %vm347 = vmor %vm346, %vm344
    %v348 = vld [vmem:[#allocation2] sm:$0x22]
    %v349 = vsel %vm347, %v336, %v348
    %350 = vst [vmem:[#allocation2] sm:$0x22] %v349
    %v351 = vld [vmem:[#allocation2 + $0x8] sm:$0x22]
    %v352 = vsel %vm347, %v340, %v351
    %353 = vst [vmem:[#allocation2 + $0x8] sm:$0x22] %v352
    %354 = vrot.lane.b32.xlu0 %v48, 30
    %v355 = vpop.permute.xlu0 %354
    %356 = vrot.lane.b32.xlu0 %v52, 30
    %v357 = vpop.permute.xlu0 %356
    %358 = vrot.lane.b32.xlu0 %v56, 30
    %v359 = vpop.permute.xlu0 %358
    %360 = vrot.lane.b32.xlu0 %v60, 30
    %v361 = vpop.permute.xlu0 %360
    %vm362 = vcmp.lt.s32.totalorder %v74, 30
    %v363 = vsel %vm362, %v359, %v361
    %v364 = vsel %vm362, %v357, %v359
    %v365 = vsel %vm362, %v355, %v357
    %v366 = vsel %vm362, %v361, %v355
    %s367 = scalar_lea.vmem %s6, 4
    %v368 = vld [vmem:[%s367] ss:$8 sm:$0xf]
    %v370 = vlaneseq
    %v371 = vshrl.u32 %v370, 7
    %v372 = vsub.s32 0, %v371
    %v373 = vrot.slane %v368, %v372
    %v374 = vlaneseq
    %v375 = vshrl.u32 %v374, 7
    %v376 = vsub.s32 1, %v375
    %v377 = vrot.slane %v368, %v376
    %v378 = vlaneseq
    %v379 = vshrl.u32 %v378, 7
    %v380 = vsub.s32 2, %v379
    %v381 = vrot.slane %v368, %v380
    %v382 = vlaneseq
    %v383 = vshrl.u32 %v382, 7
    %v384 = vsub.s32 3, %v383
    %v385 = vrot.slane %v368, %v384
    %v390 = vmul.f32 %v366, %v373
    %v391 = vmul.f32 %v365, %v377
    %v392 = vmul.f32 %v364, %v381
    %v393 = vmul.f32 %v363, %v385
    %v394 = vpack.c.bf16 %v390, %v390
    %v395 = vpack.c.bf16 %v391, %v391
    %v396 = vpack.c.bf16 %v392, %v392
    %v397 = vpack.c.bf16 %v393, %v393
    %v402 = vunpack.c.l.b16 %v394
    %v403 = vunpack.c.l.b16 %v395
    %v404 = vunpack.c.l.b16 %v396
    %v405 = vunpack.c.l.b16 %v397
    %v406 = vpack.c.b16 %v403, %v402
    %v407 = vpack.c.b16 %v405, %v404
    %v408 = vrot.slane %v406, 6
    %v409 = vrot.slane %v407, 6
    %vm412 = vcmask 1042434
    %vm413 = vsmask.f32 2304
    %vm414 = vmand %vm412, %vm413
    %vm415 = vcmask 1046534
    %vm416 = vsmask.f32 6400
    %vm417 = vmand %vm415, %vm416
    %vm418 = vmor %vm417, %vm414
    %v419 = vld [vmem:[#allocation2] sm:$0x44]
    %v420 = vsel %vm418, %v408, %v419
    %421 = vst [vmem:[#allocation2] sm:$0x44] %v420
    %v422 = vld [vmem:[#allocation2 + $0x8] sm:$0x44]
    %v423 = vsel %vm418, %v409, %v422
    %424 = vst [vmem:[#allocation2 + $0x8] sm:$0x44] %v423
    %425 = vrot.lane.b32.xlu0 %v48, 18
    %v426 = vpop.permute.xlu0 %425
    %427 = vrot.lane.b32.xlu0 %v52, 18
    %v428 = vpop.permute.xlu0 %427
    %429 = vrot.lane.b32.xlu0 %v56, 18
    %v430 = vpop.permute.xlu0 %429
    %431 = vrot.lane.b32.xlu0 %v60, 18
    %v432 = vpop.permute.xlu0 %431
    %vm433 = vcmp.lt.s32.totalorder %v74, 18
    %v434 = vsel %vm433, %v430, %v432
    %v435 = vsel %vm433, %v428, %v430
    %v436 = vsel %vm433, %v426, %v428
    %v437 = vsel %vm433, %v432, %v426
    %s438 = scalar_lea.vmem %s6, 5
    %v439 = vld [vmem:[%s438] ss:$8 sm:$0xf]
    %v441 = vlaneseq
    %v442 = vshrl.u32 %v441, 7
    %v443 = vsub.s32 0, %v442
    %v444 = vrot.slane %v439, %v443
    %v445 = vlaneseq
    %v446 = vshrl.u32 %v445, 7
    %v447 = vsub.s32 1, %v446
    %v448 = vrot.slane %v439, %v447
    %v449 = vlaneseq
    %v450 = vshrl.u32 %v449, 7
    %v451 = vsub.s32 2, %v450
    %v452 = vrot.slane %v439, %v451
    %v453 = vlaneseq
    %v454 = vshrl.u32 %v453, 7
    %v455 = vsub.s32 3, %v454
    %v456 = vrot.slane %v439, %v455
    %v461 = vmul.f32 %v437, %v444
    %v462 = vmul.f32 %v436, %v448
    %v463 = vmul.f32 %v435, %v452
    %v464 = vmul.f32 %v434, %v456
    %v465 = vpack.c.bf16 %v461, %v461
    %v466 = vpack.c.bf16 %v462, %v462
    %v467 = vpack.c.bf16 %v463, %v463
    %v468 = vpack.c.bf16 %v464, %v464
    %v473 = vunpack.c.l.b16 %v465
    %v474 = vunpack.c.l.b16 %v466
    %v475 = vunpack.c.l.b16 %v467
    %v476 = vunpack.c.l.b16 %v468
    %v477 = vpack.c.b16 %v474, %v473
    %v478 = vpack.c.b16 %v476, %v475
    %v480 = vshll.u32 %v477, 16
    %v482 = vrot.slane %v480, 6
    %v484 = vshll.u32 %v478, 16
    %v486 = vrot.slane %v484, 6
    %vm489 = vsmask.f32 7946
    %vm490 = vmand %vm412, %vm489
    %vm491 = vsmask.f32 7962
    %vm492 = vmand %vm415, %vm491
    %vm493 = vmor %vm492, %vm490
    %v494 = vld [vmem:[#allocation2] sm:$0x44]
    %v495 = vsel %vm493, %v482, %v494
    %496 = vst [vmem:[#allocation2] sm:$0x44] %v495
    %v497 = vld [vmem:[#allocation2 + $0x8] sm:$0x44]
    %v498 = vsel %vm493, %v486, %v497
    %499 = vst [vmem:[#allocation2 + $0x8] sm:$0x44] %v498
    %500 = vrot.lane.b32.xlu0 %v48, 17
    %v501 = vpop.permute.xlu0 %500
    %502 = vrot.lane.b32.xlu0 %v52, 17
    %v503 = vpop.permute.xlu0 %502
    %504 = vrot.lane.b32.xlu0 %v56, 17
    %v505 = vpop.permute.xlu0 %504
    %506 = vrot.lane.b32.xlu0 %v60, 17
    %v507 = vpop.permute.xlu0 %506
    %vm508 = vcmp.lt.s32.totalorder %v74, 17
    %v509 = vsel %vm508, %v505, %v507
    %v510 = vsel %vm508, %v503, %v505
    %v511 = vsel %vm508, %v501, %v503
    %v512 = vsel %vm508, %v507, %v501
    %s513 = scalar_lea.vmem %s6, 6
    %v514 = vld [vmem:[%s513] ss:$8 sm:$0xf]
    %v516 = vlaneseq
    %v517 = vshrl.u32 %v516, 7
    %v518 = vsub.s32 0, %v517
    %v519 = vrot.slane %v514, %v518
    %v520 = vlaneseq
    %v521 = vshrl.u32 %v520, 7
    %v522 = vsub.s32 1, %v521
    %v523 = vrot.slane %v514, %v522
    %v524 = vlaneseq
    %v525 = vshrl.u32 %v524, 7
    %v526 = vsub.s32 2, %v525
    %v527 = vrot.slane %v514, %v526
    %v528 = vlaneseq
    %v529 = vshrl.u32 %v528, 7
    %v530 = vsub.s32 3, %v529
    %v531 = vrot.slane %v514, %v530
    %v536 = vmul.f32 %v512, %v519
    %v537 = vmul.f32 %v511, %v523
    %v538 = vmul.f32 %v510, %v527
    %v539 = vmul.f32 %v509, %v531
    %v540 = vpack.c.bf16 %v536, %v536
    %v541 = vpack.c.bf16 %v537, %v537
    %v542 = vpack.c.bf16 %v538, %v538
    %v543 = vpack.c.bf16 %v539, %v539
    %v548 = vunpack.c.l.b16 %v540
    %v549 = vunpack.c.l.b16 %v541
    %v550 = vunpack.c.l.b16 %v542
    %v551 = vunpack.c.l.b16 %v543
    %v552 = vpack.c.b16 %v549, %v548
    %v553 = vpack.c.b16 %v551, %v550
    %v554 = vrot.slane %v552, 5
    %v555 = vrot.slane %v553, 5
    %vm558 = vcmask 1043459
    %vm559 = vsmask.f32 3328
    %vm560 = vmand %vm558, %vm559
    %vm561 = vcmask 1047559
    %vm562 = vsmask.f32 7424
    %vm563 = vmand %vm561, %vm562
    %vm564 = vmor %vm563, %vm560
    %v565 = vld [vmem:[#allocation2] sm:$0x88]
    %v566 = vsel %vm564, %v554, %v565
    %567 = vst [vmem:[#allocation2] sm:$0x88] %v566
    %v568 = vld [vmem:[#allocation2 + $0x8] sm:$0x88]
    %v569 = vsel %vm564, %v555, %v568
    %570 = vst [vmem:[#allocation2 + $0x8] sm:$0x88] %v569
    %571 = vrot.lane.b32.xlu0 %v48, 16
    %v572 = vpop.permute.xlu0 %571
    %573 = vrot.lane.b32.xlu0 %v52, 16
    %v574 = vpop.permute.xlu0 %573
    %575 = vrot.lane.b32.xlu0 %v56, 16
    %v576 = vpop.permute.xlu0 %575
    %577 = vrot.lane.b32.xlu0 %v60, 16
    %v578 = vpop.permute.xlu0 %577
    %vm579 = vcmp.lt.s32.totalorder %v74, 16
    %v580 = vsel %vm579, %v576, %v578
    %v581 = vsel %vm579, %v574, %v576
    %v582 = vsel %vm579, %v572, %v574
    %v583 = vsel %vm579, %v578, %v572
    %s584 = scalar_lea.vmem %s6, 7
    %v585 = vld [vmem:[%s584] ss:$8 sm:$0xf]
    %v587 = vlaneseq
    %v588 = vshrl.u32 %v587, 7
    %v589 = vsub.s32 0, %v588
    %v590 = vrot.slane %v585, %v589
    %v591 = vlaneseq
    %v592 = vshrl.u32 %v591, 7
    %v593 = vsub.s32 1, %v592
    %v594 = vrot.slane %v585, %v593
    %v595 = vlaneseq
    %v596 = vshrl.u32 %v595, 7
    %v597 = vsub.s32 2, %v596
    %v598 = vrot.slane %v585, %v597
    %v599 = vlaneseq
    %v600 = vshrl.u32 %v599, 7
    %v601 = vsub.s32 3, %v600
    %v602 = vrot.slane %v585, %v601
    %v607 = vmul.f32 %v583, %v590
    %v608 = vmul.f32 %v582, %v594
    %v609 = vmul.f32 %v581, %v598
    %v610 = vmul.f32 %v580, %v602
    %v611 = vpack.c.bf16 %v607, %v607
    %v612 = vpack.c.bf16 %v608, %v608
    %v613 = vpack.c.bf16 %v609, %v609
    %v614 = vpack.c.bf16 %v610, %v610
    %v619 = vunpack.c.l.b16 %v611
    %v620 = vunpack.c.l.b16 %v612
    %v621 = vunpack.c.l.b16 %v613
    %v622 = vunpack.c.l.b16 %v614
    %v623 = vpack.c.b16 %v620, %v619
    %v624 = vpack.c.b16 %v622, %v621
    %v626 = vshll.u32 %v623, 16
    %v628 = vrot.slane %v626, 5
    %v630 = vshll.u32 %v624, 16
    %v632 = vrot.slane %v630, 5
    %vm635 = vsmask.f32 7950
    %vm636 = vmand %vm558, %vm635
    %vm637 = vsmask.f32 7966
    %vm638 = vmand %vm561, %vm637
    %vm639 = vmor %vm638, %vm636
    %v640 = vld [vmem:[#allocation2] sm:$0x88]
    %v641 = vsel %vm639, %v628, %v640
    %642 = vst [vmem:[#allocation2] sm:$0x88] %v641
    %v643 = vld [vmem:[#allocation2 + $0x8] sm:$0x88]
    %v644 = vsel %vm639, %v632, %v643
    %645 = vst [vmem:[#allocation2 + $0x8] sm:$0x88] %v644
    %646 = vrot.lane.b32.xlu0 %v48, 15
    %v647 = vpop.permute.xlu0 %646
    %648 = vrot.lane.b32.xlu0 %v52, 15
    %v649 = vpop.permute.xlu0 %648
    %650 = vrot.lane.b32.xlu0 %v56, 15
    %v651 = vpop.permute.xlu0 %650
    %652 = vrot.lane.b32.xlu0 %v60, 15
    %v653 = vpop.permute.xlu0 %652
    %vm654 = vcmp.lt.s32.totalorder %v74, 15
    %v655 = vsel %vm654, %v651, %v653
    %v656 = vsel %vm654, %v649, %v651
    %v657 = vsel %vm654, %v647, %v649
    %v658 = vsel %vm654, %v653, %v647
    %s659 = scalar_lea.vmem %s6, 32
    %v660 = vld [vmem:[%s659] ss:$8 sm:$0xf]
    %v662 = vlaneseq
    %v663 = vshrl.u32 %v662, 7
    %v664 = vsub.s32 0, %v663
    %v665 = vrot.slane %v660, %v664
    %v666 = vlaneseq
    %v667 = vshrl.u32 %v666, 7
    %v668 = vsub.s32 1, %v667
    %v669 = vrot.slane %v660, %v668
    %v670 = vlaneseq
    %v671 = vshrl.u32 %v670, 7
    %v672 = vsub.s32 2, %v671
    %v673 = vrot.slane %v660, %v672
    %v674 = vlaneseq
    %v675 = vshrl.u32 %v674, 7
    %v676 = vsub.s32 3, %v675
    %v677 = vrot.slane %v660, %v676
    %v682 = vmul.f32 %v658, %v665
    %v683 = vmul.f32 %v657, %v669
    %v684 = vmul.f32 %v656, %v673
    %v685 = vmul.f32 %v655, %v677
    %v686 = vpack.c.bf16 %v682, %v682
    %v687 = vpack.c.bf16 %v683, %v683
    %v688 = vpack.c.bf16 %v684, %v684
    %v689 = vpack.c.bf16 %v685, %v685
    %v694 = vunpack.c.l.b16 %v686
    %v695 = vunpack.c.l.b16 %v687
    %v696 = vunpack.c.l.b16 %v688
    %v697 = vunpack.c.l.b16 %v689
    %v698 = vpack.c.b16 %v695, %v694
    %v699 = vpack.c.b16 %v697, %v696
    %v702 = vld [vmem:[#allocation2 + $0x10] sm:$0x11]
    %v703 = vsel %vm128, %v698, %v702
    %704 = vst [vmem:[#allocation2 + $0x10] sm:$0x11] %v703
    %v705 = vld [vmem:[#allocation2 + $0x18] sm:$0x11]
    %v706 = vsel %vm128, %v699, %v705
    %707 = vst [vmem:[#allocation2 + $0x18] sm:$0x11] %v706
    %708 = vrot.lane.b32.xlu0 %v48, 14
    %v709 = vpop.permute.xlu0 %708
    %710 = vrot.lane.b32.xlu0 %v52, 14
    %v711 = vpop.permute.xlu0 %710
    %712 = vrot.lane.b32.xlu0 %v56, 14
    %v713 = vpop.permute.xlu0 %712
    %714 = vrot.lane.b32.xlu0 %v60, 14
    %v715 = vpop.permute.xlu0 %714
    %vm716 = vcmp.lt.s32.totalorder %v74, 14
    %v717 = vsel %vm716, %v713, %v715
    %v718 = vsel %vm716, %v711, %v713
    %v719 = vsel %vm716, %v709, %v711
    %v720 = vsel %vm716, %v715, %v709
    %s721 = scalar_lea.vmem %s6, 33
    %v722 = vld [vmem:[%s721] ss:$8 sm:$0xf]
    %v724 = vlaneseq
    %v725 = vshrl.u32 %v724, 7
    %v726 = vsub.s32 0, %v725
    %v727 = vrot.slane %v722, %v726
    %v728 = vlaneseq
    %v729 = vshrl.u32 %v728, 7
    %v730 = vsub.s32 1, %v729
    %v731 = vrot.slane %v722, %v730
    %v732 = vlaneseq
    %v733 = vshrl.u32 %v732, 7
    %v734 = vsub.s32 2, %v733
    %v735 = vrot.slane %v722, %v734
    %v736 = vlaneseq
    %v737 = vshrl.u32 %v736, 7
    %v738 = vsub.s32 3, %v737
    %v739 = vrot.slane %v722, %v738
    %v744 = vmul.f32 %v720, %v727
    %v745 = vmul.f32 %v719, %v731
    %v746 = vmul.f32 %v718, %v735
    %v747 = vmul.f32 %v717, %v739
    %v748 = vpack.c.bf16 %v744, %v744
    %v749 = vpack.c.bf16 %v745, %v745
    %v750 = vpack.c.bf16 %v746, %v746
    %v751 = vpack.c.bf16 %v747, %v747
    %v756 = vunpack.c.l.b16 %v748
    %v757 = vunpack.c.l.b16 %v749
    %v758 = vunpack.c.l.b16 %v750
    %v759 = vunpack.c.l.b16 %v751
    %v760 = vpack.c.b16 %v757, %v756
    %v761 = vpack.c.b16 %v759, %v758
    %v763 = vshll.u32 %v760, 16
    %v766 = vshll.u32 %v761, 16
    %v770 = vld [vmem:[#allocation2 + $0x10] sm:$0x11]
    %v771 = vsel %vm201, %v763, %v770
    %772 = vst [vmem:[#allocation2 + $0x10] sm:$0x11] %v771
    %v773 = vld [vmem:[#allocation2 + $0x18] sm:$0x11]
    %v774 = vsel %vm201, %v766, %v773
    %775 = vst [vmem:[#allocation2 + $0x18] sm:$0x11] %v774
    %776 = vrot.lane.b32.xlu0 %v48, 2
    %v777 = vpop.permute.xlu0 %776
    %778 = vrot.lane.b32.xlu0 %v52, 2
    %v779 = vpop.permute.xlu0 %778
    %780 = vrot.lane.b32.xlu0 %v56, 2
    %v781 = vpop.permute.xlu0 %780
    %782 = vrot.lane.b32.xlu0 %v60, 2
    %v783 = vpop.permute.xlu0 %782
    %vm784 = vcmp.lt.s32.totalorder %v74, 2
    %v785 = vsel %vm784, %v781, %v783
    %v786 = vsel %vm784, %v779, %v781
    %v787 = vsel %vm784, %v777, %v779
    %v788 = vsel %vm784, %v783, %v777
    %s789 = scalar_lea.vmem %s6, 34
    %v790 = vld [vmem:[%s789] ss:$8 sm:$0xf]
    %v792 = vlaneseq
    %v793 = vshrl.u32 %v792, 7
    %v794 = vsub.s32 0, %v793
    %v795 = vrot.slane %v790, %v794
    %v796 = vlaneseq
    %v797 = vshrl.u32 %v796, 7
    %v798 = vsub.s32 1, %v797
    %v799 = vrot.slane %v790, %v798
    %v800 = vlaneseq
    %v801 = vshrl.u32 %v800, 7
    %v802 = vsub.s32 2, %v801
    %v803 = vrot.slane %v790, %v802
    %v804 = vlaneseq
    %v805 = vshrl.u32 %v804, 7
    %v806 = vsub.s32 3, %v805
    %v807 = vrot.slane %v790, %v806
    %v812 = vmul.f32 %v788, %v795
    %v813 = vmul.f32 %v787, %v799
    %v814 = vmul.f32 %v786, %v803
    %v815 = vmul.f32 %v785, %v807
    %v816 = vpack.c.bf16 %v812, %v812
    %v817 = vpack.c.bf16 %v813, %v813
    %v818 = vpack.c.bf16 %v814, %v814
    %v819 = vpack.c.bf16 %v815, %v815
    %v824 = vunpack.c.l.b16 %v816
    %v825 = vunpack.c.l.b16 %v817
    %v826 = vunpack.c.l.b16 %v818
    %v827 = vunpack.c.l.b16 %v819
    %v828 = vpack.c.b16 %v825, %v824
    %v829 = vpack.c.b16 %v827, %v826
    %v830 = vrot.slane %v828, 7
    %v831 = vrot.slane %v829, 7
    %v834 = vld [vmem:[#allocation2 + $0x10] sm:$0x22]
    %v835 = vsel %vm272, %v830, %v834
    %836 = vst [vmem:[#allocation2 + $0x10] sm:$0x22] %v835
    %v837 = vld [vmem:[#allocation2 + $0x18] sm:$0x22]
    %v838 = vsel %vm272, %v831, %v837
    %839 = vst [vmem:[#allocation2 + $0x18] sm:$0x22] %v838
    %840 = vrot.lane.b32.xlu0 %v48, 1
    %v841 = vpop.permute.xlu0 %840
    %842 = vrot.lane.b32.xlu0 %v52, 1
    %v843 = vpop.permute.xlu0 %842
    %844 = vrot.lane.b32.xlu0 %v56, 1
    %v845 = vpop.permute.xlu0 %844
    %846 = vrot.lane.b32.xlu0 %v60, 1
    %v847 = vpop.permute.xlu0 %846
    %vm848 = vcmp.lt.s32.totalorder %v74, 1
    %v849 = vsel %vm848, %v845, %v847
    %v850 = vsel %vm848, %v843, %v845
    %v851 = vsel %vm848, %v841, %v843
    %v852 = vsel %vm848, %v847, %v841
    %s853 = scalar_lea.vmem %s6, 35
    %v854 = vld [vmem:[%s853] ss:$8 sm:$0xf]
    %v856 = vlaneseq
    %v857 = vshrl.u32 %v856, 7
    %v858 = vsub.s32 0, %v857
    %v859 = vrot.slane %v854, %v858
    %v860 = vlaneseq
    %v861 = vshrl.u32 %v860, 7
    %v862 = vsub.s32 1, %v861
    %v863 = vrot.slane %v854, %v862
    %v864 = vlaneseq
    %v865 = vshrl.u32 %v864, 7
    %v866 = vsub.s32 2, %v865
    %v867 = vrot.slane %v854, %v866
    %v868 = vlaneseq
    %v869 = vshrl.u32 %v868, 7
    %v870 = vsub.s32 3, %v869
    %v871 = vrot.slane %v854, %v870
    %v876 = vmul.f32 %v852, %v859
    %v877 = vmul.f32 %v851, %v863
    %v878 = vmul.f32 %v850, %v867
    %v879 = vmul.f32 %v849, %v871
    %v880 = vpack.c.bf16 %v876, %v876
    %v881 = vpack.c.bf16 %v877, %v877
    %v882 = vpack.c.bf16 %v878, %v878
    %v883 = vpack.c.bf16 %v879, %v879
    %v888 = vunpack.c.l.b16 %v880
    %v889 = vunpack.c.l.b16 %v881
    %v890 = vunpack.c.l.b16 %v882
    %v891 = vunpack.c.l.b16 %v883
    %v892 = vpack.c.b16 %v889, %v888
    %v893 = vpack.c.b16 %v891, %v890
    %v895 = vshll.u32 %v892, 16
    %v897 = vrot.slane %v895, 7
    %v899 = vshll.u32 %v893, 16
    %v901 = vrot.slane %v899, 7
    %v904 = vld [vmem:[#allocation2 + $0x10] sm:$0x22]
    %v905 = vsel %vm347, %v897, %v904
    %906 = vst [vmem:[#allocation2 + $0x10] sm:$0x22] %v905
    %v907 = vld [vmem:[#allocation2 + $0x18] sm:$0x22]
    %v908 = vsel %vm347, %v901, %v907
    %909 = vst [vmem:[#allocation2 + $0x18] sm:$0x22] %v908
    %v910 = vpack.c.bf16 %v48, %v48
    %v911 = vpack.c.bf16 %v52, %v52
    %v912 = vpack.c.bf16 %v56, %v56
    %v913 = vpack.c.bf16 %v60, %v60
    %v918 = vunpack.c.l.b16 %v910
    %v919 = vunpack.c.l.b16 %v911
    %v920 = vunpack.c.l.b16 %v912
    %v921 = vunpack.c.l.b16 %v913
    %v922 = vpack.c.b16 %v919, %v918
    %v923 = vpack.c.b16 %v921, %v920
    %v924 = vrot.slane %v922, 6
    %v925 = vrot.slane %v923, 6
    %v928 = vld [vmem:[#allocation2 + $0x10] sm:$0x44]
    %v929 = vsel %vm418, %v924, %v928
    %930 = vst [vmem:[#allocation2 + $0x10] sm:$0x44] %v929
    %v931 = vld [vmem:[#allocation2 + $0x18] sm:$0x44]
    %v932 = vsel %vm418, %v925, %v931
    %933 = vst [vmem:[#allocation2 + $0x18] sm:$0x44] %v932
    %934 = vrot.lane.b32.xlu0 %v48, 127
    %v935 = vpop.permute.xlu0 %934
    %936 = vrot.lane.b32.xlu0 %v52, 127
    %v937 = vpop.permute.xlu0 %936
    %938 = vrot.lane.b32.xlu0 %v56, 127
    %v939 = vpop.permute.xlu0 %938
    %940 = vrot.lane.b32.xlu0 %v60, 127
    %v941 = vpop.permute.xlu0 %940
    %vm942 = vcmp.lt.s32.totalorder %v74, 127
    %v943 = vsel %vm942, %v939, %v941
    %v944 = vsel %vm942, %v937, %v939
    %v945 = vsel %vm942, %v935, %v937
    %v946 = vsel %vm942, %v941, %v935
    %s947 = scalar_lea.vmem %s6, 37
    %v948 = vld [vmem:[%s947] ss:$8 sm:$0xf]
    %v950 = vlaneseq
    %v951 = vshrl.u32 %v950, 7
    %v952 = vsub.s32 0, %v951
    %v953 = vrot.slane %v948, %v952
    %v954 = vlaneseq
    %v955 = vshrl.u32 %v954, 7
    %v956 = vsub.s32 1, %v955
    %v957 = vrot.slane %v948, %v956
    %v958 = vlaneseq
    %v959 = vshrl.u32 %v958, 7
    %v960 = vsub.s32 2, %v959
    %v961 = vrot.slane %v948, %v960
    %v962 = vlaneseq
    %v963 = vshrl.u32 %v962, 7
    %v964 = vsub.s32 3, %v963
    %v965 = vrot.slane %v948, %v964
    %v970 = vmul.f32 %v945, %v953
    %v971 = vmul.f32 %v944, %v957
    %v972 = vmul.f32 %v943, %v961
    %v973 = vmul.f32 %v946, %v965
    %v974 = vpack.c.bf16 %v970, %v970
    %v975 = vpack.c.bf16 %v971, %v971
    %v976 = vpack.c.bf16 %v972, %v972
    %v977 = vpack.c.bf16 %v973, %v973
    %v982 = vunpack.c.l.b16 %v974
    %v983 = vunpack.c.l.b16 %v975
    %v984 = vunpack.c.l.b16 %v976
    %v985 = vunpack.c.l.b16 %v977
    %v986 = vpack.c.b16 %v983, %v982
    %v987 = vpack.c.b16 %v985, %v984
    %v989 = vshll.u32 %v986, 16
    %v991 = vrot.slane %v989, 6
    %v993 = vshll.u32 %v987, 16
    %v995 = vrot.slane %v993, 6
    %v998 = vld [vmem:[#allocation2 + $0x10] sm:$0x44]
    %v999 = vsel %vm493, %v991, %v998
    %1000 = vst [vmem:[#allocation2 + $0x10] sm:$0x44] %v999
    %v1001 = vld [vmem:[#allocation2 + $0x18] sm:$0x44]
    %v1002 = vsel %vm493, %v995, %v1001
    %1003 = vst [vmem:[#allocation2 + $0x18] sm:$0x44] %v1002
    %1004 = vrot.lane.b32.xlu0 %v48, 126
    %v1005 = vpop.permute.xlu0 %1004
    %1006 = vrot.lane.b32.xlu0 %v52, 126
    %v1007 = vpop.permute.xlu0 %1006
    %1008 = vrot.lane.b32.xlu0 %v56, 126
    %v1009 = vpop.permute.xlu0 %1008
    %1010 = vrot.lane.b32.xlu0 %v60, 126
    %v1011 = vpop.permute.xlu0 %1010
    %vm1012 = vcmp.lt.s32.totalorder %v74, 126
    %v1013 = vsel %vm1012, %v1009, %v1011
    %v1014 = vsel %vm1012, %v1007, %v1009
    %v1015 = vsel %vm1012, %v1005, %v1007
    %v1016 = vsel %vm1012, %v1011, %v1005
    %s1017 = scalar_lea.vmem %s6, 38
    %v1018 = vld [vmem:[%s1017] ss:$8 sm:$0xf]
    %v1020 = vlaneseq
    %v1021 = vshrl.u32 %v1020, 7
    %v1022 = vsub.s32 0, %v1021
    %v1023 = vrot.slane %v1018, %v1022
    %v1024 = vlaneseq
    %v1025 = vshrl.u32 %v1024, 7
    %v1026 = vsub.s32 1, %v1025
    %v1027 = vrot.slane %v1018, %v1026
    %v1028 = vlaneseq
    %v1029 = vshrl.u32 %v1028, 7
    %v1030 = vsub.s32 2, %v1029
    %v1031 = vrot.slane %v1018, %v1030
    %v1032 = vlaneseq
    %v1033 = vshrl.u32 %v1032, 7
    %v1034 = vsub.s32 3, %v1033
    %v1035 = vrot.slane %v1018, %v1034
    %v1040 = vmul.f32 %v1015, %v1023
    %v1041 = vmul.f32 %v1014, %v1027
    %v1042 = vmul.f32 %v1013, %v1031
    %v1043 = vmul.f32 %v1016, %v1035
    %v1044 = vpack.c.bf16 %v1040, %v1040
    %v1045 = vpack.c.bf16 %v1041, %v1041
    %v1046 = vpack.c.bf16 %v1042, %v1042
    %v1047 = vpack.c.bf16 %v1043, %v1043
    %v1052 = vunpack.c.l.b16 %v1044
    %v1053 = vunpack.c.l.b16 %v1045
    %v1054 = vunpack.c.l.b16 %v1046
    %v1055 = vunpack.c.l.b16 %v1047
    %v1056 = vpack.c.b16 %v1053, %v1052
    %v1057 = vpack.c.b16 %v1055, %v1054
    %v1058 = vrot.slane %v1056, 5
    %v1059 = vrot.slane %v1057, 5
    %v1062 = vld [vmem:[#allocation2 + $0x10] sm:$0x88]
    %v1063 = vsel %vm564, %v1058, %v1062
    %1064 = vst [vmem:[#allocation2 + $0x10] sm:$0x88] %v1063
    %v1065 = vld [vmem:[#allocation2 + $0x18] sm:$0x88]
    %v1066 = vsel %vm564, %v1059, %v1065
    %1067 = vst [vmem:[#allocation2 + $0x18] sm:$0x88] %v1066
    %1068 = vrot.lane.b32.xlu0 %v48, 114
    %v1069 = vpop.permute.xlu0 %1068
    %1070 = vrot.lane.b32.xlu0 %v52, 114
    %v1071 = vpop.permute.xlu0 %1070
    %1072 = vrot.lane.b32.xlu0 %v56, 114
    %v1073 = vpop.permute.xlu0 %1072
    %1074 = vrot.lane.b32.xlu0 %v60, 114
    %v1075 = vpop.permute.xlu0 %1074
    %vm1076 = vcmp.lt.s32.totalorder %v74, 114
    %v1077 = vsel %vm1076, %v1073, %v1075
    %v1078 = vsel %vm1076, %v1071, %v1073
    %v1079 = vsel %vm1076, %v1069, %v1071
    %v1080 = vsel %vm1076, %v1075, %v1069
    %s1081 = scalar_lea.vmem %s6, 39
    %v1082 = vld [vmem:[%s1081] ss:$8 sm:$0xf]
    %v1084 = vlaneseq
    %v1085 = vshrl.u32 %v1084, 7
    %v1086 = vsub.s32 0, %v1085
    %v1087 = vrot.slane %v1082, %v1086
    %v1088 = vlaneseq
    %v1089 = vshrl.u32 %v1088, 7
    %v1090 = vsub.s32 1, %v1089
    %v1091 = vrot.slane %v1082, %v1090
    %v1092 = vlaneseq
    %v1093 = vshrl.u32 %v1092, 7
    %v1094 = vsub.s32 2, %v1093
    %v1095 = vrot.slane %v1082, %v1094
    %v1096 = vlaneseq
    %v1097 = vshrl.u32 %v1096, 7
    %v1098 = vsub.s32 3, %v1097
    %v1099 = vrot.slane %v1082, %v1098
    %v1104 = vmul.f32 %v1079, %v1087
    %v1105 = vmul.f32 %v1078, %v1091
    %v1106 = vmul.f32 %v1077, %v1095
    %v1107 = vmul.f32 %v1080, %v1099
    %v1108 = vpack.c.bf16 %v1104, %v1104
    %v1109 = vpack.c.bf16 %v1105, %v1105
    %v1110 = vpack.c.bf16 %v1106, %v1106
    %v1111 = vpack.c.bf16 %v1107, %v1107
    %v1116 = vunpack.c.l.b16 %v1108
    %v1117 = vunpack.c.l.b16 %v1109
    %v1118 = vunpack.c.l.b16 %v1110
    %v1119 = vunpack.c.l.b16 %v1111
    %v1120 = vpack.c.b16 %v1117, %v1116
    %v1121 = vpack.c.b16 %v1119, %v1118
    %v1123 = vshll.u32 %v1120, 16
    %v1125 = vrot.slane %v1123, 5
    %v1127 = vshll.u32 %v1121, 16
    %v1129 = vrot.slane %v1127, 5
    %v1132 = vld [vmem:[#allocation2 + $0x10] sm:$0x88]
    %v1133 = vsel %vm639, %v1125, %v1132
    %1134 = vst [vmem:[#allocation2 + $0x10] sm:$0x88] %v1133
    %v1135 = vld [vmem:[#allocation2 + $0x18] sm:$0x88]
    %v1136 = vsel %vm639, %v1129, %v1135
    %1137 = vst [vmem:[#allocation2 + $0x18] sm:$0x88] %v1136
    %1138 = vrot.lane.b32.xlu0 %v48, 113
    %v1139 = vpop.permute.xlu0 %1138
    %1140 = vrot.lane.b32.xlu0 %v52, 113
    %v1141 = vpop.permute.xlu0 %1140
    %1142 = vrot.lane.b32.xlu0 %v56, 113
    %v1143 = vpop.permute.xlu0 %1142
    %1144 = vrot.lane.b32.xlu0 %v60, 113
    %v1145 = vpop.permute.xlu0 %1144
    %vm1146 = vcmp.lt.s32.totalorder %v74, 113
    %v1147 = vsel %vm1146, %v1143, %v1145
    %v1148 = vsel %vm1146, %v1141, %v1143
    %v1149 = vsel %vm1146, %v1139, %v1141
    %v1150 = vsel %vm1146, %v1145, %v1139
    %s1151 = scalar_lea.vmem %s6, 64
    %v1152 = vld [vmem:[%s1151] ss:$8 sm:$0xf]
    %v1154 = vlaneseq
    %v1155 = vshrl.u32 %v1154, 7
    %v1156 = vsub.s32 0, %v1155
    %v1157 = vrot.slane %v1152, %v1156
    %v1158 = vlaneseq
    %v1159 = vshrl.u32 %v1158, 7
    %v1160 = vsub.s32 1, %v1159
    %v1161 = vrot.slane %v1152, %v1160
    %v1162 = vlaneseq
    %v1163 = vshrl.u32 %v1162, 7
    %v1164 = vsub.s32 2, %v1163
    %v1165 = vrot.slane %v1152, %v1164
    %v1166 = vlaneseq
    %v1167 = vshrl.u32 %v1166, 7
    %v1168 = vsub.s32 3, %v1167
    %v1169 = vrot.slane %v1152, %v1168
    %v1174 = vmul.f32 %v1149, %v1157
    %v1175 = vmul.f32 %v1148, %v1161
    %v1176 = vmul.f32 %v1147, %v1165
    %v1177 = vmul.f32 %v1150, %v1169
    %v1178 = vpack.c.bf16 %v1174, %v1174
    %v1179 = vpack.c.bf16 %v1175, %v1175
    %v1180 = vpack.c.bf16 %v1176, %v1176
    %v1181 = vpack.c.bf16 %v1177, %v1177
    %v1186 = vunpack.c.l.b16 %v1178
    %v1187 = vunpack.c.l.b16 %v1179
    %v1188 = vunpack.c.l.b16 %v1180
    %v1189 = vunpack.c.l.b16 %v1181
    %v1190 = vpack.c.b16 %v1187, %v1186
    %v1191 = vpack.c.b16 %v1189, %v1188
    %v1194 = vld [vmem:[#allocation2 + $0x20] sm:$0x11]
    %v1195 = vsel %vm128, %v1190, %v1194
    %1196 = vst [vmem:[#allocation2 + $0x20] sm:$0x11] %v1195
    %v1197 = vld [vmem:[#allocation2 + $0x28] sm:$0x11]
    %v1198 = vsel %vm128, %v1191, %v1197
    %1199 = vst [vmem:[#allocation2 + $0x28] sm:$0x11] %v1198
    %1200 = vrot.lane.b32.xlu0 %v48, 112
    %v1201 = vpop.permute.xlu0 %1200
    %1202 = vrot.lane.b32.xlu0 %v52, 112
    %v1203 = vpop.permute.xlu0 %1202
    %1204 = vrot.lane.b32.xlu0 %v56, 112
    %v1205 = vpop.permute.xlu0 %1204
    %1206 = vrot.lane.b32.xlu0 %v60, 112
    %v1207 = vpop.permute.xlu0 %1206
    %vm1208 = vcmp.lt.s32.totalorder %v74, 112
    %v1209 = vsel %vm1208, %v1205, %v1207
    %v1210 = vsel %vm1208, %v1203, %v1205
    %v1211 = vsel %vm1208, %v1201, %v1203
    %v1212 = vsel %vm1208, %v1207, %v1201
    %s1213 = scalar_lea.vmem %s6, 65
    %v1214 = vld [vmem:[%s1213] ss:$8 sm:$0xf]
    %v1216 = vlaneseq
    %v1217 = vshrl.u32 %v1216, 7
    %v1218 = vsub.s32 0, %v1217
    %v1219 = vrot.slane %v1214, %v1218
    %v1220 = vlaneseq
    %v1221 = vshrl.u32 %v1220, 7
    %v1222 = vsub.s32 1, %v1221
    %v1223 = vrot.slane %v1214, %v1222
    %v1224 = vlaneseq
    %v1225 = vshrl.u32 %v1224, 7
    %v1226 = vsub.s32 2, %v1225
    %v1227 = vrot.slane %v1214, %v1226
    %v1228 = vlaneseq
    %v1229 = vshrl.u32 %v1228, 7
    %v1230 = vsub.s32 3, %v1229
    %v1231 = vrot.slane %v1214, %v1230
    %v1236 = vmul.f32 %v1211, %v1219
    %v1237 = vmul.f32 %v1210, %v1223
    %v1238 = vmul.f32 %v1209, %v1227
    %v1239 = vmul.f32 %v1212, %v1231
    %v1240 = vpack.c.bf16 %v1236, %v1236
    %v1241 = vpack.c.bf16 %v1237, %v1237
    %v1242 = vpack.c.bf16 %v1238, %v1238
    %v1243 = vpack.c.bf16 %v1239, %v1239
    %v1248 = vunpack.c.l.b16 %v1240
    %v1249 = vunpack.c.l.b16 %v1241
    %v1250 = vunpack.c.l.b16 %v1242
    %v1251 = vunpack.c.l.b16 %v1243
    %v1252 = vpack.c.b16 %v1249, %v1248
    %v1253 = vpack.c.b16 %v1251, %v1250
    %v1255 = vshll.u32 %v1252, 16
    %v1258 = vshll.u32 %v1253, 16
    %v1262 = vld [vmem:[#allocation2 + $0x20] sm:$0x11]
    %v1263 = vsel %vm201, %v1255, %v1262
    %1264 = vst [vmem:[#allocation2 + $0x20] sm:$0x11] %v1263
    %v1265 = vld [vmem:[#allocation2 + $0x28] sm:$0x11]
    %v1266 = vsel %vm201, %v1258, %v1265
    %1267 = vst [vmem:[#allocation2 + $0x28] sm:$0x11] %v1266
    %1268 = vrot.lane.b32.xlu0 %v48, 111
    %v1269 = vpop.permute.xlu0 %1268
    %1270 = vrot.lane.b32.xlu0 %v52, 111
    %v1271 = vpop.permute.xlu0 %1270
    %1272 = vrot.lane.b32.xlu0 %v56, 111
    %v1273 = vpop.permute.xlu0 %1272
    %1274 = vrot.lane.b32.xlu0 %v60, 111
    %v1275 = vpop.permute.xlu0 %1274
    %vm1276 = vcmp.lt.s32.totalorder %v74, 111
    %v1277 = vsel %vm1276, %v1273, %v1275
    %v1278 = vsel %vm1276, %v1271, %v1273
    %v1279 = vsel %vm1276, %v1269, %v1271
    %v1280 = vsel %vm1276, %v1275, %v1269
    %s1281 = scalar_lea.vmem %s6, 66
    %v1282 = vld [vmem:[%s1281] ss:$8 sm:$0xf]
    %v1284 = vlaneseq
    %v1285 = vshrl.u32 %v1284, 7
    %v1286 = vsub.s32 0, %v1285
    %v1287 = vrot.slane %v1282, %v1286
    %v1288 = vlaneseq
    %v1289 = vshrl.u32 %v1288, 7
    %v1290 = vsub.s32 1, %v1289
    %v1291 = vrot.slane %v1282, %v1290
    %v1292 = vlaneseq
    %v1293 = vshrl.u32 %v1292, 7
    %v1294 = vsub.s32 2, %v1293
    %v1295 = vrot.slane %v1282, %v1294
    %v1296 = vlaneseq
    %v1297 = vshrl.u32 %v1296, 7
    %v1298 = vsub.s32 3, %v1297
    %v1299 = vrot.slane %v1282, %v1298
    %v1304 = vmul.f32 %v1279, %v1287
    %v1305 = vmul.f32 %v1278, %v1291
    %v1306 = vmul.f32 %v1277, %v1295
    %v1307 = vmul.f32 %v1280, %v1299
    %v1308 = vpack.c.bf16 %v1304, %v1304
    %v1309 = vpack.c.bf16 %v1305, %v1305
    %v1310 = vpack.c.bf16 %v1306, %v1306
    %v1311 = vpack.c.bf16 %v1307, %v1307
    %v1316 = vunpack.c.l.b16 %v1308
    %v1317 = vunpack.c.l.b16 %v1309
    %v1318 = vunpack.c.l.b16 %v1310
    %v1319 = vunpack.c.l.b16 %v1311
    %v1320 = vpack.c.b16 %v1317, %v1316
    %v1321 = vpack.c.b16 %v1319, %v1318
    %v1322 = vrot.slane %v1320, 7
    %v1323 = vrot.slane %v1321, 7
    %v1326 = vld [vmem:[#allocation2 + $0x20] sm:$0x22]
    %v1327 = vsel %vm272, %v1322, %v1326
    %1328 = vst [vmem:[#allocation2 + $0x20] sm:$0x22] %v1327
    %v1329 = vld [vmem:[#allocation2 + $0x28] sm:$0x22]
    %v1330 = vsel %vm272, %v1323, %v1329
    %1331 = vst [vmem:[#allocation2 + $0x28] sm:$0x22] %v1330
    %1332 = vrot.lane.b32.xlu0 %v48, 110
    %v1333 = vpop.permute.xlu0 %1332
    %1334 = vrot.lane.b32.xlu0 %v52, 110
    %v1335 = vpop.permute.xlu0 %1334
    %1336 = vrot.lane.b32.xlu0 %v56, 110
    %v1337 = vpop.permute.xlu0 %1336
    %1338 = vrot.lane.b32.xlu0 %v60, 110
    %v1339 = vpop.permute.xlu0 %1338
    %vm1340 = vcmp.lt.s32.totalorder %v74, 110
    %v1341 = vsel %vm1340, %v1337, %v1339
    %v1342 = vsel %vm1340, %v1335, %v1337
    %v1343 = vsel %vm1340, %v1333, %v1335
    %v1344 = vsel %vm1340, %v1339, %v1333
    %s1345 = scalar_lea.vmem %s6, 67
    %v1346 = vld [vmem:[%s1345] ss:$8 sm:$0xf]
    %v1348 = vlaneseq
    %v1349 = vshrl.u32 %v1348, 7
    %v1350 = vsub.s32 0, %v1349
    %v1351 = vrot.slane %v1346, %v1350
    %v1352 = vlaneseq
    %v1353 = vshrl.u32 %v1352, 7
    %v1354 = vsub.s32 1, %v1353
    %v1355 = vrot.slane %v1346, %v1354
    %v1356 = vlaneseq
    %v1357 = vshrl.u32 %v1356, 7
    %v1358 = vsub.s32 2, %v1357
    %v1359 = vrot.slane %v1346, %v1358
    %v1360 = vlaneseq
    %v1361 = vshrl.u32 %v1360, 7
    %v1362 = vsub.s32 3, %v1361
    %v1363 = vrot.slane %v1346, %v1362
    %v1368 = vmul.f32 %v1343, %v1351
    %v1369 = vmul.f32 %v1342, %v1355
    %v1370 = vmul.f32 %v1341, %v1359
    %v1371 = vmul.f32 %v1344, %v1363
    %v1372 = vpack.c.bf16 %v1368, %v1368
    %v1373 = vpack.c.bf16 %v1369, %v1369
    %v1374 = vpack.c.bf16 %v1370, %v1370
    %v1375 = vpack.c.bf16 %v1371, %v1371
    %v1380 = vunpack.c.l.b16 %v1372
    %v1381 = vunpack.c.l.b16 %v1373
    %v1382 = vunpack.c.l.b16 %v1374
    %v1383 = vunpack.c.l.b16 %v1375
    %v1384 = vpack.c.b16 %v1381, %v1380
    %v1385 = vpack.c.b16 %v1383, %v1382
    %v1387 = vshll.u32 %v1384, 16
    %v1389 = vrot.slane %v1387, 7
    %v1391 = vshll.u32 %v1385, 16
    %v1393 = vrot.slane %v1391, 7
    %v1396 = vld [vmem:[#allocation2 + $0x20] sm:$0x22]
    %v1397 = vsel %vm347, %v1389, %v1396
    %1398 = vst [vmem:[#allocation2 + $0x20] sm:$0x22] %v1397
    %v1399 = vld [vmem:[#allocation2 + $0x28] sm:$0x22]
    %v1400 = vsel %vm347, %v1393, %v1399
    %1401 = vst [vmem:[#allocation2 + $0x28] sm:$0x22] %v1400
    %1402 = vrot.lane.b32.xlu0 %v48, 98
    %v1403 = vpop.permute.xlu0 %1402
    %1404 = vrot.lane.b32.xlu0 %v52, 98
    %v1405 = vpop.permute.xlu0 %1404
    %1406 = vrot.lane.b32.xlu0 %v56, 98
    %v1407 = vpop.permute.xlu0 %1406
    %1408 = vrot.lane.b32.xlu0 %v60, 98
    %v1409 = vpop.permute.xlu0 %1408
    %vm1410 = vcmp.lt.s32.totalorder %v74, 98
    %v1411 = vsel %vm1410, %v1407, %v1409
    %v1412 = vsel %vm1410, %v1405, %v1407
    %v1413 = vsel %vm1410, %v1403, %v1405
    %v1414 = vsel %vm1410, %v1409, %v1403
    %s1415 = scalar_lea.vmem %s6, 68
    %v1416 = vld [vmem:[%s1415] ss:$8 sm:$0xf]
    %v1418 = vlaneseq
    %v1419 = vshrl.u32 %v1418, 7
    %v1420 = vsub.s32 0, %v1419
    %v1421 = vrot.slane %v1416, %v1420
    %v1422 = vlaneseq
    %v1423 = vshrl.u32 %v1422, 7
    %v1424 = vsub.s32 1, %v1423
    %v1425 = vrot.slane %v1416, %v1424
    %v1426 = vlaneseq
    %v1427 = vshrl.u32 %v1426, 7
    %v1428 = vsub.s32 2, %v1427
    %v1429 = vrot.slane %v1416, %v1428
    %v1430 = vlaneseq
    %v1431 = vshrl.u32 %v1430, 7
    %v1432 = vsub.s32 3, %v1431
    %v1433 = vrot.slane %v1416, %v1432
    %v1438 = vmul.f32 %v1413, %v1421
    %v1439 = vmul.f32 %v1412, %v1425
    %v1440 = vmul.f32 %v1411, %v1429
    %v1441 = vmul.f32 %v1414, %v1433
    %v1442 = vpack.c.bf16 %v1438, %v1438
    %v1443 = vpack.c.bf16 %v1439, %v1439
    %v1444 = vpack.c.bf16 %v1440, %v1440
    %v1445 = vpack.c.bf16 %v1441, %v1441
    %v1450 = vunpack.c.l.b16 %v1442
    %v1451 = vunpack.c.l.b16 %v1443
    %v1452 = vunpack.c.l.b16 %v1444
    %v1453 = vunpack.c.l.b16 %v1445
    %v1454 = vpack.c.b16 %v1451, %v1450
    %v1455 = vpack.c.b16 %v1453, %v1452
    %v1456 = vrot.slane %v1454, 6
    %v1457 = vrot.slane %v1455, 6
    %v1460 = vld [vmem:[#allocation2 + $0x20] sm:$0x44]
    %v1461 = vsel %vm418, %v1456, %v1460
    %1462 = vst [vmem:[#allocation2 + $0x20] sm:$0x44] %v1461
    %v1463 = vld [vmem:[#allocation2 + $0x28] sm:$0x44]
    %v1464 = vsel %vm418, %v1457, %v1463
    %1465 = vst [vmem:[#allocation2 + $0x28] sm:$0x44] %v1464
    %1466 = vrot.lane.b32.xlu0 %v48, 97
    %v1467 = vpop.permute.xlu0 %1466
    %1468 = vrot.lane.b32.xlu0 %v52, 97
    %v1469 = vpop.permute.xlu0 %1468
    %1470 = vrot.lane.b32.xlu0 %v56, 97
    %v1471 = vpop.permute.xlu0 %1470
    %1472 = vrot.lane.b32.xlu0 %v60, 97
    %v1473 = vpop.permute.xlu0 %1472
    %vm1474 = vcmp.lt.s32.totalorder %v74, 97
    %v1475 = vsel %vm1474, %v1471, %v1473
    %v1476 = vsel %vm1474, %v1469, %v1471
    %v1477 = vsel %vm1474, %v1467, %v1469
    %v1478 = vsel %vm1474, %v1473, %v1467
    %s1479 = scalar_lea.vmem %s6, 69
    %v1480 = vld [vmem:[%s1479] ss:$8 sm:$0xf]
    %v1482 = vlaneseq
    %v1483 = vshrl.u32 %v1482, 7
    %v1484 = vsub.s32 0, %v1483
    %v1485 = vrot.slane %v1480, %v1484
    %v1486 = vlaneseq
    %v1487 = vshrl.u32 %v1486, 7
    %v1488 = vsub.s32 1, %v1487
    %v1489 = vrot.slane %v1480, %v1488
    %v1490 = vlaneseq
    %v1491 = vshrl.u32 %v1490, 7
    %v1492 = vsub.s32 2, %v1491
    %v1493 = vrot.slane %v1480, %v1492
    %v1494 = vlaneseq
    %v1495 = vshrl.u32 %v1494, 7
    %v1496 = vsub.s32 3, %v1495
    %v1497 = vrot.slane %v1480, %v1496
    %v1502 = vmul.f32 %v1477, %v1485
    %v1503 = vmul.f32 %v1476, %v1489
    %v1504 = vmul.f32 %v1475, %v1493
    %v1505 = vmul.f32 %v1478, %v1497
    %v1506 = vpack.c.bf16 %v1502, %v1502
    %v1507 = vpack.c.bf16 %v1503, %v1503
    %v1508 = vpack.c.bf16 %v1504, %v1504
    %v1509 = vpack.c.bf16 %v1505, %v1505
    %v1514 = vunpack.c.l.b16 %v1506
    %v1515 = vunpack.c.l.b16 %v1507
    %v1516 = vunpack.c.l.b16 %v1508
    %v1517 = vunpack.c.l.b16 %v1509
    %v1518 = vpack.c.b16 %v1515, %v1514
    %v1519 = vpack.c.b16 %v1517, %v1516
    %v1521 = vshll.u32 %v1518, 16
    %v1523 = vrot.slane %v1521, 6
    %v1525 = vshll.u32 %v1519, 16
    %v1527 = vrot.slane %v1525, 6
    %v1530 = vld [vmem:[#allocation2 + $0x20] sm:$0x44]
    %v1531 = vsel %vm493, %v1523, %v1530
    %1532 = vst [vmem:[#allocation2 + $0x20] sm:$0x44] %v1531
    %v1533 = vld [vmem:[#allocation2 + $0x28] sm:$0x44]
    %v1534 = vsel %vm493, %v1527, %v1533
    %1535 = vst [vmem:[#allocation2 + $0x28] sm:$0x44] %v1534
    %1536 = vrot.lane.b32.xlu0 %v48, 96
    %v1537 = vpop.permute.xlu0 %1536
    %1538 = vrot.lane.b32.xlu0 %v52, 96
    %v1539 = vpop.permute.xlu0 %1538
    %1540 = vrot.lane.b32.xlu0 %v56, 96
    %v1541 = vpop.permute.xlu0 %1540
    %1542 = vrot.lane.b32.xlu0 %v60, 96
    %v1543 = vpop.permute.xlu0 %1542
    %vm1544 = vcmp.lt.s32.totalorder %v74, 96
    %v1545 = vsel %vm1544, %v1541, %v1543
    %v1546 = vsel %vm1544, %v1539, %v1541
    %v1547 = vsel %vm1544, %v1537, %v1539
    %v1548 = vsel %vm1544, %v1543, %v1537
    %s1549 = scalar_lea.vmem %s6, 70
    %v1550 = vld [vmem:[%s1549] ss:$8 sm:$0xf]
    %v1552 = vlaneseq
    %v1553 = vshrl.u32 %v1552, 7
    %v1554 = vsub.s32 0, %v1553
    %v1555 = vrot.slane %v1550, %v1554
    %v1556 = vlaneseq
    %v1557 = vshrl.u32 %v1556, 7
    %v1558 = vsub.s32 1, %v1557
    %v1559 = vrot.slane %v1550, %v1558
    %v1560 = vlaneseq
    %v1561 = vshrl.u32 %v1560, 7
    %v1562 = vsub.s32 2, %v1561
    %v1563 = vrot.slane %v1550, %v1562
    %v1564 = vlaneseq
    %v1565 = vshrl.u32 %v1564, 7
    %v1566 = vsub.s32 3, %v1565
    %v1567 = vrot.slane %v1550, %v1566
    %v1572 = vmul.f32 %v1547, %v1555
    %v1573 = vmul.f32 %v1546, %v1559
    %v1574 = vmul.f32 %v1545, %v1563
    %v1575 = vmul.f32 %v1548, %v1567
    %v1576 = vpack.c.bf16 %v1572, %v1572
    %v1577 = vpack.c.bf16 %v1573, %v1573
    %v1578 = vpack.c.bf16 %v1574, %v1574
    %v1579 = vpack.c.bf16 %v1575, %v1575
    %v1584 = vunpack.c.l.b16 %v1576
    %v1585 = vunpack.c.l.b16 %v1577
    %v1586 = vunpack.c.l.b16 %v1578
    %v1587 = vunpack.c.l.b16 %v1579
    %v1588 = vpack.c.b16 %v1585, %v1584
    %v1589 = vpack.c.b16 %v1587, %v1586
    %v1590 = vrot.slane %v1588, 5
    %v1591 = vrot.slane %v1589, 5
    %v1594 = vld [vmem:[#allocation2 + $0x20] sm:$0x88]
    %v1595 = vsel %vm564, %v1590, %v1594
    %1596 = vst [vmem:[#allocation2 + $0x20] sm:$0x88] %v1595
    %v1597 = vld [vmem:[#allocation2 + $0x28] sm:$0x88]
    %v1598 = vsel %vm564, %v1591, %v1597
    %1599 = vst [vmem:[#allocation2 + $0x28] sm:$0x88] %v1598
    %1600 = vrot.lane.b32.xlu0 %v48, 95
    %v1601 = vpop.permute.xlu0 %1600
    %1602 = vrot.lane.b32.xlu0 %v52, 95
    %v1603 = vpop.permute.xlu0 %1602
    %1604 = vrot.lane.b32.xlu0 %v56, 95
    %v1605 = vpop.permute.xlu0 %1604
    %1606 = vrot.lane.b32.xlu0 %v60, 95
    %v1607 = vpop.permute.xlu0 %1606
    %vm1608 = vcmp.lt.s32.totalorder %v74, 95
    %v1609 = vsel %vm1608, %v1605, %v1607
    %v1610 = vsel %vm1608, %v1603, %v1605
    %v1611 = vsel %vm1608, %v1601, %v1603
    %v1612 = vsel %vm1608, %v1607, %v1601
    %s1613 = scalar_lea.vmem %s6, 71
    %v1614 = vld [vmem:[%s1613] ss:$8 sm:$0xf]
    %v1616 = vlaneseq
    %v1617 = vshrl.u32 %v1616, 7
    %v1618 = vsub.s32 0, %v1617
    %v1619 = vrot.slane %v1614, %v1618
    %v1620 = vlaneseq
    %v1621 = vshrl.u32 %v1620, 7
    %v1622 = vsub.s32 1, %v1621
    %v1623 = vrot.slane %v1614, %v1622
    %v1624 = vlaneseq
    %v1625 = vshrl.u32 %v1624, 7
    %v1626 = vsub.s32 2, %v1625
    %v1627 = vrot.slane %v1614, %v1626
    %v1628 = vlaneseq
    %v1629 = vshrl.u32 %v1628, 7
    %v1630 = vsub.s32 3, %v1629
    %v1631 = vrot.slane %v1614, %v1630
    %v1636 = vmul.f32 %v1611, %v1619
    %v1637 = vmul.f32 %v1610, %v1623
    %v1638 = vmul.f32 %v1609, %v1627
    %v1639 = vmul.f32 %v1612, %v1631
    %v1640 = vpack.c.bf16 %v1636, %v1636
    %v1641 = vpack.c.bf16 %v1637, %v1637
    %v1642 = vpack.c.bf16 %v1638, %v1638
    %v1643 = vpack.c.bf16 %v1639, %v1639
    %v1648 = vunpack.c.l.b16 %v1640
    %v1649 = vunpack.c.l.b16 %v1641
    %v1650 = vunpack.c.l.b16 %v1642
    %v1651 = vunpack.c.l.b16 %v1643
    %v1652 = vpack.c.b16 %v1649, %v1648
    %v1653 = vpack.c.b16 %v1651, %v1650
    %v1655 = vshll.u32 %v1652, 16
    %v1657 = vrot.slane %v1655, 5
    %v1659 = vshll.u32 %v1653, 16
    %v1661 = vrot.slane %v1659, 5
    %v1664 = vld [vmem:[#allocation2 + $0x20] sm:$0x88]
    %v1665 = vsel %vm639, %v1657, %v1664
    %1666 = vst [vmem:[#allocation2 + $0x20] sm:$0x88] %v1665
    %v1667 = vld [vmem:[#allocation2 + $0x28] sm:$0x88]
    %v1668 = vsel %vm639, %v1661, %v1667
    %1669 = vst [vmem:[#allocation2 + $0x28] sm:$0x88] %v1668
    %1670 = vrot.lane.b32.xlu0 %v48, 94
    %v1671 = vpop.permute.xlu0 %1670
    %1672 = vrot.lane.b32.xlu0 %v52, 94
    %v1673 = vpop.permute.xlu0 %1672
    %1674 = vrot.lane.b32.xlu0 %v56, 94
    %v1675 = vpop.permute.xlu0 %1674
    %1676 = vrot.lane.b32.xlu0 %v60, 94
    %v1677 = vpop.permute.xlu0 %1676
    %vm1678 = vcmp.lt.s32.totalorder %v74, 94
    %v1679 = vsel %vm1678, %v1675, %v1677
    %v1680 = vsel %vm1678, %v1673, %v1675
    %v1681 = vsel %vm1678, %v1671, %v1673
    %v1682 = vsel %vm1678, %v1677, %v1671
    %s1683 = scalar_lea.vmem %s6, 96
    %v1684 = vld [vmem:[%s1683] ss:$8 sm:$0xf]
    %v1686 = vlaneseq
    %v1687 = vshrl.u32 %v1686, 7
    %v1688 = vsub.s32 0, %v1687
    %v1689 = vrot.slane %v1684, %v1688
    %v1690 = vlaneseq
    %v1691 = vshrl.u32 %v1690, 7
    %v1692 = vsub.s32 1, %v1691
    %v1693 = vrot.slane %v1684, %v1692
    %v1694 = vlaneseq
    %v1695 = vshrl.u32 %v1694, 7
    %v1696 = vsub.s32 2, %v1695
    %v1697 = vrot.slane %v1684, %v1696
    %v1698 = vlaneseq
    %v1699 = vshrl.u32 %v1698, 7
    %v1700 = vsub.s32 3, %v1699
    %v1701 = vrot.slane %v1684, %v1700
    %v1706 = vmul.f32 %v1681, %v1689
    %v1707 = vmul.f32 %v1680, %v1693
    %v1708 = vmul.f32 %v1679, %v1697
    %v1709 = vmul.f32 %v1682, %v1701
    %v1710 = vpack.c.bf16 %v1706, %v1706
    %v1711 = vpack.c.bf16 %v1707, %v1707
    %v1712 = vpack.c.bf16 %v1708, %v1708
    %v1713 = vpack.c.bf16 %v1709, %v1709
    %v1718 = vunpack.c.l.b16 %v1710
    %v1719 = vunpack.c.l.b16 %v1711
    %v1720 = vunpack.c.l.b16 %v1712
    %v1721 = vunpack.c.l.b16 %v1713
    %v1722 = vpack.c.b16 %v1719, %v1718
    %v1723 = vpack.c.b16 %v1721, %v1720
    %v1726 = vld [vmem:[#allocation2 + $0x30] sm:$0x11]
    %v1727 = vsel %vm128, %v1722, %v1726
    %1728 = vst [vmem:[#allocation2 + $0x30] sm:$0x11] %v1727
    %v1729 = vld [vmem:[#allocation2 + $0x38] sm:$0x11]
    %v1730 = vsel %vm128, %v1723, %v1729
    %1731 = vst [vmem:[#allocation2 + $0x38] sm:$0x11] %v1730
    %v1732 = vld [vmem:[%s1] sm:$0x3]
    %v1733 = vld [vmem:[#allocation2] sm:$0xff]
    %v1734 = vld [vmem:[#allocation2 + $0x8] sm:$0xff]
    %v1735 = vld [vmem:[#allocation2 + $0x10] sm:$0xff]
    %v1736 = vld [vmem:[#allocation2 + $0x18] sm:$0xff]
    %v1737 = vld [vmem:[#allocation2 + $0x20] sm:$0xff]
    %v1738 = vld [vmem:[#allocation2 + $0x28] sm:$0xff]
    %v1739 = vld [vmem:[#allocation2 + $0x30] sm:$0x11]
    %v1740 = vld [vmem:[#allocation2 + $0x38] sm:$0x11]
    %v1749 = vunpack.c.l.b16 %v1733
    %v1750 = vunpack.c.h.b16 %v1733
    %v1751 = vunpack.c.l.b16 %v1734
    %v1752 = vunpack.c.h.b16 %v1734
    %v1753 = vunpack.c.l.b16 %v1735
    %v1754 = vunpack.c.h.b16 %v1735
    %v1755 = vunpack.c.l.b16 %v1736
    %v1756 = vunpack.c.h.b16 %v1736
    %v1757 = vunpack.c.l.b16 %v1737
    %v1758 = vunpack.c.h.b16 %v1737
    %v1759 = vunpack.c.l.b16 %v1738
    %v1760 = vunpack.c.h.b16 %v1738
    %v1761 = vunpack.c.l.b16 %v1739
    %v1762 = vunpack.c.h.b16 %v1739
    %v1763 = vunpack.c.l.b16 %v1740
    %v1764 = vunpack.c.h.b16 %v1740
    %v1765 = vpack.c.b16 %v1753, %v1749
    %v1766 = vpack.c.b16 %v1754, %v1750
    %v1767 = vpack.c.b16 %v1755, %v1751
    %v1768 = vpack.c.b16 %v1756, %v1752
    %v1769 = vpack.c.b16 %v1761, %v1757
    %v1770 = vpack.c.b16 %v1762, %v1758
    %v1771 = vpack.c.b16 %v1763, %v1759
    %v1772 = vpack.c.b16 %v1764, %v1760
    %vm1777 = vcmask 203776
    %v1779 = vsel %vm1777, %v1732, 0
    %vm1781 = vcmask 1043456
    %vm1782 = vcmask 1044480
    %v1783 = vsel %vm1781, 4294967295, 65535
    %v1784 = vsel %vm1782, %v1783, 0
    %v1786 = vand.u32 %v1769, %v1784
    %v1789 = vand.u32 %v1770, %v1784
    %v1792 = vand.u32 %v1771, %v1784
    %v1795 = vand.u32 %v1772, %v1784
    %1797 = vmatprep.subr.bf16.mxu0 0
    %1798 = vmatpush1.bf16.msra.mxu0 0
    %1799 = vmatprep.subr.bf16.mxu0 0
    %1800 = vmatpush1.bf16.msra.mxu0 0
    %1801 = vmatprep.subr.bf16.mxu0 0
    %1802 = vmatpush1.bf16.msra.mxu0 0
    %1803 = vmatprep.subr.bf16.mxu0 0
    %1804 = vmatpush1.bf16.msra.mxu0 0
    %1805 = vmatprep.subr.bf16.mxu0 0
    %1806 = vmatpush1.bf16.msra.mxu0 0
    %1807 = vmatprep.subr.bf16.mxu0 0
    %1808 = vmatpush1.bf16.msra.mxu0 0
    %1809 = vmatprep.subr.bf16.mxu0 %v1789
    %1810 = vmatpush1.bf16.msra.mxu0 %v1786
    %1811 = vmatprep.subr.bf16.mxu0 %v1766
    %1812 = vmatpush1.bf16.msra.mxu0 %v1765
    %1813 = vmatprep.subr.bf16.mxu0 0
    %1814 = vmatpush2.bf16.msra.mxu0 0
    %1815 = vmatprep.subr.bf16.mxu0 0
    %1816 = vmatpush2.bf16.msra.mxu0 0
    %1817 = vmatprep.subr.bf16.mxu0 0
    %1818 = vmatpush2.bf16.msra.mxu0 0
    %1819 = vmatprep.subr.bf16.mxu0 0
    %1820 = vmatpush2.bf16.msra.mxu0 0
    %1821 = vmatprep.subr.bf16.mxu0 0
    %1822 = vmatpush2.bf16.msra.mxu0 0
    %1823 = vmatprep.subr.bf16.mxu0 0
    %1824 = vmatpush2.bf16.msra.mxu0 0
    %1825 = vmatprep.subr.bf16.mxu0 0
    %1826 = vmatpush2.bf16.msra.mxu0 0
    %1827 = vmatprep.subr.bf16.mxu0 0
    %1828 = vmatpush2.bf16.msra.mxu0 0
    %1829 = vmatprep.mubr.bf16.mxu0 0
    %1830 = vmatmul.mubr.bf16.gmra.mxu0 %v1779
    %v1831 = vpop.f32.mrf.mxu0
    %v1832 = vadd.f32 0.0, %v1831
    %v1833 = vpop.f32.mrf.mxu0
    %v1834 = vadd.f32 0.0, %v1833
    %v1835 = vpop.f32.mrf.mxu0
    %v1836 = vpop.f32.mrf.mxu0
    %1837 = vdwg.mxu0
    %1838 = vmatprep.subr.bf16.mxu0 0
    %1839 = vmatpush1.bf16.msra.mxu0 0
    %1840 = vmatprep.subr.bf16.mxu0 0
    %1841 = vmatpush1.bf16.msra.mxu0 0
    %1842 = vmatprep.subr.bf16.mxu0 0
    %1843 = vmatpush1.bf16.msra.mxu0 0
    %1844 = vmatprep.subr.bf16.mxu0 0
    %1845 = vmatpush1.bf16.msra.mxu0 0
    %1846 = vmatprep.subr.bf16.mxu0 0
    %1847 = vmatpush1.bf16.msra.mxu0 0
    %1848 = vmatprep.subr.bf16.mxu0 0
    %1849 = vmatpush1.bf16.msra.mxu0 0
    %1850 = vmatprep.subr.bf16.mxu0 %v1795
    %1851 = vmatpush1.bf16.msra.mxu0 %v1792
    %1852 = vmatprep.subr.bf16.mxu0 %v1768
    %1853 = vmatpush1.bf16.msra.mxu0 %v1767
    %1854 = vmatprep.subr.bf16.mxu0 0
    %1855 = vmatpush2.bf16.msra.mxu0 0
    %1856 = vmatprep.subr.bf16.mxu0 0
    %1857 = vmatpush2.bf16.msra.mxu0 0
    %1858 = vmatprep.subr.bf16.mxu0 0
    %1859 = vmatpush2.bf16.msra.mxu0 0
    %1860 = vmatprep.subr.bf16.mxu0 0
    %1861 = vmatpush2.bf16.msra.mxu0 0
    %1862 = vmatprep.subr.bf16.mxu0 0
    %1863 = vmatpush2.bf16.msra.mxu0 0
    %1864 = vmatprep.subr.bf16.mxu0 0
    %1865 = vmatpush2.bf16.msra.mxu0 0
    %1866 = vmatprep.subr.bf16.mxu0 0
    %1867 = vmatpush2.bf16.msra.mxu0 0
    %1868 = vmatprep.subr.bf16.mxu0 0
    %1869 = vmatpush2.bf16.msra.mxu0 0
    %1870 = vmatprep.mubr.bf16.mxu0 0
    %1871 = vmatmul.mubr.bf16.gmra.mxu0 %v1779
    %v1872 = vpop.f32.mrf.mxu0
    %v1873 = vadd.f32 0.0, %v1872
    %v1874 = vpop.f32.mrf.mxu0
    %v1875 = vadd.f32 0.0, %v1874
    %v1876 = vpop.f32.mrf.mxu0
    %v1877 = vpop.f32.mrf.mxu0
    %1878 = vdwg.mxu0
    %v1879 = vsel %vm1781, %v1832, 0.0
    %v1880 = vsel %vm1781, %v1834, 0.0
    %v1881 = vadd.f32 %v1879, %v1880
    %v1882 = vsel %vm1781, %v1873, 0.0
    %v1883 = vadd.f32 %v1881, %v1882
    %v1884 = vsel %vm1781, %v1875, 0.0
    %v1885 = vadd.f32 %v1883, %v1884
    %1886 = vadd.xlane.f32.xlu0 %v1885
    %v1887 = vpop.xlane.xlu0 %1886
    %v1888 = vrcp.pop 512.0
    %v1889 = vmul.f32 %v1887, %v1888
    %v1890 = vsub.f32 %v1832, %v1889
    %v1891 = vsub.f32 %v1834, %v1889
    %v1892 = vsub.f32 %v1873, %v1889
    %v1893 = vsub.f32 %v1875, %v1889
    %v1894 = vmul.f32 %v1890, %v1890
    %v1895 = vmul.f32 %v1891, %v1891
    %v1896 = vmul.f32 %v1892, %v1892
    %v1897 = vmul.f32 %v1893, %v1893
    %v1898 = vsel %vm1781, %v1894, 0.0
    %v1899 = vsel %vm1781, %v1895, 0.0
    %v1900 = vadd.f32 %v1898, %v1899
    %v1901 = vsel %vm1781, %v1896, 0.0
    %v1902 = vadd.f32 %v1900, %v1901
    %v1903 = vsel %vm1781, %v1897, 0.0
    %v1904 = vadd.f32 %v1902, %v1903
    %1905 = vadd.xlane.f32.xlu0 %v1904
    %v1906 = vpop.xlane.xlu0 %1905
    %v1907 = vmul.f32 %v1906, %v1888
    %v1908 = vld [vmem:[%s5] sm:$0xf]
    %v1909 = vld [vmem:[%s5 + $0x4] sm:$0xf]
    %v1910 = vadd.f32 %v1907, 1e-05
    %v1911 = vrsqrt.pop %v1910
    %v1912 = vmul.f32 %v1911, %v1908
    %v1913 = vmul.f32 %v1889, %v1912
    %v1914 = vsub.f32 %v1909, %v1913
    %1916 = vset.pattern.permute.xlu0 0
    %1917 = vperm.xlu0 %1916, %v1912
    %v1918 = vpop.permute.xlu0 %1917
    %v1920 = vmul.f32 %v1832, %v1918
    %v1921 = vmul.f32 %v1834, %v1918
    %v1922 = vmul.f32 %v1873, %v1918
    %v1923 = vmul.f32 %v1875, %v1918
    %1925 = vset.pattern.permute.xlu0 0
    %1926 = vperm.xlu0 %1925, %v1914
    %v1927 = vpop.permute.xlu0 %1926
    %v1929 = vadd.f32 %v1920, %v1927
    %v1930 = vadd.f32 %v1921, %v1927
    %v1931 = vadd.f32 %v1922, %v1927
    %v1932 = vadd.f32 %v1923, %v1927
    %v1933 = vmax.f32 %v1929, 0.0
    %v1934 = vmax.f32 %v1930, 0.0
    %v1935 = vmax.f32 %v1931, 0.0
    %v1936 = vmax.f32 %v1932, 0.0
    %1937 = vrot.lane.b32.xlu0 %v1933, 34
    %v1938 = vpop.permute.xlu0 %1937
    %1939 = vrot.lane.b32.xlu0 %v1934, 34
    %v1940 = vpop.permute.xlu0 %1939
    %1941 = vrot.lane.b32.xlu0 %v1935, 34
    %v1942 = vpop.permute.xlu0 %1941
    %1943 = vrot.lane.b32.xlu0 %v1936, 34
    %v1944 = vpop.permute.xlu0 %1943
    %v1945 = vsel %vm75, %v1942, %v1944
    %v1946 = vsel %vm75, %v1940, %v1942
    %v1947 = vsel %vm75, %v1938, %v1940
    %v1948 = vsel %vm75, %v1944, %v1938
    %v1949 = vld [vmem:[%s6] ss:$8 sm:$0xf]
    %v1951 = vlaneseq
    %v1952 = vshrl.u32 %v1951, 7
    %v1953 = vsub.s32 0, %v1952
    %v1954 = vrot.slane %v1949, %v1953
    %v1955 = vlaneseq
    %v1956 = vshrl.u32 %v1955, 7
    %v1957 = vsub.s32 1, %v1956
    %v1958 = vrot.slane %v1949, %v1957
    %v1959 = vlaneseq
    %v1960 = vshrl.u32 %v1959, 7
    %v1961 = vsub.s32 2, %v1960
    %v1962 = vrot.slane %v1949, %v1961
    %v1963 = vlaneseq
    %v1964 = vshrl.u32 %v1963, 7
    %v1965 = vsub.s32 3, %v1964
    %v1966 = vrot.slane %v1949, %v1965
    %v1971 = vmul.f32 %v1948, %v1954
    %v1972 = vmul.f32 %v1947, %v1958
    %v1973 = vmul.f32 %v1946, %v1962
    %v1974 = vmul.f32 %v1945, %v1966
    %v1975 = vpack.c.bf16 %v1971, %v1971
    %v1976 = vpack.c.bf16 %v1972, %v1972
    %v1977 = vpack.c.bf16 %v1973, %v1973
    %v1978 = vpack.c.bf16 %v1974, %v1974
    %v1983 = vunpack.c.l.b16 %v1975
    %v1984 = vunpack.c.l.b16 %v1976
    %v1985 = vunpack.c.l.b16 %v1977
    %v1986 = vunpack.c.l.b16 %v1978
    %v1987 = vpack.c.b16 %v1984, %v1983
    %v1988 = vpack.c.b16 %v1986, %v1985
    %1991 = vst [vmem:[#allocation2] sm:$0x33] %v1987
    %1992 = vst [vmem:[#allocation2 + $0x8] sm:$0x33] %v1988
    %1993 = vrot.lane.b32.xlu0 %v1933, 33
    %v1994 = vpop.permute.xlu0 %1993
    %1995 = vrot.lane.b32.xlu0 %v1934, 33
    %v1996 = vpop.permute.xlu0 %1995
    %1997 = vrot.lane.b32.xlu0 %v1935, 33
    %v1998 = vpop.permute.xlu0 %1997
    %1999 = vrot.lane.b32.xlu0 %v1936, 33
    %v2000 = vpop.permute.xlu0 %1999
    %v2001 = vsel %vm143, %v1998, %v2000
    %v2002 = vsel %vm143, %v1996, %v1998
    %v2003 = vsel %vm143, %v1994, %v1996
    %v2004 = vsel %vm143, %v2000, %v1994
    %v2005 = vld [vmem:[%s148] ss:$8 sm:$0xf]
    %v2007 = vlaneseq
    %v2008 = vshrl.u32 %v2007, 7
    %v2009 = vsub.s32 0, %v2008
    %v2010 = vrot.slane %v2005, %v2009
    %v2011 = vlaneseq
    %v2012 = vshrl.u32 %v2011, 7
    %v2013 = vsub.s32 1, %v2012
    %v2014 = vrot.slane %v2005, %v2013
    %v2015 = vlaneseq
    %v2016 = vshrl.u32 %v2015, 7
    %v2017 = vsub.s32 2, %v2016
    %v2018 = vrot.slane %v2005, %v2017
    %v2019 = vlaneseq
    %v2020 = vshrl.u32 %v2019, 7
    %v2021 = vsub.s32 3, %v2020
    %v2022 = vrot.slane %v2005, %v2021
    %v2027 = vmul.f32 %v2004, %v2010
    %v2028 = vmul.f32 %v2003, %v2014
    %v2029 = vmul.f32 %v2002, %v2018
    %v2030 = vmul.f32 %v2001, %v2022
    %v2031 = vpack.c.bf16 %v2027, %v2027
    %v2032 = vpack.c.bf16 %v2028, %v2028
    %v2033 = vpack.c.bf16 %v2029, %v2029
    %v2034 = vpack.c.bf16 %v2030, %v2030
    %v2039 = vunpack.c.l.b16 %v2031
    %v2040 = vunpack.c.l.b16 %v2032
    %v2041 = vunpack.c.l.b16 %v2033
    %v2042 = vunpack.c.l.b16 %v2034
    %v2043 = vpack.c.b16 %v2040, %v2039
    %v2044 = vpack.c.b16 %v2042, %v2041
    %v2045 = vrot.slane %v2043, 6
    %v2046 = vrot.slane %v2044, 6
    %2049 = vst [vmem:[#allocation2] sm:$0xcc] %v2045
    %2050 = vst [vmem:[#allocation2 + $0x8] sm:$0xcc] %v2046
    %2051 = vrot.lane.b32.xlu0 %v1933, 32
    %v2052 = vpop.permute.xlu0 %2051
    %2053 = vrot.lane.b32.xlu0 %v1934, 32
    %v2054 = vpop.permute.xlu0 %2053
    %2055 = vrot.lane.b32.xlu0 %v1935, 32
    %v2056 = vpop.permute.xlu0 %2055
    %2057 = vrot.lane.b32.xlu0 %v1936, 32
    %v2058 = vpop.permute.xlu0 %2057
    %v2059 = vsel %vm216, %v2056, %v2058
    %v2060 = vsel %vm216, %v2054, %v2056
    %v2061 = vsel %vm216, %v2052, %v2054
    %v2062 = vsel %vm216, %v2058, %v2052
    %v2063 = vld [vmem:[%s221] ss:$8 sm:$0xf]
    %v2065 = vlaneseq
    %v2066 = vshrl.u32 %v2065, 7
    %v2067 = vsub.s32 0, %v2066
    %v2068 = vrot.slane %v2063, %v2067
    %v2069 = vlaneseq
    %v2070 = vshrl.u32 %v2069, 7
    %v2071 = vsub.s32 1, %v2070
    %v2072 = vrot.slane %v2063, %v2071
    %v2073 = vlaneseq
    %v2074 = vshrl.u32 %v2073, 7
    %v2075 = vsub.s32 2, %v2074
    %v2076 = vrot.slane %v2063, %v2075
    %v2077 = vlaneseq
    %v2078 = vshrl.u32 %v2077, 7
    %v2079 = vsub.s32 3, %v2078
    %v2080 = vrot.slane %v2063, %v2079
    %v2085 = vmul.f32 %v2062, %v2068
    %v2086 = vmul.f32 %v2061, %v2072
    %v2087 = vmul.f32 %v2060, %v2076
    %v2088 = vmul.f32 %v2059, %v2080
    %v2089 = vpack.c.bf16 %v2085, %v2085
    %v2090 = vpack.c.bf16 %v2086, %v2086
    %v2091 = vpack.c.bf16 %v2087, %v2087
    %v2092 = vpack.c.bf16 %v2088, %v2088
    %v2097 = vunpack.c.l.b16 %v2089
    %v2098 = vunpack.c.l.b16 %v2090
    %v2099 = vunpack.c.l.b16 %v2091
    %v2100 = vunpack.c.l.b16 %v2092
    %v2101 = vpack.c.b16 %v2098, %v2097
    %v2102 = vpack.c.b16 %v2100, %v2099
    %2105 = vst [vmem:[#allocation2 + $0x10] sm:$0x33] %v2101
    %2106 = vst [vmem:[#allocation2 + $0x18] sm:$0x33] %v2102
    %2107 = vrot.lane.b32.xlu0 %v1933, 31
    %v2108 = vpop.permute.xlu0 %2107
    %2109 = vrot.lane.b32.xlu0 %v1934, 31
    %v2110 = vpop.permute.xlu0 %2109
    %2111 = vrot.lane.b32.xlu0 %v1935, 31
    %v2112 = vpop.permute.xlu0 %2111
    %2113 = vrot.lane.b32.xlu0 %v1936, 31
    %v2114 = vpop.permute.xlu0 %2113
    %v2115 = vsel %vm287, %v2112, %v2114
    %v2116 = vsel %vm287, %v2110, %v2112
    %v2117 = vsel %vm287, %v2108, %v2110
    %v2118 = vsel %vm287, %v2114, %v2108
    %v2119 = vld [vmem:[%s292] ss:$8 sm:$0xf]
    %v2121 = vlaneseq
    %v2122 = vshrl.u32 %v2121, 7
    %v2123 = vsub.s32 0, %v2122
    %v2124 = vrot.slane %v2119, %v2123
    %v2125 = vlaneseq
    %v2126 = vshrl.u32 %v2125, 7
    %v2127 = vsub.s32 1, %v2126
    %v2128 = vrot.slane %v2119, %v2127
    %v2129 = vlaneseq
    %v2130 = vshrl.u32 %v2129, 7
    %v2131 = vsub.s32 2, %v2130
    %v2132 = vrot.slane %v2119, %v2131
    %v2133 = vlaneseq
    %v2134 = vshrl.u32 %v2133, 7
    %v2135 = vsub.s32 3, %v2134
    %v2136 = vrot.slane %v2119, %v2135
    %v2141 = vmul.f32 %v2118, %v2124
    %v2142 = vmul.f32 %v2117, %v2128
    %v2143 = vmul.f32 %v2116, %v2132
    %v2144 = vmul.f32 %v2115, %v2136
    %v2145 = vpack.c.bf16 %v2141, %v2141
    %v2146 = vpack.c.bf16 %v2142, %v2142
    %v2147 = vpack.c.bf16 %v2143, %v2143
    %v2148 = vpack.c.bf16 %v2144, %v2144
    %v2153 = vunpack.c.l.b16 %v2145
    %v2154 = vunpack.c.l.b16 %v2146
    %v2155 = vunpack.c.l.b16 %v2147
    %v2156 = vunpack.c.l.b16 %v2148
    %v2157 = vpack.c.b16 %v2154, %v2153
    %v2158 = vpack.c.b16 %v2156, %v2155
    %v2159 = vrot.slane %v2157, 6
    %v2160 = vrot.slane %v2158, 6
    %2163 = vst [vmem:[#allocation2 + $0x10] sm:$0xcc] %v2159
    %2164 = vst [vmem:[#allocation2 + $0x18] sm:$0xcc] %v2160
    %2165 = vrot.lane.b32.xlu0 %v1933, 30
    %v2166 = vpop.permute.xlu0 %2165
    %2167 = vrot.lane.b32.xlu0 %v1934, 30
    %v2168 = vpop.permute.xlu0 %2167
    %2169 = vrot.lane.b32.xlu0 %v1935, 30
    %v2170 = vpop.permute.xlu0 %2169
    %2171 = vrot.lane.b32.xlu0 %v1936, 30
    %v2172 = vpop.permute.xlu0 %2171
    %v2173 = vsel %vm362, %v2170, %v2172
    %v2174 = vsel %vm362, %v2168, %v2170
    %v2175 = vsel %vm362, %v2166, %v2168
    %v2176 = vsel %vm362, %v2172, %v2166
    %v2177 = vld [vmem:[%s367] ss:$8 sm:$0xf]
    %v2179 = vlaneseq
    %v2180 = vshrl.u32 %v2179, 7
    %v2181 = vsub.s32 0, %v2180
    %v2182 = vrot.slane %v2177, %v2181
    %v2183 = vlaneseq
    %v2184 = vshrl.u32 %v2183, 7
    %v2185 = vsub.s32 1, %v2184
    %v2186 = vrot.slane %v2177, %v2185
    %v2187 = vlaneseq
    %v2188 = vshrl.u32 %v2187, 7
    %v2189 = vsub.s32 2, %v2188
    %v2190 = vrot.slane %v2177, %v2189
    %v2191 = vlaneseq
    %v2192 = vshrl.u32 %v2191, 7
    %v2193 = vsub.s32 3, %v2192
    %v2194 = vrot.slane %v2177, %v2193
    %v2199 = vmul.f32 %v2176, %v2182
    %v2200 = vmul.f32 %v2175, %v2186
    %v2201 = vmul.f32 %v2174, %v2190
    %v2202 = vmul.f32 %v2173, %v2194
    %v2203 = vpack.c.bf16 %v2199, %v2199
    %v2204 = vpack.c.bf16 %v2200, %v2200
    %v2205 = vpack.c.bf16 %v2201, %v2201
    %v2206 = vpack.c.bf16 %v2202, %v2202
    %v2211 = vunpack.c.l.b16 %v2203
    %v2212 = vunpack.c.l.b16 %v2204
    %v2213 = vunpack.c.l.b16 %v2205
    %v2214 = vunpack.c.l.b16 %v2206
    %v2215 = vpack.c.b16 %v2212, %v2211
    %v2216 = vpack.c.b16 %v2214, %v2213
    %2219 = vst [vmem:[#allocation2 + $0x20] sm:$0x33] %v2215
    %2220 = vst [vmem:[#allocation2 + $0x28] sm:$0x33] %v2216
    %2221 = vrot.lane.b32.xlu0 %v1933, 18
    %v2222 = vpop.permute.xlu0 %2221
    %2223 = vrot.lane.b32.xlu0 %v1934, 18
    %v2224 = vpop.permute.xlu0 %2223
    %2225 = vrot.lane.b32.xlu0 %v1935, 18
    %v2226 = vpop.permute.xlu0 %2225
    %2227 = vrot.lane.b32.xlu0 %v1936, 18
    %v2228 = vpop.permute.xlu0 %2227
    %v2229 = vsel %vm433, %v2226, %v2228
    %v2230 = vsel %vm433, %v2224, %v2226
    %v2231 = vsel %vm433, %v2222, %v2224
    %v2232 = vsel %vm433, %v2228, %v2222
    %v2233 = vld [vmem:[%s438] ss:$8 sm:$0xf]
    %v2235 = vlaneseq
    %v2236 = vshrl.u32 %v2235, 7
    %v2237 = vsub.s32 0, %v2236
    %v2238 = vrot.slane %v2233, %v2237
    %v2239 = vlaneseq
    %v2240 = vshrl.u32 %v2239, 7
    %v2241 = vsub.s32 1, %v2240
    %v2242 = vrot.slane %v2233, %v2241
    %v2243 = vlaneseq
    %v2244 = vshrl.u32 %v2243, 7
    %v2245 = vsub.s32 2, %v2244
    %v2246 = vrot.slane %v2233, %v2245
    %v2247 = vlaneseq
    %v2248 = vshrl.u32 %v2247, 7
    %v2249 = vsub.s32 3, %v2248
    %v2250 = vrot.slane %v2233, %v2249
    %v2255 = vmul.f32 %v2232, %v2238
    %v2256 = vmul.f32 %v2231, %v2242
    %v2257 = vmul.f32 %v2230, %v2246
    %v2258 = vmul.f32 %v2229, %v2250
    %v2259 = vpack.c.bf16 %v2255, %v2255
    %v2260 = vpack.c.bf16 %v2256, %v2256
    %v2261 = vpack.c.bf16 %v2257, %v2257
    %v2262 = vpack.c.bf16 %v2258, %v2258
    %v2267 = vunpack.c.l.b16 %v2259
    %v2268 = vunpack.c.l.b16 %v2260
    %v2269 = vunpack.c.l.b16 %v2261
    %v2270 = vunpack.c.l.b16 %v2262
    %v2271 = vpack.c.b16 %v2268, %v2267
    %v2272 = vpack.c.b16 %v2270, %v2269
    %v2273 = vrot.slane %v2271, 6
    %v2274 = vrot.slane %v2272, 6
    %2277 = vst [vmem:[#allocation2 + $0x20] sm:$0xcc] %v2273
    %2278 = vst [vmem:[#allocation2 + $0x28] sm:$0xcc] %v2274
    %2279 = vrot.lane.b32.xlu0 %v1933, 17
    %v2280 = vpop.permute.xlu0 %2279
    %2281 = vrot.lane.b32.xlu0 %v1934, 17
    %v2282 = vpop.permute.xlu0 %2281
    %2283 = vrot.lane.b32.xlu0 %v1935, 17
    %v2284 = vpop.permute.xlu0 %2283
    %2285 = vrot.lane.b32.xlu0 %v1936, 17
    %v2286 = vpop.permute.xlu0 %2285
    %v2287 = vsel %vm508, %v2284, %v2286
    %v2288 = vsel %vm508, %v2282, %v2284
    %v2289 = vsel %vm508, %v2280, %v2282
    %v2290 = vsel %vm508, %v2286, %v2280
    %v2291 = vld [vmem:[%s513] ss:$8 sm:$0xf]
    %v2293 = vlaneseq
    %v2294 = vshrl.u32 %v2293, 7
    %v2295 = vsub.s32 0, %v2294
    %v2296 = vrot.slane %v2291, %v2295
    %v2297 = vlaneseq
    %v2298 = vshrl.u32 %v2297, 7
    %v2299 = vsub.s32 1, %v2298
    %v2300 = vrot.slane %v2291, %v2299
    %v2301 = vlaneseq
    %v2302 = vshrl.u32 %v2301, 7
    %v2303 = vsub.s32 2, %v2302
    %v2304 = vrot.slane %v2291, %v2303
    %v2305 = vlaneseq
    %v2306 = vshrl.u32 %v2305, 7
    %v2307 = vsub.s32 3, %v2306
    %v2308 = vrot.slane %v2291, %v2307
    %v2313 = vmul.f32 %v2290, %v2296
    %v2314 = vmul.f32 %v2289, %v2300
    %v2315 = vmul.f32 %v2288, %v2304
    %v2316 = vmul.f32 %v2287, %v2308
    %v2317 = vpack.c.bf16 %v2313, %v2313
    %v2318 = vpack.c.bf16 %v2314, %v2314
    %v2319 = vpack.c.bf16 %v2315, %v2315
    %v2320 = vpack.c.bf16 %v2316, %v2316
    %v2325 = vunpack.c.l.b16 %v2317
    %v2326 = vunpack.c.l.b16 %v2318
    %v2327 = vunpack.c.l.b16 %v2319
    %v2328 = vunpack.c.l.b16 %v2320
    %v2329 = vpack.c.b16 %v2326, %v2325
    %v2330 = vpack.c.b16 %v2328, %v2327
    %2333 = vst [vmem:[#allocation2 + $0x30] sm:$0x33] %v2329
    %2334 = vst [vmem:[#allocation2 + $0x38] sm:$0x33] %v2330
    %2335 = vrot.lane.b32.xlu0 %v1933, 16
    %v2336 = vpop.permute.xlu0 %2335
    %2337 = vrot.lane.b32.xlu0 %v1934, 16
    %v2338 = vpop.permute.xlu0 %2337
    %2339 = vrot.lane.b32.xlu0 %v1935, 16
    %v2340 = vpop.permute.xlu0 %2339
    %2341 = vrot.lane.b32.xlu0 %v1936, 16
    %v2342 = vpop.permute.xlu0 %2341
    %v2343 = vsel %vm579, %v2340, %v2342
    %v2344 = vsel %vm579, %v2338, %v2340
    %v2345 = vsel %vm579, %v2336, %v2338
    %v2346 = vsel %vm579, %v2342, %v2336
    %v2347 = vld [vmem:[%s584] ss:$8 sm:$0xf]
    %v2349 = vlaneseq
    %v2350 = vshrl.u32 %v2349, 7
    %v2351 = vsub.s32 0, %v2350
    %v2352 = vrot.slane %v2347, %v2351
    %v2353 = vlaneseq
    %v2354 = vshrl.u32 %v2353, 7
    %v2355 = vsub.s32 1, %v2354
    %v2356 = vrot.slane %v2347, %v2355
    %v2357 = vlaneseq
    %v2358 = vshrl.u32 %v2357, 7
    %v2359 = vsub.s32 2, %v2358
    %v2360 = vrot.slane %v2347, %v2359
    %v2361 = vlaneseq
    %v2362 = vshrl.u32 %v2361, 7
    %v2363 = vsub.s32 3, %v2362
    %v2364 = vrot.slane %v2347, %v2363
    %v2369 = vmul.f32 %v2346, %v2352
    %v2370 = vmul.f32 %v2345, %v2356
    %v2371 = vmul.f32 %v2344, %v2360
    %v2372 = vmul.f32 %v2343, %v2364
    %v2373 = vpack.c.bf16 %v2369, %v2369
    %v2374 = vpack.c.bf16 %v2370, %v2370
    %v2375 = vpack.c.bf16 %v2371, %v2371
    %v2376 = vpack.c.bf16 %v2372, %v2372
    %v2381 = vunpack.c.l.b16 %v2373
    %v2382 = vunpack.c.l.b16 %v2374
    %v2383 = vunpack.c.l.b16 %v2375
    %v2384 = vunpack.c.l.b16 %v2376
    %v2385 = vpack.c.b16 %v2382, %v2381
    %v2386 = vpack.c.b16 %v2384, %v2383
    %v2387 = vrot.slane %v2385, 6
    %v2388 = vrot.slane %v2386, 6
    %2391 = vst [vmem:[#allocation2 + $0x30] sm:$0xcc] %v2387
    %2392 = vst [vmem:[#allocation2 + $0x38] sm:$0xcc] %v2388
    %2393 = vrot.lane.b32.xlu0 %v1933, 15
    %v2394 = vpop.permute.xlu0 %2393
    %2395 = vrot.lane.b32.xlu0 %v1934, 15
    %v2396 = vpop.permute.xlu0 %2395
    %2397 = vrot.lane.b32.xlu0 %v1935, 15
    %v2398 = vpop.permute.xlu0 %2397
    %2399 = vrot.lane.b32.xlu0 %v1936, 15
    %v2400 = vpop.permute.xlu0 %2399
    %v2401 = vsel %vm654, %v2398, %v2400
    %v2402 = vsel %vm654, %v2396, %v2398
    %v2403 = vsel %vm654, %v2394, %v2396
    %v2404 = vsel %vm654, %v2400, %v2394
    %v2405 = vld [vmem:[%s659] ss:$8 sm:$0xf]
    %v2407 = vlaneseq
    %v2408 = vshrl.u32 %v2407, 7
    %v2409 = vsub.s32 0, %v2408
    %v2410 = vrot.slane %v2405, %v2409
    %v2411 = vlaneseq
    %v2412 = vshrl.u32 %v2411, 7
    %v2413 = vsub.s32 1, %v2412
    %v2414 = vrot.slane %v2405, %v2413
    %v2415 = vlaneseq
    %v2416 = vshrl.u32 %v2415, 7
    %v2417 = vsub.s32 2, %v2416
    %v2418 = vrot.slane %v2405, %v2417
    %v2419 = vlaneseq
    %v2420 = vshrl.u32 %v2419, 7
    %v2421 = vsub.s32 3, %v2420
    %v2422 = vrot.slane %v2405, %v2421
    %v2427 = vmul.f32 %v2404, %v2410
    %v2428 = vmul.f32 %v2403, %v2414
    %v2429 = vmul.f32 %v2402, %v2418
    %v2430 = vmul.f32 %v2401, %v2422
    %v2431 = vpack.c.bf16 %v2427, %v2427
    %v2432 = vpack.c.bf16 %v2428, %v2428
    %v2433 = vpack.c.bf16 %v2429, %v2429
    %v2434 = vpack.c.bf16 %v2430, %v2430
    %v2439 = vunpack.c.l.b16 %v2431
    %v2440 = vunpack.c.l.b16 %v2432
    %v2441 = vunpack.c.l.b16 %v2433
    %v2442 = vunpack.c.l.b16 %v2434
    %v2443 = vpack.c.b16 %v2440, %v2439
    %v2444 = vpack.c.b16 %v2442, %v2441
    %2447 = vst [vmem:[#allocation2 + $0x40] sm:$0x33] %v2443
    %2448 = vst [vmem:[#allocation2 + $0x48] sm:$0x33] %v2444
    %2449 = vrot.lane.b32.xlu0 %v1933, 14
    %v2450 = vpop.permute.xlu0 %2449
    %2451 = vrot.lane.b32.xlu0 %v1934, 14
    %v2452 = vpop.permute.xlu0 %2451
    %2453 = vrot.lane.b32.xlu0 %v1935, 14
    %v2454 = vpop.permute.xlu0 %2453
    %2455 = vrot.lane.b32.xlu0 %v1936, 14
    %v2456 = vpop.permute.xlu0 %2455
    %v2457 = vsel %vm716, %v2454, %v2456
    %v2458 = vsel %vm716, %v2452, %v2454
    %v2459 = vsel %vm716, %v2450, %v2452
    %v2460 = vsel %vm716, %v2456, %v2450
    %v2461 = vld [vmem:[%s721] ss:$8 sm:$0xf]
    %v2463 = vlaneseq
    %v2464 = vshrl.u32 %v2463, 7
    %v2465 = vsub.s32 0, %v2464
    %v2466 = vrot.slane %v2461, %v2465
    %v2467 = vlaneseq
    %v2468 = vshrl.u32 %v2467, 7
    %v2469 = vsub.s32 1, %v2468
    %v2470 = vrot.slane %v2461, %v2469
    %v2471 = vlaneseq
    %v2472 = vshrl.u32 %v2471, 7
    %v2473 = vsub.s32 2, %v2472
    %v2474 = vrot.slane %v2461, %v2473
    %v2475 = vlaneseq
    %v2476 = vshrl.u32 %v2475, 7
    %v2477 = vsub.s32 3, %v2476
    %v2478 = vrot.slane %v2461, %v2477
    %v2483 = vmul.f32 %v2460, %v2466
    %v2484 = vmul.f32 %v2459, %v2470
    %v2485 = vmul.f32 %v2458, %v2474
    %v2486 = vmul.f32 %v2457, %v2478
    %v2487 = vpack.c.bf16 %v2483, %v2483
    %v2488 = vpack.c.bf16 %v2484, %v2484
    %v2489 = vpack.c.bf16 %v2485, %v2485
    %v2490 = vpack.c.bf16 %v2486, %v2486
    %v2495 = vunpack.c.l.b16 %v2487
    %v2496 = vunpack.c.l.b16 %v2488
    %v2497 = vunpack.c.l.b16 %v2489
    %v2498 = vunpack.c.l.b16 %v2490
    %v2499 = vpack.c.b16 %v2496, %v2495
    %v2500 = vpack.c.b16 %v2498, %v2497
    %v2501 = vrot.slane %v2499, 6
    %v2502 = vrot.slane %v2500, 6
    %2505 = vst [vmem:[#allocation2 + $0x40] sm:$0xcc] %v2501
    %2506 = vst [vmem:[#allocation2 + $0x48] sm:$0xcc] %v2502
    %2507 = vrot.lane.b32.xlu0 %v1933, 2
    %v2508 = vpop.permute.xlu0 %2507
    %2509 = vrot.lane.b32.xlu0 %v1934, 2
    %v2510 = vpop.permute.xlu0 %2509
    %2511 = vrot.lane.b32.xlu0 %v1935, 2
    %v2512 = vpop.permute.xlu0 %2511
    %2513 = vrot.lane.b32.xlu0 %v1936, 2
    %v2514 = vpop.permute.xlu0 %2513
    %v2515 = vsel %vm784, %v2512, %v2514
    %v2516 = vsel %vm784, %v2510, %v2512
    %v2517 = vsel %vm784, %v2508, %v2510
    %v2518 = vsel %vm784, %v2514, %v2508
    %v2519 = vld [vmem:[%s789] ss:$8 sm:$0xf]
    %v2521 = vlaneseq
    %v2522 = vshrl.u32 %v2521, 7
    %v2523 = vsub.s32 0, %v2522
    %v2524 = vrot.slane %v2519, %v2523
    %v2525 = vlaneseq
    %v2526 = vshrl.u32 %v2525, 7
    %v2527 = vsub.s32 1, %v2526
    %v2528 = vrot.slane %v2519, %v2527
    %v2529 = vlaneseq
    %v2530 = vshrl.u32 %v2529, 7
    %v2531 = vsub.s32 2, %v2530
    %v2532 = vrot.slane %v2519, %v2531
    %v2533 = vlaneseq
    %v2534 = vshrl.u32 %v2533, 7
    %v2535 = vsub.s32 3, %v2534
    %v2536 = vrot.slane %v2519, %v2535
    %v2541 = vmul.f32 %v2518, %v2524
    %v2542 = vmul.f32 %v2517, %v2528
    %v2543 = vmul.f32 %v2516, %v2532
    %v2544 = vmul.f32 %v2515, %v2536
    %v2545 = vpack.c.bf16 %v2541, %v2541
    %v2546 = vpack.c.bf16 %v2542, %v2542
    %v2547 = vpack.c.bf16 %v2543, %v2543
    %v2548 = vpack.c.bf16 %v2544, %v2544
    %v2553 = vunpack.c.l.b16 %v2545
    %v2554 = vunpack.c.l.b16 %v2546
    %v2555 = vunpack.c.l.b16 %v2547
    %v2556 = vunpack.c.l.b16 %v2548
    %v2557 = vpack.c.b16 %v2554, %v2553
    %v2558 = vpack.c.b16 %v2556, %v2555
    %2561 = vst [vmem:[#allocation2 + $0x50] sm:$0x33] %v2557
    %2562 = vst [vmem:[#allocation2 + $0x58] sm:$0x33] %v2558
    %2563 = vrot.lane.b32.xlu0 %v1933, 1
    %v2564 = vpop.permute.xlu0 %2563
    %2565 = vrot.lane.b32.xlu0 %v1934, 1
    %v2566 = vpop.permute.xlu0 %2565
    %2567 = vrot.lane.b32.xlu0 %v1935, 1
    %v2568 = vpop.permute.xlu0 %2567
    %2569 = vrot.lane.b32.xlu0 %v1936, 1
    %v2570 = vpop.permute.xlu0 %2569
    %v2571 = vsel %vm848, %v2568, %v2570
    %v2572 = vsel %vm848, %v2566, %v2568
    %v2573 = vsel %vm848, %v2564, %v2566
    %v2574 = vsel %vm848, %v2570, %v2564
    %v2575 = vld [vmem:[%s853] ss:$8 sm:$0xf]
    %v2577 = vlaneseq
    %v2578 = vshrl.u32 %v2577, 7
    %v2579 = vsub.s32 0, %v2578
    %v2580 = vrot.slane %v2575, %v2579
    %v2581 = vlaneseq
    %v2582 = vshrl.u32 %v2581, 7
    %v2583 = vsub.s32 1, %v2582
    %v2584 = vrot.slane %v2575, %v2583
    %v2585 = vlaneseq
    %v2586 = vshrl.u32 %v2585, 7
    %v2587 = vsub.s32 2, %v2586
    %v2588 = vrot.slane %v2575, %v2587
    %v2589 = vlaneseq
    %v2590 = vshrl.u32 %v2589, 7
    %v2591 = vsub.s32 3, %v2590
    %v2592 = vrot.slane %v2575, %v2591
    %v2597 = vmul.f32 %v2574, %v2580
    %v2598 = vmul.f32 %v2573, %v2584
    %v2599 = vmul.f32 %v2572, %v2588
    %v2600 = vmul.f32 %v2571, %v2592
    %v2601 = vpack.c.bf16 %v2597, %v2597
    %v2602 = vpack.c.bf16 %v2598, %v2598
    %v2603 = vpack.c.bf16 %v2599, %v2599
    %v2604 = vpack.c.bf16 %v2600, %v2600
    %v2609 = vunpack.c.l.b16 %v2601
    %v2610 = vunpack.c.l.b16 %v2602
    %v2611 = vunpack.c.l.b16 %v2603
    %v2612 = vunpack.c.l.b16 %v2604
    %v2613 = vpack.c.b16 %v2610, %v2609
    %v2614 = vpack.c.b16 %v2612, %v2611
    %v2615 = vrot.slane %v2613, 6
    %v2616 = vrot.slane %v2614, 6
    %2619 = vst [vmem:[#allocation2 + $0x50] sm:$0xcc] %v2615
    %2620 = vst [vmem:[#allocation2 + $0x58] sm:$0xcc] %v2616
    %v2621 = vpack.c.bf16 %v1933, %v1933
    %v2622 = vpack.c.bf16 %v1934, %v1934
    %v2623 = vpack.c.bf16 %v1935, %v1935
    %v2624 = vpack.c.bf16 %v1936, %v1936
    %v2629 = vunpack.c.l.b16 %v2621
    %v2630 = vunpack.c.l.b16 %v2622
    %v2631 = vunpack.c.l.b16 %v2623
    %v2632 = vunpack.c.l.b16 %v2624
    %v2633 = vpack.c.b16 %v2630, %v2629
    %v2634 = vpack.c.b16 %v2632, %v2631
    %2637 = vst [vmem:[#allocation2 + $0x60] sm:$0x33] %v2633
    %2638 = vst [vmem:[#allocation2 + $0x68] sm:$0x33] %v2634
    %2639 = vrot.lane.b32.xlu0 %v1933, 127
    %v2640 = vpop.permute.xlu0 %2639
    %2641 = vrot.lane.b32.xlu0 %v1934, 127
    %v2642 = vpop.permute.xlu0 %2641
    %2643 = vrot.lane.b32.xlu0 %v1935, 127
    %v2644 = vpop.permute.xlu0 %2643
    %2645 = vrot.lane.b32.xlu0 %v1936, 127
    %v2646 = vpop.permute.xlu0 %2645
    %v2647 = vsel %vm942, %v2644, %v2646
    %v2648 = vsel %vm942, %v2642, %v2644
    %v2649 = vsel %vm942, %v2640, %v2642
    %v2650 = vsel %vm942, %v2646, %v2640
    %v2651 = vld [vmem:[%s947] ss:$8 sm:$0xf]
    %v2653 = vlaneseq
    %v2654 = vshrl.u32 %v2653, 7
    %v2655 = vsub.s32 0, %v2654
    %v2656 = vrot.slane %v2651, %v2655
    %v2657 = vlaneseq
    %v2658 = vshrl.u32 %v2657, 7
    %v2659 = vsub.s32 1, %v2658
    %v2660 = vrot.slane %v2651, %v2659
    %v2661 = vlaneseq
    %v2662 = vshrl.u32 %v2661, 7
    %v2663 = vsub.s32 2, %v2662
    %v2664 = vrot.slane %v2651, %v2663
    %v2665 = vlaneseq
    %v2666 = vshrl.u32 %v2665, 7
    %v2667 = vsub.s32 3, %v2666
    %v2668 = vrot.slane %v2651, %v2667
    %v2673 = vmul.f32 %v2649, %v2656
    %v2674 = vmul.f32 %v2648, %v2660
    %v2675 = vmul.f32 %v2647, %v2664
    %v2676 = vmul.f32 %v2650, %v2668
    %v2677 = vpack.c.bf16 %v2673, %v2673
    %v2678 = vpack.c.bf16 %v2674, %v2674
    %v2679 = vpack.c.bf16 %v2675, %v2675
    %v2680 = vpack.c.bf16 %v2676, %v2676
    %v2685 = vunpack.c.l.b16 %v2677
    %v2686 = vunpack.c.l.b16 %v2678
    %v2687 = vunpack.c.l.b16 %v2679
    %v2688 = vunpack.c.l.b16 %v2680
    %v2689 = vpack.c.b16 %v2686, %v2685
    %v2690 = vpack.c.b16 %v2688, %v2687
    %v2691 = vrot.slane %v2689, 6
    %v2692 = vrot.slane %v2690, 6
    %2695 = vst [vmem:[#allocation2 + $0x60] sm:$0xcc] %v2691
    %2696 = vst [vmem:[#allocation2 + $0x68] sm:$0xcc] %v2692
    %2697 = vrot.lane.b32.xlu0 %v1933, 126
    %v2698 = vpop.permute.xlu0 %2697
    %2699 = vrot.lane.b32.xlu0 %v1934, 126
    %v2700 = vpop.permute.xlu0 %2699
    %2701 = vrot.lane.b32.xlu0 %v1935, 126
    %v2702 = vpop.permute.xlu0 %2701
    %2703 = vrot.lane.b32.xlu0 %v1936, 126
    %v2704 = vpop.permute.xlu0 %2703
    %v2705 = vsel %vm1012, %v2702, %v2704
    %v2706 = vsel %vm1012, %v2700, %v2702
    %v2707 = vsel %vm1012, %v2698, %v2700
    %v2708 = vsel %vm1012, %v2704, %v2698
    %v2709 = vld [vmem:[%s1017] ss:$8 sm:$0xf]
    %v2711 = vlaneseq
    %v2712 = vshrl.u32 %v2711, 7
    %v2713 = vsub.s32 0, %v2712
    %v2714 = vrot.slane %v2709, %v2713
    %v2715 = vlaneseq
    %v2716 = vshrl.u32 %v2715, 7
    %v2717 = vsub.s32 1, %v2716
    %v2718 = vrot.slane %v2709, %v2717
    %v2719 = vlaneseq
    %v2720 = vshrl.u32 %v2719, 7
    %v2721 = vsub.s32 2, %v2720
    %v2722 = vrot.slane %v2709, %v2721
    %v2723 = vlaneseq
    %v2724 = vshrl.u32 %v2723, 7
    %v2725 = vsub.s32 3, %v2724
    %v2726 = vrot.slane %v2709, %v2725
    %v2731 = vmul.f32 %v2707, %v2714
    %v2732 = vmul.f32 %v2706, %v2718
    %v2733 = vmul.f32 %v2705, %v2722
    %v2734 = vmul.f32 %v2708, %v2726
    %v2735 = vpack.c.bf16 %v2731, %v2731
    %v2736 = vpack.c.bf16 %v2732, %v2732
    %v2737 = vpack.c.bf16 %v2733, %v2733
    %v2738 = vpack.c.bf16 %v2734, %v2734
    %v2743 = vunpack.c.l.b16 %v2735
    %v2744 = vunpack.c.l.b16 %v2736
    %v2745 = vunpack.c.l.b16 %v2737
    %v2746 = vunpack.c.l.b16 %v2738
    %v2747 = vpack.c.b16 %v2744, %v2743
    %v2748 = vpack.c.b16 %v2746, %v2745
    %2751 = vst [vmem:[#allocation2 + $0x70] sm:$0x33] %v2747
    %2752 = vst [vmem:[#allocation2 + $0x78] sm:$0x33] %v2748
    %2753 = vrot.lane.b32.xlu0 %v1933, 114
    %v2754 = vpop.permute.xlu0 %2753
    %2755 = vrot.lane.b32.xlu0 %v1934, 114
    %v2756 = vpop.permute.xlu0 %2755
    %2757 = vrot.lane.b32.xlu0 %v1935, 114
    %v2758 = vpop.permute.xlu0 %2757
    %2759 = vrot.lane.b32.xlu0 %v1936, 114
    %v2760 = vpop.permute.xlu0 %2759
    %v2761 = vsel %vm1076, %v2758, %v2760
    %v2762 = vsel %vm1076, %v2756, %v2758
    %v2763 = vsel %vm1076, %v2754, %v2756
    %v2764 = vsel %vm1076, %v2760, %v2754
    %v2765 = vld [vmem:[%s1081] ss:$8 sm:$0xf]
    %v2767 = vlaneseq
    %v2768 = vshrl.u32 %v2767, 7
    %v2769 = vsub.s32 0, %v2768
    %v2770 = vrot.slane %v2765, %v2769
    %v2771 = vlaneseq
    %v2772 = vshrl.u32 %v2771, 7
    %v2773 = vsub.s32 1, %v2772
    %v2774 = vrot.slane %v2765, %v2773
    %v2775 = vlaneseq
    %v2776 = vshrl.u32 %v2775, 7
    %v2777 = vsub.s32 2, %v2776
    %v2778 = vrot.slane %v2765, %v2777
    %v2779 = vlaneseq
    %v2780 = vshrl.u32 %v2779, 7
    %v2781 = vsub.s32 3, %v2780
    %v2782 = vrot.slane %v2765, %v2781
    %v2787 = vmul.f32 %v2763, %v2770
    %v2788 = vmul.f32 %v2762, %v2774
    %v2789 = vmul.f32 %v2761, %v2778
    %v2790 = vmul.f32 %v2764, %v2782
    %v2791 = vpack.c.bf16 %v2787, %v2787
    %v2792 = vpack.c.bf16 %v2788, %v2788
    %v2793 = vpack.c.bf16 %v2789, %v2789
    %v2794 = vpack.c.bf16 %v2790, %v2790
    %v2799 = vunpack.c.l.b16 %v2791
    %v2800 = vunpack.c.l.b16 %v2792
    %v2801 = vunpack.c.l.b16 %v2793
    %v2802 = vunpack.c.l.b16 %v2794
    %v2803 = vpack.c.b16 %v2800, %v2799
    %v2804 = vpack.c.b16 %v2802, %v2801
    %v2805 = vrot.slane %v2803, 6
    %v2806 = vrot.slane %v2804, 6
    %2809 = vst [vmem:[#allocation2 + $0x70] sm:$0xcc] %v2805
    %2810 = vst [vmem:[#allocation2 + $0x78] sm:$0xcc] %v2806
    %2811 = vrot.lane.b32.xlu0 %v1933, 113
    %v2812 = vpop.permute.xlu0 %2811
    %2813 = vrot.lane.b32.xlu0 %v1934, 113
    %v2814 = vpop.permute.xlu0 %2813
    %2815 = vrot.lane.b32.xlu0 %v1935, 113
    %v2816 = vpop.permute.xlu0 %2815
    %2817 = vrot.lane.b32.xlu0 %v1936, 113
    %v2818 = vpop.permute.xlu0 %2817
    %v2819 = vsel %vm1146, %v2816, %v2818
    %v2820 = vsel %vm1146, %v2814, %v2816
    %v2821 = vsel %vm1146, %v2812, %v2814
    %v2822 = vsel %vm1146, %v2818, %v2812
    %v2823 = vld [vmem:[%s1151] ss:$8 sm:$0xf]
    %v2825 = vlaneseq
    %v2826 = vshrl.u32 %v2825, 7
    %v2827 = vsub.s32 0, %v2826
    %v2828 = vrot.slane %v2823, %v2827
    %v2829 = vlaneseq
    %v2830 = vshrl.u32 %v2829, 7
    %v2831 = vsub.s32 1, %v2830
    %v2832 = vrot.slane %v2823, %v2831
    %v2833 = vlaneseq
    %v2834 = vshrl.u32 %v2833, 7
    %v2835 = vsub.s32 2, %v2834
    %v2836 = vrot.slane %v2823, %v2835
    %v2837 = vlaneseq
    %v2838 = vshrl.u32 %v2837, 7
    %v2839 = vsub.s32 3, %v2838
    %v2840 = vrot.slane %v2823, %v2839
    %v2845 = vmul.f32 %v2821, %v2828
    %v2846 = vmul.f32 %v2820, %v2832
    %v2847 = vmul.f32 %v2819, %v2836
    %v2848 = vmul.f32 %v2822, %v2840
    %v2849 = vpack.c.bf16 %v2845, %v2845
    %v2850 = vpack.c.bf16 %v2846, %v2846
    %v2851 = vpack.c.bf16 %v2847, %v2847
    %v2852 = vpack.c.bf16 %v2848, %v2848
    %v2857 = vunpack.c.l.b16 %v2849
    %v2858 = vunpack.c.l.b16 %v2850
    %v2859 = vunpack.c.l.b16 %v2851
    %v2860 = vunpack.c.l.b16 %v2852
    %v2861 = vpack.c.b16 %v2858, %v2857
    %v2862 = vpack.c.b16 %v2860, %v2859
    %2865 = vst [vmem:[#allocation2 + $0x80] sm:$0x33] %v2861
    %2866 = vst [vmem:[#allocation2 + $0x88] sm:$0x33] %v2862
    %2867 = vrot.lane.b32.xlu0 %v1933, 112
    %v2868 = vpop.permute.xlu0 %2867
    %2869 = vrot.lane.b32.xlu0 %v1934, 112
    %v2870 = vpop.permute.xlu0 %2869
    %2871 = vrot.lane.b32.xlu0 %v1935, 112
    %v2872 = vpop.permute.xlu0 %2871
    %2873 = vrot.lane.b32.xlu0 %v1936, 112
    %v2874 = vpop.permute.xlu0 %2873
    %v2875 = vsel %vm1208, %v2872, %v2874
    %v2876 = vsel %vm1208, %v2870, %v2872
    %v2877 = vsel %vm1208, %v2868, %v2870
    %v2878 = vsel %vm1208, %v2874, %v2868
    %v2879 = vld [vmem:[%s1213] ss:$8 sm:$0xf]
    %v2881 = vlaneseq
    %v2882 = vshrl.u32 %v2881, 7
    %v2883 = vsub.s32 0, %v2882
    %v2884 = vrot.slane %v2879, %v2883
    %v2885 = vlaneseq
    %v2886 = vshrl.u32 %v2885, 7
    %v2887 = vsub.s32 1, %v2886
    %v2888 = vrot.slane %v2879, %v2887
    %v2889 = vlaneseq
    %v2890 = vshrl.u32 %v2889, 7
    %v2891 = vsub.s32 2, %v2890
    %v2892 = vrot.slane %v2879, %v2891
    %v2893 = vlaneseq
    %v2894 = vshrl.u32 %v2893, 7
    %v2895 = vsub.s32 3, %v2894
    %v2896 = vrot.slane %v2879, %v2895
    %v2901 = vmul.f32 %v2877, %v2884
    %v2902 = vmul.f32 %v2876, %v2888
    %v2903 = vmul.f32 %v2875, %v2892
    %v2904 = vmul.f32 %v2878, %v2896
    %v2905 = vpack.c.bf16 %v2901, %v2901
    %v2906 = vpack.c.bf16 %v2902, %v2902
    %v2907 = vpack.c.bf16 %v2903, %v2903
    %v2908 = vpack.c.bf16 %v2904, %v2904
    %v2913 = vunpack.c.l.b16 %v2905
    %v2914 = vunpack.c.l.b16 %v2906
    %v2915 = vunpack.c.l.b16 %v2907
    %v2916 = vunpack.c.l.b16 %v2908
    %v2917 = vpack.c.b16 %v2914, %v2913
    %v2918 = vpack.c.b16 %v2916, %v2915
    %v2919 = vrot.slane %v2917, 6
    %v2920 = vrot.slane %v2918, 6
    %2923 = vst [vmem:[#allocation2 + $0x80] sm:$0xcc] %v2919
    %2924 = vst [vmem:[#allocation2 + $0x88] sm:$0xcc] %v2920
    %2925 = vrot.lane.b32.xlu0 %v1933, 111
    %v2926 = vpop.permute.xlu0 %2925
    %2927 = vrot.lane.b32.xlu0 %v1934, 111
    %v2928 = vpop.permute.xlu0 %2927
    %2929 = vrot.lane.b32.xlu0 %v1935, 111
    %v2930 = vpop.permute.xlu0 %2929
    %2931 = vrot.lane.b32.xlu0 %v1936, 111
    %v2932 = vpop.permute.xlu0 %2931
    %v2933 = vsel %vm1276, %v2930, %v2932
    %v2934 = vsel %vm1276, %v2928, %v2930
    %v2935 = vsel %vm1276, %v2926, %v2928
    %v2936 = vsel %vm1276, %v2932, %v2926
    %v2937 = vld [vmem:[%s1281] ss:$8 sm:$0xf]
    %v2939 = vlaneseq
    %v2940 = vshrl.u32 %v2939, 7
    %v2941 = vsub.s32 0, %v2940
    %v2942 = vrot.slane %v2937, %v2941
    %v2943 = vlaneseq
    %v2944 = vshrl.u32 %v2943, 7
    %v2945 = vsub.s32 1, %v2944
    %v2946 = vrot.slane %v2937, %v2945
    %v2947 = vlaneseq
    %v2948 = vshrl.u32 %v2947, 7
    %v2949 = vsub.s32 2, %v2948
    %v2950 = vrot.slane %v2937, %v2949
    %v2951 = vlaneseq
    %v2952 = vshrl.u32 %v2951, 7
    %v2953 = vsub.s32 3, %v2952
    %v2954 = vrot.slane %v2937, %v2953
    %v2959 = vmul.f32 %v2935, %v2942
    %v2960 = vmul.f32 %v2934, %v2946
    %v2961 = vmul.f32 %v2933, %v2950
    %v2962 = vmul.f32 %v2936, %v2954
    %v2963 = vpack.c.bf16 %v2959, %v2959
    %v2964 = vpack.c.bf16 %v2960, %v2960
    %v2965 = vpack.c.bf16 %v2961, %v2961
    %v2966 = vpack.c.bf16 %v2962, %v2962
    %v2971 = vunpack.c.l.b16 %v2963
    %v2972 = vunpack.c.l.b16 %v2964
    %v2973 = vunpack.c.l.b16 %v2965
    %v2974 = vunpack.c.l.b16 %v2966
    %v2975 = vpack.c.b16 %v2972, %v2971
    %v2976 = vpack.c.b16 %v2974, %v2973
    %2979 = vst [vmem:[#allocation2 + $0x90] sm:$0x33] %v2975
    %2980 = vst [vmem:[#allocation2 + $0x98] sm:$0x33] %v2976
    %2981 = vrot.lane.b32.xlu0 %v1933, 110
    %v2982 = vpop.permute.xlu0 %2981
    %2983 = vrot.lane.b32.xlu0 %v1934, 110
    %v2984 = vpop.permute.xlu0 %2983
    %2985 = vrot.lane.b32.xlu0 %v1935, 110
    %v2986 = vpop.permute.xlu0 %2985
    %2987 = vrot.lane.b32.xlu0 %v1936, 110
    %v2988 = vpop.permute.xlu0 %2987
    %v2989 = vsel %vm1340, %v2986, %v2988
    %v2990 = vsel %vm1340, %v2984, %v2986
    %v2991 = vsel %vm1340, %v2982, %v2984
    %v2992 = vsel %vm1340, %v2988, %v2982
    %v2993 = vld [vmem:[%s1345] ss:$8 sm:$0xf]
    %v2995 = vlaneseq
    %v2996 = vshrl.u32 %v2995, 7
    %v2997 = vsub.s32 0, %v2996
    %v2998 = vrot.slane %v2993, %v2997
    %v2999 = vlaneseq
    %v3000 = vshrl.u32 %v2999, 7
    %v3001 = vsub.s32 1, %v3000
    %v3002 = vrot.slane %v2993, %v3001
    %v3003 = vlaneseq
    %v3004 = vshrl.u32 %v3003, 7
    %v3005 = vsub.s32 2, %v3004
    %v3006 = vrot.slane %v2993, %v3005
    %v3007 = vlaneseq
    %v3008 = vshrl.u32 %v3007, 7
    %v3009 = vsub.s32 3, %v3008
    %v3010 = vrot.slane %v2993, %v3009
    %v3015 = vmul.f32 %v2991, %v2998
    %v3016 = vmul.f32 %v2990, %v3002
    %v3017 = vmul.f32 %v2989, %v3006
    %v3018 = vmul.f32 %v2992, %v3010
    %v3019 = vpack.c.bf16 %v3015, %v3015
    %v3020 = vpack.c.bf16 %v3016, %v3016
    %v3021 = vpack.c.bf16 %v3017, %v3017
    %v3022 = vpack.c.bf16 %v3018, %v3018
    %v3027 = vunpack.c.l.b16 %v3019
    %v3028 = vunpack.c.l.b16 %v3020
    %v3029 = vunpack.c.l.b16 %v3021
    %v3030 = vunpack.c.l.b16 %v3022
    %v3031 = vpack.c.b16 %v3028, %v3027
    %v3032 = vpack.c.b16 %v3030, %v3029
    %v3033 = vrot.slane %v3031, 6
    %v3034 = vrot.slane %v3032, 6
    %3037 = vst [vmem:[#allocation2 + $0x90] sm:$0xcc] %v3033
    %3038 = vst [vmem:[#allocation2 + $0x98] sm:$0xcc] %v3034
    %3039 = vrot.lane.b32.xlu0 %v1933, 98
    %v3040 = vpop.permute.xlu0 %3039
    %3041 = vrot.lane.b32.xlu0 %v1934, 98
    %v3042 = vpop.permute.xlu0 %3041
    %3043 = vrot.lane.b32.xlu0 %v1935, 98
    %v3044 = vpop.permute.xlu0 %3043
    %3045 = vrot.lane.b32.xlu0 %v1936, 98
    %v3046 = vpop.permute.xlu0 %3045
    %v3047 = vsel %vm1410, %v3044, %v3046
    %v3048 = vsel %vm1410, %v3042, %v3044
    %v3049 = vsel %vm1410, %v3040, %v3042
    %v3050 = vsel %vm1410, %v3046, %v3040
    %v3051 = vld [vmem:[%s1415] ss:$8 sm:$0xf]
    %v3053 = vlaneseq
    %v3054 = vshrl.u32 %v3053, 7
    %v3055 = vsub.s32 0, %v3054
    %v3056 = vrot.slane %v3051, %v3055
    %v3057 = vlaneseq
    %v3058 = vshrl.u32 %v3057, 7
    %v3059 = vsub.s32 1, %v3058
    %v3060 = vrot.slane %v3051, %v3059
    %v3061 = vlaneseq
    %v3062 = vshrl.u32 %v3061, 7
    %v3063 = vsub.s32 2, %v3062
    %v3064 = vrot.slane %v3051, %v3063
    %v3065 = vlaneseq
    %v3066 = vshrl.u32 %v3065, 7
    %v3067 = vsub.s32 3, %v3066
    %v3068 = vrot.slane %v3051, %v3067
    %v3073 = vmul.f32 %v3049, %v3056
    %v3074 = vmul.f32 %v3048, %v3060
    %v3075 = vmul.f32 %v3047, %v3064
    %v3076 = vmul.f32 %v3050, %v3068
    %v3077 = vpack.c.bf16 %v3073, %v3073
    %v3078 = vpack.c.bf16 %v3074, %v3074
    %v3079 = vpack.c.bf16 %v3075, %v3075
    %v3080 = vpack.c.bf16 %v3076, %v3076
    %v3085 = vunpack.c.l.b16 %v3077
    %v3086 = vunpack.c.l.b16 %v3078
    %v3087 = vunpack.c.l.b16 %v3079
    %v3088 = vunpack.c.l.b16 %v3080
    %v3089 = vpack.c.b16 %v3086, %v3085
    %v3090 = vpack.c.b16 %v3088, %v3087
    %3093 = vst [vmem:[#allocation2 + $0xa0] sm:$0x33] %v3089
    %3094 = vst [vmem:[#allocation2 + $0xa8] sm:$0x33] %v3090
    %3095 = vrot.lane.b32.xlu0 %v1933, 97
    %v3096 = vpop.permute.xlu0 %3095
    %3097 = vrot.lane.b32.xlu0 %v1934, 97
    %v3098 = vpop.permute.xlu0 %3097
    %3099 = vrot.lane.b32.xlu0 %v1935, 97
    %v3100 = vpop.permute.xlu0 %3099
    %3101 = vrot.lane.b32.xlu0 %v1936, 97
    %v3102 = vpop.permute.xlu0 %3101
    %v3103 = vsel %vm1474, %v3100, %v3102
    %v3104 = vsel %vm1474, %v3098, %v3100
    %v3105 = vsel %vm1474, %v3096, %v3098
    %v3106 = vsel %vm1474, %v3102, %v3096
    %v3107 = vld [vmem:[%s1479] ss:$8 sm:$0xf]
    %v3109 = vlaneseq
    %v3110 = vshrl.u32 %v3109, 7
    %v3111 = vsub.s32 0, %v3110
    %v3112 = vrot.slane %v3107, %v3111
    %v3113 = vlaneseq
    %v3114 = vshrl.u32 %v3113, 7
    %v3115 = vsub.s32 1, %v3114
    %v3116 = vrot.slane %v3107, %v3115
    %v3117 = vlaneseq
    %v3118 = vshrl.u32 %v3117, 7
    %v3119 = vsub.s32 2, %v3118
    %v3120 = vrot.slane %v3107, %v3119
    %v3121 = vlaneseq
    %v3122 = vshrl.u32 %v3121, 7
    %v3123 = vsub.s32 3, %v3122
    %v3124 = vrot.slane %v3107, %v3123
    %v3129 = vmul.f32 %v3105, %v3112
    %v3130 = vmul.f32 %v3104, %v3116
    %v3131 = vmul.f32 %v3103, %v3120
    %v3132 = vmul.f32 %v3106, %v3124
    %v3133 = vpack.c.bf16 %v3129, %v3129
    %v3134 = vpack.c.bf16 %v3130, %v3130
    %v3135 = vpack.c.bf16 %v3131, %v3131
    %v3136 = vpack.c.bf16 %v3132, %v3132
    %v3141 = vunpack.c.l.b16 %v3133
    %v3142 = vunpack.c.l.b16 %v3134
    %v3143 = vunpack.c.l.b16 %v3135
    %v3144 = vunpack.c.l.b16 %v3136
    %v3145 = vpack.c.b16 %v3142, %v3141
    %v3146 = vpack.c.b16 %v3144, %v3143
    %v3147 = vrot.slane %v3145, 6
    %v3148 = vrot.slane %v3146, 6
    %3151 = vst [vmem:[#allocation2 + $0xa0] sm:$0xcc] %v3147
    %3152 = vst [vmem:[#allocation2 + $0xa8] sm:$0xcc] %v3148
    %3153 = vrot.lane.b32.xlu0 %v1933, 96
    %v3154 = vpop.permute.xlu0 %3153
    %3155 = vrot.lane.b32.xlu0 %v1934, 96
    %v3156 = vpop.permute.xlu0 %3155
    %3157 = vrot.lane.b32.xlu0 %v1935, 96
    %v3158 = vpop.permute.xlu0 %3157
    %3159 = vrot.lane.b32.xlu0 %v1936, 96
    %v3160 = vpop.permute.xlu0 %3159
    %v3161 = vsel %vm1544, %v3158, %v3160
    %v3162 = vsel %vm1544, %v3156, %v3158
    %v3163 = vsel %vm1544, %v3154, %v3156
    %v3164 = vsel %vm1544, %v3160, %v3154
    %v3165 = vld [vmem:[%s1549] ss:$8 sm:$0xf]
    %v3167 = vlaneseq
    %v3168 = vshrl.u32 %v3167, 7
    %v3169 = vsub.s32 0, %v3168
    %v3170 = vrot.slane %v3165, %v3169
    %v3171 = vlaneseq
    %v3172 = vshrl.u32 %v3171, 7
    %v3173 = vsub.s32 1, %v3172
    %v3174 = vrot.slane %v3165, %v3173
    %v3175 = vlaneseq
    %v3176 = vshrl.u32 %v3175, 7
    %v3177 = vsub.s32 2, %v3176
    %v3178 = vrot.slane %v3165, %v3177
    %v3179 = vlaneseq
    %v3180 = vshrl.u32 %v3179, 7
    %v3181 = vsub.s32 3, %v3180
    %v3182 = vrot.slane %v3165, %v3181
    %v3187 = vmul.f32 %v3163, %v3170
    %v3188 = vmul.f32 %v3162, %v3174
    %v3189 = vmul.f32 %v3161, %v3178
    %v3190 = vmul.f32 %v3164, %v3182
    %v3191 = vpack.c.bf16 %v3187, %v3187
    %v3192 = vpack.c.bf16 %v3188, %v3188
    %v3193 = vpack.c.bf16 %v3189, %v3189
    %v3194 = vpack.c.bf16 %v3190, %v3190
    %v3199 = vunpack.c.l.b16 %v3191
    %v3200 = vunpack.c.l.b16 %v3192
    %v3201 = vunpack.c.l.b16 %v3193
    %v3202 = vunpack.c.l.b16 %v3194
    %v3203 = vpack.c.b16 %v3200, %v3199
    %v3204 = vpack.c.b16 %v3202, %v3201
    %3207 = vst [vmem:[#allocation2 + $0xb0] sm:$0x33] %v3203
    %3208 = vst [vmem:[#allocation2 + $0xb8] sm:$0x33] %v3204
    %3209 = vrot.lane.b32.xlu0 %v1933, 95
    %v3210 = vpop.permute.xlu0 %3209
    %3211 = vrot.lane.b32.xlu0 %v1934, 95
    %v3212 = vpop.permute.xlu0 %3211
    %3213 = vrot.lane.b32.xlu0 %v1935, 95
    %v3214 = vpop.permute.xlu0 %3213
    %3215 = vrot.lane.b32.xlu0 %v1936, 95
    %v3216 = vpop.permute.xlu0 %3215
    %v3217 = vsel %vm1608, %v3214, %v3216
    %v3218 = vsel %vm1608, %v3212, %v3214
    %v3219 = vsel %vm1608, %v3210, %v3212
    %v3220 = vsel %vm1608, %v3216, %v3210
    %v3221 = vld [vmem:[%s1613] ss:$8 sm:$0xf]
    %v3223 = vlaneseq
    %v3224 = vshrl.u32 %v3223, 7
    %v3225 = vsub.s32 0, %v3224
    %v3226 = vrot.slane %v3221, %v3225
    %v3227 = vlaneseq
    %v3228 = vshrl.u32 %v3227, 7
    %v3229 = vsub.s32 1, %v3228
    %v3230 = vrot.slane %v3221, %v3229
    %v3231 = vlaneseq
    %v3232 = vshrl.u32 %v3231, 7
    %v3233 = vsub.s32 2, %v3232
    %v3234 = vrot.slane %v3221, %v3233
    %v3235 = vlaneseq
    %v3236 = vshrl.u32 %v3235, 7
    %v3237 = vsub.s32 3, %v3236
    %v3238 = vrot.slane %v3221, %v3237
    %v3243 = vmul.f32 %v3219, %v3226
    %v3244 = vmul.f32 %v3218, %v3230
    %v3245 = vmul.f32 %v3217, %v3234
    %v3246 = vmul.f32 %v3220, %v3238
    %v3247 = vpack.c.bf16 %v3243, %v3243
    %v3248 = vpack.c.bf16 %v3244, %v3244
    %v3249 = vpack.c.bf16 %v3245, %v3245
    %v3250 = vpack.c.bf16 %v3246, %v3246
    %v3255 = vunpack.c.l.b16 %v3247
    %v3256 = vunpack.c.l.b16 %v3248
    %v3257 = vunpack.c.l.b16 %v3249
    %v3258 = vunpack.c.l.b16 %v3250
    %v3259 = vpack.c.b16 %v3256, %v3255
    %v3260 = vpack.c.b16 %v3258, %v3257
    %v3261 = vrot.slane %v3259, 6
    %v3262 = vrot.slane %v3260, 6
    %3265 = vst [vmem:[#allocation2 + $0xb0] sm:$0xcc] %v3261
    %3266 = vst [vmem:[#allocation2 + $0xb8] sm:$0xcc] %v3262
    %3267 = vrot.lane.b32.xlu0 %v1933, 94
    %v3268 = vpop.permute.xlu0 %3267
    %3269 = vrot.lane.b32.xlu0 %v1934, 94
    %v3270 = vpop.permute.xlu0 %3269
    %3271 = vrot.lane.b32.xlu0 %v1935, 94
    %v3272 = vpop.permute.xlu0 %3271
    %3273 = vrot.lane.b32.xlu0 %v1936, 94
    %v3274 = vpop.permute.xlu0 %3273
    %v3275 = vsel %vm1678, %v3272, %v3274
    %v3276 = vsel %vm1678, %v3270, %v3272
    %v3277 = vsel %vm1678, %v3268, %v3270
    %v3278 = vsel %vm1678, %v3274, %v3268
    %v3279 = vld [vmem:[%s1683] ss:$8 sm:$0xf]
    %v3281 = vlaneseq
    %v3282 = vshrl.u32 %v3281, 7
    %v3283 = vsub.s32 0, %v3282
    %v3284 = vrot.slane %v3279, %v3283
    %v3285 = vlaneseq
    %v3286 = vshrl.u32 %v3285, 7
    %v3287 = vsub.s32 1, %v3286
    %v3288 = vrot.slane %v3279, %v3287
    %v3289 = vlaneseq
    %v3290 = vshrl.u32 %v3289, 7
    %v3291 = vsub.s32 2, %v3290
    %v3292 = vrot.slane %v3279, %v3291
    %v3293 = vlaneseq
    %v3294 = vshrl.u32 %v3293, 7
    %v3295 = vsub.s32 3, %v3294
    %v3296 = vrot.slane %v3279, %v3295
    %v3301 = vmul.f32 %v3277, %v3284
    %v3302 = vmul.f32 %v3276, %v3288
    %v3303 = vmul.f32 %v3275, %v3292
    %v3304 = vmul.f32 %v3278, %v3296
    %v3305 = vpack.c.bf16 %v3301, %v3301
    %v3306 = vpack.c.bf16 %v3302, %v3302
    %v3307 = vpack.c.bf16 %v3303, %v3303
    %v3308 = vpack.c.bf16 %v3304, %v3304
    %v3313 = vunpack.c.l.b16 %v3305
    %v3314 = vunpack.c.l.b16 %v3306
    %v3315 = vunpack.c.l.b16 %v3307
    %v3316 = vunpack.c.l.b16 %v3308
    %v3317 = vpack.c.b16 %v3314, %v3313
    %v3318 = vpack.c.b16 %v3316, %v3315
    %3321 = vst [vmem:[#allocation2 + $0xc0] sm:$0x33] %v3317
    %3322 = vst [vmem:[#allocation2 + $0xc8] sm:$0x33] %v3318
    %v3323 = vld [vmem:[%s2] sm:$0xf]
    %v3324 = vld [vmem:[%s2 + $0x4] sm:$0xf]
    %v3325 = vld [vmem:[#allocation2] sm:$0xff]
    %v3326 = vld [vmem:[#allocation2 + $0x8] sm:$0xff]
    %v3327 = vld [vmem:[#allocation2 + $0x10] sm:$0xff]
    %v3328 = vld [vmem:[#allocation2 + $0x18] sm:$0xff]
    %v3329 = vld [vmem:[#allocation2 + $0x20] sm:$0xff]
    %v3330 = vld [vmem:[#allocation2 + $0x28] sm:$0xff]
    %v3331 = vld [vmem:[#allocation2 + $0x30] sm:$0xff]
    %v3332 = vld [vmem:[#allocation2 + $0x38] sm:$0xff]
    %v3333 = vld [vmem:[#allocation2 + $0x40] sm:$0xff]
    %v3334 = vld [vmem:[#allocation2 + $0x48] sm:$0xff]
    %v3335 = vld [vmem:[#allocation2 + $0x50] sm:$0xff]
    %v3336 = vld [vmem:[#allocation2 + $0x58] sm:$0xff]
    %v3337 = vld [vmem:[#allocation2 + $0x60] sm:$0xff]
    %v3338 = vld [vmem:[#allocation2 + $0x68] sm:$0xff]
    %v3339 = vld [vmem:[#allocation2 + $0x70] sm:$0xff]
    %v3340 = vld [vmem:[#allocation2 + $0x78] sm:$0xff]
    %v3341 = vld [vmem:[#allocation2 + $0x80] sm:$0xff]
    %v3342 = vld [vmem:[#allocation2 + $0x88] sm:$0xff]
    %v3343 = vld [vmem:[#allocation2 + $0x90] sm:$0xff]
    %v3344 = vld [vmem:[#allocation2 + $0x98] sm:$0xff]
    %v3345 = vld [vmem:[#allocation2 + $0xa0] sm:$0xff]
    %v3346 = vld [vmem:[#allocation2 + $0xa8] sm:$0xff]
    %v3347 = vld [vmem:[#allocation2 + $0xb0] sm:$0xff]
    %v3348 = vld [vmem:[#allocation2 + $0xb8] sm:$0xff]
    %v3349 = vld [vmem:[#allocation2 + $0xc0] sm:$0x33]
    %v3350 = vld [vmem:[#allocation2 + $0xc8] sm:$0x33]
    %v3353 = vunpack.c.l.b16 %v3323
    %v3354 = vunpack.c.l.b16 %v3324
    %v3355 = vpack.c.b16 %v3354, %v3353
    %v3382 = vunpack.c.l.b16 %v3325
    %v3383 = vunpack.c.h.b16 %v3325
    %v3384 = vunpack.c.l.b16 %v3326
    %v3385 = vunpack.c.h.b16 %v3326
    %v3386 = vunpack.c.l.b16 %v3327
    %v3387 = vunpack.c.h.b16 %v3327
    %v3388 = vunpack.c.l.b16 %v3328
    %v3389 = vunpack.c.h.b16 %v3328
    %v3390 = vunpack.c.l.b16 %v3329
    %v3391 = vunpack.c.h.b16 %v3329
    %v3392 = vunpack.c.l.b16 %v3330
    %v3393 = vunpack.c.h.b16 %v3330
    %v3394 = vunpack.c.l.b16 %v3331
    %v3395 = vunpack.c.h.b16 %v3331
    %v3396 = vunpack.c.l.b16 %v3332
    %v3397 = vunpack.c.h.b16 %v3332
    %v3398 = vunpack.c.l.b16 %v3333
    %v3399 = vunpack.c.h.b16 %v3333
    %v3400 = vunpack.c.l.b16 %v3334
    %v3401 = vunpack.c.h.b16 %v3334
    %v3402 = vunpack.c.l.b16 %v3335
    %v3403 = vunpack.c.h.b16 %v3335
    %v3404 = vunpack.c.l.b16 %v3336
    %v3405 = vunpack.c.h.b16 %v3336
    %v3406 = vunpack.c.l.b16 %v3337
    %v3407 = vunpack.c.h.b16 %v3337
    %v3408 = vunpack.c.l.b16 %v3338
    %v3409 = vunpack.c.h.b16 %v3338
    %v3410 = vunpack.c.l.b16 %v3339
    %v3411 = vunpack.c.h.b16 %v3339
    %v3412 = vunpack.c.l.b16 %v3340
    %v3413 = vunpack.c.h.b16 %v3340
    %v3414 = vunpack.c.l.b16 %v3341
    %v3415 = vunpack.c.h.b16 %v3341
    %v3416 = vunpack.c.l.b16 %v3342
    %v3417 = vunpack.c.h.b16 %v3342
    %v3418 = vunpack.c.l.b16 %v3343
    %v3419 = vunpack.c.h.b16 %v3343
    %v3420 = vunpack.c.l.b16 %v3344
    %v3421 = vunpack.c.h.b16 %v3344
    %v3422 = vunpack.c.l.b16 %v3345
    %v3423 = vunpack.c.h.b16 %v3345
    %v3424 = vunpack.c.l.b16 %v3346
    %v3425 = vunpack.c.h.b16 %v3346
    %v3426 = vunpack.c.l.b16 %v3347
    %v3427 = vunpack.c.h.b16 %v3347
    %v3428 = vunpack.c.l.b16 %v3348
    %v3429 = vunpack.c.h.b16 %v3348
    %v3430 = vunpack.c.l.b16 %v3349
    %v3431 = vunpack.c.h.b16 %v3349
    %v3432 = vunpack.c.l.b16 %v3350
    %v3433 = vunpack.c.h.b16 %v3350
    %v3434 = vpack.c.b16 %v3386, %v3382
    %v3435 = vpack.c.b16 %v3387, %v3383
    %v3436 = vpack.c.b16 %v3388, %v3384
    %v3437 = vpack.c.b16 %v3389, %v3385
    %v3438 = vpack.c.b16 %v3394, %v3390
    %v3439 = vpack.c.b16 %v3395, %v3391
    %v3440 = vpack.c.b16 %v3396, %v3392
    %v3441 = vpack.c.b16 %v3397, %v3393
    %v3442 = vpack.c.b16 %v3402, %v3398
    %v3443 = vpack.c.b16 %v3403, %v3399
    %v3444 = vpack.c.b16 %v3404, %v3400
    %v3445 = vpack.c.b16 %v3405, %v3401
    %v3446 = vpack.c.b16 %v3410, %v3406
    %v3447 = vpack.c.b16 %v3411, %v3407
    %v3448 = vpack.c.b16 %v3412, %v3408
    %v3449 = vpack.c.b16 %v3413, %v3409
    %v3450 = vpack.c.b16 %v3418, %v3414
    %v3451 = vpack.c.b16 %v3419, %v3415
    %v3452 = vpack.c.b16 %v3420, %v3416
    %v3453 = vpack.c.b16 %v3421, %v3417
    %v3454 = vpack.c.b16 %v3426, %v3422
    %v3455 = vpack.c.b16 %v3427, %v3423
    %v3456 = vpack.c.b16 %v3428, %v3424
    %v3457 = vpack.c.b16 %v3429, %v3425
    %v3458 = vpack.c.b16 %v3430, %v3430
    %v3459 = vpack.c.b16 %v3431, %v3431
    %v3460 = vpack.c.b16 %v3432, %v3432
    %v3461 = vpack.c.b16 %v3433, %v3433
    %vm3486 = vcmask 818176
    %v3488 = vsel %vm3486, %v3355, 0
    %vm3490 = vcmask 1041408
    %v3492 = vsel %vm3490, %v3458, 0
    %v3495 = vsel %vm3490, %v3459, 0
    %v3498 = vsel %vm3490, %v3460, 0
    %v3501 = vsel %vm3490, %v3461, 0
    %3503 = vmatprep.subr.bf16.mxu0 0
    %3504 = vmatpush1.bf16.msra.mxu0 0
    %3505 = vmatprep.subr.bf16.mxu0 %v3495
    %3506 = vmatpush1.bf16.msra.mxu0 %v3492
    %3507 = vmatprep.subr.bf16.mxu0 %v3455
    %3508 = vmatpush1.bf16.msra.mxu0 %v3454
    %3509 = vmatprep.subr.bf16.mxu0 %v3451
    %3510 = vmatpush1.bf16.msra.mxu0 %v3450
    %3511 = vmatprep.subr.bf16.mxu0 %v3447
    %3512 = vmatpush1.bf16.msra.mxu0 %v3446
    %3513 = vmatprep.subr.bf16.mxu0 %v3443
    %3514 = vmatpush1.bf16.msra.mxu0 %v3442
    %3515 = vmatprep.subr.bf16.mxu0 %v3439
    %3516 = vmatpush1.bf16.msra.mxu0 %v3438
    %3517 = vmatprep.subr.bf16.mxu0 %v3435
    %3518 = vmatpush1.bf16.msra.mxu0 %v3434
    %3519 = vmatprep.subr.bf16.mxu0 0
    %3520 = vmatpush2.bf16.msra.mxu0 0
    %3521 = vmatprep.subr.bf16.mxu0 0
    %3522 = vmatpush2.bf16.msra.mxu0 0
    %3523 = vmatprep.subr.bf16.mxu0 0
    %3524 = vmatpush2.bf16.msra.mxu0 0
    %3525 = vmatprep.subr.bf16.mxu0 0
    %3526 = vmatpush2.bf16.msra.mxu0 0
    %3527 = vmatprep.subr.bf16.mxu0 0
    %3528 = vmatpush2.bf16.msra.mxu0 0
    %3529 = vmatprep.subr.bf16.mxu0 0
    %3530 = vmatpush2.bf16.msra.mxu0 0
    %3531 = vmatprep.subr.bf16.mxu0 0
    %3532 = vmatpush2.bf16.msra.mxu0 0
    %3533 = vmatprep.subr.bf16.mxu0 0
    %3534 = vmatpush2.bf16.msra.mxu0 0
    %3535 = vmatprep.mubr.bf16.mxu0 0
    %3536 = vmatmul.mubr.bf16.gmra.mxu0 %v3488
    %v3537 = vpop.f32.mrf.mxu0
    %v3538 = vadd.f32 0.0, %v3537
    %v3539 = vpop.f32.mrf.mxu0
    %v3540 = vadd.f32 0.0, %v3539
    %v3541 = vpop.f32.mrf.mxu0
    %v3542 = vadd.f32 0.0, %v3541
    %v3543 = vpop.f32.mrf.mxu0
    %v3544 = vadd.f32 0.0, %v3543
    %3545 = vdwg.mxu0
    %3546 = vmatprep.subr.bf16.mxu0 0
    %3547 = vmatpush1.bf16.msra.mxu0 0
    %3548 = vmatprep.subr.bf16.mxu0 %v3501
    %3549 = vmatpush1.bf16.msra.mxu0 %v3498
    %3550 = vmatprep.subr.bf16.mxu0 %v3457
    %3551 = vmatpush1.bf16.msra.mxu0 %v3456
    %3552 = vmatprep.subr.bf16.mxu0 %v3453
    %3553 = vmatpush1.bf16.msra.mxu0 %v3452
    %3554 = vmatprep.subr.bf16.mxu0 %v3449
    %3555 = vmatpush1.bf16.msra.mxu0 %v3448
    %3556 = vmatprep.subr.bf16.mxu0 %v3445
    %3557 = vmatpush1.bf16.msra.mxu0 %v3444
    %3558 = vmatprep.subr.bf16.mxu0 %v3441
    %3559 = vmatpush1.bf16.msra.mxu0 %v3440
    %3560 = vmatprep.subr.bf16.mxu0 %v3437
    %3561 = vmatpush1.bf16.msra.mxu0 %v3436
    %3562 = vmatprep.subr.bf16.mxu0 0
    %3563 = vmatpush2.bf16.msra.mxu0 0
    %3564 = vmatprep.subr.bf16.mxu0 0
    %3565 = vmatpush2.bf16.msra.mxu0 0
    %3566 = vmatprep.subr.bf16.mxu0 0
    %3567 = vmatpush2.bf16.msra.mxu0 0
    %3568 = vmatprep.subr.bf16.mxu0 0
    %3569 = vmatpush2.bf16.msra.mxu0 0
    %3570 = vmatprep.subr.bf16.mxu0 0
    %3571 = vmatpush2.bf16.msra.mxu0 0
    %3572 = vmatprep.subr.bf16.mxu0 0
    %3573 = vmatpush2.bf16.msra.mxu0 0
    %3574 = vmatprep.subr.bf16.mxu0 0
    %3575 = vmatpush2.bf16.msra.mxu0 0
    %3576 = vmatprep.subr.bf16.mxu0 0
    %3577 = vmatpush2.bf16.msra.mxu0 0
    %3578 = vmatprep.mubr.bf16.mxu0 0
    %3579 = vmatmul.mubr.bf16.gmra.mxu0 %v3488
    %v3580 = vpop.f32.mrf.mxu0
    %v3581 = vadd.f32 0.0, %v3580
    %v3582 = vpop.f32.mrf.mxu0
    %v3583 = vadd.f32 0.0, %v3582
    %v3584 = vpop.f32.mrf.mxu0
    %v3585 = vadd.f32 0.0, %v3584
    %v3586 = vpop.f32.mrf.mxu0
    %v3587 = vadd.f32 0.0, %v3586
    %3588 = vdwg.mxu0
    %v3589 = vadd.f32 %v3538, %v3540
    %v3590 = vadd.f32 %v3589, %v3581
    %v3591 = vadd.f32 %v3590, %v3583
    %3592 = vadd.xlane.f32.xlu0 %v3591
    %v3593 = vpop.xlane.xlu0 %3592
    %v3594 = vadd.f32 %v3542, %v3544
    %v3595 = vadd.f32 %v3594, %v3585
    %v3596 = vadd.f32 %v3595, %v3587
    %3597 = vadd.xlane.f32.xlu0 %v3596
    %v3598 = vpop.xlane.xlu0 %3597
    %v3599 = vmul.f32 %v3593, %v1888
    %v3600 = vmul.f32 %v3598, %v1888
    %v3601 = vsub.f32 %v3538, %v3599
    %v3602 = vsub.f32 %v3540, %v3599
    %v3603 = vsub.f32 %v3581, %v3599
    %v3604 = vsub.f32 %v3583, %v3599
    %v3605 = vsub.f32 %v3542, %v3600
    %v3606 = vsub.f32 %v3544, %v3600
    %v3607 = vsub.f32 %v3585, %v3600
    %v3608 = vsub.f32 %v3587, %v3600
    %v3609 = vmul.f32 %v3601, %v3601
    %v3610 = vmul.f32 %v3602, %v3602
    %v3611 = vmul.f32 %v3603, %v3603
    %v3612 = vmul.f32 %v3604, %v3604
    %v3613 = vmul.f32 %v3605, %v3605
    %v3614 = vmul.f32 %v3606, %v3606
    %v3615 = vmul.f32 %v3607, %v3607
    %v3616 = vmul.f32 %v3608, %v3608
    %v3617 = vadd.f32 %v3609, %v3610
    %v3618 = vadd.f32 %v3617, %v3611
    %v3619 = vadd.f32 %v3618, %v3612
    %3620 = vadd.xlane.f32.xlu0 %v3619
    %v3621 = vpop.xlane.xlu0 %3620
    %v3622 = vadd.f32 %v3613, %v3614
    %v3623 = vadd.f32 %v3622, %v3615
    %v3624 = vadd.f32 %v3623, %v3616
    %3625 = vadd.xlane.f32.xlu0 %v3624
    %v3626 = vpop.xlane.xlu0 %3625
    %v3627 = vmul.f32 %v3621, %v1888
    %v3628 = vmul.f32 %v3626, %v1888
    %v3629 = vld [vmem:[%s5 + $0x8] sm:$0xff]
    %v3630 = vld [vmem:[%s5 + $0x10] sm:$0xff]
    %v3631 = vld [vmem:[%s5 + $0x18] sm:$0xff]
    %v3632 = vld [vmem:[%s5 + $0x20] sm:$0xff]
    %v3633 = vadd.f32 %v3627, 1e-05
    %v3634 = vadd.f32 %v3628, 1e-05
    %v3635 = vrsqrt.pop %v3633
    %v3636 = vrsqrt.pop %v3634
    %v3637 = vmul.f32 %v3635, %v3629
    %v3638 = vmul.f32 %v3636, %v3630
    %v3639 = vmul.f32 %v3599, %v3637
    %v3640 = vmul.f32 %v3600, %v3638
    %v3641 = vsub.f32 %v3631, %v3639
    %v3642 = vsub.f32 %v3632, %v3640
    %3644 = vset.pattern.permute.xlu0 0
    %3645 = vperm.xlu0 %3644, %v3637
    %v3646 = vpop.permute.xlu0 %3645
    %3649 = vset.pattern.permute.xlu0 0
    %3650 = vperm.xlu0 %3649, %v3638
    %v3651 = vpop.permute.xlu0 %3650
    %v3653 = vmul.f32 %v3538, %v3646
    %v3654 = vmul.f32 %v3540, %v3646
    %v3655 = vmul.f32 %v3581, %v3646
    %v3656 = vmul.f32 %v3583, %v3646
    %v3657 = vmul.f32 %v3542, %v3651
    %v3658 = vmul.f32 %v3544, %v3651
    %v3659 = vmul.f32 %v3585, %v3651
    %v3660 = vmul.f32 %v3587, %v3651
    %3662 = vset.pattern.permute.xlu0 0
    %3663 = vperm.xlu0 %3662, %v3641
    %v3664 = vpop.permute.xlu0 %3663
    %3667 = vset.pattern.permute.xlu0 0
    %3668 = vperm.xlu0 %3667, %v3642
    %v3669 = vpop.permute.xlu0 %3668
    %v3671 = vadd.f32 %v3653, %v3664
    %v3672 = vadd.f32 %v3654, %v3664
    %v3673 = vadd.f32 %v3655, %v3664
    %v3674 = vadd.f32 %v3656, %v3664
    %v3675 = vadd.f32 %v3657, %v3669
    %v3676 = vadd.f32 %v3658, %v3669
    %v3677 = vadd.f32 %v3659, %v3669
    %v3678 = vadd.f32 %v3660, %v3669
    %v3679 = vmax.f32 %v3671, 0.0
    %v3680 = vmax.f32 %v3672, 0.0
    %v3681 = vmax.f32 %v3673, 0.0
    %v3682 = vmax.f32 %v3674, 0.0
    %v3683 = vmax.f32 %v3675, 0.0
    %v3684 = vmax.f32 %v3676, 0.0
    %v3685 = vmax.f32 %v3677, 0.0
    %v3686 = vmax.f32 %v3678, 0.0
    %3687 = vrot.lane.b32.xlu0 %v3679, 34
    %v3688 = vpop.permute.xlu0 %3687
    %3689 = vrot.lane.b32.xlu0 %v3683, 34
    %v3690 = vpop.permute.xlu0 %3689
    %3691 = vrot.lane.b32.xlu0 %v3680, 34
    %v3692 = vpop.permute.xlu0 %3691
    %3693 = vrot.lane.b32.xlu0 %v3684, 34
    %v3694 = vpop.permute.xlu0 %3693
    %3695 = vrot.lane.b32.xlu0 %v3681, 34
    %v3696 = vpop.permute.xlu0 %3695
    %3697 = vrot.lane.b32.xlu0 %v3685, 34
    %v3698 = vpop.permute.xlu0 %3697
    %3699 = vrot.lane.b32.xlu0 %v3682, 34
    %v3700 = vpop.permute.xlu0 %3699
    %3701 = vrot.lane.b32.xlu0 %v3686, 34
    %v3702 = vpop.permute.xlu0 %3701
    %v3703 = vsel %vm75, %v3696, %v3700
    %v3704 = vsel %vm75, %v3698, %v3702
    %v3705 = vsel %vm75, %v3692, %v3696
    %v3706 = vsel %vm75, %v3694, %v3698
    %v3707 = vsel %vm75, %v3688, %v3692
    %v3708 = vsel %vm75, %v3690, %v3694
    %v3709 = vsel %vm75, %v3700, %v3688
    %v3710 = vsel %vm75, %v3702, %v3690
    %v3711 = vld [vmem:[%s6] ss:$8 sm:$0xf]
    %v3713 = vlaneseq
    %v3714 = vshrl.u32 %v3713, 7
    %v3715 = vsub.s32 0, %v3714
    %v3716 = vrot.slane %v3711, %v3715
    %v3717 = vlaneseq
    %v3718 = vshrl.u32 %v3717, 7
    %v3719 = vsub.s32 1, %v3718
    %v3720 = vrot.slane %v3711, %v3719
    %v3721 = vlaneseq
    %v3722 = vshrl.u32 %v3721, 7
    %v3723 = vsub.s32 2, %v3722
    %v3724 = vrot.slane %v3711, %v3723
    %v3725 = vlaneseq
    %v3726 = vshrl.u32 %v3725, 7
    %v3727 = vsub.s32 3, %v3726
    %v3728 = vrot.slane %v3711, %v3727
    %v3733 = vmul.f32 %v3709, %v3716
    %v3734 = vmul.f32 %v3707, %v3720
    %v3735 = vmul.f32 %v3705, %v3724
    %v3736 = vmul.f32 %v3703, %v3728
    %v3737 = vmul.f32 %v3710, %v3716
    %v3738 = vmul.f32 %v3708, %v3720
    %v3739 = vmul.f32 %v3706, %v3724
    %v3740 = vmul.f32 %v3704, %v3728
    %v3741 = vpack.c.bf16 %v3737, %v3733
    %v3742 = vpack.c.bf16 %v3738, %v3734
    %v3743 = vpack.c.bf16 %v3739, %v3735
    %v3744 = vpack.c.bf16 %v3740, %v3736
    %v3749 = vunpack.c.l.b16 %v3741
    %v3750 = vunpack.c.l.b16 %v3742
    %v3751 = vunpack.c.l.b16 %v3743
    %v3752 = vunpack.c.l.b16 %v3744
    %v3753 = vunpack.c.h.b16 %v3741
    %v3754 = vunpack.c.h.b16 %v3742
    %v3755 = vunpack.c.h.b16 %v3743
    %v3756 = vunpack.c.h.b16 %v3744
    %v3757 = vpack.c.b16 %v3750, %v3749
    %v3758 = vpack.c.b16 %v3752, %v3751
    %v3759 = vpack.c.b16 %v3754, %v3753
    %v3760 = vpack.c.b16 %v3756, %v3755
    %3765 = vst [vmem:[#allocation2] sm:$0xff] %v3757
    %3766 = vst [vmem:[#allocation2 + $0x8] sm:$0xff] %v3758
    %3767 = vst [vmem:[#allocation2 + $0x10] sm:$0xff] %v3759
    %3768 = vst [vmem:[#allocation2 + $0x18] sm:$0xff] %v3760
    %3769 = vrot.lane.b32.xlu0 %v3679, 33
    %v3770 = vpop.permute.xlu0 %3769
    %3771 = vrot.lane.b32.xlu0 %v3683, 33
    %v3772 = vpop.permute.xlu0 %3771
    %3773 = vrot.lane.b32.xlu0 %v3680, 33
    %v3774 = vpop.permute.xlu0 %3773
    %3775 = vrot.lane.b32.xlu0 %v3684, 33
    %v3776 = vpop.permute.xlu0 %3775
    %3777 = vrot.lane.b32.xlu0 %v3681, 33
    %v3778 = vpop.permute.xlu0 %3777
    %3779 = vrot.lane.b32.xlu0 %v3685, 33
    %v3780 = vpop.permute.xlu0 %3779
    %3781 = vrot.lane.b32.xlu0 %v3682, 33
    %v3782 = vpop.permute.xlu0 %3781
    %3783 = vrot.lane.b32.xlu0 %v3686, 33
    %v3784 = vpop.permute.xlu0 %3783
    %v3785 = vsel %vm143, %v3778, %v3782
    %v3786 = vsel %vm143, %v3780, %v3784
    %v3787 = vsel %vm143, %v3774, %v3778
    %v3788 = vsel %vm143, %v3776, %v3780
    %v3789 = vsel %vm143, %v3770, %v3774
    %v3790 = vsel %vm143, %v3772, %v3776
    %v3791 = vsel %vm143, %v3782, %v3770
    %v3792 = vsel %vm143, %v3784, %v3772
    %v3793 = vld [vmem:[%s148] ss:$8 sm:$0xf]
    %v3795 = vlaneseq
    %v3796 = vshrl.u32 %v3795, 7
    %v3797 = vsub.s32 0, %v3796
    %v3798 = vrot.slane %v3793, %v3797
    %v3799 = vlaneseq
    %v3800 = vshrl.u32 %v3799, 7
    %v3801 = vsub.s32 1, %v3800
    %v3802 = vrot.slane %v3793, %v3801
    %v3803 = vlaneseq
    %v3804 = vshrl.u32 %v3803, 7
    %v3805 = vsub.s32 2, %v3804
    %v3806 = vrot.slane %v3793, %v3805
    %v3807 = vlaneseq
    %v3808 = vshrl.u32 %v3807, 7
    %v3809 = vsub.s32 3, %v3808
    %v3810 = vrot.slane %v3793, %v3809
    %v3815 = vmul.f32 %v3791, %v3798
    %v3816 = vmul.f32 %v3789, %v3802
    %v3817 = vmul.f32 %v3787, %v3806
    %v3818 = vmul.f32 %v3785, %v3810
    %v3819 = vmul.f32 %v3792, %v3798
    %v3820 = vmul.f32 %v3790, %v3802
    %v3821 = vmul.f32 %v3788, %v3806
    %v3822 = vmul.f32 %v3786, %v3810
    %v3823 = vpack.c.bf16 %v3819, %v3815
    %v3824 = vpack.c.bf16 %v3820, %v3816
    %v3825 = vpack.c.bf16 %v3821, %v3817
    %v3826 = vpack.c.bf16 %v3822, %v3818
    %v3831 = vunpack.c.l.b16 %v3823
    %v3832 = vunpack.c.l.b16 %v3824
    %v3833 = vunpack.c.l.b16 %v3825
    %v3834 = vunpack.c.l.b16 %v3826
    %v3835 = vunpack.c.h.b16 %v3823
    %v3836 = vunpack.c.h.b16 %v3824
    %v3837 = vunpack.c.h.b16 %v3825
    %v3838 = vunpack.c.h.b16 %v3826
    %v3839 = vpack.c.b16 %v3832, %v3831
    %v3840 = vpack.c.b16 %v3834, %v3833
    %v3841 = vpack.c.b16 %v3836, %v3835
    %v3842 = vpack.c.b16 %v3838, %v3837
    %3847 = vst [vmem:[#allocation2 + $0x20] sm:$0xff] %v3839
    %3848 = vst [vmem:[#allocation2 + $0x28] sm:$0xff] %v3840
    %3849 = vst [vmem:[#allocation2 + $0x30] sm:$0xff] %v3841
    %3850 = vst [vmem:[#allocation2 + $0x38] sm:$0xff] %v3842
    %3851 = vrot.lane.b32.xlu0 %v3679, 32
    %v3852 = vpop.permute.xlu0 %3851
    %3853 = vrot.lane.b32.xlu0 %v3683, 32
    %v3854 = vpop.permute.xlu0 %3853
    %3855 = vrot.lane.b32.xlu0 %v3680, 32
    %v3856 = vpop.permute.xlu0 %3855
    %3857 = vrot.lane.b32.xlu0 %v3684, 32
    %v3858 = vpop.permute.xlu0 %3857
    %3859 = vrot.lane.b32.xlu0 %v3681, 32
    %v3860 = vpop.permute.xlu0 %3859
    %3861 = vrot.lane.b32.xlu0 %v3685, 32
    %v3862 = vpop.permute.xlu0 %3861
    %3863 = vrot.lane.b32.xlu0 %v3682, 32
    %v3864 = vpop.permute.xlu0 %3863
    %3865 = vrot.lane.b32.xlu0 %v3686, 32
    %v3866 = vpop.permute.xlu0 %3865
    %v3867 = vsel %vm216, %v3860, %v3864
    %v3868 = vsel %vm216, %v3862, %v3866
    %v3869 = vsel %vm216, %v3856, %v3860
    %v3870 = vsel %vm216, %v3858, %v3862
    %v3871 = vsel %vm216, %v3852, %v3856
    %v3872 = vsel %vm216, %v3854, %v3858
    %v3873 = vsel %vm216, %v3864, %v3852
    %v3874 = vsel %vm216, %v3866, %v3854
    %v3875 = vld [vmem:[%s221] ss:$8 sm:$0xf]
    %v3877 = vlaneseq
    %v3878 = vshrl.u32 %v3877, 7
    %v3879 = vsub.s32 0, %v3878
    %v3880 = vrot.slane %v3875, %v3879
    %v3881 = vlaneseq
    %v3882 = vshrl.u32 %v3881, 7
    %v3883 = vsub.s32 1, %v3882
    %v3884 = vrot.slane %v3875, %v3883
    %v3885 = vlaneseq
    %v3886 = vshrl.u32 %v3885, 7
    %v3887 = vsub.s32 2, %v3886
    %v3888 = vrot.slane %v3875, %v3887
    %v3889 = vlaneseq
    %v3890 = vshrl.u32 %v3889, 7
    %v3891 = vsub.s32 3, %v3890
    %v3892 = vrot.slane %v3875, %v3891
    %v3897 = vmul.f32 %v3873, %v3880
    %v3898 = vmul.f32 %v3871, %v3884
    %v3899 = vmul.f32 %v3869, %v3888
    %v3900 = vmul.f32 %v3867, %v3892
    %v3901 = vmul.f32 %v3874, %v3880
    %v3902 = vmul.f32 %v3872, %v3884
    %v3903 = vmul.f32 %v3870, %v3888
    %v3904 = vmul.f32 %v3868, %v3892
    %v3905 = vpack.c.bf16 %v3901, %v3897
    %v3906 = vpack.c.bf16 %v3902, %v3898
    %v3907 = vpack.c.bf16 %v3903, %v3899
    %v3908 = vpack.c.bf16 %v3904, %v3900
    %v3913 = vunpack.c.l.b16 %v3905
    %v3914 = vunpack.c.l.b16 %v3906
    %v3915 = vunpack.c.l.b16 %v3907
    %v3916 = vunpack.c.l.b16 %v3908
    %v3917 = vunpack.c.h.b16 %v3905
    %v3918 = vunpack.c.h.b16 %v3906
    %v3919 = vunpack.c.h.b16 %v3907
    %v3920 = vunpack.c.h.b16 %v3908
    %v3921 = vpack.c.b16 %v3914, %v3913
    %v3922 = vpack.c.b16 %v3916, %v3915
    %v3923 = vpack.c.b16 %v3918, %v3917
    %v3924 = vpack.c.b16 %v3920, %v3919
    %3929 = vst [vmem:[#allocation2 + $0x40] sm:$0xff] %v3921
    %3930 = vst [vmem:[#allocation2 + $0x48] sm:$0xff] %v3922
    %3931 = vst [vmem:[#allocation2 + $0x50] sm:$0xff] %v3923
    %3932 = vst [vmem:[#allocation2 + $0x58] sm:$0xff] %v3924
    %3933 = vrot.lane.b32.xlu0 %v3679, 31
    %v3934 = vpop.permute.xlu0 %3933
    %3935 = vrot.lane.b32.xlu0 %v3683, 31
    %v3936 = vpop.permute.xlu0 %3935
    %3937 = vrot.lane.b32.xlu0 %v3680, 31
    %v3938 = vpop.permute.xlu0 %3937
    %3939 = vrot.lane.b32.xlu0 %v3684, 31
    %v3940 = vpop.permute.xlu0 %3939
    %3941 = vrot.lane.b32.xlu0 %v3681, 31
    %v3942 = vpop.permute.xlu0 %3941
    %3943 = vrot.lane.b32.xlu0 %v3685, 31
    %v3944 = vpop.permute.xlu0 %3943
    %3945 = vrot.lane.b32.xlu0 %v3682, 31
    %v3946 = vpop.permute.xlu0 %3945
    %3947 = vrot.lane.b32.xlu0 %v3686, 31
    %v3948 = vpop.permute.xlu0 %3947
    %v3949 = vsel %vm287, %v3942, %v3946
    %v3950 = vsel %vm287, %v3944, %v3948
    %v3951 = vsel %vm287, %v3938, %v3942
    %v3952 = vsel %vm287, %v3940, %v3944
    %v3953 = vsel %vm287, %v3934, %v3938
    %v3954 = vsel %vm287, %v3936, %v3940
    %v3955 = vsel %vm287, %v3946, %v3934
    %v3956 = vsel %vm287, %v3948, %v3936
    %v3957 = vld [vmem:[%s292] ss:$8 sm:$0xf]
    %v3959 = vlaneseq
    %v3960 = vshrl.u32 %v3959, 7
    %v3961 = vsub.s32 0, %v3960
    %v3962 = vrot.slane %v3957, %v3961
    %v3963 = vlaneseq
    %v3964 = vshrl.u32 %v3963, 7
    %v3965 = vsub.s32 1, %v3964
    %v3966 = vrot.slane %v3957, %v3965
    %v3967 = vlaneseq
    %v3968 = vshrl.u32 %v3967, 7
    %v3969 = vsub.s32 2, %v3968
    %v3970 = vrot.slane %v3957, %v3969
    %v3971 = vlaneseq
    %v3972 = vshrl.u32 %v3971, 7
    %v3973 = vsub.s32 3, %v3972
    %v3974 = vrot.slane %v3957, %v3973
    %v3979 = vmul.f32 %v3955, %v3962
    %v3980 = vmul.f32 %v3953, %v3966
    %v3981 = vmul.f32 %v3951, %v3970
    %v3982 = vmul.f32 %v3949, %v3974
    %v3983 = vmul.f32 %v3956, %v3962
    %v3984 = vmul.f32 %v3954, %v3966
    %v3985 = vmul.f32 %v3952, %v3970
    %v3986 = vmul.f32 %v3950, %v3974
    %v3987 = vpack.c.bf16 %v3983, %v3979
    %v3988 = vpack.c.bf16 %v3984, %v3980
    %v3989 = vpack.c.bf16 %v3985, %v3981
    %v3990 = vpack.c.bf16 %v3986, %v3982
    %v3995 = vunpack.c.l.b16 %v3987
    %v3996 = vunpack.c.l.b16 %v3988
    %v3997 = vunpack.c.l.b16 %v3989
    %v3998 = vunpack.c.l.b16 %v3990
    %v3999 = vunpack.c.h.b16 %v3987
    %v4000 = vunpack.c.h.b16 %v3988
    %v4001 = vunpack.c.h.b16 %v3989
    %v4002 = vunpack.c.h.b16 %v3990
    %v4003 = vpack.c.b16 %v3996, %v3995
    %v4004 = vpack.c.b16 %v3998, %v3997
    %v4005 = vpack.c.b16 %v4000, %v3999
    %v4006 = vpack.c.b16 %v4002, %v4001
    %4011 = vst [vmem:[#allocation2 + $0x60] sm:$0xff] %v4003
    %4012 = vst [vmem:[#allocation2 + $0x68] sm:$0xff] %v4004
    %4013 = vst [vmem:[#allocation2 + $0x70] sm:$0xff] %v4005
    %4014 = vst [vmem:[#allocation2 + $0x78] sm:$0xff] %v4006
    %4015 = vrot.lane.b32.xlu0 %v3679, 30
    %v4016 = vpop.permute.xlu0 %4015
    %4017 = vrot.lane.b32.xlu0 %v3683, 30
    %v4018 = vpop.permute.xlu0 %4017
    %4019 = vrot.lane.b32.xlu0 %v3680, 30
    %v4020 = vpop.permute.xlu0 %4019
    %4021 = vrot.lane.b32.xlu0 %v3684, 30
    %v4022 = vpop.permute.xlu0 %4021
    %4023 = vrot.lane.b32.xlu0 %v3681, 30
    %v4024 = vpop.permute.xlu0 %4023
    %4025 = vrot.lane.b32.xlu0 %v3685, 30
    %v4026 = vpop.permute.xlu0 %4025
    %4027 = vrot.lane.b32.xlu0 %v3682, 30
    %v4028 = vpop.permute.xlu0 %4027
    %4029 = vrot.lane.b32.xlu0 %v3686, 30
    %v4030 = vpop.permute.xlu0 %4029
    %v4031 = vsel %vm362, %v4024, %v4028
    %v4032 = vsel %vm362, %v4026, %v4030
    %v4033 = vsel %vm362, %v4020, %v4024
    %v4034 = vsel %vm362, %v4022, %v4026
    %v4035 = vsel %vm362, %v4016, %v4020
    %v4036 = vsel %vm362, %v4018, %v4022
    %v4037 = vsel %vm362, %v4028, %v4016
    %v4038 = vsel %vm362, %v4030, %v4018
    %v4039 = vld [vmem:[%s367] ss:$8 sm:$0xf]
    %v4041 = vlaneseq
    %v4042 = vshrl.u32 %v4041, 7
    %v4043 = vsub.s32 0, %v4042
    %v4044 = vrot.slane %v4039, %v4043
    %v4045 = vlaneseq
    %v4046 = vshrl.u32 %v4045, 7
    %v4047 = vsub.s32 1, %v4046
    %v4048 = vrot.slane %v4039, %v4047
    %v4049 = vlaneseq
    %v4050 = vshrl.u32 %v4049, 7
    %v4051 = vsub.s32 2, %v4050
    %v4052 = vrot.slane %v4039, %v4051
    %v4053 = vlaneseq
    %v4054 = vshrl.u32 %v4053, 7
    %v4055 = vsub.s32 3, %v4054
    %v4056 = vrot.slane %v4039, %v4055
    %v4061 = vmul.f32 %v4037, %v4044
    %v4062 = vmul.f32 %v4035, %v4048
    %v4063 = vmul.f32 %v4033, %v4052
    %v4064 = vmul.f32 %v4031, %v4056
    %v4065 = vmul.f32 %v4038, %v4044
    %v4066 = vmul.f32 %v4036, %v4048
    %v4067 = vmul.f32 %v4034, %v4052
    %v4068 = vmul.f32 %v4032, %v4056
    %v4069 = vpack.c.bf16 %v4065, %v4061
    %v4070 = vpack.c.bf16 %v4066, %v4062
    %v4071 = vpack.c.bf16 %v4067, %v4063
    %v4072 = vpack.c.bf16 %v4068, %v4064
    %v4077 = vunpack.c.l.b16 %v4069
    %v4078 = vunpack.c.l.b16 %v4070
    %v4079 = vunpack.c.l.b16 %v4071
    %v4080 = vunpack.c.l.b16 %v4072
    %v4081 = vunpack.c.h.b16 %v4069
    %v4082 = vunpack.c.h.b16 %v4070
    %v4083 = vunpack.c.h.b16 %v4071
    %v4084 = vunpack.c.h.b16 %v4072
    %v4085 = vpack.c.b16 %v4078, %v4077
    %v4086 = vpack.c.b16 %v4080, %v4079
    %v4087 = vpack.c.b16 %v4082, %v4081
    %v4088 = vpack.c.b16 %v4084, %v4083
    %4093 = vst [vmem:[#allocation2 + $0x80] sm:$0xff] %v4085
    %4094 = vst [vmem:[#allocation2 + $0x88] sm:$0xff] %v4086
    %4095 = vst [vmem:[#allocation2 + $0x90] sm:$0xff] %v4087
    %4096 = vst [vmem:[#allocation2 + $0x98] sm:$0xff] %v4088
    %4097 = vrot.lane.b32.xlu0 %v3679, 18
    %v4098 = vpop.permute.xlu0 %4097
    %4099 = vrot.lane.b32.xlu0 %v3683, 18
    %v4100 = vpop.permute.xlu0 %4099
    %4101 = vrot.lane.b32.xlu0 %v3680, 18
    %v4102 = vpop.permute.xlu0 %4101
    %4103 = vrot.lane.b32.xlu0 %v3684, 18
    %v4104 = vpop.permute.xlu0 %4103
    %4105 = vrot.lane.b32.xlu0 %v3681, 18
    %v4106 = vpop.permute.xlu0 %4105
    %4107 = vrot.lane.b32.xlu0 %v3685, 18
    %v4108 = vpop.permute.xlu0 %4107
    %4109 = vrot.lane.b32.xlu0 %v3682, 18
    %v4110 = vpop.permute.xlu0 %4109
    %4111 = vrot.lane.b32.xlu0 %v3686, 18
    %v4112 = vpop.permute.xlu0 %4111
    %v4113 = vsel %vm433, %v4106, %v4110
    %v4114 = vsel %vm433, %v4108, %v4112
    %v4115 = vsel %vm433, %v4102, %v4106
    %v4116 = vsel %vm433, %v4104, %v4108
    %v4117 = vsel %vm433, %v4098, %v4102
    %v4118 = vsel %vm433, %v4100, %v4104
    %v4119 = vsel %vm433, %v4110, %v4098
    %v4120 = vsel %vm433, %v4112, %v4100
    %v4121 = vld [vmem:[%s438] ss:$8 sm:$0xf]
    %v4123 = vlaneseq
    %v4124 = vshrl.u32 %v4123, 7
    %v4125 = vsub.s32 0, %v4124
    %v4126 = vrot.slane %v4121, %v4125
    %v4127 = vlaneseq
    %v4128 = vshrl.u32 %v4127, 7
    %v4129 = vsub.s32 1, %v4128
    %v4130 = vrot.slane %v4121, %v4129
    %v4131 = vlaneseq
    %v4132 = vshrl.u32 %v4131, 7
    %v4133 = vsub.s32 2, %v4132
    %v4134 = vrot.slane %v4121, %v4133
    %v4135 = vlaneseq
    %v4136 = vshrl.u32 %v4135, 7
    %v4137 = vsub.s32 3, %v4136
    %v4138 = vrot.slane %v4121, %v4137
    %v4143 = vmul.f32 %v4119, %v4126
    %v4144 = vmul.f32 %v4117, %v4130
    %v4145 = vmul.f32 %v4115, %v4134
    %v4146 = vmul.f32 %v4113, %v4138
    %v4147 = vmul.f32 %v4120, %v4126
    %v4148 = vmul.f32 %v4118, %v4130
    %v4149 = vmul.f32 %v4116, %v4134
    %v4150 = vmul.f32 %v4114, %v4138
    %v4151 = vpack.c.bf16 %v4147, %v4143
    %v4152 = vpack.c.bf16 %v4148, %v4144
    %v4153 = vpack.c.bf16 %v4149, %v4145
    %v4154 = vpack.c.bf16 %v4150, %v4146
    %v4159 = vunpack.c.l.b16 %v4151
    %v4160 = vunpack.c.l.b16 %v4152
    %v4161 = vunpack.c.l.b16 %v4153
    %v4162 = vunpack.c.l.b16 %v4154
    %v4163 = vunpack.c.h.b16 %v4151
    %v4164 = vunpack.c.h.b16 %v4152
    %v4165 = vunpack.c.h.b16 %v4153
    %v4166 = vunpack.c.h.b16 %v4154
    %v4167 = vpack.c.b16 %v4160, %v4159
    %v4168 = vpack.c.b16 %v4162, %v4161
    %v4169 = vpack.c.b16 %v4164, %v4163
    %v4170 = vpack.c.b16 %v4166, %v4165
    %4175 = vst [vmem:[#allocation2 + $0xa0] sm:$0xff] %v4167
    %4176 = vst [vmem:[#allocation2 + $0xa8] sm:$0xff] %v4168
    %4177 = vst [vmem:[#allocation2 + $0xb0] sm:$0xff] %v4169
    %4178 = vst [vmem:[#allocation2 + $0xb8] sm:$0xff] %v4170
    %4179 = vrot.lane.b32.xlu0 %v3679, 17
    %v4180 = vpop.permute.xlu0 %4179
    %4181 = vrot.lane.b32.xlu0 %v3683, 17
    %v4182 = vpop.permute.xlu0 %4181
    %4183 = vrot.lane.b32.xlu0 %v3680, 17
    %v4184 = vpop.permute.xlu0 %4183
    %4185 = vrot.lane.b32.xlu0 %v3684, 17
    %v4186 = vpop.permute.xlu0 %4185
    %4187 = vrot.lane.b32.xlu0 %v3681, 17
    %v4188 = vpop.permute.xlu0 %4187
    %4189 = vrot.lane.b32.xlu0 %v3685, 17
    %v4190 = vpop.permute.xlu0 %4189
    %4191 = vrot.lane.b32.xlu0 %v3682, 17
    %v4192 = vpop.permute.xlu0 %4191
    %4193 = vrot.lane.b32.xlu0 %v3686, 17
    %v4194 = vpop.permute.xlu0 %4193
    %v4195 = vsel %vm508, %v4188, %v4192
    %v4196 = vsel %vm508, %v4190, %v4194
    %v4197 = vsel %vm508, %v4184, %v4188
    %v4198 = vsel %vm508, %v4186, %v4190
    %v4199 = vsel %vm508, %v4180, %v4184
    %v4200 = vsel %vm508, %v4182, %v4186
    %v4201 = vsel %vm508, %v4192, %v4180
    %v4202 = vsel %vm508, %v4194, %v4182
    %v4203 = vld [vmem:[%s513] ss:$8 sm:$0xf]
    %v4205 = vlaneseq
    %v4206 = vshrl.u32 %v4205, 7
    %v4207 = vsub.s32 0, %v4206
    %v4208 = vrot.slane %v4203, %v4207
    %v4209 = vlaneseq
    %v4210 = vshrl.u32 %v4209, 7
    %v4211 = vsub.s32 1, %v4210
    %v4212 = vrot.slane %v4203, %v4211
    %v4213 = vlaneseq
    %v4214 = vshrl.u32 %v4213, 7
    %v4215 = vsub.s32 2, %v4214
    %v4216 = vrot.slane %v4203, %v4215
    %v4217 = vlaneseq
    %v4218 = vshrl.u32 %v4217, 7
    %v4219 = vsub.s32 3, %v4218
    %v4220 = vrot.slane %v4203, %v4219
    %v4225 = vmul.f32 %v4201, %v4208
    %v4226 = vmul.f32 %v4199, %v4212
    %v4227 = vmul.f32 %v4197, %v4216
    %v4228 = vmul.f32 %v4195, %v4220
    %v4229 = vmul.f32 %v4202, %v4208
    %v4230 = vmul.f32 %v4200, %v4212
    %v4231 = vmul.f32 %v4198, %v4216
    %v4232 = vmul.f32 %v4196, %v4220
    %v4233 = vpack.c.bf16 %v4229, %v4225
    %v4234 = vpack.c.bf16 %v4230, %v4226
    %v4235 = vpack.c.bf16 %v4231, %v4227
    %v4236 = vpack.c.bf16 %v4232, %v4228
    %v4241 = vunpack.c.l.b16 %v4233
    %v4242 = vunpack.c.l.b16 %v4234
    %v4243 = vunpack.c.l.b16 %v4235
    %v4244 = vunpack.c.l.b16 %v4236
    %v4245 = vunpack.c.h.b16 %v4233
    %v4246 = vunpack.c.h.b16 %v4234
    %v4247 = vunpack.c.h.b16 %v4235
    %v4248 = vunpack.c.h.b16 %v4236
    %v4249 = vpack.c.b16 %v4242, %v4241
    %v4250 = vpack.c.b16 %v4244, %v4243
    %v4251 = vpack.c.b16 %v4246, %v4245
    %v4252 = vpack.c.b16 %v4248, %v4247
    %4257 = vst [vmem:[#allocation2 + $0xc0] sm:$0xff] %v4249
    %4258 = vst [vmem:[#allocation2 + $0xc8] sm:$0xff] %v4250
    %4259 = vst [vmem:[#allocation2 + $0xd0] sm:$0xff] %v4251
    %4260 = vst [vmem:[#allocation2 + $0xd8] sm:$0xff] %v4252
    %4261 = vrot.lane.b32.xlu0 %v3679, 16
    %v4262 = vpop.permute.xlu0 %4261
    %4263 = vrot.lane.b32.xlu0 %v3683, 16
    %v4264 = vpop.permute.xlu0 %4263
    %4265 = vrot.lane.b32.xlu0 %v3680, 16
    %v4266 = vpop.permute.xlu0 %4265
    %4267 = vrot.lane.b32.xlu0 %v3684, 16
    %v4268 = vpop.permute.xlu0 %4267
    %4269 = vrot.lane.b32.xlu0 %v3681, 16
    %v4270 = vpop.permute.xlu0 %4269
    %4271 = vrot.lane.b32.xlu0 %v3685, 16
    %v4272 = vpop.permute.xlu0 %4271
    %4273 = vrot.lane.b32.xlu0 %v3682, 16
    %v4274 = vpop.permute.xlu0 %4273
    %4275 = vrot.lane.b32.xlu0 %v3686, 16
    %v4276 = vpop.permute.xlu0 %4275
    %v4277 = vsel %vm579, %v4270, %v4274
    %v4278 = vsel %vm579, %v4272, %v4276
    %v4279 = vsel %vm579, %v4266, %v4270
    %v4280 = vsel %vm579, %v4268, %v4272
    %v4281 = vsel %vm579, %v4262, %v4266
    %v4282 = vsel %vm579, %v4264, %v4268
    %v4283 = vsel %vm579, %v4274, %v4262
    %v4284 = vsel %vm579, %v4276, %v4264
    %v4285 = vld [vmem:[%s584] ss:$8 sm:$0xf]
    %v4287 = vlaneseq
    %v4288 = vshrl.u32 %v4287, 7
    %v4289 = vsub.s32 0, %v4288
    %v4290 = vrot.slane %v4285, %v4289
    %v4291 = vlaneseq
    %v4292 = vshrl.u32 %v4291, 7
    %v4293 = vsub.s32 1, %v4292
    %v4294 = vrot.slane %v4285, %v4293
    %v4295 = vlaneseq
    %v4296 = vshrl.u32 %v4295, 7
    %v4297 = vsub.s32 2, %v4296
    %v4298 = vrot.slane %v4285, %v4297
    %v4299 = vlaneseq
    %v4300 = vshrl.u32 %v4299, 7
    %v4301 = vsub.s32 3, %v4300
    %v4302 = vrot.slane %v4285, %v4301
    %v4307 = vmul.f32 %v4283, %v4290
    %v4308 = vmul.f32 %v4281, %v4294
    %v4309 = vmul.f32 %v4279, %v4298
    %v4310 = vmul.f32 %v4277, %v4302
    %v4311 = vmul.f32 %v4284, %v4290
    %v4312 = vmul.f32 %v4282, %v4294
    %v4313 = vmul.f32 %v4280, %v4298
    %v4314 = vmul.f32 %v4278, %v4302
    %v4315 = vpack.c.bf16 %v4311, %v4307
    %v4316 = vpack.c.bf16 %v4312, %v4308
    %v4317 = vpack.c.bf16 %v4313, %v4309
    %v4318 = vpack.c.bf16 %v4314, %v4310
    %v4323 = vunpack.c.l.b16 %v4315
    %v4324 = vunpack.c.l.b16 %v4316
    %v4325 = vunpack.c.l.b16 %v4317
    %v4326 = vunpack.c.l.b16 %v4318
    %v4327 = vunpack.c.h.b16 %v4315
    %v4328 = vunpack.c.h.b16 %v4316
    %v4329 = vunpack.c.h.b16 %v4317
    %v4330 = vunpack.c.h.b16 %v4318
    %v4331 = vpack.c.b16 %v4324, %v4323
    %v4332 = vpack.c.b16 %v4326, %v4325
    %v4333 = vpack.c.b16 %v4328, %v4327
    %v4334 = vpack.c.b16 %v4330, %v4329
    %4339 = vst [vmem:[#allocation2 + $0xe0] sm:$0xff] %v4331
    %4340 = vst [vmem:[#allocation2 + $0xe8] sm:$0xff] %v4332
    %4341 = vst [vmem:[#allocation2 + $0xf0] sm:$0xff] %v4333
    %4342 = vst [vmem:[#allocation2 + $0xf8] sm:$0xff] %v4334
    %4343 = vrot.lane.b32.xlu0 %v3679, 15
    %v4344 = vpop.permute.xlu0 %4343
    %4345 = vrot.lane.b32.xlu0 %v3683, 15
    %v4346 = vpop.permute.xlu0 %4345
    %4347 = vrot.lane.b32.xlu0 %v3680, 15
    %v4348 = vpop.permute.xlu0 %4347
    %4349 = vrot.lane.b32.xlu0 %v3684, 15
    %v4350 = vpop.permute.xlu0 %4349
    %4351 = vrot.lane.b32.xlu0 %v3681, 15
    %v4352 = vpop.permute.xlu0 %4351
    %4353 = vrot.lane.b32.xlu0 %v3685, 15
    %v4354 = vpop.permute.xlu0 %4353
    %4355 = vrot.lane.b32.xlu0 %v3682, 15
    %v4356 = vpop.permute.xlu0 %4355
    %4357 = vrot.lane.b32.xlu0 %v3686, 15
    %v4358 = vpop.permute.xlu0 %4357
    %v4359 = vsel %vm654, %v4352, %v4356
    %v4360 = vsel %vm654, %v4354, %v4358
    %v4361 = vsel %vm654, %v4348, %v4352
    %v4362 = vsel %vm654, %v4350, %v4354
    %v4363 = vsel %vm654, %v4344, %v4348
    %v4364 = vsel %vm654, %v4346, %v4350
    %v4365 = vsel %vm654, %v4356, %v4344
    %v4366 = vsel %vm654, %v4358, %v4346
    %v4367 = vld [vmem:[%s659] ss:$8 sm:$0xf]
    %v4369 = vlaneseq
    %v4370 = vshrl.u32 %v4369, 7
    %v4371 = vsub.s32 0, %v4370
    %v4372 = vrot.slane %v4367, %v4371
    %v4373 = vlaneseq
    %v4374 = vshrl.u32 %v4373, 7
    %v4375 = vsub.s32 1, %v4374
    %v4376 = vrot.slane %v4367, %v4375
    %v4377 = vlaneseq
    %v4378 = vshrl.u32 %v4377, 7
    %v4379 = vsub.s32 2, %v4378
    %v4380 = vrot.slane %v4367, %v4379
    %v4381 = vlaneseq
    %v4382 = vshrl.u32 %v4381, 7
    %v4383 = vsub.s32 3, %v4382
    %v4384 = vrot.slane %v4367, %v4383
    %v4389 = vmul.f32 %v4365, %v4372
    %v4390 = vmul.f32 %v4363, %v4376
    %v4391 = vmul.f32 %v4361, %v4380
    %v4392 = vmul.f32 %v4359, %v4384
    %v4393 = vmul.f32 %v4366, %v4372
    %v4394 = vmul.f32 %v4364, %v4376
    %v4395 = vmul.f32 %v4362, %v4380
    %v4396 = vmul.f32 %v4360, %v4384
    %v4397 = vpack.c.bf16 %v4393, %v4389
    %v4398 = vpack.c.bf16 %v4394, %v4390
    %v4399 = vpack.c.bf16 %v4395, %v4391
    %v4400 = vpack.c.bf16 %v4396, %v4392
    %v4405 = vunpack.c.l.b16 %v4397
    %v4406 = vunpack.c.l.b16 %v4398
    %v4407 = vunpack.c.l.b16 %v4399
    %v4408 = vunpack.c.l.b16 %v4400
    %v4409 = vunpack.c.h.b16 %v4397
    %v4410 = vunpack.c.h.b16 %v4398
    %v4411 = vunpack.c.h.b16 %v4399
    %v4412 = vunpack.c.h.b16 %v4400
    %v4413 = vpack.c.b16 %v4406, %v4405
    %v4414 = vpack.c.b16 %v4408, %v4407
    %v4415 = vpack.c.b16 %v4410, %v4409
    %v4416 = vpack.c.b16 %v4412, %v4411
    %4421 = vst [vmem:[#allocation2 + $0x100] sm:$0xff] %v4413
    %4422 = vst [vmem:[#allocation2 + $0x108] sm:$0xff] %v4414
    %4423 = vst [vmem:[#allocation2 + $0x110] sm:$0xff] %v4415
    %4424 = vst [vmem:[#allocation2 + $0x118] sm:$0xff] %v4416
    %4425 = vrot.lane.b32.xlu0 %v3679, 14
    %v4426 = vpop.permute.xlu0 %4425
    %4427 = vrot.lane.b32.xlu0 %v3683, 14
    %v4428 = vpop.permute.xlu0 %4427
    %4429 = vrot.lane.b32.xlu0 %v3680, 14
    %v4430 = vpop.permute.xlu0 %4429
    %4431 = vrot.lane.b32.xlu0 %v3684, 14
    %v4432 = vpop.permute.xlu0 %4431
    %4433 = vrot.lane.b32.xlu0 %v3681, 14
    %v4434 = vpop.permute.xlu0 %4433
    %4435 = vrot.lane.b32.xlu0 %v3685, 14
    %v4436 = vpop.permute.xlu0 %4435
    %4437 = vrot.lane.b32.xlu0 %v3682, 14
    %v4438 = vpop.permute.xlu0 %4437
    %4439 = vrot.lane.b32.xlu0 %v3686, 14
    %v4440 = vpop.permute.xlu0 %4439
    %v4441 = vsel %vm716, %v4434, %v4438
    %v4442 = vsel %vm716, %v4436, %v4440
    %v4443 = vsel %vm716, %v4430, %v4434
    %v4444 = vsel %vm716, %v4432, %v4436
    %v4445 = vsel %vm716, %v4426, %v4430
    %v4446 = vsel %vm716, %v4428, %v4432
    %v4447 = vsel %vm716, %v4438, %v4426
    %v4448 = vsel %vm716, %v4440, %v4428
    %v4449 = vld [vmem:[%s721] ss:$8 sm:$0xf]
    %v4451 = vlaneseq
    %v4452 = vshrl.u32 %v4451, 7
    %v4453 = vsub.s32 0, %v4452
    %v4454 = vrot.slane %v4449, %v4453
    %v4455 = vlaneseq
    %v4456 = vshrl.u32 %v4455, 7
    %v4457 = vsub.s32 1, %v4456
    %v4458 = vrot.slane %v4449, %v4457
    %v4459 = vlaneseq
    %v4460 = vshrl.u32 %v4459, 7
    %v4461 = vsub.s32 2, %v4460
    %v4462 = vrot.slane %v4449, %v4461
    %v4463 = vlaneseq
    %v4464 = vshrl.u32 %v4463, 7
    %v4465 = vsub.s32 3, %v4464
    %v4466 = vrot.slane %v4449, %v4465
    %v4471 = vmul.f32 %v4447, %v4454
    %v4472 = vmul.f32 %v4445, %v4458
    %v4473 = vmul.f32 %v4443, %v4462
    %v4474 = vmul.f32 %v4441, %v4466
    %v4475 = vmul.f32 %v4448, %v4454
    %v4476 = vmul.f32 %v4446, %v4458
    %v4477 = vmul.f32 %v4444, %v4462
    %v4478 = vmul.f32 %v4442, %v4466
    %v4479 = vpack.c.bf16 %v4475, %v4471
    %v4480 = vpack.c.bf16 %v4476, %v4472
    %v4481 = vpack.c.bf16 %v4477, %v4473
    %v4482 = vpack.c.bf16 %v4478, %v4474
    %v4487 = vunpack.c.l.b16 %v4479
    %v4488 = vunpack.c.l.b16 %v4480
    %v4489 = vunpack.c.l.b16 %v4481
    %v4490 = vunpack.c.l.b16 %v4482
    %v4491 = vunpack.c.h.b16 %v4479
    %v4492 = vunpack.c.h.b16 %v4480
    %v4493 = vunpack.c.h.b16 %v4481
    %v4494 = vunpack.c.h.b16 %v4482
    %v4495 = vpack.c.b16 %v4488, %v4487
    %v4496 = vpack.c.b16 %v4490, %v4489
    %v4497 = vpack.c.b16 %v4492, %v4491
    %v4498 = vpack.c.b16 %v4494, %v4493
    %4503 = vst [vmem:[#allocation2 + $0x120] sm:$0xff] %v4495
    %4504 = vst [vmem:[#allocation2 + $0x128] sm:$0xff] %v4496
    %4505 = vst [vmem:[#allocation2 + $0x130] sm:$0xff] %v4497
    %4506 = vst [vmem:[#allocation2 + $0x138] sm:$0xff] %v4498
    %4507 = vrot.lane.b32.xlu0 %v3679, 2
    %v4508 = vpop.permute.xlu0 %4507
    %4509 = vrot.lane.b32.xlu0 %v3683, 2
    %v4510 = vpop.permute.xlu0 %4509
    %4511 = vrot.lane.b32.xlu0 %v3680, 2
    %v4512 = vpop.permute.xlu0 %4511
    %4513 = vrot.lane.b32.xlu0 %v3684, 2
    %v4514 = vpop.permute.xlu0 %4513
    %4515 = vrot.lane.b32.xlu0 %v3681, 2
    %v4516 = vpop.permute.xlu0 %4515
    %4517 = vrot.lane.b32.xlu0 %v3685, 2
    %v4518 = vpop.permute.xlu0 %4517
    %4519 = vrot.lane.b32.xlu0 %v3682, 2
    %v4520 = vpop.permute.xlu0 %4519
    %4521 = vrot.lane.b32.xlu0 %v3686, 2
    %v4522 = vpop.permute.xlu0 %4521
    %v4523 = vsel %vm784, %v4516, %v4520
    %v4524 = vsel %vm784, %v4518, %v4522
    %v4525 = vsel %vm784, %v4512, %v4516
    %v4526 = vsel %vm784, %v4514, %v4518
    %v4527 = vsel %vm784, %v4508, %v4512
    %v4528 = vsel %vm784, %v4510, %v4514
    %v4529 = vsel %vm784, %v4520, %v4508
    %v4530 = vsel %vm784, %v4522, %v4510
    %v4531 = vld [vmem:[%s789] ss:$8 sm:$0xf]
    %v4533 = vlaneseq
    %v4534 = vshrl.u32 %v4533, 7
    %v4535 = vsub.s32 0, %v4534
    %v4536 = vrot.slane %v4531, %v4535
    %v4537 = vlaneseq
    %v4538 = vshrl.u32 %v4537, 7
    %v4539 = vsub.s32 1, %v4538
    %v4540 = vrot.slane %v4531, %v4539
    %v4541 = vlaneseq
    %v4542 = vshrl.u32 %v4541, 7
    %v4543 = vsub.s32 2, %v4542
    %v4544 = vrot.slane %v4531, %v4543
    %v4545 = vlaneseq
    %v4546 = vshrl.u32 %v4545, 7
    %v4547 = vsub.s32 3, %v4546
    %v4548 = vrot.slane %v4531, %v4547
    %v4553 = vmul.f32 %v4529, %v4536
    %v4554 = vmul.f32 %v4527, %v4540
    %v4555 = vmul.f32 %v4525, %v4544
    %v4556 = vmul.f32 %v4523, %v4548
    %v4557 = vmul.f32 %v4530, %v4536
    %v4558 = vmul.f32 %v4528, %v4540
    %v4559 = vmul.f32 %v4526, %v4544
    %v4560 = vmul.f32 %v4524, %v4548
    %v4561 = vpack.c.bf16 %v4557, %v4553
    %v4562 = vpack.c.bf16 %v4558, %v4554
    %v4563 = vpack.c.bf16 %v4559, %v4555
    %v4564 = vpack.c.bf16 %v4560, %v4556
    %v4569 = vunpack.c.l.b16 %v4561
    %v4570 = vunpack.c.l.b16 %v4562
    %v4571 = vunpack.c.l.b16 %v4563
    %v4572 = vunpack.c.l.b16 %v4564
    %v4573 = vunpack.c.h.b16 %v4561
    %v4574 = vunpack.c.h.b16 %v4562
    %v4575 = vunpack.c.h.b16 %v4563
    %v4576 = vunpack.c.h.b16 %v4564
    %v4577 = vpack.c.b16 %v4570, %v4569
    %v4578 = vpack.c.b16 %v4572, %v4571
    %v4579 = vpack.c.b16 %v4574, %v4573
    %v4580 = vpack.c.b16 %v4576, %v4575
    %4585 = vst [vmem:[#allocation2 + $0x140] sm:$0xff] %v4577
    %4586 = vst [vmem:[#allocation2 + $0x148] sm:$0xff] %v4578
    %4587 = vst [vmem:[#allocation2 + $0x150] sm:$0xff] %v4579
    %4588 = vst [vmem:[#allocation2 + $0x158] sm:$0xff] %v4580
    %4589 = vrot.lane.b32.xlu0 %v3679, 1
    %v4590 = vpop.permute.xlu0 %4589
    %4591 = vrot.lane.b32.xlu0 %v3683, 1
    %v4592 = vpop.permute.xlu0 %4591
    %4593 = vrot.lane.b32.xlu0 %v3680, 1
    %v4594 = vpop.permute.xlu0 %4593
    %4595 = vrot.lane.b32.xlu0 %v3684, 1
    %v4596 = vpop.permute.xlu0 %4595
    %4597 = vrot.lane.b32.xlu0 %v3681, 1
    %v4598 = vpop.permute.xlu0 %4597
    %4599 = vrot.lane.b32.xlu0 %v3685, 1
    %v4600 = vpop.permute.xlu0 %4599
    %4601 = vrot.lane.b32.xlu0 %v3682, 1
    %v4602 = vpop.permute.xlu0 %4601
    %4603 = vrot.lane.b32.xlu0 %v3686, 1
    %v4604 = vpop.permute.xlu0 %4603
    %v4605 = vsel %vm848, %v4598, %v4602
    %v4606 = vsel %vm848, %v4600, %v4604
    %v4607 = vsel %vm848, %v4594, %v4598
    %v4608 = vsel %vm848, %v4596, %v4600
    %v4609 = vsel %vm848, %v4590, %v4594
    %v4610 = vsel %vm848, %v4592, %v4596
    %v4611 = vsel %vm848, %v4602, %v4590
    %v4612 = vsel %vm848, %v4604, %v4592
    %v4613 = vld [vmem:[%s853] ss:$8 sm:$0xf]
    %v4615 = vlaneseq
    %v4616 = vshrl.u32 %v4615, 7
    %v4617 = vsub.s32 0, %v4616
    %v4618 = vrot.slane %v4613, %v4617
    %v4619 = vlaneseq
    %v4620 = vshrl.u32 %v4619, 7
    %v4621 = vsub.s32 1, %v4620
    %v4622 = vrot.slane %v4613, %v4621
    %v4623 = vlaneseq
    %v4624 = vshrl.u32 %v4623, 7
    %v4625 = vsub.s32 2, %v4624
    %v4626 = vrot.slane %v4613, %v4625
    %v4627 = vlaneseq
    %v4628 = vshrl.u32 %v4627, 7
    %v4629 = vsub.s32 3, %v4628
    %v4630 = vrot.slane %v4613, %v4629
    %v4635 = vmul.f32 %v4611, %v4618
    %v4636 = vmul.f32 %v4609, %v4622
    %v4637 = vmul.f32 %v4607, %v4626
    %v4638 = vmul.f32 %v4605, %v4630
    %v4639 = vmul.f32 %v4612, %v4618
    %v4640 = vmul.f32 %v4610, %v4622
    %v4641 = vmul.f32 %v4608, %v4626
    %v4642 = vmul.f32 %v4606, %v4630
    %v4643 = vpack.c.bf16 %v4639, %v4635
    %v4644 = vpack.c.bf16 %v4640, %v4636
    %v4645 = vpack.c.bf16 %v4641, %v4637
    %v4646 = vpack.c.bf16 %v4642, %v4638
    %v4651 = vunpack.c.l.b16 %v4643
    %v4652 = vunpack.c.l.b16 %v4644
    %v4653 = vunpack.c.l.b16 %v4645
    %v4654 = vunpack.c.l.b16 %v4646
    %v4655 = vunpack.c.h.b16 %v4643
    %v4656 = vunpack.c.h.b16 %v4644
    %v4657 = vunpack.c.h.b16 %v4645
    %v4658 = vunpack.c.h.b16 %v4646
    %v4659 = vpack.c.b16 %v4652, %v4651
    %v4660 = vpack.c.b16 %v4654, %v4653
    %v4661 = vpack.c.b16 %v4656, %v4655
    %v4662 = vpack.c.b16 %v4658, %v4657
    %4667 = vst [vmem:[#allocation2 + $0x160] sm:$0xff] %v4659
    %4668 = vst [vmem:[#allocation2 + $0x168] sm:$0xff] %v4660
    %4669 = vst [vmem:[#allocation2 + $0x170] sm:$0xff] %v4661
    %4670 = vst [vmem:[#allocation2 + $0x178] sm:$0xff] %v4662
    %v4671 = vpack.c.bf16 %v3683, %v3679
    %v4672 = vpack.c.bf16 %v3684, %v3680
    %v4673 = vpack.c.bf16 %v3685, %v3681
    %v4674 = vpack.c.bf16 %v3686, %v3682
    %v4679 = vunpack.c.l.b16 %v4671
    %v4680 = vunpack.c.l.b16 %v4672
    %v4681 = vunpack.c.l.b16 %v4673
    %v4682 = vunpack.c.l.b16 %v4674
    %v4683 = vunpack.c.h.b16 %v4671
    %v4684 = vunpack.c.h.b16 %v4672
    %v4685 = vunpack.c.h.b16 %v4673
    %v4686 = vunpack.c.h.b16 %v4674
    %v4687 = vpack.c.b16 %v4680, %v4679
    %v4688 = vpack.c.b16 %v4682, %v4681
    %v4689 = vpack.c.b16 %v4684, %v4683
    %v4690 = vpack.c.b16 %v4686, %v4685
    %4695 = vst [vmem:[#allocation2 + $0x180] sm:$0xff] %v4687
    %4696 = vst [vmem:[#allocation2 + $0x188] sm:$0xff] %v4688
    %4697 = vst [vmem:[#allocation2 + $0x190] sm:$0xff] %v4689
    %4698 = vst [vmem:[#allocation2 + $0x198] sm:$0xff] %v4690
    %4699 = vrot.lane.b32.xlu0 %v3679, 127
    %v4700 = vpop.permute.xlu0 %4699
    %4701 = vrot.lane.b32.xlu0 %v3683, 127
    %v4702 = vpop.permute.xlu0 %4701
    %4703 = vrot.lane.b32.xlu0 %v3680, 127
    %v4704 = vpop.permute.xlu0 %4703
    %4705 = vrot.lane.b32.xlu0 %v3684, 127
    %v4706 = vpop.permute.xlu0 %4705
    %4707 = vrot.lane.b32.xlu0 %v3681, 127
    %v4708 = vpop.permute.xlu0 %4707
    %4709 = vrot.lane.b32.xlu0 %v3685, 127
    %v4710 = vpop.permute.xlu0 %4709
    %4711 = vrot.lane.b32.xlu0 %v3682, 127
    %v4712 = vpop.permute.xlu0 %4711
    %4713 = vrot.lane.b32.xlu0 %v3686, 127
    %v4714 = vpop.permute.xlu0 %4713
    %v4715 = vsel %vm942, %v4708, %v4712
    %v4716 = vsel %vm942, %v4710, %v4714
    %v4717 = vsel %vm942, %v4704, %v4708
    %v4718 = vsel %vm942, %v4706, %v4710
    %v4719 = vsel %vm942, %v4700, %v4704
    %v4720 = vsel %vm942, %v4702, %v4706
    %v4721 = vsel %vm942, %v4712, %v4700
    %v4722 = vsel %vm942, %v4714, %v4702
    %v4723 = vld [vmem:[%s947] ss:$8 sm:$0xf]
    %v4725 = vlaneseq
    %v4726 = vshrl.u32 %v4725, 7
    %v4727 = vsub.s32 0, %v4726
    %v4728 = vrot.slane %v4723, %v4727
    %v4729 = vlaneseq
    %v4730 = vshrl.u32 %v4729, 7
    %v4731 = vsub.s32 1, %v4730
    %v4732 = vrot.slane %v4723, %v4731
    %v4733 = vlaneseq
    %v4734 = vshrl.u32 %v4733, 7
    %v4735 = vsub.s32 2, %v4734
    %v4736 = vrot.slane %v4723, %v4735
    %v4737 = vlaneseq
    %v4738 = vshrl.u32 %v4737, 7
    %v4739 = vsub.s32 3, %v4738
    %v4740 = vrot.slane %v4723, %v4739
    %v4745 = vmul.f32 %v4719, %v4728
    %v4746 = vmul.f32 %v4717, %v4732
    %v4747 = vmul.f32 %v4715, %v4736
    %v4748 = vmul.f32 %v4721, %v4740
    %v4749 = vmul.f32 %v4720, %v4728
    %v4750 = vmul.f32 %v4718, %v4732
    %v4751 = vmul.f32 %v4716, %v4736
    %v4752 = vmul.f32 %v4722, %v4740
    %v4753 = vpack.c.bf16 %v4749, %v4745
    %v4754 = vpack.c.bf16 %v4750, %v4746
    %v4755 = vpack.c.bf16 %v4751, %v4747
    %v4756 = vpack.c.bf16 %v4752, %v4748
    %v4761 = vunpack.c.l.b16 %v4753
    %v4762 = vunpack.c.l.b16 %v4754
    %v4763 = vunpack.c.l.b16 %v4755
    %v4764 = vunpack.c.l.b16 %v4756
    %v4765 = vunpack.c.h.b16 %v4753
    %v4766 = vunpack.c.h.b16 %v4754
    %v4767 = vunpack.c.h.b16 %v4755
    %v4768 = vunpack.c.h.b16 %v4756
    %v4769 = vpack.c.b16 %v4762, %v4761
    %v4770 = vpack.c.b16 %v4764, %v4763
    %v4771 = vpack.c.b16 %v4766, %v4765
    %v4772 = vpack.c.b16 %v4768, %v4767
    %4777 = vst [vmem:[#allocation2 + $0x1a0] sm:$0xff] %v4769
    %4778 = vst [vmem:[#allocation2 + $0x1a8] sm:$0xff] %v4770
    %4779 = vst [vmem:[#allocation2 + $0x1b0] sm:$0xff] %v4771
    %4780 = vst [vmem:[#allocation2 + $0x1b8] sm:$0xff] %v4772
    %4781 = vrot.lane.b32.xlu0 %v3679, 126
    %v4782 = vpop.permute.xlu0 %4781
    %4783 = vrot.lane.b32.xlu0 %v3683, 126
    %v4784 = vpop.permute.xlu0 %4783
    %4785 = vrot.lane.b32.xlu0 %v3680, 126
    %v4786 = vpop.permute.xlu0 %4785
    %4787 = vrot.lane.b32.xlu0 %v3684, 126
    %v4788 = vpop.permute.xlu0 %4787
    %4789 = vrot.lane.b32.xlu0 %v3681, 126
    %v4790 = vpop.permute.xlu0 %4789
    %4791 = vrot.lane.b32.xlu0 %v3685, 126
    %v4792 = vpop.permute.xlu0 %4791
    %4793 = vrot.lane.b32.xlu0 %v3682, 126
    %v4794 = vpop.permute.xlu0 %4793
    %4795 = vrot.lane.b32.xlu0 %v3686, 126
    %v4796 = vpop.permute.xlu0 %4795
    %v4797 = vsel %vm1012, %v4790, %v4794
    %v4798 = vsel %vm1012, %v4792, %v4796
    %v4799 = vsel %vm1012, %v4786, %v4790
    %v4800 = vsel %vm1012, %v4788, %v4792
    %v4801 = vsel %vm1012, %v4782, %v4786
    %v4802 = vsel %vm1012, %v4784, %v4788
    %v4803 = vsel %vm1012, %v4794, %v4782
    %v4804 = vsel %vm1012, %v4796, %v4784
    %v4805 = vld [vmem:[%s1017] ss:$8 sm:$0xf]
    %v4807 = vlaneseq
    %v4808 = vshrl.u32 %v4807, 7
    %v4809 = vsub.s32 0, %v4808
    %v4810 = vrot.slane %v4805, %v4809
    %v4811 = vlaneseq
    %v4812 = vshrl.u32 %v4811, 7
    %v4813 = vsub.s32 1, %v4812
    %v4814 = vrot.slane %v4805, %v4813
    %v4815 = vlaneseq
    %v4816 = vshrl.u32 %v4815, 7
    %v4817 = vsub.s32 2, %v4816
    %v4818 = vrot.slane %v4805, %v4817
    %v4819 = vlaneseq
    %v4820 = vshrl.u32 %v4819, 7
    %v4821 = vsub.s32 3, %v4820
    %v4822 = vrot.slane %v4805, %v4821
    %v4827 = vmul.f32 %v4801, %v4810
    %v4828 = vmul.f32 %v4799, %v4814
    %v4829 = vmul.f32 %v4797, %v4818
    %v4830 = vmul.f32 %v4803, %v4822
    %v4831 = vmul.f32 %v4802, %v4810
    %v4832 = vmul.f32 %v4800, %v4814
    %v4833 = vmul.f32 %v4798, %v4818
    %v4834 = vmul.f32 %v4804, %v4822
    %v4835 = vpack.c.bf16 %v4831, %v4827
    %v4836 = vpack.c.bf16 %v4832, %v4828
    %v4837 = vpack.c.bf16 %v4833, %v4829
    %v4838 = vpack.c.bf16 %v4834, %v4830
    %v4843 = vunpack.c.l.b16 %v4835
    %v4844 = vunpack.c.l.b16 %v4836
    %v4845 = vunpack.c.l.b16 %v4837
    %v4846 = vunpack.c.l.b16 %v4838
    %v4847 = vunpack.c.h.b16 %v4835
    %v4848 = vunpack.c.h.b16 %v4836
    %v4849 = vunpack.c.h.b16 %v4837
    %v4850 = vunpack.c.h.b16 %v4838
    %v4851 = vpack.c.b16 %v4844, %v4843
    %v4852 = vpack.c.b16 %v4846, %v4845
    %v4853 = vpack.c.b16 %v4848, %v4847
    %v4854 = vpack.c.b16 %v4850, %v4849
    %4859 = vst [vmem:[#allocation2 + $0x1c0] sm:$0xff] %v4851
    %4860 = vst [vmem:[#allocation2 + $0x1c8] sm:$0xff] %v4852
    %4861 = vst [vmem:[#allocation2 + $0x1d0] sm:$0xff] %v4853
    %4862 = vst [vmem:[#allocation2 + $0x1d8] sm:$0xff] %v4854
    %4863 = vrot.lane.b32.xlu0 %v3679, 114
    %v4864 = vpop.permute.xlu0 %4863
    %4865 = vrot.lane.b32.xlu0 %v3683, 114
    %v4866 = vpop.permute.xlu0 %4865
    %4867 = vrot.lane.b32.xlu0 %v3680, 114
    %v4868 = vpop.permute.xlu0 %4867
    %4869 = vrot.lane.b32.xlu0 %v3684, 114
    %v4870 = vpop.permute.xlu0 %4869
    %4871 = vrot.lane.b32.xlu0 %v3681, 114
    %v4872 = vpop.permute.xlu0 %4871
    %4873 = vrot.lane.b32.xlu0 %v3685, 114
    %v4874 = vpop.permute.xlu0 %4873
    %4875 = vrot.lane.b32.xlu0 %v3682, 114
    %v4876 = vpop.permute.xlu0 %4875
    %4877 = vrot.lane.b32.xlu0 %v3686, 114
    %v4878 = vpop.permute.xlu0 %4877
    %v4879 = vsel %vm1076, %v4872, %v4876
    %v4880 = vsel %vm1076, %v4874, %v4878
    %v4881 = vsel %vm1076, %v4868, %v4872
    %v4882 = vsel %vm1076, %v4870, %v4874
    %v4883 = vsel %vm1076, %v4864, %v4868
    %v4884 = vsel %vm1076, %v4866, %v4870
    %v4885 = vsel %vm1076, %v4876, %v4864
    %v4886 = vsel %vm1076, %v4878, %v4866
    %v4887 = vld [vmem:[%s1081] ss:$8 sm:$0xf]
    %v4889 = vlaneseq
    %v4890 = vshrl.u32 %v4889, 7
    %v4891 = vsub.s32 0, %v4890
    %v4892 = vrot.slane %v4887, %v4891
    %v4893 = vlaneseq
    %v4894 = vshrl.u32 %v4893, 7
    %v4895 = vsub.s32 1, %v4894
    %v4896 = vrot.slane %v4887, %v4895
    %v4897 = vlaneseq
    %v4898 = vshrl.u32 %v4897, 7
    %v4899 = vsub.s32 2, %v4898
    %v4900 = vrot.slane %v4887, %v4899
    %v4901 = vlaneseq
    %v4902 = vshrl.u32 %v4901, 7
    %v4903 = vsub.s32 3, %v4902
    %v4904 = vrot.slane %v4887, %v4903
    %v4909 = vmul.f32 %v4883, %v4892
    %v4910 = vmul.f32 %v4881, %v4896
    %v4911 = vmul.f32 %v4879, %v4900
    %v4912 = vmul.f32 %v4885, %v4904
    %v4913 = vmul.f32 %v4884, %v4892
    %v4914 = vmul.f32 %v4882, %v4896
    %v4915 = vmul.f32 %v4880, %v4900
    %v4916 = vmul.f32 %v4886, %v4904
    %v4917 = vpack.c.bf16 %v4913, %v4909
    %v4918 = vpack.c.bf16 %v4914, %v4910
    %v4919 = vpack.c.bf16 %v4915, %v4911
    %v4920 = vpack.c.bf16 %v4916, %v4912
    %v4925 = vunpack.c.l.b16 %v4917
    %v4926 = vunpack.c.l.b16 %v4918
    %v4927 = vunpack.c.l.b16 %v4919
    %v4928 = vunpack.c.l.b16 %v4920
    %v4929 = vunpack.c.h.b16 %v4917
    %v4930 = vunpack.c.h.b16 %v4918
    %v4931 = vunpack.c.h.b16 %v4919
    %v4932 = vunpack.c.h.b16 %v4920
    %v4933 = vpack.c.b16 %v4926, %v4925
    %v4934 = vpack.c.b16 %v4928, %v4927
    %v4935 = vpack.c.b16 %v4930, %v4929
    %v4936 = vpack.c.b16 %v4932, %v4931
    %4941 = vst [vmem:[#allocation2 + $0x1e0] sm:$0xff] %v4933
    %4942 = vst [vmem:[#allocation2 + $0x1e8] sm:$0xff] %v4934
    %4943 = vst [vmem:[#allocation2 + $0x1f0] sm:$0xff] %v4935
    %4944 = vst [vmem:[#allocation2 + $0x1f8] sm:$0xff] %v4936
    %4945 = vrot.lane.b32.xlu0 %v3679, 113
    %v4946 = vpop.permute.xlu0 %4945
    %4947 = vrot.lane.b32.xlu0 %v3683, 113
    %v4948 = vpop.permute.xlu0 %4947
    %4949 = vrot.lane.b32.xlu0 %v3680, 113
    %v4950 = vpop.permute.xlu0 %4949
    %4951 = vrot.lane.b32.xlu0 %v3684, 113
    %v4952 = vpop.permute.xlu0 %4951
    %4953 = vrot.lane.b32.xlu0 %v3681, 113
    %v4954 = vpop.permute.xlu0 %4953
    %4955 = vrot.lane.b32.xlu0 %v3685, 113
    %v4956 = vpop.permute.xlu0 %4955
    %4957 = vrot.lane.b32.xlu0 %v3682, 113
    %v4958 = vpop.permute.xlu0 %4957
    %4959 = vrot.lane.b32.xlu0 %v3686, 113
    %v4960 = vpop.permute.xlu0 %4959
    %v4961 = vsel %vm1146, %v4954, %v4958
    %v4962 = vsel %vm1146, %v4956, %v4960
    %v4963 = vsel %vm1146, %v4950, %v4954
    %v4964 = vsel %vm1146, %v4952, %v4956
    %v4965 = vsel %vm1146, %v4946, %v4950
    %v4966 = vsel %vm1146, %v4948, %v4952
    %v4967 = vsel %vm1146, %v4958, %v4946
    %v4968 = vsel %vm1146, %v4960, %v4948
    %v4969 = vld [vmem:[%s1151] ss:$8 sm:$0xf]
    %v4971 = vlaneseq
    %v4972 = vshrl.u32 %v4971, 7
    %v4973 = vsub.s32 0, %v4972
    %v4974 = vrot.slane %v4969, %v4973
    %v4975 = vlaneseq
    %v4976 = vshrl.u32 %v4975, 7
    %v4977 = vsub.s32 1, %v4976
    %v4978 = vrot.slane %v4969, %v4977
    %v4979 = vlaneseq
    %v4980 = vshrl.u32 %v4979, 7
    %v4981 = vsub.s32 2, %v4980
    %v4982 = vrot.slane %v4969, %v4981
    %v4983 = vlaneseq
    %v4984 = vshrl.u32 %v4983, 7
    %v4985 = vsub.s32 3, %v4984
    %v4986 = vrot.slane %v4969, %v4985
    %v4991 = vmul.f32 %v4965, %v4974
    %v4992 = vmul.f32 %v4963, %v4978
    %v4993 = vmul.f32 %v4961, %v4982
    %v4994 = vmul.f32 %v4967, %v4986
    %v4995 = vmul.f32 %v4966, %v4974
    %v4996 = vmul.f32 %v4964, %v4978
    %v4997 = vmul.f32 %v4962, %v4982
    %v4998 = vmul.f32 %v4968, %v4986
    %v4999 = vpack.c.bf16 %v4995, %v4991
    %v5000 = vpack.c.bf16 %v4996, %v4992
    %v5001 = vpack.c.bf16 %v4997, %v4993
    %v5002 = vpack.c.bf16 %v4998, %v4994
    %v5007 = vunpack.c.l.b16 %v4999
    %v5008 = vunpack.c.l.b16 %v5000
    %v5009 = vunpack.c.l.b16 %v5001
    %v5010 = vunpack.c.l.b16 %v5002
    %v5011 = vunpack.c.h.b16 %v4999
    %v5012 = vunpack.c.h.b16 %v5000
    %v5013 = vunpack.c.h.b16 %v5001
    %v5014 = vunpack.c.h.b16 %v5002
    %v5015 = vpack.c.b16 %v5008, %v5007
    %v5016 = vpack.c.b16 %v5010, %v5009
    %v5017 = vpack.c.b16 %v5012, %v5011
    %v5018 = vpack.c.b16 %v5014, %v5013
    %5023 = vst [vmem:[#allocation2 + $0x200] sm:$0xff] %v5015
    %5024 = vst [vmem:[#allocation2 + $0x208] sm:$0xff] %v5016
    %5025 = vst [vmem:[#allocation2 + $0x210] sm:$0xff] %v5017
    %5026 = vst [vmem:[#allocation2 + $0x218] sm:$0xff] %v5018
    %5027 = vrot.lane.b32.xlu0 %v3679, 112
    %v5028 = vpop.permute.xlu0 %5027
    %5029 = vrot.lane.b32.xlu0 %v3683, 112
    %v5030 = vpop.permute.xlu0 %5029
    %5031 = vrot.lane.b32.xlu0 %v3680, 112
    %v5032 = vpop.permute.xlu0 %5031
    %5033 = vrot.lane.b32.xlu0 %v3684, 112
    %v5034 = vpop.permute.xlu0 %5033
    %5035 = vrot.lane.b32.xlu0 %v3681, 112
    %v5036 = vpop.permute.xlu0 %5035
    %5037 = vrot.lane.b32.xlu0 %v3685, 112
    %v5038 = vpop.permute.xlu0 %5037
    %5039 = vrot.lane.b32.xlu0 %v3682, 112
    %v5040 = vpop.permute.xlu0 %5039
    %5041 = vrot.lane.b32.xlu0 %v3686, 112
    %v5042 = vpop.permute.xlu0 %5041
    %v5043 = vsel %vm1208, %v5036, %v5040
    %v5044 = vsel %vm1208, %v5038, %v5042
    %v5045 = vsel %vm1208, %v5032, %v5036
    %v5046 = vsel %vm1208, %v5034, %v5038
    %v5047 = vsel %vm1208, %v5028, %v5032
    %v5048 = vsel %vm1208, %v5030, %v5034
    %v5049 = vsel %vm1208, %v5040, %v5028
    %v5050 = vsel %vm1208, %v5042, %v5030
    %v5051 = vld [vmem:[%s1213] ss:$8 sm:$0xf]
    %v5053 = vlaneseq
    %v5054 = vshrl.u32 %v5053, 7
    %v5055 = vsub.s32 0, %v5054
    %v5056 = vrot.slane %v5051, %v5055
    %v5057 = vlaneseq
    %v5058 = vshrl.u32 %v5057, 7
    %v5059 = vsub.s32 1, %v5058
    %v5060 = vrot.slane %v5051, %v5059
    %v5061 = vlaneseq
    %v5062 = vshrl.u32 %v5061, 7
    %v5063 = vsub.s32 2, %v5062
    %v5064 = vrot.slane %v5051, %v5063
    %v5065 = vlaneseq
    %v5066 = vshrl.u32 %v5065, 7
    %v5067 = vsub.s32 3, %v5066
    %v5068 = vrot.slane %v5051, %v5067
    %v5073 = vmul.f32 %v5047, %v5056
    %v5074 = vmul.f32 %v5045, %v5060
    %v5075 = vmul.f32 %v5043, %v5064
    %v5076 = vmul.f32 %v5049, %v5068
    %v5077 = vmul.f32 %v5048, %v5056
    %v5078 = vmul.f32 %v5046, %v5060
    %v5079 = vmul.f32 %v5044, %v5064
    %v5080 = vmul.f32 %v5050, %v5068
    %v5081 = vpack.c.bf16 %v5077, %v5073
    %v5082 = vpack.c.bf16 %v5078, %v5074
    %v5083 = vpack.c.bf16 %v5079, %v5075
    %v5084 = vpack.c.bf16 %v5080, %v5076
    %v5089 = vunpack.c.l.b16 %v5081
    %v5090 = vunpack.c.l.b16 %v5082
    %v5091 = vunpack.c.l.b16 %v5083
    %v5092 = vunpack.c.l.b16 %v5084
    %v5093 = vunpack.c.h.b16 %v5081
    %v5094 = vunpack.c.h.b16 %v5082
    %v5095 = vunpack.c.h.b16 %v5083
    %v5096 = vunpack.c.h.b16 %v5084
    %v5097 = vpack.c.b16 %v5090, %v5089
    %v5098 = vpack.c.b16 %v5092, %v5091
    %v5099 = vpack.c.b16 %v5094, %v5093
    %v5100 = vpack.c.b16 %v5096, %v5095
    %5105 = vst [vmem:[#allocation2 + $0x220] sm:$0xff] %v5097
    %5106 = vst [vmem:[#allocation2 + $0x228] sm:$0xff] %v5098
    %5107 = vst [vmem:[#allocation2 + $0x230] sm:$0xff] %v5099
    %5108 = vst [vmem:[#allocation2 + $0x238] sm:$0xff] %v5100
    %5109 = vrot.lane.b32.xlu0 %v3679, 111
    %v5110 = vpop.permute.xlu0 %5109
    %5111 = vrot.lane.b32.xlu0 %v3683, 111
    %v5112 = vpop.permute.xlu0 %5111
    %5113 = vrot.lane.b32.xlu0 %v3680, 111
    %v5114 = vpop.permute.xlu0 %5113
    %5115 = vrot.lane.b32.xlu0 %v3684, 111
    %v5116 = vpop.permute.xlu0 %5115
    %5117 = vrot.lane.b32.xlu0 %v3681, 111
    %v5118 = vpop.permute.xlu0 %5117
    %5119 = vrot.lane.b32.xlu0 %v3685, 111
    %v5120 = vpop.permute.xlu0 %5119
    %5121 = vrot.lane.b32.xlu0 %v3682, 111
    %v5122 = vpop.permute.xlu0 %5121
    %5123 = vrot.lane.b32.xlu0 %v3686, 111
    %v5124 = vpop.permute.xlu0 %5123
    %v5125 = vsel %vm1276, %v5118, %v5122
    %v5126 = vsel %vm1276, %v5120, %v5124
    %v5127 = vsel %vm1276, %v5114, %v5118
    %v5128 = vsel %vm1276, %v5116, %v5120
    %v5129 = vsel %vm1276, %v5110, %v5114
    %v5130 = vsel %vm1276, %v5112, %v5116
    %v5131 = vsel %vm1276, %v5122, %v5110
    %v5132 = vsel %vm1276, %v5124, %v5112
    %v5133 = vld [vmem:[%s1281] ss:$8 sm:$0xf]
    %v5135 = vlaneseq
    %v5136 = vshrl.u32 %v5135, 7
    %v5137 = vsub.s32 0, %v5136
    %v5138 = vrot.slane %v5133, %v5137
    %v5139 = vlaneseq
    %v5140 = vshrl.u32 %v5139, 7
    %v5141 = vsub.s32 1, %v5140
    %v5142 = vrot.slane %v5133, %v5141
    %v5143 = vlaneseq
    %v5144 = vshrl.u32 %v5143, 7
    %v5145 = vsub.s32 2, %v5144
    %v5146 = vrot.slane %v5133, %v5145
    %v5147 = vlaneseq
    %v5148 = vshrl.u32 %v5147, 7
    %v5149 = vsub.s32 3, %v5148
    %v5150 = vrot.slane %v5133, %v5149
    %v5155 = vmul.f32 %v5129, %v5138
    %v5156 = vmul.f32 %v5127, %v5142
    %v5157 = vmul.f32 %v5125, %v5146
    %v5158 = vmul.f32 %v5131, %v5150
    %v5159 = vmul.f32 %v5130, %v5138
    %v5160 = vmul.f32 %v5128, %v5142
    %v5161 = vmul.f32 %v5126, %v5146
    %v5162 = vmul.f32 %v5132, %v5150
    %v5163 = vpack.c.bf16 %v5159, %v5155
    %v5164 = vpack.c.bf16 %v5160, %v5156
    %v5165 = vpack.c.bf16 %v5161, %v5157
    %v5166 = vpack.c.bf16 %v5162, %v5158
    %v5171 = vunpack.c.l.b16 %v5163
    %v5172 = vunpack.c.l.b16 %v5164
    %v5173 = vunpack.c.l.b16 %v5165
    %v5174 = vunpack.c.l.b16 %v5166
    %v5175 = vunpack.c.h.b16 %v5163
    %v5176 = vunpack.c.h.b16 %v5164
    %v5177 = vunpack.c.h.b16 %v5165
    %v5178 = vunpack.c.h.b16 %v5166
    %v5179 = vpack.c.b16 %v5172, %v5171
    %v5180 = vpack.c.b16 %v5174, %v5173
    %v5181 = vpack.c.b16 %v5176, %v5175
    %v5182 = vpack.c.b16 %v5178, %v5177
    %5187 = vst [vmem:[#allocation2 + $0x240] sm:$0xff] %v5179
    %5188 = vst [vmem:[#allocation2 + $0x248] sm:$0xff] %v5180
    %5189 = vst [vmem:[#allocation2 + $0x250] sm:$0xff] %v5181
    %5190 = vst [vmem:[#allocation2 + $0x258] sm:$0xff] %v5182
    %5191 = vrot.lane.b32.xlu0 %v3679, 110
    %v5192 = vpop.permute.xlu0 %5191
    %5193 = vrot.lane.b32.xlu0 %v3683, 110
    %v5194 = vpop.permute.xlu0 %5193
    %5195 = vrot.lane.b32.xlu0 %v3680, 110
    %v5196 = vpop.permute.xlu0 %5195
    %5197 = vrot.lane.b32.xlu0 %v3684, 110
    %v5198 = vpop.permute.xlu0 %5197
    %5199 = vrot.lane.b32.xlu0 %v3681, 110
    %v5200 = vpop.permute.xlu0 %5199
    %5201 = vrot.lane.b32.xlu0 %v3685, 110
    %v5202 = vpop.permute.xlu0 %5201
    %5203 = vrot.lane.b32.xlu0 %v3682, 110
    %v5204 = vpop.permute.xlu0 %5203
    %5205 = vrot.lane.b32.xlu0 %v3686, 110
    %v5206 = vpop.permute.xlu0 %5205
    %v5207 = vsel %vm1340, %v5200, %v5204
    %v5208 = vsel %vm1340, %v5202, %v5206
    %v5209 = vsel %vm1340, %v5196, %v5200
    %v5210 = vsel %vm1340, %v5198, %v5202
    %v5211 = vsel %vm1340, %v5192, %v5196
    %v5212 = vsel %vm1340, %v5194, %v5198
    %v5213 = vsel %vm1340, %v5204, %v5192
    %v5214 = vsel %vm1340, %v5206, %v5194
    %v5215 = vld [vmem:[%s1345] ss:$8 sm:$0xf]
    %v5217 = vlaneseq
    %v5218 = vshrl.u32 %v5217, 7
    %v5219 = vsub.s32 0, %v5218
    %v5220 = vrot.slane %v5215, %v5219
    %v5221 = vlaneseq
    %v5222 = vshrl.u32 %v5221, 7
    %v5223 = vsub.s32 1, %v5222
    %v5224 = vrot.slane %v5215, %v5223
    %v5225 = vlaneseq
    %v5226 = vshrl.u32 %v5225, 7
    %v5227 = vsub.s32 2, %v5226
    %v5228 = vrot.slane %v5215, %v5227
    %v5229 = vlaneseq
    %v5230 = vshrl.u32 %v5229, 7
    %v5231 = vsub.s32 3, %v5230
    %v5232 = vrot.slane %v5215, %v5231
    %v5237 = vmul.f32 %v5211, %v5220
    %v5238 = vmul.f32 %v5209, %v5224
    %v5239 = vmul.f32 %v5207, %v5228
    %v5240 = vmul.f32 %v5213, %v5232
    %v5241 = vmul.f32 %v5212, %v5220
    %v5242 = vmul.f32 %v5210, %v5224
    %v5243 = vmul.f32 %v5208, %v5228
    %v5244 = vmul.f32 %v5214, %v5232
    %v5245 = vpack.c.bf16 %v5241, %v5237
    %v5246 = vpack.c.bf16 %v5242, %v5238
    %v5247 = vpack.c.bf16 %v5243, %v5239
    %v5248 = vpack.c.bf16 %v5244, %v5240
    %v5253 = vunpack.c.l.b16 %v5245
    %v5254 = vunpack.c.l.b16 %v5246
    %v5255 = vunpack.c.l.b16 %v5247
    %v5256 = vunpack.c.l.b16 %v5248
    %v5257 = vunpack.c.h.b16 %v5245
    %v5258 = vunpack.c.h.b16 %v5246
    %v5259 = vunpack.c.h.b16 %v5247
    %v5260 = vunpack.c.h.b16 %v5248
    %v5261 = vpack.c.b16 %v5254, %v5253
    %v5262 = vpack.c.b16 %v5256, %v5255
    %v5263 = vpack.c.b16 %v5258, %v5257
    %v5264 = vpack.c.b16 %v5260, %v5259
    %5269 = vst [vmem:[#allocation2 + $0x260] sm:$0xff] %v5261
    %5270 = vst [vmem:[#allocation2 + $0x268] sm:$0xff] %v5262
    %5271 = vst [vmem:[#allocation2 + $0x270] sm:$0xff] %v5263
    %5272 = vst [vmem:[#allocation2 + $0x278] sm:$0xff] %v5264
    %5273 = vrot.lane.b32.xlu0 %v3679, 98
    %v5274 = vpop.permute.xlu0 %5273
    %5275 = vrot.lane.b32.xlu0 %v3683, 98
    %v5276 = vpop.permute.xlu0 %5275
    %5277 = vrot.lane.b32.xlu0 %v3680, 98
    %v5278 = vpop.permute.xlu0 %5277
    %5279 = vrot.lane.b32.xlu0 %v3684, 98
    %v5280 = vpop.permute.xlu0 %5279
    %5281 = vrot.lane.b32.xlu0 %v3681, 98
    %v5282 = vpop.permute.xlu0 %5281
    %5283 = vrot.lane.b32.xlu0 %v3685, 98
    %v5284 = vpop.permute.xlu0 %5283
    %5285 = vrot.lane.b32.xlu0 %v3682, 98
    %v5286 = vpop.permute.xlu0 %5285
    %5287 = vrot.lane.b32.xlu0 %v3686, 98
    %v5288 = vpop.permute.xlu0 %5287
    %v5289 = vsel %vm1410, %v5282, %v5286
    %v5290 = vsel %vm1410, %v5284, %v5288
    %v5291 = vsel %vm1410, %v5278, %v5282
    %v5292 = vsel %vm1410, %v5280, %v5284
    %v5293 = vsel %vm1410, %v5274, %v5278
    %v5294 = vsel %vm1410, %v5276, %v5280
    %v5295 = vsel %vm1410, %v5286, %v5274
    %v5296 = vsel %vm1410, %v5288, %v5276
    %v5297 = vld [vmem:[%s1415] ss:$8 sm:$0xf]
    %v5299 = vlaneseq
    %v5300 = vshrl.u32 %v5299, 7
    %v5301 = vsub.s32 0, %v5300
    %v5302 = vrot.slane %v5297, %v5301
    %v5303 = vlaneseq
    %v5304 = vshrl.u32 %v5303, 7
    %v5305 = vsub.s32 1, %v5304
    %v5306 = vrot.slane %v5297, %v5305
    %v5307 = vlaneseq
    %v5308 = vshrl.u32 %v5307, 7
    %v5309 = vsub.s32 2, %v5308
    %v5310 = vrot.slane %v5297, %v5309
    %v5311 = vlaneseq
    %v5312 = vshrl.u32 %v5311, 7
    %v5313 = vsub.s32 3, %v5312
    %v5314 = vrot.slane %v5297, %v5313
    %v5319 = vmul.f32 %v5293, %v5302
    %v5320 = vmul.f32 %v5291, %v5306
    %v5321 = vmul.f32 %v5289, %v5310
    %v5322 = vmul.f32 %v5295, %v5314
    %v5323 = vmul.f32 %v5294, %v5302
    %v5324 = vmul.f32 %v5292, %v5306
    %v5325 = vmul.f32 %v5290, %v5310
    %v5326 = vmul.f32 %v5296, %v5314
    %v5327 = vpack.c.bf16 %v5323, %v5319
    %v5328 = vpack.c.bf16 %v5324, %v5320
    %v5329 = vpack.c.bf16 %v5325, %v5321
    %v5330 = vpack.c.bf16 %v5326, %v5322
    %v5335 = vunpack.c.l.b16 %v5327
    %v5336 = vunpack.c.l.b16 %v5328
    %v5337 = vunpack.c.l.b16 %v5329
    %v5338 = vunpack.c.l.b16 %v5330
    %v5339 = vunpack.c.h.b16 %v5327
    %v5340 = vunpack.c.h.b16 %v5328
    %v5341 = vunpack.c.h.b16 %v5329
    %v5342 = vunpack.c.h.b16 %v5330
    %v5343 = vpack.c.b16 %v5336, %v5335
    %v5344 = vpack.c.b16 %v5338, %v5337
    %v5345 = vpack.c.b16 %v5340, %v5339
    %v5346 = vpack.c.b16 %v5342, %v5341
    %5351 = vst [vmem:[#allocation2 + $0x280] sm:$0xff] %v5343
    %5352 = vst [vmem:[#allocation2 + $0x288] sm:$0xff] %v5344
    %5353 = vst [vmem:[#allocation2 + $0x290] sm:$0xff] %v5345
    %5354 = vst [vmem:[#allocation2 + $0x298] sm:$0xff] %v5346
    %5355 = vrot.lane.b32.xlu0 %v3679, 97
    %v5356 = vpop.permute.xlu0 %5355
    %5357 = vrot.lane.b32.xlu0 %v3683, 97
    %v5358 = vpop.permute.xlu0 %5357
    %5359 = vrot.lane.b32.xlu0 %v3680, 97
    %v5360 = vpop.permute.xlu0 %5359
    %5361 = vrot.lane.b32.xlu0 %v3684, 97
    %v5362 = vpop.permute.xlu0 %5361
    %5363 = vrot.lane.b32.xlu0 %v3681, 97
    %v5364 = vpop.permute.xlu0 %5363
    %5365 = vrot.lane.b32.xlu0 %v3685, 97
    %v5366 = vpop.permute.xlu0 %5365
    %5367 = vrot.lane.b32.xlu0 %v3682, 97
    %v5368 = vpop.permute.xlu0 %5367
    %5369 = vrot.lane.b32.xlu0 %v3686, 97
    %v5370 = vpop.permute.xlu0 %5369
    %v5371 = vsel %vm1474, %v5364, %v5368
    %v5372 = vsel %vm1474, %v5366, %v5370
    %v5373 = vsel %vm1474, %v5360, %v5364
    %v5374 = vsel %vm1474, %v5362, %v5366
    %v5375 = vsel %vm1474, %v5356, %v5360
    %v5376 = vsel %vm1474, %v5358, %v5362
    %v5377 = vsel %vm1474, %v5368, %v5356
    %v5378 = vsel %vm1474, %v5370, %v5358
    %v5379 = vld [vmem:[%s1479] ss:$8 sm:$0xf]
    %v5381 = vlaneseq
    %v5382 = vshrl.u32 %v5381, 7
    %v5383 = vsub.s32 0, %v5382
    %v5384 = vrot.slane %v5379, %v5383
    %v5385 = vlaneseq
    %v5386 = vshrl.u32 %v5385, 7
    %v5387 = vsub.s32 1, %v5386
    %v5388 = vrot.slane %v5379, %v5387
    %v5389 = vlaneseq
    %v5390 = vshrl.u32 %v5389, 7
    %v5391 = vsub.s32 2, %v5390
    %v5392 = vrot.slane %v5379, %v5391
    %v5393 = vlaneseq
    %v5394 = vshrl.u32 %v5393, 7
    %v5395 = vsub.s32 3, %v5394
    %v5396 = vrot.slane %v5379, %v5395
    %v5401 = vmul.f32 %v5375, %v5384
    %v5402 = vmul.f32 %v5373, %v5388
    %v5403 = vmul.f32 %v5371, %v5392
    %v5404 = vmul.f32 %v5377, %v5396
    %v5405 = vmul.f32 %v5376, %v5384
    %v5406 = vmul.f32 %v5374, %v5388
    %v5407 = vmul.f32 %v5372, %v5392
    %v5408 = vmul.f32 %v5378, %v5396
    %v5409 = vpack.c.bf16 %v5405, %v5401
    %v5410 = vpack.c.bf16 %v5406, %v5402
    %v5411 = vpack.c.bf16 %v5407, %v5403
    %v5412 = vpack.c.bf16 %v5408, %v5404
    %v5417 = vunpack.c.l.b16 %v5409
    %v5418 = vunpack.c.l.b16 %v5410
    %v5419 = vunpack.c.l.b16 %v5411
    %v5420 = vunpack.c.l.b16 %v5412
    %v5421 = vunpack.c.h.b16 %v5409
    %v5422 = vunpack.c.h.b16 %v5410
    %v5423 = vunpack.c.h.b16 %v5411
    %v5424 = vunpack.c.h.b16 %v5412
    %v5425 = vpack.c.b16 %v5418, %v5417
    %v5426 = vpack.c.b16 %v5420, %v5419
    %v5427 = vpack.c.b16 %v5422, %v5421
    %v5428 = vpack.c.b16 %v5424, %v5423
    %5433 = vst [vmem:[#allocation2 + $0x2a0] sm:$0xff] %v5425
    %5434 = vst [vmem:[#allocation2 + $0x2a8] sm:$0xff] %v5426
    %5435 = vst [vmem:[#allocation2 + $0x2b0] sm:$0xff] %v5427
    %5436 = vst [vmem:[#allocation2 + $0x2b8] sm:$0xff] %v5428
    %5437 = vrot.lane.b32.xlu0 %v3679, 96
    %v5438 = vpop.permute.xlu0 %5437
    %5439 = vrot.lane.b32.xlu0 %v3683, 96
    %v5440 = vpop.permute.xlu0 %5439
    %5441 = vrot.lane.b32.xlu0 %v3680, 96
    %v5442 = vpop.permute.xlu0 %5441
    %5443 = vrot.lane.b32.xlu0 %v3684, 96
    %v5444 = vpop.permute.xlu0 %5443
    %5445 = vrot.lane.b32.xlu0 %v3681, 96
    %v5446 = vpop.permute.xlu0 %5445
    %5447 = vrot.lane.b32.xlu0 %v3685, 96
    %v5448 = vpop.permute.xlu0 %5447
    %5449 = vrot.lane.b32.xlu0 %v3682, 96
    %v5450 = vpop.permute.xlu0 %5449
    %5451 = vrot.lane.b32.xlu0 %v3686, 96
    %v5452 = vpop.permute.xlu0 %5451
    %v5453 = vsel %vm1544, %v5446, %v5450
    %v5454 = vsel %vm1544, %v5448, %v5452
    %v5455 = vsel %vm1544, %v5442, %v5446
    %v5456 = vsel %vm1544, %v5444, %v5448
    %v5457 = vsel %vm1544, %v5438, %v5442
    %v5458 = vsel %vm1544, %v5440, %v5444
    %v5459 = vsel %vm1544, %v5450, %v5438
    %v5460 = vsel %vm1544, %v5452, %v5440
    %v5461 = vld [vmem:[%s1549] ss:$8 sm:$0xf]
    %v5463 = vlaneseq
    %v5464 = vshrl.u32 %v5463, 7
    %v5465 = vsub.s32 0, %v5464
    %v5466 = vrot.slane %v5461, %v5465
    %v5467 = vlaneseq
    %v5468 = vshrl.u32 %v5467, 7
    %v5469 = vsub.s32 1, %v5468
    %v5470 = vrot.slane %v5461, %v5469
    %v5471 = vlaneseq
    %v5472 = vshrl.u32 %v5471, 7
    %v5473 = vsub.s32 2, %v5472
    %v5474 = vrot.slane %v5461, %v5473
    %v5475 = vlaneseq
    %v5476 = vshrl.u32 %v5475, 7
    %v5477 = vsub.s32 3, %v5476
    %v5478 = vrot.slane %v5461, %v5477
    %v5483 = vmul.f32 %v5457, %v5466
    %v5484 = vmul.f32 %v5455, %v5470
    %v5485 = vmul.f32 %v5453, %v5474
    %v5486 = vmul.f32 %v5459, %v5478
    %v5487 = vmul.f32 %v5458, %v5466
    %v5488 = vmul.f32 %v5456, %v5470
    %v5489 = vmul.f32 %v5454, %v5474
    %v5490 = vmul.f32 %v5460, %v5478
    %v5491 = vpack.c.bf16 %v5487, %v5483
    %v5492 = vpack.c.bf16 %v5488, %v5484
    %v5493 = vpack.c.bf16 %v5489, %v5485
    %v5494 = vpack.c.bf16 %v5490, %v5486
    %v5499 = vunpack.c.l.b16 %v5491
    %v5500 = vunpack.c.l.b16 %v5492
    %v5501 = vunpack.c.l.b16 %v5493
    %v5502 = vunpack.c.l.b16 %v5494
    %v5503 = vunpack.c.h.b16 %v5491
    %v5504 = vunpack.c.h.b16 %v5492
    %v5505 = vunpack.c.h.b16 %v5493
    %v5506 = vunpack.c.h.b16 %v5494
    %v5507 = vpack.c.b16 %v5500, %v5499
    %v5508 = vpack.c.b16 %v5502, %v5501
    %v5509 = vpack.c.b16 %v5504, %v5503
    %v5510 = vpack.c.b16 %v5506, %v5505
    %5515 = vst [vmem:[#allocation2 + $0x2c0] sm:$0xff] %v5507
    %5516 = vst [vmem:[#allocation2 + $0x2c8] sm:$0xff] %v5508
    %5517 = vst [vmem:[#allocation2 + $0x2d0] sm:$0xff] %v5509
    %5518 = vst [vmem:[#allocation2 + $0x2d8] sm:$0xff] %v5510
    %5519 = vrot.lane.b32.xlu0 %v3679, 95
    %v5520 = vpop.permute.xlu0 %5519
    %5521 = vrot.lane.b32.xlu0 %v3683, 95
    %v5522 = vpop.permute.xlu0 %5521
    %5523 = vrot.lane.b32.xlu0 %v3680, 95
    %v5524 = vpop.permute.xlu0 %5523
    %5525 = vrot.lane.b32.xlu0 %v3684, 95
    %v5526 = vpop.permute.xlu0 %5525
    %5527 = vrot.lane.b32.xlu0 %v3681, 95
    %v5528 = vpop.permute.xlu0 %5527
    %5529 = vrot.lane.b32.xlu0 %v3685, 95
    %v5530 = vpop.permute.xlu0 %5529
    %5531 = vrot.lane.b32.xlu0 %v3682, 95
    %v5532 = vpop.permute.xlu0 %5531
    %5533 = vrot.lane.b32.xlu0 %v3686, 95
    %v5534 = vpop.permute.xlu0 %5533
    %v5535 = vsel %vm1608, %v5528, %v5532
    %v5536 = vsel %vm1608, %v5530, %v5534
    %v5537 = vsel %vm1608, %v5524, %v5528
    %v5538 = vsel %vm1608, %v5526, %v5530
    %v5539 = vsel %vm1608, %v5520, %v5524
    %v5540 = vsel %vm1608, %v5522, %v5526
    %v5541 = vsel %vm1608, %v5532, %v5520
    %v5542 = vsel %vm1608, %v5534, %v5522
    %v5543 = vld [vmem:[%s1613] ss:$8 sm:$0xf]
    %v5545 = vlaneseq
    %v5546 = vshrl.u32 %v5545, 7
    %v5547 = vsub.s32 0, %v5546
    %v5548 = vrot.slane %v5543, %v5547
    %v5549 = vlaneseq
    %v5550 = vshrl.u32 %v5549, 7
    %v5551 = vsub.s32 1, %v5550
    %v5552 = vrot.slane %v5543, %v5551
    %v5553 = vlaneseq
    %v5554 = vshrl.u32 %v5553, 7
    %v5555 = vsub.s32 2, %v5554
    %v5556 = vrot.slane %v5543, %v5555
    %v5557 = vlaneseq
    %v5558 = vshrl.u32 %v5557, 7
    %v5559 = vsub.s32 3, %v5558
    %v5560 = vrot.slane %v5543, %v5559
    %v5565 = vmul.f32 %v5539, %v5548
    %v5566 = vmul.f32 %v5537, %v5552
    %v5567 = vmul.f32 %v5535, %v5556
    %v5568 = vmul.f32 %v5541, %v5560
    %v5569 = vmul.f32 %v5540, %v5548
    %v5570 = vmul.f32 %v5538, %v5552
    %v5571 = vmul.f32 %v5536, %v5556
    %v5572 = vmul.f32 %v5542, %v5560
    %v5573 = vpack.c.bf16 %v5569, %v5565
    %v5574 = vpack.c.bf16 %v5570, %v5566
    %v5575 = vpack.c.bf16 %v5571, %v5567
    %v5576 = vpack.c.bf16 %v5572, %v5568
    %v5581 = vunpack.c.l.b16 %v5573
    %v5582 = vunpack.c.l.b16 %v5574
    %v5583 = vunpack.c.l.b16 %v5575
    %v5584 = vunpack.c.l.b16 %v5576
    %v5585 = vunpack.c.h.b16 %v5573
    %v5586 = vunpack.c.h.b16 %v5574
    %v5587 = vunpack.c.h.b16 %v5575
    %v5588 = vunpack.c.h.b16 %v5576
    %v5589 = vpack.c.b16 %v5582, %v5581
    %v5590 = vpack.c.b16 %v5584, %v5583
    %v5591 = vpack.c.b16 %v5586, %v5585
    %v5592 = vpack.c.b16 %v5588, %v5587
    %5597 = vst [vmem:[#allocation2 + $0x2e0] sm:$0xff] %v5589
    %5598 = vst [vmem:[#allocation2 + $0x2e8] sm:$0xff] %v5590
    %5599 = vst [vmem:[#allocation2 + $0x2f0] sm:$0xff] %v5591
    %5600 = vst [vmem:[#allocation2 + $0x2f8] sm:$0xff] %v5592
    %5601 = vrot.lane.b32.xlu0 %v3679, 94
    %v5602 = vpop.permute.xlu0 %5601
    %5603 = vrot.lane.b32.xlu0 %v3683, 94
    %v5604 = vpop.permute.xlu0 %5603
    %5605 = vrot.lane.b32.xlu0 %v3680, 94
    %v5606 = vpop.permute.xlu0 %5605
    %5607 = vrot.lane.b32.xlu0 %v3684, 94
    %v5608 = vpop.permute.xlu0 %5607
    %5609 = vrot.lane.b32.xlu0 %v3681, 94
    %v5610 = vpop.permute.xlu0 %5609
    %5611 = vrot.lane.b32.xlu0 %v3685, 94
    %v5612 = vpop.permute.xlu0 %5611
    %5613 = vrot.lane.b32.xlu0 %v3682, 94
    %v5614 = vpop.permute.xlu0 %5613
    %5615 = vrot.lane.b32.xlu0 %v3686, 94
    %v5616 = vpop.permute.xlu0 %5615
    %v5617 = vsel %vm1678, %v5610, %v5614
    %v5618 = vsel %vm1678, %v5612, %v5616
    %v5619 = vsel %vm1678, %v5606, %v5610
    %v5620 = vsel %vm1678, %v5608, %v5612
    %v5621 = vsel %vm1678, %v5602, %v5606
    %v5622 = vsel %vm1678, %v5604, %v5608
    %v5623 = vsel %vm1678, %v5614, %v5602
    %v5624 = vsel %vm1678, %v5616, %v5604
    %v5625 = vld [vmem:[%s1683] ss:$8 sm:$0xf]
    %v5627 = vlaneseq
    %v5628 = vshrl.u32 %v5627, 7
    %v5629 = vsub.s32 0, %v5628
    %v5630 = vrot.slane %v5625, %v5629
    %v5631 = vlaneseq
    %v5632 = vshrl.u32 %v5631, 7
    %v5633 = vsub.s32 1, %v5632
    %v5634 = vrot.slane %v5625, %v5633
    %v5635 = vlaneseq
    %v5636 = vshrl.u32 %v5635, 7
    %v5637 = vsub.s32 2, %v5636
    %v5638 = vrot.slane %v5625, %v5637
    %v5639 = vlaneseq
    %v5640 = vshrl.u32 %v5639, 7
    %v5641 = vsub.s32 3, %v5640
    %v5642 = vrot.slane %v5625, %v5641
    %v5647 = vmul.f32 %v5621, %v5630
    %v5648 = vmul.f32 %v5619, %v5634
    %v5649 = vmul.f32 %v5617, %v5638
    %v5650 = vmul.f32 %v5623, %v5642
    %v5651 = vmul.f32 %v5622, %v5630
    %v5652 = vmul.f32 %v5620, %v5634
    %v5653 = vmul.f32 %v5618, %v5638
    %v5654 = vmul.f32 %v5624, %v5642
    %v5655 = vpack.c.bf16 %v5651, %v5647
    %v5656 = vpack.c.bf16 %v5652, %v5648
    %v5657 = vpack.c.bf16 %v5653, %v5649
    %v5658 = vpack.c.bf16 %v5654, %v5650
    %v5663 = vunpack.c.l.b16 %v5655
    %v5664 = vunpack.c.l.b16 %v5656
    %v5665 = vunpack.c.l.b16 %v5657
    %v5666 = vunpack.c.l.b16 %v5658
    %v5667 = vunpack.c.h.b16 %v5655
    %v5668 = vunpack.c.h.b16 %v5656
    %v5669 = vunpack.c.h.b16 %v5657
    %v5670 = vunpack.c.h.b16 %v5658
    %v5671 = vpack.c.b16 %v5664, %v5663
    %v5672 = vpack.c.b16 %v5666, %v5665
    %v5673 = vpack.c.b16 %v5668, %v5667
    %v5674 = vpack.c.b16 %v5670, %v5669
    %5679 = vst [vmem:[#allocation2 + $0x300] sm:$0xff] %v5671
    %5680 = vst [vmem:[#allocation2 + $0x308] sm:$0xff] %v5672
    %5681 = vst [vmem:[#allocation2 + $0x310] sm:$0xff] %v5673
    %5682 = vst [vmem:[#allocation2 + $0x318] sm:$0xff] %v5674
    %v5683 = vld [vmem:[%s3] sm:$0xff]
    %v5684 = vld [vmem:[#allocation2] sm:$0xff]
    %v5685 = vld [vmem:[#allocation2 + $0x8] sm:$0xff]
    %v5686 = vld [vmem:[#allocation2 + $0x10] sm:$0xff]
    %v5687 = vld [vmem:[#allocation2 + $0x18] sm:$0xff]
    %v5688 = vld [vmem:[#allocation2 + $0x20] sm:$0xff]
    %v5689 = vld [vmem:[#allocation2 + $0x28] sm:$0xff]
    %v5690 = vld [vmem:[#allocation2 + $0x30] sm:$0xff]
    %v5691 = vld [vmem:[#allocation2 + $0x38] sm:$0xff]
    %v5692 = vld [vmem:[#allocation2 + $0x40] sm:$0xff]
    %v5693 = vld [vmem:[#allocation2 + $0x48] sm:$0xff]
    %v5694 = vld [vmem:[#allocation2 + $0x50] sm:$0xff]
    %v5695 = vld [vmem:[#allocation2 + $0x58] sm:$0xff]
    %v5696 = vld [vmem:[#allocation2 + $0x60] sm:$0xff]
    %v5697 = vld [vmem:[#allocation2 + $0x68] sm:$0xff]
    %v5698 = vld [vmem:[#allocation2 + $0x70] sm:$0xff]
    %v5699 = vld [vmem:[#allocation2 + $0x78] sm:$0xff]
    %v5700 = vld [vmem:[#allocation2 + $0x80] sm:$0xff]
    %v5701 = vld [vmem:[#allocation2 + $0x88] sm:$0xff]
    %v5702 = vld [vmem:[#allocation2 + $0x90] sm:$0xff]
    %v5703 = vld [vmem:[#allocation2 + $0x98] sm:$0xff]
    %v5704 = vld [vmem:[#allocation2 + $0xa0] sm:$0xff]
    %v5705 = vld [vmem:[#allocation2 + $0xa8] sm:$0xff]
    %v5706 = vld [vmem:[#allocation2 + $0xb0] sm:$0xff]
    %v5707 = vld [vmem:[#allocation2 + $0xb8] sm:$0xff]
    %v5708 = vld [vmem:[#allocation2 + $0xc0] sm:$0xff]
    %v5709 = vld [vmem:[#allocation2 + $0xc8] sm:$0xff]
    %v5710 = vld [vmem:[#allocation2 + $0xd0] sm:$0xff]
    %v5711 = vld [vmem:[#allocation2 + $0xd8] sm:$0xff]
    %v5712 = vld [vmem:[#allocation2 + $0xe0] sm:$0xff]
    %v5713 = vld [vmem:[#allocation2 + $0xe8] sm:$0xff]
    %v5714 = vld [vmem:[#allocation2 + $0xf0] sm:$0xff]
    %v5715 = vld [vmem:[#allocation2 + $0xf8] sm:$0xff]
    %v5716 = vld [vmem:[#allocation2 + $0x100] sm:$0xff]
    %v5717 = vld [vmem:[#allocation2 + $0x108] sm:$0xff]
    %v5718 = vld [vmem:[#allocation2 + $0x110] sm:$0xff]
    %v5719 = vld [vmem:[#allocation2 + $0x118] sm:$0xff]
    %v5720 = vld [vmem:[#allocation2 + $0x120] sm:$0xff]
    %v5721 = vld [vmem:[#allocation2 + $0x128] sm:$0xff]
    %v5722 = vld [vmem:[#allocation2 + $0x130] sm:$0xff]
    %v5723 = vld [vmem:[#allocation2 + $0x138] sm:$0xff]
    %v5724 = vld [vmem:[#allocation2 + $0x140] sm:$0xff]
    %v5725 = vld [vmem:[#allocation2 + $0x148] sm:$0xff]
    %v5726 = vld [vmem:[#allocation2 + $0x150] sm:$0xff]
    %v5727 = vld [vmem:[#allocation2 + $0x158] sm:$0xff]
    %v5728 = vld [vmem:[#allocation2 + $0x160] sm:$0xff]
    %v5729 = vld [vmem:[#allocation2 + $0x168] sm:$0xff]
    %v5730 = vld [vmem:[#allocation2 + $0x170] sm:$0xff]
    %v5731 = vld [vmem:[#allocation2 + $0x178] sm:$0xff]
    %v5732 = vld [vmem:[#allocation2 + $0x180] sm:$0xff]
    %v5733 = vld [vmem:[#allocation2 + $0x188] sm:$0xff]
    %v5734 = vld [vmem:[#allocation2 + $0x190] sm:$0xff]
    %v5735 = vld [vmem:[#allocation2 + $0x198] sm:$0xff]
    %v5736 = vld [vmem:[#allocation2 + $0x1a0] sm:$0xff]
    %v5737 = vld [vmem:[#allocation2 + $0x1a8] sm:$0xff]
    %v5738 = vld [vmem:[#allocation2 + $0x1b0] sm:$0xff]
    %v5739 = vld [vmem:[#allocation2 + $0x1b8] sm:$0xff]
    %v5740 = vld [vmem:[#allocation2 + $0x1c0] sm:$0xff]
    %v5741 = vld [vmem:[#allocation2 + $0x1c8] sm:$0xff]
    %v5742 = vld [vmem:[#allocation2 + $0x1d0] sm:$0xff]
    %v5743 = vld [vmem:[#allocation2 + $0x1d8] sm:$0xff]
    %v5744 = vld [vmem:[#allocation2 + $0x1e0] sm:$0xff]
    %v5745 = vld [vmem:[#allocation2 + $0x1e8] sm:$0xff]
    %v5746 = vld [vmem:[#allocation2 + $0x1f0] sm:$0xff]
    %v5747 = vld [vmem:[#allocation2 + $0x1f8] sm:$0xff]
    %v5748 = vld [vmem:[#allocation2 + $0x200] sm:$0xff]
    %v5749 = vld [vmem:[#allocation2 + $0x208] sm:$0xff]
    %v5750 = vld [vmem:[#allocation2 + $0x210] sm:$0xff]
    %v5751 = vld [vmem:[#allocation2 + $0x218] sm:$0xff]
    %v5752 = vld [vmem:[#allocation2 + $0x220] sm:$0xff]
    %v5753 = vld [vmem:[#allocation2 + $0x228] sm:$0xff]
    %v5754 = vld [vmem:[#allocation2 + $0x230] sm:$0xff]
    %v5755 = vld [vmem:[#allocation2 + $0x238] sm:$0xff]
    %v5756 = vld [vmem:[#allocation2 + $0x240] sm:$0xff]
    %v5757 = vld [vmem:[#allocation2 + $0x248] sm:$0xff]
    %v5758 = vld [vmem:[#allocation2 + $0x250] sm:$0xff]
    %v5759 = vld [vmem:[#allocation2 + $0x258] sm:$0xff]
    %v5760 = vld [vmem:[#allocation2 + $0x260] sm:$0xff]
    %v5761 = vld [vmem:[#allocation2 + $0x268] sm:$0xff]
    %v5762 = vld [vmem:[#allocation2 + $0x270] sm:$0xff]
    %v5763 = vld [vmem:[#allocation2 + $0x278] sm:$0xff]
    %v5764 = vld [vmem:[#allocation2 + $0x280] sm:$0xff]
    %v5765 = vld [vmem:[#allocation2 + $0x288] sm:$0xff]
    %v5766 = vld [vmem:[#allocation2 + $0x290] sm:$0xff]
    %v5767 = vld [vmem:[#allocation2 + $0x298] sm:$0xff]
    %v5768 = vld [vmem:[#allocation2 + $0x2a0] sm:$0xff]
    %v5769 = vld [vmem:[#allocation2 + $0x2a8] sm:$0xff]
    %v5770 = vld [vmem:[#allocation2 + $0x2b0] sm:$0xff]
    %v5771 = vld [vmem:[#allocation2 + $0x2b8] sm:$0xff]
    %v5772 = vld [vmem:[#allocation2 + $0x2c0] sm:$0xff]
    %v5773 = vld [vmem:[#allocation2 + $0x2c8] sm:$0xff]
    %v5774 = vld [vmem:[#allocation2 + $0x2d0] sm:$0xff]
    %v5775 = vld [vmem:[#allocation2 + $0x2d8] sm:$0xff]
    %v5776 = vld [vmem:[#allocation2 + $0x2e0] sm:$0xff]
    %v5777 = vld [vmem:[#allocation2 + $0x2e8] sm:$0xff]
    %v5778 = vld [vmem:[#allocation2 + $0x2f0] sm:$0xff]
    %v5779 = vld [vmem:[#allocation2 + $0x2f8] sm:$0xff]
    %v5780 = vld [vmem:[#allocation2 + $0x300] sm:$0xff]
    %v5781 = vld [vmem:[#allocation2 + $0x308] sm:$0xff]
    %v5782 = vld [vmem:[#allocation2 + $0x310] sm:$0xff]
    %v5783 = vld [vmem:[#allocation2 + $0x318] sm:$0xff]
    %v5785 = vcombine.high %v5683, %v5683
    %v5787 = vunpack.c.l.s4 1983009808
    %v5788 = vunpack.c.0.s8 %v5787
    %v5789 = vlaneseq
    %v5790 = vshrl.u32 %v5789, 7
    %v5791 = vsub.s32 %v5788, %v5790
    %v5792 = vrot.slane %v5683, %v5791
    %v5794 = vunpack.c.l.s4 1983009808
    %v5795 = vunpack.c.0.s8 %v5794
    %v5796 = vlaneseq
    %v5797 = vshrl.u32 %v5796, 7
    %v5798 = vsub.s32 %v5795, %v5797
    %v5799 = vrot.slane %v5785, %v5798
    %v5800 = vcombine.high %v5792, %v5792
    %v5801 = vcombine.high %v5799, %v5799
    %v5905 = vunpack.c.l.b16 %v5684
    %v5906 = vunpack.c.h.b16 %v5684
    %v5907 = vunpack.c.l.b16 %v5685
    %v5908 = vunpack.c.h.b16 %v5685
    %v5909 = vunpack.c.l.b16 %v5686
    %v5910 = vunpack.c.h.b16 %v5686
    %v5911 = vunpack.c.l.b16 %v5687
    %v5912 = vunpack.c.h.b16 %v5687
    %v5913 = vunpack.c.l.b16 %v5688
    %v5914 = vunpack.c.h.b16 %v5688
    %v5915 = vunpack.c.l.b16 %v5689
    %v5916 = vunpack.c.h.b16 %v5689
    %v5917 = vunpack.c.l.b16 %v5690
    %v5918 = vunpack.c.h.b16 %v5690
    %v5919 = vunpack.c.l.b16 %v5691
    %v5920 = vunpack.c.h.b16 %v5691
    %v5921 = vunpack.c.l.b16 %v5692
    %v5922 = vunpack.c.h.b16 %v5692
    %v5923 = vunpack.c.l.b16 %v5693
    %v5924 = vunpack.c.h.b16 %v5693
    %v5925 = vunpack.c.l.b16 %v5694
    %v5926 = vunpack.c.h.b16 %v5694
    %v5927 = vunpack.c.l.b16 %v5695
    %v5928 = vunpack.c.h.b16 %v5695
    %v5929 = vunpack.c.l.b16 %v5696
    %v5930 = vunpack.c.h.b16 %v5696
    %v5931 = vunpack.c.l.b16 %v5697
    %v5932 = vunpack.c.h.b16 %v5697
    %v5933 = vunpack.c.l.b16 %v5698
    %v5934 = vunpack.c.h.b16 %v5698
    %v5935 = vunpack.c.l.b16 %v5699
    %v5936 = vunpack.c.h.b16 %v5699
    %v5937 = vunpack.c.l.b16 %v5700
    %v5938 = vunpack.c.h.b16 %v5700
    %v5939 = vunpack.c.l.b16 %v5701
    %v5940 = vunpack.c.h.b16 %v5701
    %v5941 = vunpack.c.l.b16 %v5702
    %v5942 = vunpack.c.h.b16 %v5702
    %v5943 = vunpack.c.l.b16 %v5703
    %v5944 = vunpack.c.h.b16 %v5703
    %v5945 = vunpack.c.l.b16 %v5704
    %v5946 = vunpack.c.h.b16 %v5704
    %v5947 = vunpack.c.l.b16 %v5705
    %v5948 = vunpack.c.h.b16 %v5705
    %v5949 = vunpack.c.l.b16 %v5706
    %v5950 = vunpack.c.h.b16 %v5706
    %v5951 = vunpack.c.l.b16 %v5707
    %v5952 = vunpack.c.h.b16 %v5707
    %v5953 = vunpack.c.l.b16 %v5708
    %v5954 = vunpack.c.h.b16 %v5708
    %v5955 = vunpack.c.l.b16 %v5709
    %v5956 = vunpack.c.h.b16 %v5709
    %v5957 = vunpack.c.l.b16 %v5710
    %v5958 = vunpack.c.h.b16 %v5710
    %v5959 = vunpack.c.l.b16 %v5711
    %v5960 = vunpack.c.h.b16 %v5711
    %v5961 = vunpack.c.l.b16 %v5712
    %v5962 = vunpack.c.h.b16 %v5712
    %v5963 = vunpack.c.l.b16 %v5713
    %v5964 = vunpack.c.h.b16 %v5713
    %v5965 = vunpack.c.l.b16 %v5714
    %v5966 = vunpack.c.h.b16 %v5714
    %v5967 = vunpack.c.l.b16 %v5715
    %v5968 = vunpack.c.h.b16 %v5715
    %v5969 = vunpack.c.l.b16 %v5716
    %v5970 = vunpack.c.h.b16 %v5716
    %v5971 = vunpack.c.l.b16 %v5717
    %v5972 = vunpack.c.h.b16 %v5717
    %v5973 = vunpack.c.l.b16 %v5718
    %v5974 = vunpack.c.h.b16 %v5718
    %v5975 = vunpack.c.l.b16 %v5719
    %v5976 = vunpack.c.h.b16 %v5719
    %v5977 = vunpack.c.l.b16 %v5720
    %v5978 = vunpack.c.h.b16 %v5720
    %v5979 = vunpack.c.l.b16 %v5721
    %v5980 = vunpack.c.h.b16 %v5721
    %v5981 = vunpack.c.l.b16 %v5722
    %v5982 = vunpack.c.h.b16 %v5722
    %v5983 = vunpack.c.l.b16 %v5723
    %v5984 = vunpack.c.h.b16 %v5723
    %v5985 = vunpack.c.l.b16 %v5724
    %v5986 = vunpack.c.h.b16 %v5724
    %v5987 = vunpack.c.l.b16 %v5725
    %v5988 = vunpack.c.h.b16 %v5725
    %v5989 = vunpack.c.l.b16 %v5726
    %v5990 = vunpack.c.h.b16 %v5726
    %v5991 = vunpack.c.l.b16 %v5727
    %v5992 = vunpack.c.h.b16 %v5727
    %v5993 = vunpack.c.l.b16 %v5728
    %v5994 = vunpack.c.h.b16 %v5728
    %v5995 = vunpack.c.l.b16 %v5729
    %v5996 = vunpack.c.h.b16 %v5729
    %v5997 = vunpack.c.l.b16 %v5730
    %v5998 = vunpack.c.h.b16 %v5730
    %v5999 = vunpack.c.l.b16 %v5731
    %v6000 = vunpack.c.h.b16 %v5731
    %v6001 = vunpack.c.l.b16 %v5732
    %v6002 = vunpack.c.h.b16 %v5732
    %v6003 = vunpack.c.l.b16 %v5733
    %v6004 = vunpack.c.h.b16 %v5733
    %v6005 = vunpack.c.l.b16 %v5734
    %v6006 = vunpack.c.h.b16 %v5734
    %v6007 = vunpack.c.l.b16 %v5735
    %v6008 = vunpack.c.h.b16 %v5735
    %v6009 = vunpack.c.l.b16 %v5736
    %v6010 = vunpack.c.h.b16 %v5736
    %v6011 = vunpack.c.l.b16 %v5737
    %v6012 = vunpack.c.h.b16 %v5737
    %v6013 = vunpack.c.l.b16 %v5738
    %v6014 = vunpack.c.h.b16 %v5738
    %v6015 = vunpack.c.l.b16 %v5739
    %v6016 = vunpack.c.h.b16 %v5739
    %v6017 = vunpack.c.l.b16 %v5740
    %v6018 = vunpack.c.h.b16 %v5740
    %v6019 = vunpack.c.l.b16 %v5741
    %v6020 = vunpack.c.h.b16 %v5741
    %v6021 = vunpack.c.l.b16 %v5742
    %v6022 = vunpack.c.h.b16 %v5742
    %v6023 = vunpack.c.l.b16 %v5743
    %v6024 = vunpack.c.h.b16 %v5743
    %v6025 = vunpack.c.l.b16 %v5744
    %v6026 = vunpack.c.h.b16 %v5744
    %v6027 = vunpack.c.l.b16 %v5745
    %v6028 = vunpack.c.h.b16 %v5745
    %v6029 = vunpack.c.l.b16 %v5746
    %v6030 = vunpack.c.h.b16 %v5746
    %v6031 = vunpack.c.l.b16 %v5747
    %v6032 = vunpack.c.h.b16 %v5747
    %v6033 = vunpack.c.l.b16 %v5748
    %v6034 = vunpack.c.h.b16 %v5748
    %v6035 = vunpack.c.l.b16 %v5749
    %v6036 = vunpack.c.h.b16 %v5749
    %v6037 = vunpack.c.l.b16 %v5750
    %v6038 = vunpack.c.h.b16 %v5750
    %v6039 = vunpack.c.l.b16 %v5751
    %v6040 = vunpack.c.h.b16 %v5751
    %v6041 = vunpack.c.l.b16 %v5752
    %v6042 = vunpack.c.h.b16 %v5752
    %v6043 = vunpack.c.l.b16 %v5753
    %v6044 = vunpack.c.h.b16 %v5753
    %v6045 = vunpack.c.l.b16 %v5754
    %v6046 = vunpack.c.h.b16 %v5754
    %v6047 = vunpack.c.l.b16 %v5755
    %v6048 = vunpack.c.h.b16 %v5755
    %v6049 = vunpack.c.l.b16 %v5756
    %v6050 = vunpack.c.h.b16 %v5756
    %v6051 = vunpack.c.l.b16 %v5757
    %v6052 = vunpack.c.h.b16 %v5757
    %v6053 = vunpack.c.l.b16 %v5758
    %v6054 = vunpack.c.h.b16 %v5758
    %v6055 = vunpack.c.l.b16 %v5759
    %v6056 = vunpack.c.h.b16 %v5759
    %v6057 = vunpack.c.l.b16 %v5760
    %v6058 = vunpack.c.h.b16 %v5760
    %v6059 = vunpack.c.l.b16 %v5761
    %v6060 = vunpack.c.h.b16 %v5761
    %v6061 = vunpack.c.l.b16 %v5762
    %v6062 = vunpack.c.h.b16 %v5762
    %v6063 = vunpack.c.l.b16 %v5763
    %v6064 = vunpack.c.h.b16 %v5763
    %v6065 = vunpack.c.l.b16 %v5764
    %v6066 = vunpack.c.h.b16 %v5764
    %v6067 = vunpack.c.l.b16 %v5765
    %v6068 = vunpack.c.h.b16 %v5765
    %v6069 = vunpack.c.l.b16 %v5766
    %v6070 = vunpack.c.h.b16 %v5766
    %v6071 = vunpack.c.l.b16 %v5767
    %v6072 = vunpack.c.h.b16 %v5767
    %v6073 = vunpack.c.l.b16 %v5768
    %v6074 = vunpack.c.h.b16 %v5768
    %v6075 = vunpack.c.l.b16 %v5769
    %v6076 = vunpack.c.h.b16 %v5769
    %v6077 = vunpack.c.l.b16 %v5770
    %v6078 = vunpack.c.h.b16 %v5770
    %v6079 = vunpack.c.l.b16 %v5771
    %v6080 = vunpack.c.h.b16 %v5771
    %v6081 = vunpack.c.l.b16 %v5772
    %v6082 = vunpack.c.h.b16 %v5772
    %v6083 = vunpack.c.l.b16 %v5773
    %v6084 = vunpack.c.h.b16 %v5773
    %v6085 = vunpack.c.l.b16 %v5774
    %v6086 = vunpack.c.h.b16 %v5774
    %v6087 = vunpack.c.l.b16 %v5775
    %v6088 = vunpack.c.h.b16 %v5775
    %v6089 = vunpack.c.l.b16 %v5776
    %v6090 = vunpack.c.h.b16 %v5776
    %v6091 = vunpack.c.l.b16 %v5777
    %v6092 = vunpack.c.h.b16 %v5777
    %v6093 = vunpack.c.l.b16 %v5778
    %v6094 = vunpack.c.h.b16 %v5778
    %v6095 = vunpack.c.l.b16 %v5779
    %v6096 = vunpack.c.h.b16 %v5779
    %v6097 = vunpack.c.l.b16 %v5780
    %v6098 = vunpack.c.h.b16 %v5780
    %v6099 = vunpack.c.l.b16 %v5781
    %v6100 = vunpack.c.h.b16 %v5781
    %v6101 = vunpack.c.l.b16 %v5782
    %v6102 = vunpack.c.h.b16 %v5782
    %v6103 = vunpack.c.l.b16 %v5783
    %v6104 = vunpack.c.h.b16 %v5783
    %v6105 = vpack.c.b16 %v5909, %v5905
    %v6106 = vpack.c.b16 %v5910, %v5906
    %v6107 = vpack.c.b16 %v5911, %v5907
    %v6108 = vpack.c.b16 %v5912, %v5908
    %v6109 = vpack.c.b16 %v5917, %v5913
    %v6110 = vpack.c.b16 %v5918, %v5914
    %v6111 = vpack.c.b16 %v5919, %v5915
    %v6112 = vpack.c.b16 %v5920, %v5916
    %v6113 = vpack.c.b16 %v5925, %v5921
    %v6114 = vpack.c.b16 %v5926, %v5922
    %v6115 = vpack.c.b16 %v5927, %v5923
    %v6116 = vpack.c.b16 %v5928, %v5924
    %v6117 = vpack.c.b16 %v5933, %v5929
    %v6118 = vpack.c.b16 %v5934, %v5930
    %v6119 = vpack.c.b16 %v5935, %v5931
    %v6120 = vpack.c.b16 %v5936, %v5932
    %v6121 = vpack.c.b16 %v5941, %v5937
    %v6122 = vpack.c.b16 %v5942, %v5938
    %v6123 = vpack.c.b16 %v5943, %v5939
    %v6124 = vpack.c.b16 %v5944, %v5940
    %v6125 = vpack.c.b16 %v5949, %v5945
    %v6126 = vpack.c.b16 %v5950, %v5946
    %v6127 = vpack.c.b16 %v5951, %v5947
    %v6128 = vpack.c.b16 %v5952, %v5948
    %v6129 = vpack.c.b16 %v5957, %v5953
    %v6130 = vpack.c.b16 %v5958, %v5954
    %v6131 = vpack.c.b16 %v5959, %v5955
    %v6132 = vpack.c.b16 %v5960, %v5956
    %v6133 = vpack.c.b16 %v5965, %v5961
    %v6134 = vpack.c.b16 %v5966, %v5962
    %v6135 = vpack.c.b16 %v5967, %v5963
    %v6136 = vpack.c.b16 %v5968, %v5964
    %v6137 = vpack.c.b16 %v5973, %v5969
    %v6138 = vpack.c.b16 %v5974, %v5970
    %v6139 = vpack.c.b16 %v5975, %v5971
    %v6140 = vpack.c.b16 %v5976, %v5972
    %v6141 = vpack.c.b16 %v5981, %v5977
    %v6142 = vpack.c.b16 %v5982, %v5978
    %v6143 = vpack.c.b16 %v5983, %v5979
    %v6144 = vpack.c.b16 %v5984, %v5980
    %v6145 = vpack.c.b16 %v5989, %v5985
    %v6146 = vpack.c.b16 %v5990, %v5986
    %v6147 = vpack.c.b16 %v5991, %v5987
    %v6148 = vpack.c.b16 %v5992, %v5988
    %v6149 = vpack.c.b16 %v5997, %v5993
    %v6150 = vpack.c.b16 %v5998, %v5994
    %v6151 = vpack.c.b16 %v5999, %v5995
    %v6152 = vpack.c.b16 %v6000, %v5996
    %v6153 = vpack.c.b16 %v6005, %v6001
    %v6154 = vpack.c.b16 %v6006, %v6002
    %v6155 = vpack.c.b16 %v6007, %v6003
    %v6156 = vpack.c.b16 %v6008, %v6004
    %v6157 = vpack.c.b16 %v6013, %v6009
    %v6158 = vpack.c.b16 %v6014, %v6010
    %v6159 = vpack.c.b16 %v6015, %v6011
    %v6160 = vpack.c.b16 %v6016, %v6012
    %v6161 = vpack.c.b16 %v6021, %v6017
    %v6162 = vpack.c.b16 %v6022, %v6018
    %v6163 = vpack.c.b16 %v6023, %v6019
    %v6164 = vpack.c.b16 %v6024, %v6020
    %v6165 = vpack.c.b16 %v6029, %v6025
    %v6166 = vpack.c.b16 %v6030, %v6026
    %v6167 = vpack.c.b16 %v6031, %v6027
    %v6168 = vpack.c.b16 %v6032, %v6028
    %v6169 = vpack.c.b16 %v6037, %v6033
    %v6170 = vpack.c.b16 %v6038, %v6034
    %v6171 = vpack.c.b16 %v6039, %v6035
    %v6172 = vpack.c.b16 %v6040, %v6036
    %v6173 = vpack.c.b16 %v6045, %v6041
    %v6174 = vpack.c.b16 %v6046, %v6042
    %v6175 = vpack.c.b16 %v6047, %v6043
    %v6176 = vpack.c.b16 %v6048, %v6044
    %v6177 = vpack.c.b16 %v6053, %v6049
    %v6178 = vpack.c.b16 %v6054, %v6050
    %v6179 = vpack.c.b16 %v6055, %v6051
    %v6180 = vpack.c.b16 %v6056, %v6052
    %v6181 = vpack.c.b16 %v6061, %v6057
    %v6182 = vpack.c.b16 %v6062, %v6058
    %v6183 = vpack.c.b16 %v6063, %v6059
    %v6184 = vpack.c.b16 %v6064, %v6060
    %v6185 = vpack.c.b16 %v6069, %v6065
    %v6186 = vpack.c.b16 %v6070, %v6066
    %v6187 = vpack.c.b16 %v6071, %v6067
    %v6188 = vpack.c.b16 %v6072, %v6068
    %v6189 = vpack.c.b16 %v6077, %v6073
    %v6190 = vpack.c.b16 %v6078, %v6074
    %v6191 = vpack.c.b16 %v6079, %v6075
    %v6192 = vpack.c.b16 %v6080, %v6076
    %v6193 = vpack.c.b16 %v6085, %v6081
    %v6194 = vpack.c.b16 %v6086, %v6082
    %v6195 = vpack.c.b16 %v6087, %v6083
    %v6196 = vpack.c.b16 %v6088, %v6084
    %v6197 = vpack.c.b16 %v6093, %v6089
    %v6198 = vpack.c.b16 %v6094, %v6090
    %v6199 = vpack.c.b16 %v6095, %v6091
    %v6200 = vpack.c.b16 %v6096, %v6092
    %v6201 = vpack.c.b16 %v6101, %v6097
    %v6202 = vpack.c.b16 %v6102, %v6098
    %v6203 = vpack.c.b16 %v6103, %v6099
    %v6204 = vpack.c.b16 %v6104, %v6100
    %vm6305 = vcmask 130048
    %v6307 = vsel %vm6305, %v5801, 0
    %6309 = vmatprep.subr.bf16.mxu0 %v6134
    %6310 = vmatpush1.bf16.msra.mxu0 %v6133
    %6311 = vmatprep.subr.bf16.mxu0 %v6130
    %6312 = vmatpush1.bf16.msra.mxu0 %v6129
    %6313 = vmatprep.subr.bf16.mxu0 %v6126
    %6314 = vmatpush1.bf16.msra.mxu0 %v6125
    %6315 = vmatprep.subr.bf16.mxu0 %v6122
    %6316 = vmatpush1.bf16.msra.mxu0 %v6121
    %6317 = vmatprep.subr.bf16.mxu0 %v6118
    %6318 = vmatpush1.bf16.msra.mxu0 %v6117
    %6319 = vmatprep.subr.bf16.mxu0 %v6114
    %6320 = vmatpush1.bf16.msra.mxu0 %v6113
    %6321 = vmatprep.subr.bf16.mxu0 %v6110
    %6322 = vmatpush1.bf16.msra.mxu0 %v6109
    %6323 = vmatprep.subr.bf16.mxu0 %v6106
    %6324 = vmatpush1.bf16.msra.mxu0 %v6105
    %6325 = vmatprep.subr.bf16.mxu0 %v6166
    %6326 = vmatpush2.bf16.msra.mxu0 %v6165
    %6327 = vmatprep.subr.bf16.mxu0 %v6162
    %6328 = vmatpush2.bf16.msra.mxu0 %v6161
    %6329 = vmatprep.subr.bf16.mxu0 %v6158
    %6330 = vmatpush2.bf16.msra.mxu0 %v6157
    %6331 = vmatprep.subr.bf16.mxu0 %v6154
    %6332 = vmatpush2.bf16.msra.mxu0 %v6153
    %6333 = vmatprep.subr.bf16.mxu0 %v6150
    %6334 = vmatpush2.bf16.msra.mxu0 %v6149
    %6335 = vmatprep.subr.bf16.mxu0 %v6146
    %6336 = vmatpush2.bf16.msra.mxu0 %v6145
    %6337 = vmatprep.subr.bf16.mxu0 %v6142
    %6338 = vmatpush2.bf16.msra.mxu0 %v6141
    %6339 = vmatprep.subr.bf16.mxu0 %v6138
    %6340 = vmatpush2.bf16.msra.mxu0 %v6137
    %6341 = vmatprep.mubr.bf16.mxu0 %v5800
    %6342 = vmatmul.mubr.bf16.gmra.mxu0 %v5792
    %v6343 = vpop.f32.mrf.mxu0
    %v6344 = vadd.f32 0.0, %v6343
    %v6345 = vpop.f32.mrf.mxu0
    %v6346 = vadd.f32 0.0, %v6345
    %v6347 = vpop.f32.mrf.mxu0
    %v6348 = vpop.f32.mrf.mxu0
    %6349 = vdwg.mxu0
    %6350 = vmatprep.subr.bf16.mxu0 %v6198
    %6351 = vmatpush1.bf16.msra.mxu0 %v6197
    %6352 = vmatprep.subr.bf16.mxu0 %v6194
    %6353 = vmatpush1.bf16.msra.mxu0 %v6193
    %6354 = vmatprep.subr.bf16.mxu0 %v6190
    %6355 = vmatpush1.bf16.msra.mxu0 %v6189
    %6356 = vmatprep.subr.bf16.mxu0 %v6186
    %6357 = vmatpush1.bf16.msra.mxu0 %v6185
    %6358 = vmatprep.subr.bf16.mxu0 %v6182
    %6359 = vmatpush1.bf16.msra.mxu0 %v6181
    %6360 = vmatprep.subr.bf16.mxu0 %v6178
    %6361 = vmatpush1.bf16.msra.mxu0 %v6177
    %6362 = vmatprep.subr.bf16.mxu0 %v6174
    %6363 = vmatpush1.bf16.msra.mxu0 %v6173
    %6364 = vmatprep.subr.bf16.mxu0 %v6170
    %6365 = vmatpush1.bf16.msra.mxu0 %v6169
    %6366 = vmatprep.subr.bf16.mxu0 0
    %6367 = vmatpush2.bf16.msra.mxu0 0
    %6368 = vmatprep.subr.bf16.mxu0 0
    %6369 = vmatpush2.bf16.msra.mxu0 0
    %6370 = vmatprep.subr.bf16.mxu0 0
    %6371 = vmatpush2.bf16.msra.mxu0 0
    %6372 = vmatprep.subr.bf16.mxu0 0
    %6373 = vmatpush2.bf16.msra.mxu0 0
    %6374 = vmatprep.subr.bf16.mxu0 0
    %6375 = vmatpush2.bf16.msra.mxu0 0
    %6376 = vmatprep.subr.bf16.mxu0 0
    %6377 = vmatpush2.bf16.msra.mxu0 0
    %6378 = vmatprep.subr.bf16.mxu0 0
    %6379 = vmatpush2.bf16.msra.mxu0 0
    %6380 = vmatprep.subr.bf16.mxu0 %v6202
    %6381 = vmatpush2.bf16.msra.mxu0 %v6201
    %6382 = vmatprep.mubr.bf16.mxu0 %v6307
    %6383 = vmatmul.mubr.bf16.gmra.mxu0 %v5799
    %v6384 = vpop.f32.mrf.mxu0
    %v6385 = vadd.f32 %v6344, %v6384
    %v6386 = vpop.f32.mrf.mxu0
    %v6387 = vadd.f32 %v6346, %v6386
    %v6388 = vpop.f32.mrf.mxu0
    %v6389 = vpop.f32.mrf.mxu0
    %6390 = vdwg.mxu0
    %6391 = vmatprep.subr.bf16.mxu0 %v6136
    %6392 = vmatpush1.bf16.msra.mxu0 %v6135
    %6393 = vmatprep.subr.bf16.mxu0 %v6132
    %6394 = vmatpush1.bf16.msra.mxu0 %v6131
    %6395 = vmatprep.subr.bf16.mxu0 %v6128
    %6396 = vmatpush1.bf16.msra.mxu0 %v6127
    %6397 = vmatprep.subr.bf16.mxu0 %v6124
    %6398 = vmatpush1.bf16.msra.mxu0 %v6123
    %6399 = vmatprep.subr.bf16.mxu0 %v6120
    %6400 = vmatpush1.bf16.msra.mxu0 %v6119
    %6401 = vmatprep.subr.bf16.mxu0 %v6116
    %6402 = vmatpush1.bf16.msra.mxu0 %v6115
    %6403 = vmatprep.subr.bf16.mxu0 %v6112
    %6404 = vmatpush1.bf16.msra.mxu0 %v6111
    %6405 = vmatprep.subr.bf16.mxu0 %v6108
    %6406 = vmatpush1.bf16.msra.mxu0 %v6107
    %6407 = vmatprep.subr.bf16.mxu0 %v6168
    %6408 = vmatpush2.bf16.msra.mxu0 %v6167
    %6409 = vmatprep.subr.bf16.mxu0 %v6164
    %6410 = vmatpush2.bf16.msra.mxu0 %v6163
    %6411 = vmatprep.subr.bf16.mxu0 %v6160
    %6412 = vmatpush2.bf16.msra.mxu0 %v6159
    %6413 = vmatprep.subr.bf16.mxu0 %v6156
    %6414 = vmatpush2.bf16.msra.mxu0 %v6155
    %6415 = vmatprep.subr.bf16.mxu0 %v6152
    %6416 = vmatpush2.bf16.msra.mxu0 %v6151
    %6417 = vmatprep.subr.bf16.mxu0 %v6148
    %6418 = vmatpush2.bf16.msra.mxu0 %v6147
    %6419 = vmatprep.subr.bf16.mxu0 %v6144
    %6420 = vmatpush2.bf16.msra.mxu0 %v6143
    %6421 = vmatprep.subr.bf16.mxu0 %v6140
    %6422 = vmatpush2.bf16.msra.mxu0 %v6139
    %6423 = vmatprep.mubr.bf16.mxu0 %v5800
    %6424 = vmatmul.mubr.bf16.gmra.mxu0 %v5792
    %v6425 = vpop.f32.mrf.mxu0
    %v6426 = vadd.f32 0.0, %v6425
    %v6427 = vpop.f32.mrf.mxu0
    %v6428 = vadd.f32 0.0, %v6427
    %v6429 = vpop.f32.mrf.mxu0
    %v6430 = vpop.f32.mrf.mxu0
    %6431 = vdwg.mxu0
    %6432 = vmatprep.subr.bf16.mxu0 %v6200
    %6433 = vmatpush1.bf16.msra.mxu0 %v6199
    %6434 = vmatprep.subr.bf16.mxu0 %v6196
    %6435 = vmatpush1.bf16.msra.mxu0 %v6195
    %6436 = vmatprep.subr.bf16.mxu0 %v6192
    %6437 = vmatpush1.bf16.msra.mxu0 %v6191
    %6438 = vmatprep.subr.bf16.mxu0 %v6188
    %6439 = vmatpush1.bf16.msra.mxu0 %v6187
    %6440 = vmatprep.subr.bf16.mxu0 %v6184
    %6441 = vmatpush1.bf16.msra.mxu0 %v6183
    %6442 = vmatprep.subr.bf16.mxu0 %v6180
    %6443 = vmatpush1.bf16.msra.mxu0 %v6179
    %6444 = vmatprep.subr.bf16.mxu0 %v6176
    %6445 = vmatpush1.bf16.msra.mxu0 %v6175
    %6446 = vmatprep.subr.bf16.mxu0 %v6172
    %6447 = vmatpush1.bf16.msra.mxu0 %v6171
    %6448 = vmatprep.subr.bf16.mxu0 0
    %6449 = vmatpush2.bf16.msra.mxu0 0
    %6450 = vmatprep.subr.bf16.mxu0 0
    %6451 = vmatpush2.bf16.msra.mxu0 0
    %6452 = vmatprep.subr.bf16.mxu0 0
    %6453 = vmatpush2.bf16.msra.mxu0 0
    %6454 = vmatprep.subr.bf16.mxu0 0
    %6455 = vmatpush2.bf16.msra.mxu0 0
    %6456 = vmatprep.subr.bf16.mxu0 0
    %6457 = vmatpush2.bf16.msra.mxu0 0
    %6458 = vmatprep.subr.bf16.mxu0 0
    %6459 = vmatpush2.bf16.msra.mxu0 0
    %6460 = vmatprep.subr.bf16.mxu0 0
    %6461 = vmatpush2.bf16.msra.mxu0 0
    %6462 = vmatprep.subr.bf16.mxu0 %v6204
    %6463 = vmatpush2.bf16.msra.mxu0 %v6203
    %6464 = vmatprep.mubr.bf16.mxu0 %v6307
    %6465 = vmatmul.mubr.bf16.gmra.mxu0 %v5799
    %v6466 = vpop.f32.mrf.mxu0
    %v6467 = vadd.f32 %v6426, %v6466
    %v6468 = vpop.f32.mrf.mxu0
    %v6469 = vadd.f32 %v6428, %v6468
    %v6470 = vpop.f32.mrf.mxu0
    %v6471 = vpop.f32.mrf.mxu0
    %6472 = vdwg.mxu0
    %v6473 = vsel %vm1781, %v6385, 0.0
    %v6474 = vsel %vm1781, %v6387, 0.0
    %v6475 = vadd.f32 %v6473, %v6474
    %v6476 = vsel %vm1781, %v6467, 0.0
    %v6477 = vadd.f32 %v6475, %v6476
    %v6478 = vsel %vm1781, %v6469, 0.0
    %v6479 = vadd.f32 %v6477, %v6478
    %6480 = vadd.xlane.f32.xlu0 %v6479
    %v6481 = vpop.xlane.xlu0 %6480
    %v6482 = vmul.f32 %v6481, %v1888
    %v6483 = vsub.f32 %v6385, %v6482
    %v6484 = vsub.f32 %v6387, %v6482
    %v6485 = vsub.f32 %v6467, %v6482
    %v6486 = vsub.f32 %v6469, %v6482
    %v6487 = vmul.f32 %v6483, %v6483
    %v6488 = vmul.f32 %v6484, %v6484
    %v6489 = vmul.f32 %v6485, %v6485
    %v6490 = vmul.f32 %v6486, %v6486
    %v6491 = vsel %vm1781, %v6487, 0.0
    %v6492 = vsel %vm1781, %v6488, 0.0
    %v6493 = vadd.f32 %v6491, %v6492
    %v6494 = vsel %vm1781, %v6489, 0.0
    %v6495 = vadd.f32 %v6493, %v6494
    %v6496 = vsel %vm1781, %v6490, 0.0
    %v6497 = vadd.f32 %v6495, %v6496
    %6498 = vadd.xlane.f32.xlu0 %v6497
    %v6499 = vpop.xlane.xlu0 %6498
    %v6500 = vmul.f32 %v6499, %v1888
    %v6501 = vld [vmem:[%s5 + $0x28] sm:$0xf]
    %v6502 = vld [vmem:[%s5 + $0x2c] sm:$0xf]
    %v6503 = vadd.f32 %v6500, 1e-05
    %v6504 = vrsqrt.pop %v6503
    %v6505 = vmul.f32 %v6504, %v6501
    %v6506 = vmul.f32 %v6482, %v6505
    %v6507 = vsub.f32 %v6502, %v6506
    %6509 = vset.pattern.permute.xlu0 0
    %6510 = vperm.xlu0 %6509, %v6505
    %v6511 = vpop.permute.xlu0 %6510
    %v6513 = vmul.f32 %v6385, %v6511
    %v6514 = vmul.f32 %v6387, %v6511
    %v6515 = vmul.f32 %v6467, %v6511
    %v6516 = vmul.f32 %v6469, %v6511
    %6518 = vset.pattern.permute.xlu0 0
    %6519 = vperm.xlu0 %6518, %v6507
    %v6520 = vpop.permute.xlu0 %6519
    %v6522 = vadd.f32 %v6513, %v6520
    %v6523 = vadd.f32 %v6514, %v6520
    %v6524 = vadd.f32 %v6515, %v6520
    %v6525 = vadd.f32 %v6516, %v6520
    %v6526 = vmax.f32 %v6522, 0.0
    %v6527 = vmax.f32 %v6523, 0.0
    %v6528 = vmax.f32 %v6524, 0.0
    %v6529 = vmax.f32 %v6525, 0.0
    %s6530 = sld [smem:[#allocation3]]
    %v6531 = vsub.f32 %v6526, %v1933
    %v6532 = vsub.f32 %v6527, %v1934
    %v6533 = vsub.f32 %v6528, %v1935
    %v6534 = vsub.f32 %v6529, %v1936
    %v6535 = vstv %s6530
    %v6536 = vmul.f32 %v6535, %v6531
    %v6537 = vmul.f32 %v6535, %v6532
    %v6538 = vmul.f32 %v6535, %v6533
    %v6539 = vmul.f32 %v6535, %v6534
    %v6540 = vadd.f32 %v1933, %v6536
    %v6541 = vadd.f32 %v1934, %v6537
    %v6542 = vadd.f32 %v1935, %v6538
    %v6543 = vadd.f32 %v1936, %v6539
    %6544 = vrot.lane.b32.xlu0 %v6540, 34
    %v6545 = vpop.permute.xlu0 %6544
    %6546 = vrot.lane.b32.xlu0 %v6541, 34
    %v6547 = vpop.permute.xlu0 %6546
    %6548 = vrot.lane.b32.xlu0 %v6542, 34
    %v6549 = vpop.permute.xlu0 %6548
    %6550 = vrot.lane.b32.xlu0 %v6543, 34
    %v6551 = vpop.permute.xlu0 %6550
    %v6552 = vsel %vm75, %v6549, %v6551
    %v6553 = vsel %vm75, %v6547, %v6549
    %v6554 = vsel %vm75, %v6545, %v6547
    %v6555 = vsel %vm75, %v6551, %v6545
    %v6556 = vld [vmem:[%s6] ss:$8 sm:$0xf]
    %v6558 = vlaneseq
    %v6559 = vshrl.u32 %v6558, 7
    %v6560 = vsub.s32 0, %v6559
    %v6561 = vrot.slane %v6556, %v6560
    %v6562 = vlaneseq
    %v6563 = vshrl.u32 %v6562, 7
    %v6564 = vsub.s32 1, %v6563
    %v6565 = vrot.slane %v6556, %v6564
    %v6566 = vlaneseq
    %v6567 = vshrl.u32 %v6566, 7
    %v6568 = vsub.s32 2, %v6567
    %v6569 = vrot.slane %v6556, %v6568
    %v6570 = vlaneseq
    %v6571 = vshrl.u32 %v6570, 7
    %v6572 = vsub.s32 3, %v6571
    %v6573 = vrot.slane %v6556, %v6572
    %v6578 = vmul.f32 %v6555, %v6561
    %v6579 = vmul.f32 %v6554, %v6565
    %v6580 = vmul.f32 %v6553, %v6569
    %v6581 = vmul.f32 %v6552, %v6573
    %v6582 = vpack.c.bf16 %v6578, %v6578
    %v6583 = vpack.c.bf16 %v6579, %v6579
    %v6584 = vpack.c.bf16 %v6580, %v6580
    %v6585 = vpack.c.bf16 %v6581, %v6581
    %v6590 = vunpack.c.l.b16 %v6582
    %v6591 = vunpack.c.l.b16 %v6583
    %v6592 = vunpack.c.l.b16 %v6584
    %v6593 = vunpack.c.l.b16 %v6585
    %v6594 = vpack.c.b16 %v6591, %v6590
    %v6595 = vpack.c.b16 %v6593, %v6592
    %6598 = vst [vmem:[#allocation2] sm:$0x33] %v6594
    %6599 = vst [vmem:[#allocation2 + $0x8] sm:$0x33] %v6595
    %6600 = vrot.lane.b32.xlu0 %v6540, 33
    %v6601 = vpop.permute.xlu0 %6600
    %6602 = vrot.lane.b32.xlu0 %v6541, 33
    %v6603 = vpop.permute.xlu0 %6602
    %6604 = vrot.lane.b32.xlu0 %v6542, 33
    %v6605 = vpop.permute.xlu0 %6604
    %6606 = vrot.lane.b32.xlu0 %v6543, 33
    %v6607 = vpop.permute.xlu0 %6606
    %v6608 = vsel %vm143, %v6605, %v6607
    %v6609 = vsel %vm143, %v6603, %v6605
    %v6610 = vsel %vm143, %v6601, %v6603
    %v6611 = vsel %vm143, %v6607, %v6601
    %v6612 = vld [vmem:[%s148] ss:$8 sm:$0xf]
    %v6614 = vlaneseq
    %v6615 = vshrl.u32 %v6614, 7
    %v6616 = vsub.s32 0, %v6615
    %v6617 = vrot.slane %v6612, %v6616
    %v6618 = vlaneseq
    %v6619 = vshrl.u32 %v6618, 7
    %v6620 = vsub.s32 1, %v6619
    %v6621 = vrot.slane %v6612, %v6620
    %v6622 = vlaneseq
    %v6623 = vshrl.u32 %v6622, 7
    %v6624 = vsub.s32 2, %v6623
    %v6625 = vrot.slane %v6612, %v6624
    %v6626 = vlaneseq
    %v6627 = vshrl.u32 %v6626, 7
    %v6628 = vsub.s32 3, %v6627
    %v6629 = vrot.slane %v6612, %v6628
    %v6634 = vmul.f32 %v6611, %v6617
    %v6635 = vmul.f32 %v6610, %v6621
    %v6636 = vmul.f32 %v6609, %v6625
    %v6637 = vmul.f32 %v6608, %v6629
    %v6638 = vpack.c.bf16 %v6634, %v6634
    %v6639 = vpack.c.bf16 %v6635, %v6635
    %v6640 = vpack.c.bf16 %v6636, %v6636
    %v6641 = vpack.c.bf16 %v6637, %v6637
    %v6646 = vunpack.c.l.b16 %v6638
    %v6647 = vunpack.c.l.b16 %v6639
    %v6648 = vunpack.c.l.b16 %v6640
    %v6649 = vunpack.c.l.b16 %v6641
    %v6650 = vpack.c.b16 %v6647, %v6646
    %v6651 = vpack.c.b16 %v6649, %v6648
    %v6652 = vrot.slane %v6650, 6
    %v6653 = vrot.slane %v6651, 6
    %6656 = vst [vmem:[#allocation2] sm:$0xcc] %v6652
    %6657 = vst [vmem:[#allocation2 + $0x8] sm:$0xcc] %v6653
    %6658 = vrot.lane.b32.xlu0 %v6540, 32
    %v6659 = vpop.permute.xlu0 %6658
    %6660 = vrot.lane.b32.xlu0 %v6541, 32
    %v6661 = vpop.permute.xlu0 %6660
    %6662 = vrot.lane.b32.xlu0 %v6542, 32
    %v6663 = vpop.permute.xlu0 %6662
    %6664 = vrot.lane.b32.xlu0 %v6543, 32
    %v6665 = vpop.permute.xlu0 %6664
    %v6666 = vsel %vm216, %v6663, %v6665
    %v6667 = vsel %vm216, %v6661, %v6663
    %v6668 = vsel %vm216, %v6659, %v6661
    %v6669 = vsel %vm216, %v6665, %v6659
    %v6670 = vld [vmem:[%s221] ss:$8 sm:$0xf]
    %v6672 = vlaneseq
    %v6673 = vshrl.u32 %v6672, 7
    %v6674 = vsub.s32 0, %v6673
    %v6675 = vrot.slane %v6670, %v6674
    %v6676 = vlaneseq
    %v6677 = vshrl.u32 %v6676, 7
    %v6678 = vsub.s32 1, %v6677
    %v6679 = vrot.slane %v6670, %v6678
    %v6680 = vlaneseq
    %v6681 = vshrl.u32 %v6680, 7
    %v6682 = vsub.s32 2, %v6681
    %v6683 = vrot.slane %v6670, %v6682
    %v6684 = vlaneseq
    %v6685 = vshrl.u32 %v6684, 7
    %v6686 = vsub.s32 3, %v6685
    %v6687 = vrot.slane %v6670, %v6686
    %v6692 = vmul.f32 %v6669, %v6675
    %v6693 = vmul.f32 %v6668, %v6679
    %v6694 = vmul.f32 %v6667, %v6683
    %v6695 = vmul.f32 %v6666, %v6687
    %v6696 = vpack.c.bf16 %v6692, %v6692
    %v6697 = vpack.c.bf16 %v6693, %v6693
    %v6698 = vpack.c.bf16 %v6694, %v6694
    %v6699 = vpack.c.bf16 %v6695, %v6695
    %v6704 = vunpack.c.l.b16 %v6696
    %v6705 = vunpack.c.l.b16 %v6697
    %v6706 = vunpack.c.l.b16 %v6698
    %v6707 = vunpack.c.l.b16 %v6699
    %v6708 = vpack.c.b16 %v6705, %v6704
    %v6709 = vpack.c.b16 %v6707, %v6706
    %6712 = vst [vmem:[#allocation2 + $0x10] sm:$0x33] %v6708
    %6713 = vst [vmem:[#allocation2 + $0x18] sm:$0x33] %v6709
    %6714 = vrot.lane.b32.xlu0 %v6540, 31
    %v6715 = vpop.permute.xlu0 %6714
    %6716 = vrot.lane.b32.xlu0 %v6541, 31
    %v6717 = vpop.permute.xlu0 %6716
    %6718 = vrot.lane.b32.xlu0 %v6542, 31
    %v6719 = vpop.permute.xlu0 %6718
    %6720 = vrot.lane.b32.xlu0 %v6543, 31
    %v6721 = vpop.permute.xlu0 %6720
    %v6722 = vsel %vm287, %v6719, %v6721
    %v6723 = vsel %vm287, %v6717, %v6719
    %v6724 = vsel %vm287, %v6715, %v6717
    %v6725 = vsel %vm287, %v6721, %v6715
    %v6726 = vld [vmem:[%s292] ss:$8 sm:$0xf]
    %v6728 = vlaneseq
    %v6729 = vshrl.u32 %v6728, 7
    %v6730 = vsub.s32 0, %v6729
    %v6731 = vrot.slane %v6726, %v6730
    %v6732 = vlaneseq
    %v6733 = vshrl.u32 %v6732, 7
    %v6734 = vsub.s32 1, %v6733
    %v6735 = vrot.slane %v6726, %v6734
    %v6736 = vlaneseq
    %v6737 = vshrl.u32 %v6736, 7
    %v6738 = vsub.s32 2, %v6737
    %v6739 = vrot.slane %v6726, %v6738
    %v6740 = vlaneseq
    %v6741 = vshrl.u32 %v6740, 7
    %v6742 = vsub.s32 3, %v6741
    %v6743 = vrot.slane %v6726, %v6742
    %v6748 = vmul.f32 %v6725, %v6731
    %v6749 = vmul.f32 %v6724, %v6735
    %v6750 = vmul.f32 %v6723, %v6739
    %v6751 = vmul.f32 %v6722, %v6743
    %v6752 = vpack.c.bf16 %v6748, %v6748
    %v6753 = vpack.c.bf16 %v6749, %v6749
    %v6754 = vpack.c.bf16 %v6750, %v6750
    %v6755 = vpack.c.bf16 %v6751, %v6751
    %v6760 = vunpack.c.l.b16 %v6752
    %v6761 = vunpack.c.l.b16 %v6753
    %v6762 = vunpack.c.l.b16 %v6754
    %v6763 = vunpack.c.l.b16 %v6755
    %v6764 = vpack.c.b16 %v6761, %v6760
    %v6765 = vpack.c.b16 %v6763, %v6762
    %v6766 = vrot.slane %v6764, 6
    %v6767 = vrot.slane %v6765, 6
    %6770 = vst [vmem:[#allocation2 + $0x10] sm:$0xcc] %v6766
    %6771 = vst [vmem:[#allocation2 + $0x18] sm:$0xcc] %v6767
    %6772 = vrot.lane.b32.xlu0 %v6540, 30
    %v6773 = vpop.permute.xlu0 %6772
    %6774 = vrot.lane.b32.xlu0 %v6541, 30
    %v6775 = vpop.permute.xlu0 %6774
    %6776 = vrot.lane.b32.xlu0 %v6542, 30
    %v6777 = vpop.permute.xlu0 %6776
    %6778 = vrot.lane.b32.xlu0 %v6543, 30
    %v6779 = vpop.permute.xlu0 %6778
    %v6780 = vsel %vm362, %v6777, %v6779
    %v6781 = vsel %vm362, %v6775, %v6777
    %v6782 = vsel %vm362, %v6773, %v6775
    %v6783 = vsel %vm362, %v6779, %v6773
    %v6784 = vld [vmem:[%s367] ss:$8 sm:$0xf]
    %v6786 = vlaneseq
    %v6787 = vshrl.u32 %v6786, 7
    %v6788 = vsub.s32 0, %v6787
    %v6789 = vrot.slane %v6784, %v6788
    %v6790 = vlaneseq
    %v6791 = vshrl.u32 %v6790, 7
    %v6792 = vsub.s32 1, %v6791
    %v6793 = vrot.slane %v6784, %v6792
    %v6794 = vlaneseq
    %v6795 = vshrl.u32 %v6794, 7
    %v6796 = vsub.s32 2, %v6795
    %v6797 = vrot.slane %v6784, %v6796
    %v6798 = vlaneseq
    %v6799 = vshrl.u32 %v6798, 7
    %v6800 = vsub.s32 3, %v6799
    %v6801 = vrot.slane %v6784, %v6800
    %v6806 = vmul.f32 %v6783, %v6789
    %v6807 = vmul.f32 %v6782, %v6793
    %v6808 = vmul.f32 %v6781, %v6797
    %v6809 = vmul.f32 %v6780, %v6801
    %v6810 = vpack.c.bf16 %v6806, %v6806
    %v6811 = vpack.c.bf16 %v6807, %v6807
    %v6812 = vpack.c.bf16 %v6808, %v6808
    %v6813 = vpack.c.bf16 %v6809, %v6809
    %v6818 = vunpack.c.l.b16 %v6810
    %v6819 = vunpack.c.l.b16 %v6811
    %v6820 = vunpack.c.l.b16 %v6812
    %v6821 = vunpack.c.l.b16 %v6813
    %v6822 = vpack.c.b16 %v6819, %v6818
    %v6823 = vpack.c.b16 %v6821, %v6820
    %6826 = vst [vmem:[#allocation2 + $0x20] sm:$0x33] %v6822
    %6827 = vst [vmem:[#allocation2 + $0x28] sm:$0x33] %v6823
    %6828 = vrot.lane.b32.xlu0 %v6540, 18
    %v6829 = vpop.permute.xlu0 %6828
    %6830 = vrot.lane.b32.xlu0 %v6541, 18
    %v6831 = vpop.permute.xlu0 %6830
    %6832 = vrot.lane.b32.xlu0 %v6542, 18
    %v6833 = vpop.permute.xlu0 %6832
    %6834 = vrot.lane.b32.xlu0 %v6543, 18
    %v6835 = vpop.permute.xlu0 %6834
    %v6836 = vsel %vm433, %v6833, %v6835
    %v6837 = vsel %vm433, %v6831, %v6833
    %v6838 = vsel %vm433, %v6829, %v6831
    %v6839 = vsel %vm433, %v6835, %v6829
    %v6840 = vld [vmem:[%s438] ss:$8 sm:$0xf]
    %v6842 = vlaneseq
    %v6843 = vshrl.u32 %v6842, 7
    %v6844 = vsub.s32 0, %v6843
    %v6845 = vrot.slane %v6840, %v6844
    %v6846 = vlaneseq
    %v6847 = vshrl.u32 %v6846, 7
    %v6848 = vsub.s32 1, %v6847
    %v6849 = vrot.slane %v6840, %v6848
    %v6850 = vlaneseq
    %v6851 = vshrl.u32 %v6850, 7
    %v6852 = vsub.s32 2, %v6851
    %v6853 = vrot.slane %v6840, %v6852
    %v6854 = vlaneseq
    %v6855 = vshrl.u32 %v6854, 7
    %v6856 = vsub.s32 3, %v6855
    %v6857 = vrot.slane %v6840, %v6856
    %v6862 = vmul.f32 %v6839, %v6845
    %v6863 = vmul.f32 %v6838, %v6849
    %v6864 = vmul.f32 %v6837, %v6853
    %v6865 = vmul.f32 %v6836, %v6857
    %v6866 = vpack.c.bf16 %v6862, %v6862
    %v6867 = vpack.c.bf16 %v6863, %v6863
    %v6868 = vpack.c.bf16 %v6864, %v6864
    %v6869 = vpack.c.bf16 %v6865, %v6865
    %v6874 = vunpack.c.l.b16 %v6866
    %v6875 = vunpack.c.l.b16 %v6867
    %v6876 = vunpack.c.l.b16 %v6868
    %v6877 = vunpack.c.l.b16 %v6869
    %v6878 = vpack.c.b16 %v6875, %v6874
    %v6879 = vpack.c.b16 %v6877, %v6876
    %v6880 = vrot.slane %v6878, 6
    %v6881 = vrot.slane %v6879, 6
    %6884 = vst [vmem:[#allocation2 + $0x20] sm:$0xcc] %v6880
    %6885 = vst [vmem:[#allocation2 + $0x28] sm:$0xcc] %v6881
    %6886 = vrot.lane.b32.xlu0 %v6540, 17
    %v6887 = vpop.permute.xlu0 %6886
    %6888 = vrot.lane.b32.xlu0 %v6541, 17
    %v6889 = vpop.permute.xlu0 %6888
    %6890 = vrot.lane.b32.xlu0 %v6542, 17
    %v6891 = vpop.permute.xlu0 %6890
    %6892 = vrot.lane.b32.xlu0 %v6543, 17
    %v6893 = vpop.permute.xlu0 %6892
    %v6894 = vsel %vm508, %v6891, %v6893
    %v6895 = vsel %vm508, %v6889, %v6891
    %v6896 = vsel %vm508, %v6887, %v6889
    %v6897 = vsel %vm508, %v6893, %v6887
    %v6898 = vld [vmem:[%s513] ss:$8 sm:$0xf]
    %v6900 = vlaneseq
    %v6901 = vshrl.u32 %v6900, 7
    %v6902 = vsub.s32 0, %v6901
    %v6903 = vrot.slane %v6898, %v6902
    %v6904 = vlaneseq
    %v6905 = vshrl.u32 %v6904, 7
    %v6906 = vsub.s32 1, %v6905
    %v6907 = vrot.slane %v6898, %v6906
    %v6908 = vlaneseq
    %v6909 = vshrl.u32 %v6908, 7
    %v6910 = vsub.s32 2, %v6909
    %v6911 = vrot.slane %v6898, %v6910
    %v6912 = vlaneseq
    %v6913 = vshrl.u32 %v6912, 7
    %v6914 = vsub.s32 3, %v6913
    %v6915 = vrot.slane %v6898, %v6914
    %v6920 = vmul.f32 %v6897, %v6903
    %v6921 = vmul.f32 %v6896, %v6907
    %v6922 = vmul.f32 %v6895, %v6911
    %v6923 = vmul.f32 %v6894, %v6915
    %v6924 = vpack.c.bf16 %v6920, %v6920
    %v6925 = vpack.c.bf16 %v6921, %v6921
    %v6926 = vpack.c.bf16 %v6922, %v6922
    %v6927 = vpack.c.bf16 %v6923, %v6923
    %v6932 = vunpack.c.l.b16 %v6924
    %v6933 = vunpack.c.l.b16 %v6925
    %v6934 = vunpack.c.l.b16 %v6926
    %v6935 = vunpack.c.l.b16 %v6927
    %v6936 = vpack.c.b16 %v6933, %v6932
    %v6937 = vpack.c.b16 %v6935, %v6934
    %6940 = vst [vmem:[#allocation2 + $0x30] sm:$0x33] %v6936
    %6941 = vst [vmem:[#allocation2 + $0x38] sm:$0x33] %v6937
    %6942 = vrot.lane.b32.xlu0 %v6540, 16
    %v6943 = vpop.permute.xlu0 %6942
    %6944 = vrot.lane.b32.xlu0 %v6541, 16
    %v6945 = vpop.permute.xlu0 %6944
    %6946 = vrot.lane.b32.xlu0 %v6542, 16
    %v6947 = vpop.permute.xlu0 %6946
    %6948 = vrot.lane.b32.xlu0 %v6543, 16
    %v6949 = vpop.permute.xlu0 %6948
    %v6950 = vsel %vm579, %v6947, %v6949
    %v6951 = vsel %vm579, %v6945, %v6947
    %v6952 = vsel %vm579, %v6943, %v6945
    %v6953 = vsel %vm579, %v6949, %v6943
    %v6954 = vld [vmem:[%s584] ss:$8 sm:$0xf]
    %v6956 = vlaneseq
    %v6957 = vshrl.u32 %v6956, 7
    %v6958 = vsub.s32 0, %v6957
    %v6959 = vrot.slane %v6954, %v6958
    %v6960 = vlaneseq
    %v6961 = vshrl.u32 %v6960, 7
    %v6962 = vsub.s32 1, %v6961
    %v6963 = vrot.slane %v6954, %v6962
    %v6964 = vlaneseq
    %v6965 = vshrl.u32 %v6964, 7
    %v6966 = vsub.s32 2, %v6965
    %v6967 = vrot.slane %v6954, %v6966
    %v6968 = vlaneseq
    %v6969 = vshrl.u32 %v6968, 7
    %v6970 = vsub.s32 3, %v6969
    %v6971 = vrot.slane %v6954, %v6970
    %v6976 = vmul.f32 %v6953, %v6959
    %v6977 = vmul.f32 %v6952, %v6963
    %v6978 = vmul.f32 %v6951, %v6967
    %v6979 = vmul.f32 %v6950, %v6971
    %v6980 = vpack.c.bf16 %v6976, %v6976
    %v6981 = vpack.c.bf16 %v6977, %v6977
    %v6982 = vpack.c.bf16 %v6978, %v6978
    %v6983 = vpack.c.bf16 %v6979, %v6979
    %v6988 = vunpack.c.l.b16 %v6980
    %v6989 = vunpack.c.l.b16 %v6981
    %v6990 = vunpack.c.l.b16 %v6982
    %v6991 = vunpack.c.l.b16 %v6983
    %v6992 = vpack.c.b16 %v6989, %v6988
    %v6993 = vpack.c.b16 %v6991, %v6990
    %v6994 = vrot.slane %v6992, 6
    %v6995 = vrot.slane %v6993, 6
    %6998 = vst [vmem:[#allocation2 + $0x30] sm:$0xcc] %v6994
    %6999 = vst [vmem:[#allocation2 + $0x38] sm:$0xcc] %v6995
    %7000 = vrot.lane.b32.xlu0 %v6540, 15
    %v7001 = vpop.permute.xlu0 %7000
    %7002 = vrot.lane.b32.xlu0 %v6541, 15
    %v7003 = vpop.permute.xlu0 %7002
    %7004 = vrot.lane.b32.xlu0 %v6542, 15
    %v7005 = vpop.permute.xlu0 %7004
    %7006 = vrot.lane.b32.xlu0 %v6543, 15
    %v7007 = vpop.permute.xlu0 %7006
    %v7008 = vsel %vm654, %v7005, %v7007
    %v7009 = vsel %vm654, %v7003, %v7005
    %v7010 = vsel %vm654, %v7001, %v7003
    %v7011 = vsel %vm654, %v7007, %v7001
    %v7012 = vld [vmem:[%s659] ss:$8 sm:$0xf]
    %v7014 = vlaneseq
    %v7015 = vshrl.u32 %v7014, 7
    %v7016 = vsub.s32 0, %v7015
    %v7017 = vrot.slane %v7012, %v7016
    %v7018 = vlaneseq
    %v7019 = vshrl.u32 %v7018, 7
    %v7020 = vsub.s32 1, %v7019
    %v7021 = vrot.slane %v7012, %v7020
    %v7022 = vlaneseq
    %v7023 = vshrl.u32 %v7022, 7
    %v7024 = vsub.s32 2, %v7023
    %v7025 = vrot.slane %v7012, %v7024
    %v7026 = vlaneseq
    %v7027 = vshrl.u32 %v7026, 7
    %v7028 = vsub.s32 3, %v7027
    %v7029 = vrot.slane %v7012, %v7028
    %v7034 = vmul.f32 %v7011, %v7017
    %v7035 = vmul.f32 %v7010, %v7021
    %v7036 = vmul.f32 %v7009, %v7025
    %v7037 = vmul.f32 %v7008, %v7029
    %v7038 = vpack.c.bf16 %v7034, %v7034
    %v7039 = vpack.c.bf16 %v7035, %v7035
    %v7040 = vpack.c.bf16 %v7036, %v7036
    %v7041 = vpack.c.bf16 %v7037, %v7037
    %v7046 = vunpack.c.l.b16 %v7038
    %v7047 = vunpack.c.l.b16 %v7039
    %v7048 = vunpack.c.l.b16 %v7040
    %v7049 = vunpack.c.l.b16 %v7041
    %v7050 = vpack.c.b16 %v7047, %v7046
    %v7051 = vpack.c.b16 %v7049, %v7048
    %7054 = vst [vmem:[#allocation2 + $0x40] sm:$0x33] %v7050
    %7055 = vst [vmem:[#allocation2 + $0x48] sm:$0x33] %v7051
    %7056 = vrot.lane.b32.xlu0 %v6540, 14
    %v7057 = vpop.permute.xlu0 %7056
    %7058 = vrot.lane.b32.xlu0 %v6541, 14
    %v7059 = vpop.permute.xlu0 %7058
    %7060 = vrot.lane.b32.xlu0 %v6542, 14
    %v7061 = vpop.permute.xlu0 %7060
    %7062 = vrot.lane.b32.xlu0 %v6543, 14
    %v7063 = vpop.permute.xlu0 %7062
    %v7064 = vsel %vm716, %v7061, %v7063
    %v7065 = vsel %vm716, %v7059, %v7061
    %v7066 = vsel %vm716, %v7057, %v7059
    %v7067 = vsel %vm716, %v7063, %v7057
    %v7068 = vld [vmem:[%s721] ss:$8 sm:$0xf]
    %v7070 = vlaneseq
    %v7071 = vshrl.u32 %v7070, 7
    %v7072 = vsub.s32 0, %v7071
    %v7073 = vrot.slane %v7068, %v7072
    %v7074 = vlaneseq
    %v7075 = vshrl.u32 %v7074, 7
    %v7076 = vsub.s32 1, %v7075
    %v7077 = vrot.slane %v7068, %v7076
    %v7078 = vlaneseq
    %v7079 = vshrl.u32 %v7078, 7
    %v7080 = vsub.s32 2, %v7079
    %v7081 = vrot.slane %v7068, %v7080
    %v7082 = vlaneseq
    %v7083 = vshrl.u32 %v7082, 7
    %v7084 = vsub.s32 3, %v7083
    %v7085 = vrot.slane %v7068, %v7084
    %v7090 = vmul.f32 %v7067, %v7073
    %v7091 = vmul.f32 %v7066, %v7077
    %v7092 = vmul.f32 %v7065, %v7081
    %v7093 = vmul.f32 %v7064, %v7085
    %v7094 = vpack.c.bf16 %v7090, %v7090
    %v7095 = vpack.c.bf16 %v7091, %v7091
    %v7096 = vpack.c.bf16 %v7092, %v7092
    %v7097 = vpack.c.bf16 %v7093, %v7093
    %v7102 = vunpack.c.l.b16 %v7094
    %v7103 = vunpack.c.l.b16 %v7095
    %v7104 = vunpack.c.l.b16 %v7096
    %v7105 = vunpack.c.l.b16 %v7097
    %v7106 = vpack.c.b16 %v7103, %v7102
    %v7107 = vpack.c.b16 %v7105, %v7104
    %v7108 = vrot.slane %v7106, 6
    %v7109 = vrot.slane %v7107, 6
    %7112 = vst [vmem:[#allocation2 + $0x40] sm:$0xcc] %v7108
    %7113 = vst [vmem:[#allocation2 + $0x48] sm:$0xcc] %v7109
    %7114 = vrot.lane.b32.xlu0 %v6540, 2
    %v7115 = vpop.permute.xlu0 %7114
    %7116 = vrot.lane.b32.xlu0 %v6541, 2
    %v7117 = vpop.permute.xlu0 %7116
    %7118 = vrot.lane.b32.xlu0 %v6542, 2
    %v7119 = vpop.permute.xlu0 %7118
    %7120 = vrot.lane.b32.xlu0 %v6543, 2
    %v7121 = vpop.permute.xlu0 %7120
    %v7122 = vsel %vm784, %v7119, %v7121
    %v7123 = vsel %vm784, %v7117, %v7119
    %v7124 = vsel %vm784, %v7115, %v7117
    %v7125 = vsel %vm784, %v7121, %v7115
    %v7126 = vld [vmem:[%s789] ss:$8 sm:$0xf]
    %v7128 = vlaneseq
    %v7129 = vshrl.u32 %v7128, 7
    %v7130 = vsub.s32 0, %v7129
    %v7131 = vrot.slane %v7126, %v7130
    %v7132 = vlaneseq
    %v7133 = vshrl.u32 %v7132, 7
    %v7134 = vsub.s32 1, %v7133
    %v7135 = vrot.slane %v7126, %v7134
    %v7136 = vlaneseq
    %v7137 = vshrl.u32 %v7136, 7
    %v7138 = vsub.s32 2, %v7137
    %v7139 = vrot.slane %v7126, %v7138
    %v7140 = vlaneseq
    %v7141 = vshrl.u32 %v7140, 7
    %v7142 = vsub.s32 3, %v7141
    %v7143 = vrot.slane %v7126, %v7142
    %v7148 = vmul.f32 %v7125, %v7131
    %v7149 = vmul.f32 %v7124, %v7135
    %v7150 = vmul.f32 %v7123, %v7139
    %v7151 = vmul.f32 %v7122, %v7143
    %v7152 = vpack.c.bf16 %v7148, %v7148
    %v7153 = vpack.c.bf16 %v7149, %v7149
    %v7154 = vpack.c.bf16 %v7150, %v7150
    %v7155 = vpack.c.bf16 %v7151, %v7151
    %v7160 = vunpack.c.l.b16 %v7152
    %v7161 = vunpack.c.l.b16 %v7153
    %v7162 = vunpack.c.l.b16 %v7154
    %v7163 = vunpack.c.l.b16 %v7155
    %v7164 = vpack.c.b16 %v7161, %v7160
    %v7165 = vpack.c.b16 %v7163, %v7162
    %7168 = vst [vmem:[#allocation2 + $0x50] sm:$0x33] %v7164
    %7169 = vst [vmem:[#allocation2 + $0x58] sm:$0x33] %v7165
    %7170 = vrot.lane.b32.xlu0 %v6540, 1
    %v7171 = vpop.permute.xlu0 %7170
    %7172 = vrot.lane.b32.xlu0 %v6541, 1
    %v7173 = vpop.permute.xlu0 %7172
    %7174 = vrot.lane.b32.xlu0 %v6542, 1
    %v7175 = vpop.permute.xlu0 %7174
    %7176 = vrot.lane.b32.xlu0 %v6543, 1
    %v7177 = vpop.permute.xlu0 %7176
    %v7178 = vsel %vm848, %v7175, %v7177
    %v7179 = vsel %vm848, %v7173, %v7175
    %v7180 = vsel %vm848, %v7171, %v7173
    %v7181 = vsel %vm848, %v7177, %v7171
    %v7182 = vld [vmem:[%s853] ss:$8 sm:$0xf]
    %v7184 = vlaneseq
    %v7185 = vshrl.u32 %v7184, 7
    %v7186 = vsub.s32 0, %v7185
    %v7187 = vrot.slane %v7182, %v7186
    %v7188 = vlaneseq
    %v7189 = vshrl.u32 %v7188, 7
    %v7190 = vsub.s32 1, %v7189
    %v7191 = vrot.slane %v7182, %v7190
    %v7192 = vlaneseq
    %v7193 = vshrl.u32 %v7192, 7
    %v7194 = vsub.s32 2, %v7193
    %v7195 = vrot.slane %v7182, %v7194
    %v7196 = vlaneseq
    %v7197 = vshrl.u32 %v7196, 7
    %v7198 = vsub.s32 3, %v7197
    %v7199 = vrot.slane %v7182, %v7198
    %v7204 = vmul.f32 %v7181, %v7187
    %v7205 = vmul.f32 %v7180, %v7191
    %v7206 = vmul.f32 %v7179, %v7195
    %v7207 = vmul.f32 %v7178, %v7199
    %v7208 = vpack.c.bf16 %v7204, %v7204
    %v7209 = vpack.c.bf16 %v7205, %v7205
    %v7210 = vpack.c.bf16 %v7206, %v7206
    %v7211 = vpack.c.bf16 %v7207, %v7207
    %v7216 = vunpack.c.l.b16 %v7208
    %v7217 = vunpack.c.l.b16 %v7209
    %v7218 = vunpack.c.l.b16 %v7210
    %v7219 = vunpack.c.l.b16 %v7211
    %v7220 = vpack.c.b16 %v7217, %v7216
    %v7221 = vpack.c.b16 %v7219, %v7218
    %v7222 = vrot.slane %v7220, 6
    %v7223 = vrot.slane %v7221, 6
    %7226 = vst [vmem:[#allocation2 + $0x50] sm:$0xcc] %v7222
    %7227 = vst [vmem:[#allocation2 + $0x58] sm:$0xcc] %v7223
    %v7228 = vpack.c.bf16 %v6540, %v6540
    %v7229 = vpack.c.bf16 %v6541, %v6541
    %v7230 = vpack.c.bf16 %v6542, %v6542
    %v7231 = vpack.c.bf16 %v6543, %v6543
    %v7236 = vunpack.c.l.b16 %v7228
    %v7237 = vunpack.c.l.b16 %v7229
    %v7238 = vunpack.c.l.b16 %v7230
    %v7239 = vunpack.c.l.b16 %v7231
    %v7240 = vpack.c.b16 %v7237, %v7236
    %v7241 = vpack.c.b16 %v7239, %v7238
    %7244 = vst [vmem:[#allocation2 + $0x60] sm:$0x33] %v7240
    %7245 = vst [vmem:[#allocation2 + $0x68] sm:$0x33] %v7241
    %7246 = vrot.lane.b32.xlu0 %v6540, 127
    %v7247 = vpop.permute.xlu0 %7246
    %7248 = vrot.lane.b32.xlu0 %v6541, 127
    %v7249 = vpop.permute.xlu0 %7248
    %7250 = vrot.lane.b32.xlu0 %v6542, 127
    %v7251 = vpop.permute.xlu0 %7250
    %7252 = vrot.lane.b32.xlu0 %v6543, 127
    %v7253 = vpop.permute.xlu0 %7252
    %v7254 = vsel %vm942, %v7251, %v7253
    %v7255 = vsel %vm942, %v7249, %v7251
    %v7256 = vsel %vm942, %v7247, %v7249
    %v7257 = vsel %vm942, %v7253, %v7247
    %v7258 = vld [vmem:[%s947] ss:$8 sm:$0xf]
    %v7260 = vlaneseq
    %v7261 = vshrl.u32 %v7260, 7
    %v7262 = vsub.s32 0, %v7261
    %v7263 = vrot.slane %v7258, %v7262
    %v7264 = vlaneseq
    %v7265 = vshrl.u32 %v7264, 7
    %v7266 = vsub.s32 1, %v7265
    %v7267 = vrot.slane %v7258, %v7266
    %v7268 = vlaneseq
    %v7269 = vshrl.u32 %v7268, 7
    %v7270 = vsub.s32 2, %v7269
    %v7271 = vrot.slane %v7258, %v7270
    %v7272 = vlaneseq
    %v7273 = vshrl.u32 %v7272, 7
    %v7274 = vsub.s32 3, %v7273
    %v7275 = vrot.slane %v7258, %v7274
    %v7280 = vmul.f32 %v7256, %v7263
    %v7281 = vmul.f32 %v7255, %v7267
    %v7282 = vmul.f32 %v7254, %v7271
    %v7283 = vmul.f32 %v7257, %v7275
    %v7284 = vpack.c.bf16 %v7280, %v7280
    %v7285 = vpack.c.bf16 %v7281, %v7281
    %v7286 = vpack.c.bf16 %v7282, %v7282
    %v7287 = vpack.c.bf16 %v7283, %v7283
    %v7292 = vunpack.c.l.b16 %v7284
    %v7293 = vunpack.c.l.b16 %v7285
    %v7294 = vunpack.c.l.b16 %v7286
    %v7295 = vunpack.c.l.b16 %v7287
    %v7296 = vpack.c.b16 %v7293, %v7292
    %v7297 = vpack.c.b16 %v7295, %v7294
    %v7298 = vrot.slane %v7296, 6
    %v7299 = vrot.slane %v7297, 6
    %7302 = vst [vmem:[#allocation2 + $0x60] sm:$0xcc] %v7298
    %7303 = vst [vmem:[#allocation2 + $0x68] sm:$0xcc] %v7299
    %7304 = vrot.lane.b32.xlu0 %v6540, 126
    %v7305 = vpop.permute.xlu0 %7304
    %7306 = vrot.lane.b32.xlu0 %v6541, 126
    %v7307 = vpop.permute.xlu0 %7306
    %7308 = vrot.lane.b32.xlu0 %v6542, 126
    %v7309 = vpop.permute.xlu0 %7308
    %7310 = vrot.lane.b32.xlu0 %v6543, 126
    %v7311 = vpop.permute.xlu0 %7310
    %v7312 = vsel %vm1012, %v7309, %v7311
    %v7313 = vsel %vm1012, %v7307, %v7309
    %v7314 = vsel %vm1012, %v7305, %v7307
    %v7315 = vsel %vm1012, %v7311, %v7305
    %v7316 = vld [vmem:[%s1017] ss:$8 sm:$0xf]
    %v7318 = vlaneseq
    %v7319 = vshrl.u32 %v7318, 7
    %v7320 = vsub.s32 0, %v7319
    %v7321 = vrot.slane %v7316, %v7320
    %v7322 = vlaneseq
    %v7323 = vshrl.u32 %v7322, 7
    %v7324 = vsub.s32 1, %v7323
    %v7325 = vrot.slane %v7316, %v7324
    %v7326 = vlaneseq
    %v7327 = vshrl.u32 %v7326, 7
    %v7328 = vsub.s32 2, %v7327
    %v7329 = vrot.slane %v7316, %v7328
    %v7330 = vlaneseq
    %v7331 = vshrl.u32 %v7330, 7
    %v7332 = vsub.s32 3, %v7331
    %v7333 = vrot.slane %v7316, %v7332
    %v7338 = vmul.f32 %v7314, %v7321
    %v7339 = vmul.f32 %v7313, %v7325
    %v7340 = vmul.f32 %v7312, %v7329
    %v7341 = vmul.f32 %v7315, %v7333
    %v7342 = vpack.c.bf16 %v7338, %v7338
    %v7343 = vpack.c.bf16 %v7339, %v7339
    %v7344 = vpack.c.bf16 %v7340, %v7340
    %v7345 = vpack.c.bf16 %v7341, %v7341
    %v7350 = vunpack.c.l.b16 %v7342
    %v7351 = vunpack.c.l.b16 %v7343
    %v7352 = vunpack.c.l.b16 %v7344
    %v7353 = vunpack.c.l.b16 %v7345
    %v7354 = vpack.c.b16 %v7351, %v7350
    %v7355 = vpack.c.b16 %v7353, %v7352
    %7358 = vst [vmem:[#allocation2 + $0x70] sm:$0x33] %v7354
    %7359 = vst [vmem:[#allocation2 + $0x78] sm:$0x33] %v7355
    %7360 = vrot.lane.b32.xlu0 %v6540, 114
    %v7361 = vpop.permute.xlu0 %7360
    %7362 = vrot.lane.b32.xlu0 %v6541, 114
    %v7363 = vpop.permute.xlu0 %7362
    %7364 = vrot.lane.b32.xlu0 %v6542, 114
    %v7365 = vpop.permute.xlu0 %7364
    %7366 = vrot.lane.b32.xlu0 %v6543, 114
    %v7367 = vpop.permute.xlu0 %7366
    %v7368 = vsel %vm1076, %v7365, %v7367
    %v7369 = vsel %vm1076, %v7363, %v7365
    %v7370 = vsel %vm1076, %v7361, %v7363
    %v7371 = vsel %vm1076, %v7367, %v7361
    %v7372 = vld [vmem:[%s1081] ss:$8 sm:$0xf]
    %v7374 = vlaneseq
    %v7375 = vshrl.u32 %v7374, 7
    %v7376 = vsub.s32 0, %v7375
    %v7377 = vrot.slane %v7372, %v7376
    %v7378 = vlaneseq
    %v7379 = vshrl.u32 %v7378, 7
    %v7380 = vsub.s32 1, %v7379
    %v7381 = vrot.slane %v7372, %v7380
    %v7382 = vlaneseq
    %v7383 = vshrl.u32 %v7382, 7
    %v7384 = vsub.s32 2, %v7383
    %v7385 = vrot.slane %v7372, %v7384
    %v7386 = vlaneseq
    %v7387 = vshrl.u32 %v7386, 7
    %v7388 = vsub.s32 3, %v7387
    %v7389 = vrot.slane %v7372, %v7388
    %v7394 = vmul.f32 %v7370, %v7377
    %v7395 = vmul.f32 %v7369, %v7381
    %v7396 = vmul.f32 %v7368, %v7385
    %v7397 = vmul.f32 %v7371, %v7389
    %v7398 = vpack.c.bf16 %v7394, %v7394
    %v7399 = vpack.c.bf16 %v7395, %v7395
    %v7400 = vpack.c.bf16 %v7396, %v7396
    %v7401 = vpack.c.bf16 %v7397, %v7397
    %v7406 = vunpack.c.l.b16 %v7398
    %v7407 = vunpack.c.l.b16 %v7399
    %v7408 = vunpack.c.l.b16 %v7400
    %v7409 = vunpack.c.l.b16 %v7401
    %v7410 = vpack.c.b16 %v7407, %v7406
    %v7411 = vpack.c.b16 %v7409, %v7408
    %v7412 = vrot.slane %v7410, 6
    %v7413 = vrot.slane %v7411, 6
    %7416 = vst [vmem:[#allocation2 + $0x70] sm:$0xcc] %v7412
    %7417 = vst [vmem:[#allocation2 + $0x78] sm:$0xcc] %v7413
    %7418 = vrot.lane.b32.xlu0 %v6540, 113
    %v7419 = vpop.permute.xlu0 %7418
    %7420 = vrot.lane.b32.xlu0 %v6541, 113
    %v7421 = vpop.permute.xlu0 %7420
    %7422 = vrot.lane.b32.xlu0 %v6542, 113
    %v7423 = vpop.permute.xlu0 %7422
    %7424 = vrot.lane.b32.xlu0 %v6543, 113
    %v7425 = vpop.permute.xlu0 %7424
    %v7426 = vsel %vm1146, %v7423, %v7425
    %v7427 = vsel %vm1146, %v7421, %v7423
    %v7428 = vsel %vm1146, %v7419, %v7421
    %v7429 = vsel %vm1146, %v7425, %v7419
    %v7430 = vld [vmem:[%s1151] ss:$8 sm:$0xf]
    %v7432 = vlaneseq
    %v7433 = vshrl.u32 %v7432, 7
    %v7434 = vsub.s32 0, %v7433
    %v7435 = vrot.slane %v7430, %v7434
    %v7436 = vlaneseq
    %v7437 = vshrl.u32 %v7436, 7
    %v7438 = vsub.s32 1, %v7437
    %v7439 = vrot.slane %v7430, %v7438
    %v7440 = vlaneseq
    %v7441 = vshrl.u32 %v7440, 7
    %v7442 = vsub.s32 2, %v7441
    %v7443 = vrot.slane %v7430, %v7442
    %v7444 = vlaneseq
    %v7445 = vshrl.u32 %v7444, 7
    %v7446 = vsub.s32 3, %v7445
    %v7447 = vrot.slane %v7430, %v7446
    %v7452 = vmul.f32 %v7428, %v7435
    %v7453 = vmul.f32 %v7427, %v7439
    %v7454 = vmul.f32 %v7426, %v7443
    %v7455 = vmul.f32 %v7429, %v7447
    %v7456 = vpack.c.bf16 %v7452, %v7452
    %v7457 = vpack.c.bf16 %v7453, %v7453
    %v7458 = vpack.c.bf16 %v7454, %v7454
    %v7459 = vpack.c.bf16 %v7455, %v7455
    %v7464 = vunpack.c.l.b16 %v7456
    %v7465 = vunpack.c.l.b16 %v7457
    %v7466 = vunpack.c.l.b16 %v7458
    %v7467 = vunpack.c.l.b16 %v7459
    %v7468 = vpack.c.b16 %v7465, %v7464
    %v7469 = vpack.c.b16 %v7467, %v7466
    %7472 = vst [vmem:[#allocation2 + $0x80] sm:$0x33] %v7468
    %7473 = vst [vmem:[#allocation2 + $0x88] sm:$0x33] %v7469
    %7474 = vrot.lane.b32.xlu0 %v6540, 112
    %v7475 = vpop.permute.xlu0 %7474
    %7476 = vrot.lane.b32.xlu0 %v6541, 112
    %v7477 = vpop.permute.xlu0 %7476
    %7478 = vrot.lane.b32.xlu0 %v6542, 112
    %v7479 = vpop.permute.xlu0 %7478
    %7480 = vrot.lane.b32.xlu0 %v6543, 112
    %v7481 = vpop.permute.xlu0 %7480
    %v7482 = vsel %vm1208, %v7479, %v7481
    %v7483 = vsel %vm1208, %v7477, %v7479
    %v7484 = vsel %vm1208, %v7475, %v7477
    %v7485 = vsel %vm1208, %v7481, %v7475
    %v7486 = vld [vmem:[%s1213] ss:$8 sm:$0xf]
    %v7488 = vlaneseq
    %v7489 = vshrl.u32 %v7488, 7
    %v7490 = vsub.s32 0, %v7489
    %v7491 = vrot.slane %v7486, %v7490
    %v7492 = vlaneseq
    %v7493 = vshrl.u32 %v7492, 7
    %v7494 = vsub.s32 1, %v7493
    %v7495 = vrot.slane %v7486, %v7494
    %v7496 = vlaneseq
    %v7497 = vshrl.u32 %v7496, 7
    %v7498 = vsub.s32 2, %v7497
    %v7499 = vrot.slane %v7486, %v7498
    %v7500 = vlaneseq
    %v7501 = vshrl.u32 %v7500, 7
    %v7502 = vsub.s32 3, %v7501
    %v7503 = vrot.slane %v7486, %v7502
    %v7508 = vmul.f32 %v7484, %v7491
    %v7509 = vmul.f32 %v7483, %v7495
    %v7510 = vmul.f32 %v7482, %v7499
    %v7511 = vmul.f32 %v7485, %v7503
    %v7512 = vpack.c.bf16 %v7508, %v7508
    %v7513 = vpack.c.bf16 %v7509, %v7509
    %v7514 = vpack.c.bf16 %v7510, %v7510
    %v7515 = vpack.c.bf16 %v7511, %v7511
    %v7520 = vunpack.c.l.b16 %v7512
    %v7521 = vunpack.c.l.b16 %v7513
    %v7522 = vunpack.c.l.b16 %v7514
    %v7523 = vunpack.c.l.b16 %v7515
    %v7524 = vpack.c.b16 %v7521, %v7520
    %v7525 = vpack.c.b16 %v7523, %v7522
    %v7526 = vrot.slane %v7524, 6
    %v7527 = vrot.slane %v7525, 6
    %7530 = vst [vmem:[#allocation2 + $0x80] sm:$0xcc] %v7526
    %7531 = vst [vmem:[#allocation2 + $0x88] sm:$0xcc] %v7527
    %7532 = vrot.lane.b32.xlu0 %v6540, 111
    %v7533 = vpop.permute.xlu0 %7532
    %7534 = vrot.lane.b32.xlu0 %v6541, 111
    %v7535 = vpop.permute.xlu0 %7534
    %7536 = vrot.lane.b32.xlu0 %v6542, 111
    %v7537 = vpop.permute.xlu0 %7536
    %7538 = vrot.lane.b32.xlu0 %v6543, 111
    %v7539 = vpop.permute.xlu0 %7538
    %v7540 = vsel %vm1276, %v7537, %v7539
    %v7541 = vsel %vm1276, %v7535, %v7537
    %v7542 = vsel %vm1276, %v7533, %v7535
    %v7543 = vsel %vm1276, %v7539, %v7533
    %v7544 = vld [vmem:[%s1281] ss:$8 sm:$0xf]
    %v7546 = vlaneseq
    %v7547 = vshrl.u32 %v7546, 7
    %v7548 = vsub.s32 0, %v7547
    %v7549 = vrot.slane %v7544, %v7548
    %v7550 = vlaneseq
    %v7551 = vshrl.u32 %v7550, 7
    %v7552 = vsub.s32 1, %v7551
    %v7553 = vrot.slane %v7544, %v7552
    %v7554 = vlaneseq
    %v7555 = vshrl.u32 %v7554, 7
    %v7556 = vsub.s32 2, %v7555
    %v7557 = vrot.slane %v7544, %v7556
    %v7558 = vlaneseq
    %v7559 = vshrl.u32 %v7558, 7
    %v7560 = vsub.s32 3, %v7559
    %v7561 = vrot.slane %v7544, %v7560
    %v7566 = vmul.f32 %v7542, %v7549
    %v7567 = vmul.f32 %v7541, %v7553
    %v7568 = vmul.f32 %v7540, %v7557
    %v7569 = vmul.f32 %v7543, %v7561
    %v7570 = vpack.c.bf16 %v7566, %v7566
    %v7571 = vpack.c.bf16 %v7567, %v7567
    %v7572 = vpack.c.bf16 %v7568, %v7568
    %v7573 = vpack.c.bf16 %v7569, %v7569
    %v7578 = vunpack.c.l.b16 %v7570
    %v7579 = vunpack.c.l.b16 %v7571
    %v7580 = vunpack.c.l.b16 %v7572
    %v7581 = vunpack.c.l.b16 %v7573
    %v7582 = vpack.c.b16 %v7579, %v7578
    %v7583 = vpack.c.b16 %v7581, %v7580
    %7586 = vst [vmem:[#allocation2 + $0x90] sm:$0x33] %v7582
    %7587 = vst [vmem:[#allocation2 + $0x98] sm:$0x33] %v7583
    %7588 = vrot.lane.b32.xlu0 %v6540, 110
    %v7589 = vpop.permute.xlu0 %7588
    %7590 = vrot.lane.b32.xlu0 %v6541, 110
    %v7591 = vpop.permute.xlu0 %7590
    %7592 = vrot.lane.b32.xlu0 %v6542, 110
    %v7593 = vpop.permute.xlu0 %7592
    %7594 = vrot.lane.b32.xlu0 %v6543, 110
    %v7595 = vpop.permute.xlu0 %7594
    %v7596 = vsel %vm1340, %v7593, %v7595
    %v7597 = vsel %vm1340, %v7591, %v7593
    %v7598 = vsel %vm1340, %v7589, %v7591
    %v7599 = vsel %vm1340, %v7595, %v7589
    %v7600 = vld [vmem:[%s1345] ss:$8 sm:$0xf]
    %v7602 = vlaneseq
    %v7603 = vshrl.u32 %v7602, 7
    %v7604 = vsub.s32 0, %v7603
    %v7605 = vrot.slane %v7600, %v7604
    %v7606 = vlaneseq
    %v7607 = vshrl.u32 %v7606, 7
    %v7608 = vsub.s32 1, %v7607
    %v7609 = vrot.slane %v7600, %v7608
    %v7610 = vlaneseq
    %v7611 = vshrl.u32 %v7610, 7
    %v7612 = vsub.s32 2, %v7611
    %v7613 = vrot.slane %v7600, %v7612
    %v7614 = vlaneseq
    %v7615 = vshrl.u32 %v7614, 7
    %v7616 = vsub.s32 3, %v7615
    %v7617 = vrot.slane %v7600, %v7616
    %v7622 = vmul.f32 %v7598, %v7605
    %v7623 = vmul.f32 %v7597, %v7609
    %v7624 = vmul.f32 %v7596, %v7613
    %v7625 = vmul.f32 %v7599, %v7617
    %v7626 = vpack.c.bf16 %v7622, %v7622
    %v7627 = vpack.c.bf16 %v7623, %v7623
    %v7628 = vpack.c.bf16 %v7624, %v7624
    %v7629 = vpack.c.bf16 %v7625, %v7625
    %v7634 = vunpack.c.l.b16 %v7626
    %v7635 = vunpack.c.l.b16 %v7627
    %v7636 = vunpack.c.l.b16 %v7628
    %v7637 = vunpack.c.l.b16 %v7629
    %v7638 = vpack.c.b16 %v7635, %v7634
    %v7639 = vpack.c.b16 %v7637, %v7636
    %v7640 = vrot.slane %v7638, 6
    %v7641 = vrot.slane %v7639, 6
    %7644 = vst [vmem:[#allocation2 + $0x90] sm:$0xcc] %v7640
    %7645 = vst [vmem:[#allocation2 + $0x98] sm:$0xcc] %v7641
    %7646 = vrot.lane.b32.xlu0 %v6540, 98
    %v7647 = vpop.permute.xlu0 %7646
    %7648 = vrot.lane.b32.xlu0 %v6541, 98
    %v7649 = vpop.permute.xlu0 %7648
    %7650 = vrot.lane.b32.xlu0 %v6542, 98
    %v7651 = vpop.permute.xlu0 %7650
    %7652 = vrot.lane.b32.xlu0 %v6543, 98
    %v7653 = vpop.permute.xlu0 %7652
    %v7654 = vsel %vm1410, %v7651, %v7653
    %v7655 = vsel %vm1410, %v7649, %v7651
    %v7656 = vsel %vm1410, %v7647, %v7649
    %v7657 = vsel %vm1410, %v7653, %v7647
    %v7658 = vld [vmem:[%s1415] ss:$8 sm:$0xf]
    %v7660 = vlaneseq
    %v7661 = vshrl.u32 %v7660, 7
    %v7662 = vsub.s32 0, %v7661
    %v7663 = vrot.slane %v7658, %v7662
    %v7664 = vlaneseq
    %v7665 = vshrl.u32 %v7664, 7
    %v7666 = vsub.s32 1, %v7665
    %v7667 = vrot.slane %v7658, %v7666
    %v7668 = vlaneseq
    %v7669 = vshrl.u32 %v7668, 7
    %v7670 = vsub.s32 2, %v7669
    %v7671 = vrot.slane %v7658, %v7670
    %v7672 = vlaneseq
    %v7673 = vshrl.u32 %v7672, 7
    %v7674 = vsub.s32 3, %v7673
    %v7675 = vrot.slane %v7658, %v7674
    %v7680 = vmul.f32 %v7656, %v7663
    %v7681 = vmul.f32 %v7655, %v7667
    %v7682 = vmul.f32 %v7654, %v7671
    %v7683 = vmul.f32 %v7657, %v7675
    %v7684 = vpack.c.bf16 %v7680, %v7680
    %v7685 = vpack.c.bf16 %v7681, %v7681
    %v7686 = vpack.c.bf16 %v7682, %v7682
    %v7687 = vpack.c.bf16 %v7683, %v7683
    %v7692 = vunpack.c.l.b16 %v7684
    %v7693 = vunpack.c.l.b16 %v7685
    %v7694 = vunpack.c.l.b16 %v7686
    %v7695 = vunpack.c.l.b16 %v7687
    %v7696 = vpack.c.b16 %v7693, %v7692
    %v7697 = vpack.c.b16 %v7695, %v7694
    %7700 = vst [vmem:[#allocation2 + $0xa0] sm:$0x33] %v7696
    %7701 = vst [vmem:[#allocation2 + $0xa8] sm:$0x33] %v7697
    %7702 = vrot.lane.b32.xlu0 %v6540, 97
    %v7703 = vpop.permute.xlu0 %7702
    %7704 = vrot.lane.b32.xlu0 %v6541, 97
    %v7705 = vpop.permute.xlu0 %7704
    %7706 = vrot.lane.b32.xlu0 %v6542, 97
    %v7707 = vpop.permute.xlu0 %7706
    %7708 = vrot.lane.b32.xlu0 %v6543, 97
    %v7709 = vpop.permute.xlu0 %7708
    %v7710 = vsel %vm1474, %v7707, %v7709
    %v7711 = vsel %vm1474, %v7705, %v7707
    %v7712 = vsel %vm1474, %v7703, %v7705
    %v7713 = vsel %vm1474, %v7709, %v7703
    %v7714 = vld [vmem:[%s1479] ss:$8 sm:$0xf]
    %v7716 = vlaneseq
    %v7717 = vshrl.u32 %v7716, 7
    %v7718 = vsub.s32 0, %v7717
    %v7719 = vrot.slane %v7714, %v7718
    %v7720 = vlaneseq
    %v7721 = vshrl.u32 %v7720, 7
    %v7722 = vsub.s32 1, %v7721
    %v7723 = vrot.slane %v7714, %v7722
    %v7724 = vlaneseq
    %v7725 = vshrl.u32 %v7724, 7
    %v7726 = vsub.s32 2, %v7725
    %v7727 = vrot.slane %v7714, %v7726
    %v7728 = vlaneseq
    %v7729 = vshrl.u32 %v7728, 7
    %v7730 = vsub.s32 3, %v7729
    %v7731 = vrot.slane %v7714, %v7730
    %v7736 = vmul.f32 %v7712, %v7719
    %v7737 = vmul.f32 %v7711, %v7723
    %v7738 = vmul.f32 %v7710, %v7727
    %v7739 = vmul.f32 %v7713, %v7731
    %v7740 = vpack.c.bf16 %v7736, %v7736
    %v7741 = vpack.c.bf16 %v7737, %v7737
    %v7742 = vpack.c.bf16 %v7738, %v7738
    %v7743 = vpack.c.bf16 %v7739, %v7739
    %v7748 = vunpack.c.l.b16 %v7740
    %v7749 = vunpack.c.l.b16 %v7741
    %v7750 = vunpack.c.l.b16 %v7742
    %v7751 = vunpack.c.l.b16 %v7743
    %v7752 = vpack.c.b16 %v7749, %v7748
    %v7753 = vpack.c.b16 %v7751, %v7750
    %v7754 = vrot.slane %v7752, 6
    %v7755 = vrot.slane %v7753, 6
    %7758 = vst [vmem:[#allocation2 + $0xa0] sm:$0xcc] %v7754
    %7759 = vst [vmem:[#allocation2 + $0xa8] sm:$0xcc] %v7755
    %7760 = vrot.lane.b32.xlu0 %v6540, 96
    %v7761 = vpop.permute.xlu0 %7760
    %7762 = vrot.lane.b32.xlu0 %v6541, 96
    %v7763 = vpop.permute.xlu0 %7762
    %7764 = vrot.lane.b32.xlu0 %v6542, 96
    %v7765 = vpop.permute.xlu0 %7764
    %7766 = vrot.lane.b32.xlu0 %v6543, 96
    %v7767 = vpop.permute.xlu0 %7766
    %v7768 = vsel %vm1544, %v7765, %v7767
    %v7769 = vsel %vm1544, %v7763, %v7765
    %v7770 = vsel %vm1544, %v7761, %v7763
    %v7771 = vsel %vm1544, %v7767, %v7761
    %v7772 = vld [vmem:[%s1549] ss:$8 sm:$0xf]
    %v7774 = vlaneseq
    %v7775 = vshrl.u32 %v7774, 7
    %v7776 = vsub.s32 0, %v7775
    %v7777 = vrot.slane %v7772, %v7776
    %v7778 = vlaneseq
    %v7779 = vshrl.u32 %v7778, 7
    %v7780 = vsub.s32 1, %v7779
    %v7781 = vrot.slane %v7772, %v7780
    %v7782 = vlaneseq
    %v7783 = vshrl.u32 %v7782, 7
    %v7784 = vsub.s32 2, %v7783
    %v7785 = vrot.slane %v7772, %v7784
    %v7786 = vlaneseq
    %v7787 = vshrl.u32 %v7786, 7
    %v7788 = vsub.s32 3, %v7787
    %v7789 = vrot.slane %v7772, %v7788
    %v7794 = vmul.f32 %v7770, %v7777
    %v7795 = vmul.f32 %v7769, %v7781
    %v7796 = vmul.f32 %v7768, %v7785
    %v7797 = vmul.f32 %v7771, %v7789
    %v7798 = vpack.c.bf16 %v7794, %v7794
    %v7799 = vpack.c.bf16 %v7795, %v7795
    %v7800 = vpack.c.bf16 %v7796, %v7796
    %v7801 = vpack.c.bf16 %v7797, %v7797
    %v7806 = vunpack.c.l.b16 %v7798
    %v7807 = vunpack.c.l.b16 %v7799
    %v7808 = vunpack.c.l.b16 %v7800
    %v7809 = vunpack.c.l.b16 %v7801
    %v7810 = vpack.c.b16 %v7807, %v7806
    %v7811 = vpack.c.b16 %v7809, %v7808
    %7814 = vst [vmem:[#allocation2 + $0xb0] sm:$0x33] %v7810
    %7815 = vst [vmem:[#allocation2 + $0xb8] sm:$0x33] %v7811
    %7816 = vrot.lane.b32.xlu0 %v6540, 95
    %v7817 = vpop.permute.xlu0 %7816
    %7818 = vrot.lane.b32.xlu0 %v6541, 95
    %v7819 = vpop.permute.xlu0 %7818
    %7820 = vrot.lane.b32.xlu0 %v6542, 95
    %v7821 = vpop.permute.xlu0 %7820
    %7822 = vrot.lane.b32.xlu0 %v6543, 95
    %v7823 = vpop.permute.xlu0 %7822
    %v7824 = vsel %vm1608, %v7821, %v7823
    %v7825 = vsel %vm1608, %v7819, %v7821
    %v7826 = vsel %vm1608, %v7817, %v7819
    %v7827 = vsel %vm1608, %v7823, %v7817
    %v7828 = vld [vmem:[%s1613] ss:$8 sm:$0xf]
    %v7830 = vlaneseq
    %v7831 = vshrl.u32 %v7830, 7
    %v7832 = vsub.s32 0, %v7831
    %v7833 = vrot.slane %v7828, %v7832
    %v7834 = vlaneseq
    %v7835 = vshrl.u32 %v7834, 7
    %v7836 = vsub.s32 1, %v7835
    %v7837 = vrot.slane %v7828, %v7836
    %v7838 = vlaneseq
    %v7839 = vshrl.u32 %v7838, 7
    %v7840 = vsub.s32 2, %v7839
    %v7841 = vrot.slane %v7828, %v7840
    %v7842 = vlaneseq
    %v7843 = vshrl.u32 %v7842, 7
    %v7844 = vsub.s32 3, %v7843
    %v7845 = vrot.slane %v7828, %v7844
    %v7850 = vmul.f32 %v7826, %v7833
    %v7851 = vmul.f32 %v7825, %v7837
    %v7852 = vmul.f32 %v7824, %v7841
    %v7853 = vmul.f32 %v7827, %v7845
    %v7854 = vpack.c.bf16 %v7850, %v7850
    %v7855 = vpack.c.bf16 %v7851, %v7851
    %v7856 = vpack.c.bf16 %v7852, %v7852
    %v7857 = vpack.c.bf16 %v7853, %v7853
    %v7862 = vunpack.c.l.b16 %v7854
    %v7863 = vunpack.c.l.b16 %v7855
    %v7864 = vunpack.c.l.b16 %v7856
    %v7865 = vunpack.c.l.b16 %v7857
    %v7866 = vpack.c.b16 %v7863, %v7862
    %v7867 = vpack.c.b16 %v7865, %v7864
    %v7868 = vrot.slane %v7866, 6
    %v7869 = vrot.slane %v7867, 6
    %7872 = vst [vmem:[#allocation2 + $0xb0] sm:$0xcc] %v7868
    %7873 = vst [vmem:[#allocation2 + $0xb8] sm:$0xcc] %v7869
    %7874 = vrot.lane.b32.xlu0 %v6540, 94
    %v7875 = vpop.permute.xlu0 %7874
    %7876 = vrot.lane.b32.xlu0 %v6541, 94
    %v7877 = vpop.permute.xlu0 %7876
    %7878 = vrot.lane.b32.xlu0 %v6542, 94
    %v7879 = vpop.permute.xlu0 %7878
    %7880 = vrot.lane.b32.xlu0 %v6543, 94
    %v7881 = vpop.permute.xlu0 %7880
    %v7882 = vsel %vm1678, %v7879, %v7881
    %v7883 = vsel %vm1678, %v7877, %v7879
    %v7884 = vsel %vm1678, %v7875, %v7877
    %v7885 = vsel %vm1678, %v7881, %v7875
    %v7886 = vld [vmem:[%s1683] ss:$8 sm:$0xf]
    %v7888 = vlaneseq
    %v7889 = vshrl.u32 %v7888, 7
    %v7890 = vsub.s32 0, %v7889
    %v7891 = vrot.slane %v7886, %v7890
    %v7892 = vlaneseq
    %v7893 = vshrl.u32 %v7892, 7
    %v7894 = vsub.s32 1, %v7893
    %v7895 = vrot.slane %v7886, %v7894
    %v7896 = vlaneseq
    %v7897 = vshrl.u32 %v7896, 7
    %v7898 = vsub.s32 2, %v7897
    %v7899 = vrot.slane %v7886, %v7898
    %v7900 = vlaneseq
    %v7901 = vshrl.u32 %v7900, 7
    %v7902 = vsub.s32 3, %v7901
    %v7903 = vrot.slane %v7886, %v7902
    %v7908 = vmul.f32 %v7884, %v7891
    %v7909 = vmul.f32 %v7883, %v7895
    %v7910 = vmul.f32 %v7882, %v7899
    %v7911 = vmul.f32 %v7885, %v7903
    %v7912 = vpack.c.bf16 %v7908, %v7908
    %v7913 = vpack.c.bf16 %v7909, %v7909
    %v7914 = vpack.c.bf16 %v7910, %v7910
    %v7915 = vpack.c.bf16 %v7911, %v7911
    %v7920 = vunpack.c.l.b16 %v7912
    %v7921 = vunpack.c.l.b16 %v7913
    %v7922 = vunpack.c.l.b16 %v7914
    %v7923 = vunpack.c.l.b16 %v7915
    %v7924 = vpack.c.b16 %v7921, %v7920
    %v7925 = vpack.c.b16 %v7923, %v7922
    %7928 = vst [vmem:[#allocation2 + $0xc0] sm:$0x33] %v7924
    %7929 = vst [vmem:[#allocation2 + $0xc8] sm:$0x33] %v7925
    %v7930 = vld [vmem:[%s4] sm:$0x1]
    %v7931 = vld [vmem:[#allocation2] sm:$0xff]
    %v7932 = vld [vmem:[#allocation2 + $0x8] sm:$0xff]
    %v7933 = vld [vmem:[#allocation2 + $0x10] sm:$0xff]
    %v7934 = vld [vmem:[#allocation2 + $0x18] sm:$0xff]
    %v7935 = vld [vmem:[#allocation2 + $0x20] sm:$0xff]
    %v7936 = vld [vmem:[#allocation2 + $0x28] sm:$0xff]
    %v7937 = vld [vmem:[#allocation2 + $0x30] sm:$0xff]
    %v7938 = vld [vmem:[#allocation2 + $0x38] sm:$0xff]
    %v7939 = vld [vmem:[#allocation2 + $0x40] sm:$0xff]
    %v7940 = vld [vmem:[#allocation2 + $0x48] sm:$0xff]
    %v7941 = vld [vmem:[#allocation2 + $0x50] sm:$0xff]
    %v7942 = vld [vmem:[#allocation2 + $0x58] sm:$0xff]
    %v7943 = vld [vmem:[#allocation2 + $0x60] sm:$0xff]
    %v7944 = vld [vmem:[#allocation2 + $0x68] sm:$0xff]
    %v7945 = vld [vmem:[#allocation2 + $0x70] sm:$0xff]
    %v7946 = vld [vmem:[#allocation2 + $0x78] sm:$0xff]
    %v7947 = vld [vmem:[#allocation2 + $0x80] sm:$0xff]
    %v7948 = vld [vmem:[#allocation2 + $0x88] sm:$0xff]
    %v7949 = vld [vmem:[#allocation2 + $0x90] sm:$0xff]
    %v7950 = vld [vmem:[#allocation2 + $0x98] sm:$0xff]
    %v7951 = vld [vmem:[#allocation2 + $0xa0] sm:$0xff]
    %v7952 = vld [vmem:[#allocation2 + $0xa8] sm:$0xff]
    %v7953 = vld [vmem:[#allocation2 + $0xb0] sm:$0xff]
    %v7954 = vld [vmem:[#allocation2 + $0xb8] sm:$0xff]
    %v7955 = vld [vmem:[#allocation2 + $0xc0] sm:$0x33]
    %v7956 = vld [vmem:[#allocation2 + $0xc8] sm:$0x33]
    %v7983 = vunpack.c.l.b16 %v7931
    %v7984 = vunpack.c.h.b16 %v7931
    %v7985 = vunpack.c.l.b16 %v7932
    %v7986 = vunpack.c.h.b16 %v7932
    %v7987 = vunpack.c.l.b16 %v7933
    %v7988 = vunpack.c.h.b16 %v7933
    %v7989 = vunpack.c.l.b16 %v7934
    %v7990 = vunpack.c.h.b16 %v7934
    %v7991 = vunpack.c.l.b16 %v7935
    %v7992 = vunpack.c.h.b16 %v7935
    %v7993 = vunpack.c.l.b16 %v7936
    %v7994 = vunpack.c.h.b16 %v7936
    %v7995 = vunpack.c.l.b16 %v7937
    %v7996 = vunpack.c.h.b16 %v7937
    %v7997 = vunpack.c.l.b16 %v7938
    %v7998 = vunpack.c.h.b16 %v7938
    %v7999 = vunpack.c.l.b16 %v7939
    %v8000 = vunpack.c.h.b16 %v7939
    %v8001 = vunpack.c.l.b16 %v7940
    %v8002 = vunpack.c.h.b16 %v7940
    %v8003 = vunpack.c.l.b16 %v7941
    %v8004 = vunpack.c.h.b16 %v7941
    %v8005 = vunpack.c.l.b16 %v7942
    %v8006 = vunpack.c.h.b16 %v7942
    %v8007 = vunpack.c.l.b16 %v7943
    %v8008 = vunpack.c.h.b16 %v7943
    %v8009 = vunpack.c.l.b16 %v7944
    %v8010 = vunpack.c.h.b16 %v7944
    %v8011 = vunpack.c.l.b16 %v7945
    %v8012 = vunpack.c.h.b16 %v7945
    %v8013 = vunpack.c.l.b16 %v7946
    %v8014 = vunpack.c.h.b16 %v7946
    %v8015 = vunpack.c.l.b16 %v7947
    %v8016 = vunpack.c.h.b16 %v7947
    %v8017 = vunpack.c.l.b16 %v7948
    %v8018 = vunpack.c.h.b16 %v7948
    %v8019 = vunpack.c.l.b16 %v7949
    %v8020 = vunpack.c.h.b16 %v7949
    %v8021 = vunpack.c.l.b16 %v7950
    %v8022 = vunpack.c.h.b16 %v7950
    %v8023 = vunpack.c.l.b16 %v7951
    %v8024 = vunpack.c.h.b16 %v7951
    %v8025 = vunpack.c.l.b16 %v7952
    %v8026 = vunpack.c.h.b16 %v7952
    %v8027 = vunpack.c.l.b16 %v7953
    %v8028 = vunpack.c.h.b16 %v7953
    %v8029 = vunpack.c.l.b16 %v7954
    %v8030 = vunpack.c.h.b16 %v7954
    %v8031 = vunpack.c.l.b16 %v7955
    %v8032 = vunpack.c.h.b16 %v7955
    %v8033 = vunpack.c.l.b16 %v7956
    %v8034 = vunpack.c.h.b16 %v7956
    %v8035 = vpack.c.b16 %v7987, %v7983
    %v8036 = vpack.c.b16 %v7988, %v7984
    %v8037 = vpack.c.b16 %v7989, %v7985
    %v8038 = vpack.c.b16 %v7990, %v7986
    %v8039 = vpack.c.b16 %v7995, %v7991
    %v8040 = vpack.c.b16 %v7996, %v7992
    %v8041 = vpack.c.b16 %v7997, %v7993
    %v8042 = vpack.c.b16 %v7998, %v7994
    %v8043 = vpack.c.b16 %v8003, %v7999
    %v8044 = vpack.c.b16 %v8004, %v8000
    %v8045 = vpack.c.b16 %v8005, %v8001
    %v8046 = vpack.c.b16 %v8006, %v8002
    %v8047 = vpack.c.b16 %v8011, %v8007
    %v8048 = vpack.c.b16 %v8012, %v8008
    %v8049 = vpack.c.b16 %v8013, %v8009
    %v8050 = vpack.c.b16 %v8014, %v8010
    %v8051 = vpack.c.b16 %v8019, %v8015
    %v8052 = vpack.c.b16 %v8020, %v8016
    %v8053 = vpack.c.b16 %v8021, %v8017
    %v8054 = vpack.c.b16 %v8022, %v8018
    %v8055 = vpack.c.b16 %v8027, %v8023
    %v8056 = vpack.c.b16 %v8028, %v8024
    %v8057 = vpack.c.b16 %v8029, %v8025
    %v8058 = vpack.c.b16 %v8030, %v8026
    %v8059 = vpack.c.b16 %v8031, %v8031
    %v8060 = vpack.c.b16 %v8032, %v8032
    %v8061 = vpack.c.b16 %v8033, %v8033
    %v8062 = vpack.c.b16 %v8034, %v8034
    %v8088 = vsel %vm3486, %v7930, 0
    %v8091 = vsel %vm3490, %v8059, 0
    %v8094 = vsel %vm3490, %v8060, 0
    %v8097 = vsel %vm3490, %v8061, 0
    %v8100 = vsel %vm3490, %v8062, 0
    %8102 = vmatprep.subr.bf16.mxu0 0
    %8103 = vmatpush1.bf16.msra.mxu0 0
    %8104 = vmatprep.subr.bf16.mxu0 %v8094
    %8105 = vmatpush1.bf16.msra.mxu0 %v8091
    %8106 = vmatprep.subr.bf16.mxu0 %v8056
    %8107 = vmatpush1.bf16.msra.mxu0 %v8055
    %8108 = vmatprep.subr.bf16.mxu0 %v8052
    %8109 = vmatpush1.bf16.msra.mxu0 %v8051
    %8110 = vmatprep.subr.bf16.mxu0 %v8048
    %8111 = vmatpush1.bf16.msra.mxu0 %v8047
    %8112 = vmatprep.subr.bf16.mxu0 %v8044
    %8113 = vmatpush1.bf16.msra.mxu0 %v8043
    %8114 = vmatprep.subr.bf16.mxu0 %v8040
    %8115 = vmatpush1.bf16.msra.mxu0 %v8039
    %8116 = vmatprep.subr.bf16.mxu0 %v8036
    %8117 = vmatpush1.bf16.msra.mxu0 %v8035
    %8118 = vmatprep.subr.bf16.mxu0 0
    %8119 = vmatpush2.bf16.msra.mxu0 0
    %8120 = vmatprep.subr.bf16.mxu0 0
    %8121 = vmatpush2.bf16.msra.mxu0 0
    %8122 = vmatprep.subr.bf16.mxu0 0
    %8123 = vmatpush2.bf16.msra.mxu0 0
    %8124 = vmatprep.subr.bf16.mxu0 0
    %8125 = vmatpush2.bf16.msra.mxu0 0
    %8126 = vmatprep.subr.bf16.mxu0 0
    %8127 = vmatpush2.bf16.msra.mxu0 0
    %8128 = vmatprep.subr.bf16.mxu0 0
    %8129 = vmatpush2.bf16.msra.mxu0 0
    %8130 = vmatprep.subr.bf16.mxu0 0
    %8131 = vmatpush2.bf16.msra.mxu0 0
    %8132 = vmatprep.subr.bf16.mxu0 0
    %8133 = vmatpush2.bf16.msra.mxu0 0
    %8134 = vmatprep.mubr.bf16.mxu0 0
    %8135 = vmatmul.mubr.bf16.gmra.mxu0 %v8088
    %v8136 = vpop.f32.mrf.mxu0
    %v8137 = vadd.f32 0.0, %v8136
    %v8138 = vpop.f32.mrf.mxu0
    %v8139 = vadd.f32 0.0, %v8138
    %v8140 = vpop.f32.mrf.mxu0
    %v8141 = vpop.f32.mrf.mxu0
    %8142 = vdwg.mxu0
    %8143 = vmatprep.subr.bf16.mxu0 0
    %8144 = vmatpush1.bf16.msra.mxu0 0
    %8145 = vmatprep.subr.bf16.mxu0 %v8100
    %8146 = vmatpush1.bf16.msra.mxu0 %v8097
    %8147 = vmatprep.subr.bf16.mxu0 %v8058
    %8148 = vmatpush1.bf16.msra.mxu0 %v8057
    %8149 = vmatprep.subr.bf16.mxu0 %v8054
    %8150 = vmatpush1.bf16.msra.mxu0 %v8053
    %8151 = vmatprep.subr.bf16.mxu0 %v8050
    %8152 = vmatpush1.bf16.msra.mxu0 %v8049
    %8153 = vmatprep.subr.bf16.mxu0 %v8046
    %8154 = vmatpush1.bf16.msra.mxu0 %v8045
    %8155 = vmatprep.subr.bf16.mxu0 %v8042
    %8156 = vmatpush1.bf16.msra.mxu0 %v8041
    %8157 = vmatprep.subr.bf16.mxu0 %v8038
    %8158 = vmatpush1.bf16.msra.mxu0 %v8037
    %8159 = vmatprep.subr.bf16.mxu0 0
    %8160 = vmatpush2.bf16.msra.mxu0 0
    %8161 = vmatprep.subr.bf16.mxu0 0
    %8162 = vmatpush2.bf16.msra.mxu0 0
    %8163 = vmatprep.subr.bf16.mxu0 0
    %8164 = vmatpush2.bf16.msra.mxu0 0
    %8165 = vmatprep.subr.bf16.mxu0 0
    %8166 = vmatpush2.bf16.msra.mxu0 0
    %8167 = vmatprep.subr.bf16.mxu0 0
    %8168 = vmatpush2.bf16.msra.mxu0 0
    %8169 = vmatprep.subr.bf16.mxu0 0
    %8170 = vmatpush2.bf16.msra.mxu0 0
    %8171 = vmatprep.subr.bf16.mxu0 0
    %8172 = vmatpush2.bf16.msra.mxu0 0
    %8173 = vmatprep.subr.bf16.mxu0 0
    %8174 = vmatpush2.bf16.msra.mxu0 0
    %8175 = vmatprep.mubr.bf16.mxu0 0
    %8176 = vmatmul.mubr.bf16.gmra.mxu0 %v8088
    %v8177 = vpop.f32.mrf.mxu0
    %v8178 = vadd.f32 0.0, %v8177
    %v8179 = vpop.f32.mrf.mxu0
    %v8180 = vadd.f32 0.0, %v8179
    %v8181 = vpop.f32.mrf.mxu0
    %v8182 = vpop.f32.mrf.mxu0
    %8183 = vdwg.mxu0
    %vm8184 = vcmask 1040384
    %v8185 = vsel %vm8184, %v8137, 0.0
    %v8186 = vsel %vm8184, %v8139, 0.0
    %v8187 = vadd.f32 %v8185, %v8186
    %v8188 = vsel %vm8184, %v8178, 0.0
    %v8189 = vadd.f32 %v8187, %v8188
    %v8190 = vsel %vm8184, %v8180, 0.0
    %v8191 = vadd.f32 %v8189, %v8190
    %8192 = vadd.xlane.f32.xlu0 %v8191
    %v8193 = vpop.xlane.xlu0 %8192
    %v8194 = vmul.f32 %v8193, %v1888
    %v8195 = vsub.f32 %v8137, %v8194
    %v8196 = vsub.f32 %v8139, %v8194
    %v8197 = vsub.f32 %v8178, %v8194
    %v8198 = vsub.f32 %v8180, %v8194
    %v8199 = vmul.f32 %v8195, %v8195
    %v8200 = vmul.f32 %v8196, %v8196
    %v8201 = vmul.f32 %v8197, %v8197
    %v8202 = vmul.f32 %v8198, %v8198
    %v8203 = vsel %vm8184, %v8199, 0.0
    %v8204 = vsel %vm8184, %v8200, 0.0
    %v8205 = vadd.f32 %v8203, %v8204
    %v8206 = vsel %vm8184, %v8201, 0.0
    %v8207 = vadd.f32 %v8205, %v8206
    %v8208 = vsel %vm8184, %v8202, 0.0
    %v8209 = vadd.f32 %v8207, %v8208
    %8210 = vadd.xlane.f32.xlu0 %v8209
    %v8211 = vpop.xlane.xlu0 %8210
    %v8212 = vmul.f32 %v8211, %v1888
    %v8213 = vld [vmem:[%s5 + $0x30] sm:$0x1]
    %v8214 = vld [vmem:[%s5 + $0x31] sm:$0x1]
    %v8215 = vadd.f32 %v8212, 1e-05
    %v8216 = vrsqrt.pop %v8215
    %v8217 = vmul.f32 %v8216, %v8213
    %v8218 = vmul.f32 %v8194, %v8217
    %v8219 = vsub.f32 %v8214, %v8218
    %8221 = vset.pattern.permute.xlu0 0
    %8222 = vperm.xlu0 %8221, %v8217
    %v8223 = vpop.permute.xlu0 %8222
    %v8225 = vmul.f32 %v8137, %v8223
    %v8226 = vmul.f32 %v8139, %v8223
    %v8227 = vmul.f32 %v8178, %v8223
    %v8228 = vmul.f32 %v8180, %v8223
    %8230 = vset.pattern.permute.xlu0 0
    %8231 = vperm.xlu0 %8230, %v8219
    %v8232 = vpop.permute.xlu0 %8231
    %v8234 = vadd.f32 %v8225, %v8232
    %v8235 = vadd.f32 %v8226, %v8232
    %v8236 = vadd.f32 %v8227, %v8232
    %v8237 = vadd.f32 %v8228, %v8232
    %v8238 = vmax.f32 %v8234, 0.0
    %v8239 = vmax.f32 %v8235, 0.0
    %v8240 = vmax.f32 %v8236, 0.0
    %v8241 = vmax.f32 %v8237, 0.0
    %s8242 = sld [smem:[#allocation3 + $0x1]]
    %v8243 = vsub.f32 %v8238, %v48
    %v8244 = vsub.f32 %v8239, %v52
    %v8245 = vsub.f32 %v8240, %v56
    %v8246 = vsub.f32 %v8241, %v60
    %v8247 = vstv %s8242
    %v8248 = vmul.f32 %v8247, %v8243
    %v8249 = vmul.f32 %v8247, %v8244
    %v8250 = vmul.f32 %v8247, %v8245
    %v8251 = vmul.f32 %v8247, %v8246
    %v8256 = vcombine.low %v8248, %v8249
    %v8257 = vcombine.low %v8250, %v8251
    %v8259 = vunpack.c.l.s4 1966171168
    %v8260 = vunpack.c.0.s8 %v8259
    %v8261 = vlaneseq
    %v8262 = vshrl.u32 %v8261, 7
    %v8263 = vsub.s32 %v8260, %v8262
    %v8264 = vrot.slane %v8256, %v8263
    %v8266 = vunpack.c.l.s4 1966171168
    %v8267 = vunpack.c.0.s8 %v8266
    %v8268 = vlaneseq
    %v8269 = vshrl.u32 %v8268, 7
    %v8270 = vsub.s32 %v8267, %v8269
    %v8271 = vrot.slane %v8257, %v8270
    %v8272 = vcombine.low %v8264, %v8271
    %v8274 = vunpack.c.l.s4 1966171168
    %v8275 = vunpack.c.0.s8 %v8274
    %v8276 = vlaneseq
    %v8277 = vshrl.u32 %v8276, 7
    %v8278 = vsub.s32 %v8275, %v8277
    %v8279 = vrot.slane %v8272, %v8278
    %v8281 = vadd.f32 %v43, %v8279
    %v8282 = vlaneseq
    %vm8283 = vcmp.ge.s32.totalorder %v8282, 0
    %vm8284 = vcmp.lt.s32.totalorder %v8282, 512
    %vm8285 = vmand %vm8283, %vm8284
    %8286 = vst.msk [vmem:[%s8] sm:$0xf] %vm8285, %v8281
    // Predicated region
    $region38: #{affn_forward.1} parent=1 // pred_check
      _
    $region39: #{affn_forward.1} parent=1 // pred_check_branch
      %8288 = sbr.rel (0) target = $region41
    $region40: #{affn_forward.1} parent=1 // pred_region
      _
    $region41: #{affn_forward.1} parent=1 // pred_fallthru
      _
    // Predicated region
    $region42: #{affn_forward.1} parent=1 // pred_check
      _
    $region43: #{affn_forward.1} parent=1 // pred_check_branch
      %8290 = sbr.rel (0) target = $region45
    $region44: #{affn_forward.1} parent=1 // pred_region
      _
    $region45: #{affn_forward.1} parent=1 // pred_fallthru
      _
    %8291 = vsyncpa [#allocation4], 1

</llo_original>
